<compile_context>
chip_gen: v6e
topology: v6e:2x2x1
jax: 0.10.0
libtpu: 0.0.40
codegen_flags: <defaults>
</compile_context>

<pallas_src>
import functools

import jax
import jax.numpy as jnp
from jax import lax
from jax.experimental import pallas as pl
from jax.experimental.pallas import tpu as pltpu

# (cin, cout, kernel, stride, padding); cin=None -> input_dim
LAYER_DEFS = [
    (None, 512, 1, 1, 0),
    (512, 64, 4, 1, 0),
    (64, 64, 4, 2, 1),
    (64, 32, 4, 2, 1),
    (32, 1, 4, 2, 1),
]


def _round_up(x, m):
    return (x + m - 1) // m * m


# ---------------------------------------------------------------------------
# Pallas kernels
# ---------------------------------------------------------------------------
def _gemm_bias_act_kernel(x_ref, w_ref, b_ref, o_ref, *, apply_relu):
    """o = relu?(x @ w + b); bf16 MXU inputs, f32 accumulate / epilogue."""
    acc = jnp.dot(x_ref[...], w_ref[...], preferred_element_type=jnp.float32)
    acc = acc + b_ref[...]
    if apply_relu:
        acc = jnp.maximum(acc, 0.0)
    o_ref[...] = acc.astype(o_ref.dtype)


def _head_kernel(z_ref, w0_ref, b0_ref, w1_ref, b1_ref, o_ref):
    """Fused layers 0+1 (both act on 1x1 spatial input => channel GEMM chain)."""
    h = jnp.dot(z_ref[...], w0_ref[...], preferred_element_type=jnp.float32)
    h = jnp.maximum(h + b0_ref[...], 0.0)
    h = jnp.dot(h.astype(jnp.bfloat16), w1_ref[...],
                preferred_element_type=jnp.float32)
    h = jnp.maximum(h + b1_ref[...], 0.0)
    o_ref[...] = h.astype(o_ref.dtype)


# ---------------------------------------------------------------------------
# Pallas wrappers
# ---------------------------------------------------------------------------
def _pick_tm(m):
    # Largest M-tile <= 512 that divides M and still gives >= 2 grid steps
    # (keeps both v7x TensorCores busy); otherwise one full-M block.
    for cand in (512, 256, 128, 64, 32, 16, 8):
        if m % cand == 0 and m // cand >= 2:
            return cand
    return m


def gemm_bias_act(x, w, b_row, apply_relu, out_dtype):
    """y = relu?(x @ w + b_row): x (M,K) bf16, w (K,N) bf16, b_row (1,N) f32."""
    m, k = x.shape
    k2, n = w.shape
    assert k == k2 and b_row.shape == (1, n)
    tm = _pick_tm(m)
    kernel = functools.partial(_gemm_bias_act_kernel, apply_relu=apply_relu)
    return pl.pallas_call(
        kernel,
        out_shape=jax.ShapeDtypeStruct((m, n), out_dtype),
        grid_spec=pltpu.PrefetchScalarGridSpec(
            num_scalar_prefetch=0,
            grid=(m // tm,),
            in_specs=[
                pl.BlockSpec((tm, k), lambda i: (i, 0)),  # activation M-tile
                pl.BlockSpec((k, n), lambda i: (0, 0)),   # full weight, resident
                pl.BlockSpec((1, n), lambda i: (0, 0)),   # bias row
            ],
            out_specs=pl.BlockSpec((tm, n), lambda i: (i, 0)),
        ),
        compiler_params=pltpu.CompilerParams(
            dimension_semantics=("parallel",)),
    )(x, w, b_row)


def decoder_head(z, w0, b0_row, w1, b1_row):
    """Fused layers 0+1: (B, D) f32 -> (B, k1*k1*C1) bf16, NHWC-flat (y,x,c)."""
    bsz, d = z.shape
    n0 = w0.shape[1]
    n1 = w1.shape[1]
    # tiny one-time zero-pads so both GEMMs see (8,128)-aligned operands
    bp = _round_up(bsz, 8)
    dp = _round_up(d, 128)
    zp = jnp.zeros((bp, dp), jnp.bfloat16).at[:bsz, :d].set(
        z.astype(jnp.bfloat16))
    w0p = w0
    if dp != d:
        w0p = jnp.zeros((dp, n0), w0.dtype).at[:d, :].set(w0)
    out = pl.pallas_call(
        _head_kernel,
        out_shape=jax.ShapeDtypeStruct((bp, n1), jnp.bfloat16),
        grid_spec=pltpu.PrefetchScalarGridSpec(
            num_scalar_prefetch=0,
            grid=(1,),
            in_specs=[
                pl.BlockSpec((bp, dp), lambda i: (0, 0)),
                pl.BlockSpec((dp, n0), lambda i: (0, 0)),
                pl.BlockSpec((1, n0), lambda i: (0, 0)),
                pl.BlockSpec((n0, n1), lambda i: (0, 0)),
                pl.BlockSpec((1, n1), lambda i: (0, 0)),
            ],
            out_specs=pl.BlockSpec((bp, n1), lambda i: (0, 0)),
        ),
        compiler_params=pltpu.CompilerParams(
            dimension_semantics=("arbitrary",)),
    )(zp, w0p, b0_row, w1, b1_row)
    return out[:bsz]


# ---------------------------------------------------------------------------
# ConvTranspose2d as (dilate + pad + flipped-kernel im2col) -> fused GEMM
# ---------------------------------------------------------------------------
def _conv_transpose_gemm(h, wmat, b_row, k, stride, padding, cout,
                         apply_relu, gemm_fn, out_dtype):
    """ConvTranspose2d (groups=1, dilation=1, out_pad=0) on NHWC input."""
    bsz, hin, win, cin = h.shape
    oh = (hin - 1) * stride - 2 * padding + k
    ow = (win - 1) * stride - 2 * padding + k
    pp = k - 1 - padding
    # zero-dilate by `stride` and zero-pad by pp in a single XLA pad op
    hp = lax.pad(h, jnp.zeros((), h.dtype),
                 ((0, 0, 0), (pp, pp, stride - 1), (pp, pp, stride - 1),
                  (0, 0, 0)))
    # im2col: K ordering (ky, kx, ci); channels stay on the minor (lane) axis
    patches = jnp.concatenate(
        [hp[:, ky:ky + oh, kx:kx + ow, :]
         for ky in range(k) for kx in range(k)], axis=-1)
    patches = patches.reshape(bsz * oh * ow, k * k * cin)
    out = gemm_fn(patches, wmat, b_row, apply_relu, out_dtype)
    return out[:, :cout].reshape(bsz, oh, ow, cout)


# ---------------------------------------------------------------------------
# Parameters
# ---------------------------------------------------------------------------
def init_conv_decoder_params(key, input_dim):
    """PyTorch-layout ConvTranspose2d params: w (Cin, Cout, k, k), b (Cout,)."""
    params = []
    for (cin, cout, k, _, _) in LAYER_DEFS:
        cin = input_dim if cin is None else cin
        key, kw, kb = jax.random.split(key, 3)
        fan_in = cout * k * k  # PyTorch ConvTranspose2d fan-in
        bound = 1.0 / float(fan_in) ** 0.5
        w = jax.random.uniform(kw, (cin, cout, k, k), jnp.float32, -bound, bound)
        b = jax.random.uniform(kb, (cout,), jnp.float32, -bound, bound)
        params.append((w, b))
    return params


def prepare_params(params):
    """One-time repack: GEMM-layout bf16 weights + f32 bias rows."""
    (w0, b0), (w1, b1) = params[0], params[1]
    d, c0 = w0.shape[0], w0.shape[1]
    c1, k1 = w1.shape[1], w1.shape[2]
    prepped = {
        # layer 0: 1x1 ConvTranspose == plain channel matmul
        "w0": w0.reshape(d, c0).astype(jnp.bfloat16),
        "b0": b0.reshape(1, c0).astype(jnp.float32),
        # layer 1 (1x1 spatial input): out[b,(y,x,c)] = sum_ci h[b,ci]*w1[ci,c,y,x]
        "w1": w1.transpose(0, 2, 3, 1).reshape(c0, k1 * k1 * c1).astype(jnp.bfloat16),
        "b1": jnp.tile(b1, k1 * k1).reshape(1, k1 * k1 * c1).astype(jnp.float32),
    }
    for li in range(2, len(params)):
        w, b = params[li]
        cin, cout, k, _ = w.shape
        # equivalent forward-conv weight: flip spatially; rows ordered (ky,kx,ci)
        wmat = jnp.flip(w, (2, 3)).transpose(2, 3, 0, 1).reshape(k * k * cin, cout)
        npad = _round_up(cout, 8)  # Cout=1 padded only to 8 lanes (not 128)
        if npad != cout:
            wmat = jnp.pad(wmat, ((0, 0), (0, npad - cout)))
            b = jnp.pad(b, (0, npad - cout))
        prepped[f"w{li}"] = wmat.astype(jnp.bfloat16)
        prepped[f"b{li}"] = b.reshape(1, npad).astype(jnp.float32)
    return prepped


# ---------------------------------------------------------------------------
# Forward pass + references
# ---------------------------------------------------------------------------
def _ref_gemm(x, w, b_row, apply_relu, out_dtype):
    """Plain-JAX GEMM with the same bf16-in / f32-accumulate contract."""
    acc = jnp.dot(x, w, preferred_element_type=jnp.float32) + b_row
    if apply_relu:
        acc = jnp.maximum(acc, 0.0)
    return acc.astype(out_dtype)


def conv_decoder_forward(prepped, z, *, use_pallas=True):
    """ConvDecoder.forward: z (B, D) -> (B, 1, 32, 32) f32 (NCHW)."""
    bsz = z.shape[0]
    gemm = gemm_bias_act if use_pallas else _ref_gemm

    # layers 0+1 (spatial 1x1) -> (B, 4, 4, 64) NHWC
    if use_pallas:
        h = decoder_head(z, prepped["w0"], prepped["b0"],
                         prepped["w1"], prepped["b1"])
    else:
        h = _ref_gemm(z.astype(jnp.bfloat16), prepped["w0"], prepped["b0"],
                      True, jnp.bfloat16)
        h = _ref_gemm(h, prepped["w1"], prepped["b1"], True, jnp.bfloat16)
    k1, c1 = LAYER_DEFS[1][2], LAYER_DEFS[1][1]
    h = h.reshape(bsz, k1, k1, c1)

    # layers 2..4: stride-2 ConvTranspose as im2col + fused GEMM (NHWC)
    nlayers = len(LAYER_DEFS)
    for li in range(2, nlayers):
        _, cout, k, s, p = LAYER_DEFS[li]
        last = li == nlayers - 1
        h = _conv_transpose_gemm(
            h, prepped[f"w{li}"], prepped[f"b{li}"], k, s, p, cout,
            apply_relu=not last, gemm_fn=gemm,
            out_dtype=jnp.float32 if last else jnp.bfloat16)

    return h.transpose(0, 3, 1, 2)  # NHWC -> NCHW (B, 1, 32, 32)


def conv_decoder_reference_f32(params, z):
    """Independent f32 reference using lax.conv_general_dilated (NCHW)."""
    bsz, d = z.shape
    h = z.reshape(bsz, d, 1, 1)
    n = len(params)
    for li, (w, b) in enumerate(params):
        _, _, k, s, p = LAYER_DEFS[li]
        pp = k - 1 - p
        rhs = jnp.flip(w, (2, 3)).transpose(1, 0, 2, 3)  # (Cout, Cin, k, k)
        h = lax.conv_general_dilated(
            h, rhs, window_strides=(1, 1), padding=((pp, pp), (pp, pp)),
            lhs_dilation=(s, s), rhs_dilation=(1, 1),
            dimension_numbers=("NCHW", "OIHW", "NCHW"))
        h = h + b.reshape(1, -1, 1, 1)
        if li < n - 1:
            h = jnp.maximum(h, 0.0)
    return h


if __name__ == "__main__":
    key = jax.random.PRNGKey(0)
    key_p, key_z = jax.random.split(key)

    input_dim = 32
    batch = 2

    params = init_conv_decoder_params(key_p, input_dim)
    prepped = prepare_params(params)
    z = jax.random.normal(key_z, (batch, input_dim), dtype=jnp.float32)

    fwd = jax.jit(functools.partial(conv_decoder_forward, use_pallas=True))
    out = jax.block_until_ready(fwd(prepped, z))

    assert out.shape == (batch, 1, 32, 32), out.shape
    assert bool(jnp.all(jnp.isfinite(out)))

    # 1) Pallas GEMMs vs plain-JAX GEMMs on identical bf16 inputs (shared glue)
    out_ref_bf16 = conv_decoder_forward(prepped, z, use_pallas=False)
    assert bool(jnp.allclose(out, out_ref_bf16, atol=1e-2, rtol=1e-2)), (
        float(jnp.max(jnp.abs(out - out_ref_bf16))))

    # 2) end-to-end vs an independent f32 lax.conv reference of the module
    out_ref_f32 = jax.block_until_ready(conv_decoder_reference_f32(params, z))
    assert bool(jnp.allclose(out, out_ref_f32, atol=2e-2, rtol=2e-2)), (
        float(jnp.max(jnp.abs(out - out_ref_f32))))

    print("KERNEL_OK")
</pallas_src>

<mosaic_0001>
module attributes {stable_mosaic.version = 11 : i64} {
  func.func @_head_kernel(%arg0: i32, %arg1: memref<8x128xbf16, #tpu.memory_space<vmem>>, %arg2: memref<128x512xbf16, #tpu.memory_space<vmem>>, %arg3: memref<1x512xf32, #tpu.memory_space<vmem>>, %arg4: memref<512x1024xbf16, #tpu.memory_space<vmem>>, %arg5: memref<1x1024xf32, #tpu.memory_space<vmem>>, %arg6: memref<8x1024xbf16, #tpu.memory_space<vmem>>) attributes {dimension_semantics = [#tpu.dimension_semantics<arbitrary>], iteration_bounds = array<i64: 1>, scalar_prefetch = 0 : i64, scratch_operands = 0 : i64, tpu.core_type = #tpu.core_type<tc>, window_params = [{pipeline_mode = #tpu.pipeline_mode<synchronous>, transform_indices = @transform_0, window_bounds = array<i64: 8, 128>}, {pipeline_mode = #tpu.pipeline_mode<synchronous>, transform_indices = @transform_1, window_bounds = array<i64: 128, 512>}, {pipeline_mode = #tpu.pipeline_mode<synchronous>, transform_indices = @transform_2, window_bounds = array<i64: 1, 512>}, {pipeline_mode = #tpu.pipeline_mode<synchronous>, transform_indices = @transform_3, window_bounds = array<i64: 512, 1024>}, {pipeline_mode = #tpu.pipeline_mode<synchronous>, transform_indices = @transform_4, window_bounds = array<i64: 1, 1024>}, {pipeline_mode = #tpu.pipeline_mode<synchronous>, transform_indices = @transform_5, window_bounds = array<i64: 8, 1024>}]} {
    %c0 = arith.constant 0 : index
    %c0_0 = arith.constant 0 : index
    %0 = vector.load %arg1[%c0, %c0_0] : memref<8x128xbf16, #tpu.memory_space<vmem>>, vector<8x128xbf16>
    %c0_1 = arith.constant 0 : index
    %c0_2 = arith.constant 0 : index
    %1 = vector.load %arg2[%c0_1, %c0_2] : memref<128x512xbf16, #tpu.memory_space<vmem>>, vector<128x512xbf16>
    %cst = arith.constant dense<0.000000e+00> : vector<8x512xf32>
    %2 = tpu.matmul %0, %1, %cst {dimension_numbers = #tpu.dot_dimension_numbers<[1], [0], [0], [1], [0, 0, 1, 1], [], []>} : vector<8x128xbf16>, vector<128x512xbf16>, vector<8x512xf32> -> vector<8x512xf32>
    %c0_3 = arith.constant 0 : index
    %c0_4 = arith.constant 0 : index
    %3 = vector.load %arg3[%c0_3, %c0_4] : memref<1x512xf32, #tpu.memory_space<vmem>>, vector<1x512xf32>
    %4 = vector.broadcast %3 : vector<1x512xf32> to vector<8x512xf32>
    %5 = arith.addf %2, %4 : vector<8x512xf32>
    %cst_5 = arith.constant 0.000000e+00 : f32
    %6 = vector.broadcast %cst_5 : f32 to vector<8x512xf32>
    %7 = arith.maximumf %5, %6 : vector<8x512xf32>
    %8 = arith.truncf %7 : vector<8x512xf32> to vector<8x512xbf16>
    %c0_6 = arith.constant 0 : index
    %c0_7 = arith.constant 0 : index
    %9 = vector.load %arg4[%c0_6, %c0_7] : memref<512x1024xbf16, #tpu.memory_space<vmem>>, vector<512x1024xbf16>
    %cst_8 = arith.constant dense<0.000000e+00> : vector<8x1024xf32>
    %10 = tpu.matmul %8, %9, %cst_8 {dimension_numbers = #tpu.dot_dimension_numbers<[1], [0], [0], [1], [0, 0, 1, 1], [], []>} : vector<8x512xbf16>, vector<512x1024xbf16>, vector<8x1024xf32> -> vector<8x1024xf32>
    %c0_9 = arith.constant 0 : index
    %c0_10 = arith.constant 0 : index
    %11 = vector.load %arg5[%c0_9, %c0_10] : memref<1x1024xf32, #tpu.memory_space<vmem>>, vector<1x1024xf32>
    %12 = vector.broadcast %11 : vector<1x1024xf32> to vector<8x1024xf32>
    %13 = arith.addf %10, %12 : vector<8x1024xf32>
    %cst_11 = arith.constant 0.000000e+00 : f32
    %14 = vector.broadcast %cst_11 : f32 to vector<8x1024xf32>
    %15 = arith.maximumf %13, %14 : vector<8x1024xf32>
    %16 = arith.truncf %15 : vector<8x1024xf32> to vector<8x1024xbf16>
    %c0_12 = arith.constant 0 : index
    %c0_13 = arith.constant 0 : index
    %17 = vector.load %arg6[%c0_12, %c0_13] : memref<8x1024xbf16, #tpu.memory_space<vmem>>, vector<8x1024xbf16>
    tpu.vector_store %arg6[%c0_12, %c0_13], %16 {strides = array<i32>} : memref<8x1024xbf16, #tpu.memory_space<vmem>>, vector<8x1024xbf16>,
    return
  }
  func.func @transform_0(%arg0: i32) -> (i32, i32) {
    %c0_i32 = arith.constant 0 : i32
    %c0_i32_0 = arith.constant 0 : i32
    %c0_i32_1 = arith.constant 0 : i32
    return %c0_i32, %c0_i32_0 : i32, i32
  }
  func.func @transform_1(%arg0: i32) -> (i32, i32) {
    %c0_i32 = arith.constant 0 : i32
    %c0_i32_0 = arith.constant 0 : i32
    %c0_i32_1 = arith.constant 0 : i32
    return %c0_i32, %c0_i32_0 : i32, i32
  }
  func.func @transform_2(%arg0: i32) -> (i32, i32) {
    %c0_i32 = arith.constant 0 : i32
    %c0_i32_0 = arith.constant 0 : i32
    %c0_i32_1 = arith.constant 0 : i32
    return %c0_i32, %c0_i32_0 : i32, i32
  }
  func.func @transform_3(%arg0: i32) -> (i32, i32) {
    %c0_i32 = arith.constant 0 : i32
    %c0_i32_0 = arith.constant 0 : i32
    %c0_i32_1 = arith.constant 0 : i32
    return %c0_i32, %c0_i32_0 : i32, i32
  }
  func.func @transform_4(%arg0: i32) -> (i32, i32) {
    %c0_i32 = arith.constant 0 : i32
    %c0_i32_0 = arith.constant 0 : i32
    %c0_i32_1 = arith.constant 0 : i32
    return %c0_i32, %c0_i32_0 : i32, i32
  }
  func.func @transform_5(%arg0: i32) -> (i32, i32) {
    %c0_i32 = arith.constant 0 : i32
    %c0_i32_0 = arith.constant 0 : i32
    %c0_i32_1 = arith.constant 0 : i32
    return %c0_i32, %c0_i32_0 : i32, i32
  }
}

module attributes {stable_mosaic.version = 11 : i64} {
  func.func @_gemm_bias_act_kernel(%arg0: i32, %arg1: memref<64x1024xbf16, #tpu.memory_space<vmem>>, %arg2: memref<1024x64xbf16, #tpu.memory_space<vmem>>, %arg3: memref<1x64xf32, #tpu.memory_space<vmem>>, %arg4: memref<64x64xbf16, #tpu.memory_space<vmem>>) attributes {dimension_semantics = [#tpu.dimension_semantics<parallel>], iteration_bounds = array<i64: 2>, scalar_prefetch = 0 : i64, scratch_operands = 0 : i64, tpu.core_type = #tpu.core_type<tc>, window_params = [{transform_indices = @transform_0, window_bounds = array<i64: 64, 1024>}, {pipeline_mode = #tpu.pipeline_mode<synchronous>, transform_indices = @transform_1, window_bounds = array<i64: 1024, 64>}, {pipeline_mode = #tpu.pipeline_mode<synchronous>, transform_indices = @transform_2, window_bounds = array<i64: 1, 64>}, {transform_indices = @transform_3, window_bounds = array<i64: 64, 64>}]} {
    %c0 = arith.constant 0 : index
    %c0_0 = arith.constant 0 : index
    %0 = vector.load %arg1[%c0, %c0_0] : memref<64x1024xbf16, #tpu.memory_space<vmem>>, vector<64x1024xbf16>
    %c0_1 = arith.constant 0 : index
    %c0_2 = arith.constant 0 : index
    %1 = vector.load %arg2[%c0_1, %c0_2] : memref<1024x64xbf16, #tpu.memory_space<vmem>>, vector<1024x64xbf16>
    %cst = arith.constant dense<0.000000e+00> : vector<64x64xf32>
    %2 = tpu.matmul %0, %1, %cst {dimension_numbers = #tpu.dot_dimension_numbers<[1], [0], [0], [1], [0, 0, 1, 1], [], []>} : vector<64x1024xbf16>, vector<1024x64xbf16>, vector<64x64xf32> -> vector<64x64xf32>
    %c0_3 = arith.constant 0 : index
    %c0_4 = arith.constant 0 : index
    %3 = vector.load %arg3[%c0_3, %c0_4] : memref<1x64xf32, #tpu.memory_space<vmem>>, vector<1x64xf32>
    %4 = vector.broadcast %3 : vector<1x64xf32> to vector<64x64xf32>
    %5 = arith.addf %2, %4 : vector<64x64xf32>
    %cst_5 = arith.constant 0.000000e+00 : f32
    %6 = vector.broadcast %cst_5 : f32 to vector<64x64xf32>
    %7 = arith.maximumf %5, %6 : vector<64x64xf32>
    %8 = arith.truncf %7 : vector<64x64xf32> to vector<64x64xbf16>
    %c0_6 = arith.constant 0 : index
    %c0_7 = arith.constant 0 : index
    %9 = vector.load %arg4[%c0_6, %c0_7] : memref<64x64xbf16, #tpu.memory_space<vmem>>, vector<64x64xbf16>
    tpu.vector_store %arg4[%c0_6, %c0_7], %8 {strides = array<i32>} : memref<64x64xbf16, #tpu.memory_space<vmem>>, vector<64x64xbf16>,
    return
  }
  func.func @transform_0(%arg0: i32) -> (i32, i32) {
    %c0_i32 = arith.constant 0 : i32
    %c0_i32_0 = arith.constant 0 : i32
    return %arg0, %c0_i32 : i32, i32
  }
  func.func @transform_1(%arg0: i32) -> (i32, i32) {
    %c0_i32 = arith.constant 0 : i32
    %c0_i32_0 = arith.constant 0 : i32
    %c0_i32_1 = arith.constant 0 : i32
    return %c0_i32, %c0_i32_0 : i32, i32
  }
  func.func @transform_2(%arg0: i32) -> (i32, i32) {
    %c0_i32 = arith.constant 0 : i32
    %c0_i32_0 = arith.constant 0 : i32
    %c0_i32_1 = arith.constant 0 : i32
    return %c0_i32, %c0_i32_0 : i32, i32
  }
  func.func @transform_3(%arg0: i32) -> (i32, i32) {
    %c0_i32 = arith.constant 0 : i32
    %c0_i32_0 = arith.constant 0 : i32
    return %arg0, %c0_i32 : i32, i32
  }
}

module attributes {stable_mosaic.version = 11 : i64} {
  func.func @_gemm_bias_act_kernel(%arg0: i32, %arg1: memref<256x1024xbf16, #tpu.memory_space<vmem>>, %arg2: memref<1024x32xbf16, #tpu.memory_space<vmem>>, %arg3: memref<1x32xf32, #tpu.memory_space<vmem>>, %arg4: memref<256x32xbf16, #tpu.memory_space<vmem>>) attributes {dimension_semantics = [#tpu.dimension_semantics<parallel>], iteration_bounds = array<i64: 2>, scalar_prefetch = 0 : i64, scratch_operands = 0 : i64, tpu.core_type = #tpu.core_type<tc>, window_params = [{transform_indices = @transform_0, window_bounds = array<i64: 256, 1024>}, {pipeline_mode = #tpu.pipeline_mode<synchronous>, transform_indices = @transform_1, window_bounds = array<i64: 1024, 32>}, {pipeline_mode = #tpu.pipeline_mode<synchronous>, transform_indices = @transform_2, window_bounds = array<i64: 1, 32>}, {transform_indices = @transform_3, window_bounds = array<i64: 256, 32>}]} {
    %c0 = arith.constant 0 : index
    %c0_0 = arith.constant 0 : index
    %0 = vector.load %arg1[%c0, %c0_0] : memref<256x1024xbf16, #tpu.memory_space<vmem>>, vector<256x1024xbf16>
    %c0_1 = arith.constant 0 : index
    %c0_2 = arith.constant 0 : index
    %1 = vector.load %arg2[%c0_1, %c0_2] : memref<1024x32xbf16, #tpu.memory_space<vmem>>, vector<1024x32xbf16>
    %cst = arith.constant dense<0.000000e+00> : vector<256x32xf32>
    %2 = tpu.matmul %0, %1, %cst {dimension_numbers = #tpu.dot_dimension_numbers<[1], [0], [0], [1], [0, 0, 1, 1], [], []>} : vector<256x1024xbf16>, vector<1024x32xbf16>, vector<256x32xf32> -> vector<256x32xf32>
    %c0_3 = arith.constant 0 : index
    %c0_4 = arith.constant 0 : index
    %3 = vector.load %arg3[%c0_3, %c0_4] : memref<1x32xf32, #tpu.memory_space<vmem>>, vector<1x32xf32>
    %4 = vector.broadcast %3 : vector<1x32xf32> to vector<256x32xf32>
    %5 = arith.addf %2, %4 : vector<256x32xf32>
    %cst_5 = arith.constant 0.000000e+00 : f32
    %6 = vector.broadcast %cst_5 : f32 to vector<256x32xf32>
    %7 = arith.maximumf %5, %6 : vector<256x32xf32>
    %8 = arith.truncf %7 : vector<256x32xf32> to vector<256x32xbf16>
    %c0_6 = arith.constant 0 : index
    %c0_7 = arith.constant 0 : index
    %9 = vector.load %arg4[%c0_6, %c0_7] : memref<256x32xbf16, #tpu.memory_space<vmem>>, vector<256x32xbf16>
    tpu.vector_store %arg4[%c0_6, %c0_7], %8 {strides = array<i32>} : memref<256x32xbf16, #tpu.memory_space<vmem>>, vector<256x32xbf16>,
    return
  }
  func.func @transform_0(%arg0: i32) -> (i32, i32) {
    %c0_i32 = arith.constant 0 : i32
    %c0_i32_0 = arith.constant 0 : i32
    return %arg0, %c0_i32 : i32, i32
  }
  func.func @transform_1(%arg0: i32) -> (i32, i32) {
    %c0_i32 = arith.constant 0 : i32
    %c0_i32_0 = arith.constant 0 : i32
    %c0_i32_1 = arith.constant 0 : i32
    return %c0_i32, %c0_i32_0 : i32, i32
  }
  func.func @transform_2(%arg0: i32) -> (i32, i32) {
    %c0_i32 = arith.constant 0 : i32
    %c0_i32_0 = arith.constant 0 : i32
    %c0_i32_1 = arith.constant 0 : i32
    return %c0_i32, %c0_i32_0 : i32, i32
  }
  func.func @transform_3(%arg0: i32) -> (i32, i32) {
    %c0_i32 = arith.constant 0 : i32
    %c0_i32_0 = arith.constant 0 : i32
    return %arg0, %c0_i32 : i32, i32
  }
}

module attributes {stable_mosaic.version = 11 : i64} {
  func.func @_gemm_bias_act_kernel(%arg0: i32, %arg1: memref<512x512xbf16, #tpu.memory_space<vmem>>, %arg2: memref<512x8xbf16, #tpu.memory_space<vmem>>, %arg3: memref<1x8xf32, #tpu.memory_space<vmem>>, %arg4: memref<512x8xf32, #tpu.memory_space<vmem>>) attributes {dimension_semantics = [#tpu.dimension_semantics<parallel>], iteration_bounds = array<i64: 4>, scalar_prefetch = 0 : i64, scratch_operands = 0 : i64, tpu.core_type = #tpu.core_type<tc>, window_params = [{transform_indices = @transform_0, window_bounds = array<i64: 512, 512>}, {pipeline_mode = #tpu.pipeline_mode<synchronous>, transform_indices = @transform_1, window_bounds = array<i64: 512, 8>}, {pipeline_mode = #tpu.pipeline_mode<synchronous>, transform_indices = @transform_2, window_bounds = array<i64: 1, 8>}, {transform_indices = @transform_3, window_bounds = array<i64: 512, 8>}]} {
    %c0 = arith.constant 0 : index
    %c0_0 = arith.constant 0 : index
    %0 = vector.load %arg1[%c0, %c0_0] : memref<512x512xbf16, #tpu.memory_space<vmem>>, vector<512x512xbf16>
    %c0_1 = arith.constant 0 : index
    %c0_2 = arith.constant 0 : index
    %1 = vector.load %arg2[%c0_1, %c0_2] : memref<512x8xbf16, #tpu.memory_space<vmem>>, vector<512x8xbf16>
    %cst = arith.constant dense<0.000000e+00> : vector<512x8xf32>
    %2 = tpu.matmul %0, %1, %cst {dimension_numbers = #tpu.dot_dimension_numbers<[1], [0], [0], [1], [0, 0, 1, 1], [], []>} : vector<512x512xbf16>, vector<512x8xbf16>, vector<512x8xf32> -> vector<512x8xf32>
    %c0_3 = arith.constant 0 : index
    %c0_4 = arith.constant 0 : index
    %3 = vector.load %arg3[%c0_3, %c0_4] : memref<1x8xf32, #tpu.memory_space<vmem>>, vector<1x8xf32>
    %4 = vector.broadcast %3 : vector<1x8xf32> to vector<512x8xf32>
    %5 = arith.addf %2, %4 : vector<512x8xf32>
    %c0_5 = arith.constant 0 : index
    %c0_6 = arith.constant 0 : index
    %6 = vector.load %arg4[%c0_5, %c0_6] : memref<512x8xf32, #tpu.memory_space<vmem>>, vector<512x8xf32>
    tpu.vector_store %arg4[%c0_5, %c0_6], %5 {strides = array<i32>} : memref<512x8xf32, #tpu.memory_space<vmem>>, vector<512x8xf32>,
    return
  }
  func.func @transform_0(%arg0: i32) -> (i32, i32) {
    %c0_i32 = arith.constant 0 : i32
    %c0_i32_0 = arith.constant 0 : i32
    return %arg0, %c0_i32 : i32, i32
  }
  func.func @transform_1(%arg0: i32) -> (i32, i32) {
    %c0_i32 = arith.constant 0 : i32
    %c0_i32_0 = arith.constant 0 : i32
    %c0_i32_1 = arith.constant 0 : i32
    return %c0_i32, %c0_i32_0 : i32, i32
  }
  func.func @transform_2(%arg0: i32) -> (i32, i32) {
    %c0_i32 = arith.constant 0 : i32
    %c0_i32_0 = arith.constant 0 : i32
    %c0_i32_1 = arith.constant 0 : i32
    return %c0_i32, %c0_i32_0 : i32, i32
  }
  func.func @transform_3(%arg0: i32) -> (i32, i32) {
    %c0_i32 = arith.constant 0 : i32
    %c0_i32_0 = arith.constant 0 : i32
    return %arg0, %c0_i32 : i32, i32
  }
}

</mosaic_0001>

<llo_original>
// kernel: conv_decoder_forward.5
$region0: #{conv_decoder_forward.5}
  #allocation0 [shape = 'u32[]', space=smem, size = 0x4, offset = 0x4, fixed_abs, tag = 'smem constant byte address 0x4 - core index']
  #allocation1 [shape = 'u32[144,128]{1,0:T(1,128)}', space=vmem, size = 0x12000, scoped, tag = 'internal scratch']
  %s0 = inlined_call_operand.vmem [shape: bf16[128,1024], index: 0, kind: input, shape index: {}]
  %s1 = inlined_call_operand.vmem [shape: bf16[1024,64], index: 1, kind: input, shape index: {}]
  %s2 = inlined_call_operand.vmem [shape: f32[1,64], index: 2, kind: input, shape index: {}]
  %s3 = inlined_call_operand.vmem [shape: bf16[128,64], index: 3, kind: output, shape index: {}]
  %s4 = sld [smem:[#allocation0]]
  $region45: #{conv_decoder_forward.5} parent=0
    _
  %s6 = ssub.s32 1, %s4
  %s7 = scalar_select 0, %s6, %s4
  loop: start=0, step=1, limit=4
  $region2: #{conv_decoder_forward.5} parent=0 // loop_pre_header
    _
  $region3: #{conv_decoder_forward.5} parent=0 // loop_header
    %s9 = sphi 0, %s13
    %p10 = scmp.ge.s32.totalorder %s9, 4
    %s19 = sphi 0, %s21
    %s22 = sphi 0, %s19
    %s23 = sphi 0, %s22
    %s39 = sphi 0, %s23
    %s43 = sphi 0, %s43
    %s45 = sphi 0, %s43
    %s46 = sphi 0, %s45
    %s60 = sphi 0, %s46
    %s64 = sphi 0, %s64
    %s66 = sphi 0, %s64
    %s67 = sphi 0, %s66
    %s81 = sphi 0, %s67
    %s87 = sphi 0, %s89
    %s90 = sphi 0, %s87
    %s91 = sphi 0, %s90
    %s107 = sphi 0, %s91
  $region4: #{conv_decoder_forward.5} parent=0 // loop_header_branch
    %12 = sbr.rel (%p10) target = $region8
  $region5: #{conv_decoder_forward.5} parent=0 // loop_body
    %s14 = ssub.s32 %s9, 1
    %s15 = ssub.s32 %s9, 2
    %s16 = sadd.s32 %s9, 1
    %s17 = ssub.s32 %s9, %s16
    %p18 = scmp.eq.s32.totalorder %s17, 0
    %s20 = sadd.s32 %s19, 1
    %s21 = scalar_select %p18, %s19, %s20
    %p24 = pneg %p18
    %p25 = scmp.eq.s32.totalorder %s9, 1
    %p26 = por %p24, %p25
    %p27 = scmp.ne.s32.totalorder %s19, %s22
    %p28 = scmp.eq.s32.totalorder %s9, 0
    %p29 = por %p27, %p28
    %p30 = scmp.ne.s32.totalorder %s19, %s22
    %p31 = scmp.eq.s32.totalorder %s14, 1
    %p32 = por %p30, %p31
    %p33 = scmp.ne.s32.totalorder %s22, %s23
    %p34 = scmp.eq.s32.totalorder %s14, 0
    %p35 = por %p33, %p34
    %p36 = scmp.ne.s32.totalorder %s22, %s23
    %p37 = scmp.eq.s32.totalorder %s15, 1
    %p38 = por %p36, %p37
    %p40 = scmp.ne.s32.totalorder %s23, %s39
    %p41 = scmp.eq.s32.totalorder %s15, 0
    %p42 = por %p40, %p41
    %s44 = sadd.s32 %s43, 1
    %p47 = scmp.eq.s32.totalorder %s9, 1
    %p48 = scmp.ne.s32.totalorder %s43, %s45
    %p49 = scmp.eq.s32.totalorder %s9, 0
    %p50 = por %p48, %p49
    %p51 = scmp.ne.s32.totalorder %s43, %s45
    %p52 = scmp.eq.s32.totalorder %s14, 1
    %p53 = por %p51, %p52
    %p54 = scmp.ne.s32.totalorder %s45, %s46
    %p55 = scmp.eq.s32.totalorder %s14, 0
    %p56 = por %p54, %p55
    %p57 = scmp.ne.s32.totalorder %s45, %s46
    %p58 = scmp.eq.s32.totalorder %s15, 1
    %p59 = por %p57, %p58
    %p61 = scmp.ne.s32.totalorder %s46, %s60
    %p62 = scmp.eq.s32.totalorder %s15, 0
    %p63 = por %p61, %p62
    %s65 = sadd.s32 %s64, 1
    %p68 = scmp.eq.s32.totalorder %s9, 1
    %p69 = scmp.ne.s32.totalorder %s64, %s66
    %p70 = scmp.eq.s32.totalorder %s9, 0
    %p71 = por %p69, %p70
    %p72 = scmp.ne.s32.totalorder %s64, %s66
    %p73 = scmp.eq.s32.totalorder %s14, 1
    %p74 = por %p72, %p73
    %p75 = scmp.ne.s32.totalorder %s66, %s67
    %p76 = scmp.eq.s32.totalorder %s14, 0
    %p77 = por %p75, %p76
    %p78 = scmp.ne.s32.totalorder %s66, %s67
    %p79 = scmp.eq.s32.totalorder %s15, 1
    %p80 = por %p78, %p79
    %p82 = scmp.ne.s32.totalorder %s67, %s81
    %p83 = scmp.eq.s32.totalorder %s15, 0
    %p84 = por %p82, %p83
    %s85 = ssub.s32 %s9, %s16
    %p86 = scmp.eq.s32.totalorder %s85, 0
    %s88 = sadd.s32 %s87, 1
    %s89 = scalar_select %p86, %s87, %s88
    %p92 = pneg %p86
    %p93 = scmp.eq.s32.totalorder %s9, 1
    %p94 = por %p92, %p93
    %p95 = scmp.ne.s32.totalorder %s87, %s90
    %p96 = scmp.eq.s32.totalorder %s9, 0
    %p97 = por %p95, %p96
    %p98 = scmp.ne.s32.totalorder %s87, %s90
    %p99 = scmp.eq.s32.totalorder %s14, 1
    %p100 = por %p98, %p99
    %p101 = scmp.ne.s32.totalorder %s90, %s91
    %p102 = scmp.eq.s32.totalorder %s14, 0
    %p103 = por %p101, %p102
    %p104 = scmp.ne.s32.totalorder %s90, %s91
    %p105 = scmp.eq.s32.totalorder %s15, 1
    %p106 = por %p104, %p105
    %p108 = scmp.ne.s32.totalorder %s91, %s107
    %p109 = scmp.eq.s32.totalorder %s15, 0
    %p110 = por %p108, %p109
    %p111 = scmp.le.s32.totalorder 1, %s9
    %p112 = scmp.lt.s32.totalorder %s9, 3
    %p113 = pnand %p111, %p112
    %p114 = pneg %p113
    // Predicated region
    $region9: #{conv_decoder_forward.5} parent=5 // pred_check
      _
    $region10: #{conv_decoder_forward.5} parent=5 // pred_check_branch
      %116 = sbr.rel (%p113) target = $region12
    $region11: #{conv_decoder_forward.5} parent=5 // pred_region
      %s117 = ssub.s32 %s9, 1
      // Predicated region
      $region13: #{conv_decoder_forward.5} parent=11 // pred_check
        %p118 = pneg %p56
      $region14: #{conv_decoder_forward.5} parent=11 // pred_check_branch
        %120 = sbr.rel (%p118) target = $region16
      $region15: #{conv_decoder_forward.5} parent=11 // pred_region
        _
      $region16: #{conv_decoder_forward.5} parent=11 // pred_fallthru
        _
      // Predicated region
      $region17: #{conv_decoder_forward.5} parent=11 // pred_check
        %p121 = pneg %p77
      $region18: #{conv_decoder_forward.5} parent=11 // pred_check_branch
        %123 = sbr.rel (%p121) target = $region20
      $region19: #{conv_decoder_forward.5} parent=11 // pred_region
        _
      $region20: #{conv_decoder_forward.5} parent=11 // pred_fallthru
        _
    $region12: #{conv_decoder_forward.5} parent=5 // pred_fallthru
      _
    %p124 = scmp.lt.s32.totalorder %s9, 2
    // Predicated region
    $region21: #{conv_decoder_forward.5} parent=5 // pred_check
      %p125 = pneg %p124
    $region22: #{conv_decoder_forward.5} parent=5 // pred_check_branch
      %127 = sbr.rel (%p125) target = $region24
    $region23: #{conv_decoder_forward.5} parent=5 // pred_region
      // Predicated region
      $region25: #{conv_decoder_forward.5} parent=23 // pred_check
        %p128 = pneg %p29
      $region26: #{conv_decoder_forward.5} parent=23 // pred_check_branch
        %130 = sbr.rel (%p128) target = $region28
      $region27: #{conv_decoder_forward.5} parent=23 // pred_region
        %s131 = smul.u32 8, %s9
        %p132 = scmp.lt.s32.totalorder %s131, 15
        %s133 = scalar_select %p132, %s131, 15
        %s134 = smul.addr %s133, 8
        %s135 = smul.addr %s134, 4
        %s136 = scalar_lea.vmem %s0, %s135
        %s137 = smul.u32 8, %s9
      $region28: #{conv_decoder_forward.5} parent=23 // pred_fallthru
        _
    $region24: #{conv_decoder_forward.5} parent=5 // pred_fallthru
      _
    %p138 = scmp.le.s32.totalorder 1, %s9
    %p139 = scmp.lt.s32.totalorder %s9, 3
    %p140 = pnand %p138, %p139
    %p141 = pneg %p140
    // Predicated region
    $region29: #{conv_decoder_forward.5} parent=5 // pred_check
      _
    $region30: #{conv_decoder_forward.5} parent=5 // pred_check_branch
      %143 = sbr.rel (%p140) target = $region32
    $region31: #{conv_decoder_forward.5} parent=5 // pred_region
      %s144 = ssub.s32 %s9, 1
      %s145 = smul.u32 8, %s14
      %p146 = scmp.lt.s32.totalorder %s145, 15
      %s147 = scalar_select %p146, %s145, 15
      %s148 = smul.addr %s147, 8
      %s149 = smul.addr %s148, 4
      %s150 = scalar_lea.vmem %s0, %s149
      %p151 = pneg %p35
      %p152 = pneg %p32
      %p153 = pneg %p56
      %p154 = pneg %p53
      %p155 = pneg %p77
      %p156 = pneg %p74
      %p157 = pneg %p103
      %p158 = pneg %p100
      %s159 = smul.u32 8, %s14
      %p160 = scmp.lt.s32.totalorder %s159, 15
      %s161 = scalar_select %p160, %s159, 15
      %s162 = smul.addr %s161, 4
      %s163 = scalar_lea.vmem %s3, %s162
      %s164 = smul.u32 8, %s14
      %p165 = scmp.lt.s32.totalorder %s164, 15
      %s166 = scalar_select %p165, %s164, 15
      %s167 = smul.addr %s166, 8
      %s168 = smul.addr %s167, 4
      %s169 = scalar_lea.vmem %s0, %s168
      %s170 = smul.u32 8, %s14
      %s171 = smul.u32 8, %s14
      %p172 = scmp.lt.s32.totalorder %s171, 15
      %s173 = scalar_select %p172, %s171, 15
      %s174 = smul.addr %s173, 4
      %s175 = scalar_lea.vmem %s3, %s174
      %s176 = smul.u32 8, %s14
      %v178 = vld [vmem:[%s169] sm:$0xff]
      %v179 = vld [vmem:[%s169 + $0x8] sm:$0xff]
      %v180 = vld [vmem:[%s169 + $0x10] sm:$0xff]
      %v181 = vld [vmem:[%s169 + $0x18] sm:$0xff]
      %v182 = vld [vmem:[%s169 + $0x20] sm:$0xff]
      %v183 = vld [vmem:[%s169 + $0x28] sm:$0xff]
      %v184 = vld [vmem:[%s169 + $0x30] sm:$0xff]
      %v185 = vld [vmem:[%s169 + $0x38] sm:$0xff]
      %v186 = vld [vmem:[%s169 + $0x40] sm:$0xff]
      %v187 = vld [vmem:[%s169 + $0x48] sm:$0xff]
      %v188 = vld [vmem:[%s169 + $0x50] sm:$0xff]
      %v189 = vld [vmem:[%s169 + $0x58] sm:$0xff]
      %v190 = vld [vmem:[%s169 + $0x60] sm:$0xff]
      %v191 = vld [vmem:[%s169 + $0x68] sm:$0xff]
      %v192 = vld [vmem:[%s169 + $0x70] sm:$0xff]
      %v193 = vld [vmem:[%s169 + $0x78] sm:$0xff]
      %v194 = vld [vmem:[%s169 + $0x80] sm:$0xff]
      %v195 = vld [vmem:[%s169 + $0x88] sm:$0xff]
      %v196 = vld [vmem:[%s169 + $0x90] sm:$0xff]
      %v197 = vld [vmem:[%s169 + $0x98] sm:$0xff]
      %v198 = vld [vmem:[%s169 + $0xa0] sm:$0xff]
      %v199 = vld [vmem:[%s169 + $0xa8] sm:$0xff]
      %v200 = vld [vmem:[%s169 + $0xb0] sm:$0xff]
      %v201 = vld [vmem:[%s169 + $0xb8] sm:$0xff]
      %v202 = vld [vmem:[%s169 + $0xc0] sm:$0xff]
      %v203 = vld [vmem:[%s169 + $0xc8] sm:$0xff]
      %v204 = vld [vmem:[%s169 + $0xd0] sm:$0xff]
      %v205 = vld [vmem:[%s169 + $0xd8] sm:$0xff]
      %v206 = vld [vmem:[%s169 + $0xe0] sm:$0xff]
      %v207 = vld [vmem:[%s169 + $0xe8] sm:$0xff]
      %v208 = vld [vmem:[%s169 + $0xf0] sm:$0xff]
      %v209 = vld [vmem:[%s169 + $0xf8] sm:$0xff]
      %v210 = vld [vmem:[%s1] sm:$0xf]
      %v211 = vld [vmem:[%s1 + $0x4] sm:$0xf]
      %v212 = vld [vmem:[%s1 + $0x8] sm:$0xf]
      %v213 = vld [vmem:[%s1 + $0xc] sm:$0xf]
      %v214 = vld [vmem:[%s1 + $0x10] sm:$0xf]
      %v215 = vld [vmem:[%s1 + $0x14] sm:$0xf]
      %v216 = vld [vmem:[%s1 + $0x18] sm:$0xf]
      %v217 = vld [vmem:[%s1 + $0x1c] sm:$0xf]
      %v218 = vld [vmem:[%s1 + $0x20] sm:$0xf]
      %v219 = vld [vmem:[%s1 + $0x24] sm:$0xf]
      %v220 = vld [vmem:[%s1 + $0x28] sm:$0xf]
      %v221 = vld [vmem:[%s1 + $0x2c] sm:$0xf]
      %v222 = vld [vmem:[%s1 + $0x30] sm:$0xf]
      %v223 = vld [vmem:[%s1 + $0x34] sm:$0xf]
      %v224 = vld [vmem:[%s1 + $0x38] sm:$0xf]
      %v225 = vld [vmem:[%s1 + $0x3c] sm:$0xf]
      %v226 = vld [vmem:[%s1 + $0x40] sm:$0xf]
      %v227 = vld [vmem:[%s1 + $0x44] sm:$0xf]
      %v228 = vld [vmem:[%s1 + $0x48] sm:$0xf]
      %v229 = vld [vmem:[%s1 + $0x4c] sm:$0xf]
      %v230 = vld [vmem:[%s1 + $0x50] sm:$0xf]
      %v231 = vld [vmem:[%s1 + $0x54] sm:$0xf]
      %v232 = vld [vmem:[%s1 + $0x58] sm:$0xf]
      %v233 = vld [vmem:[%s1 + $0x5c] sm:$0xf]
      %v234 = vld [vmem:[%s1 + $0x60] sm:$0xf]
      %v235 = vld [vmem:[%s1 + $0x64] sm:$0xf]
      %v236 = vld [vmem:[%s1 + $0x68] sm:$0xf]
      %v237 = vld [vmem:[%s1 + $0x6c] sm:$0xf]
      %v238 = vld [vmem:[%s1 + $0x70] sm:$0xf]
      %v239 = vld [vmem:[%s1 + $0x74] sm:$0xf]
      %v240 = vld [vmem:[%s1 + $0x78] sm:$0xf]
      %v241 = vld [vmem:[%s1 + $0x7c] sm:$0xf]
      %v242 = vld [vmem:[%s1 + $0x80] sm:$0xf]
      %v243 = vld [vmem:[%s1 + $0x84] sm:$0xf]
      %v244 = vld [vmem:[%s1 + $0x88] sm:$0xf]
      %v245 = vld [vmem:[%s1 + $0x8c] sm:$0xf]
      %v246 = vld [vmem:[%s1 + $0x90] sm:$0xf]
      %v247 = vld [vmem:[%s1 + $0x94] sm:$0xf]
      %v248 = vld [vmem:[%s1 + $0x98] sm:$0xf]
      %v249 = vld [vmem:[%s1 + $0x9c] sm:$0xf]
      %v250 = vld [vmem:[%s1 + $0xa0] sm:$0xf]
      %v251 = vld [vmem:[%s1 + $0xa4] sm:$0xf]
      %v252 = vld [vmem:[%s1 + $0xa8] sm:$0xf]
      %v253 = vld [vmem:[%s1 + $0xac] sm:$0xf]
      %v254 = vld [vmem:[%s1 + $0xb0] sm:$0xf]
      %v255 = vld [vmem:[%s1 + $0xb4] sm:$0xf]
      %v256 = vld [vmem:[%s1 + $0xb8] sm:$0xf]
      %v257 = vld [vmem:[%s1 + $0xbc] sm:$0xf]
      %v258 = vld [vmem:[%s1 + $0xc0] sm:$0xf]
      %v259 = vld [vmem:[%s1 + $0xc4] sm:$0xf]
      %v260 = vld [vmem:[%s1 + $0xc8] sm:$0xf]
      %v261 = vld [vmem:[%s1 + $0xcc] sm:$0xf]
      %v262 = vld [vmem:[%s1 + $0xd0] sm:$0xf]
      %v263 = vld [vmem:[%s1 + $0xd4] sm:$0xf]
      %v264 = vld [vmem:[%s1 + $0xd8] sm:$0xf]
      %v265 = vld [vmem:[%s1 + $0xdc] sm:$0xf]
      %v266 = vld [vmem:[%s1 + $0xe0] sm:$0xf]
      %v267 = vld [vmem:[%s1 + $0xe4] sm:$0xf]
      %v268 = vld [vmem:[%s1 + $0xe8] sm:$0xf]
      %v269 = vld [vmem:[%s1 + $0xec] sm:$0xf]
      %v270 = vld [vmem:[%s1 + $0xf0] sm:$0xf]
      %v271 = vld [vmem:[%s1 + $0xf4] sm:$0xf]
      %v272 = vld [vmem:[%s1 + $0xf8] sm:$0xf]
      %v273 = vld [vmem:[%s1 + $0xfc] sm:$0xf]
      %v274 = vld [vmem:[%s1 + $0x100] sm:$0xf]
      %v275 = vld [vmem:[%s1 + $0x104] sm:$0xf]
      %v276 = vld [vmem:[%s1 + $0x108] sm:$0xf]
      %v277 = vld [vmem:[%s1 + $0x10c] sm:$0xf]
      %v278 = vld [vmem:[%s1 + $0x110] sm:$0xf]
      %v279 = vld [vmem:[%s1 + $0x114] sm:$0xf]
      %v280 = vld [vmem:[%s1 + $0x118] sm:$0xf]
      %v281 = vld [vmem:[%s1 + $0x11c] sm:$0xf]
      %v282 = vld [vmem:[%s1 + $0x120] sm:$0xf]
      %v283 = vld [vmem:[%s1 + $0x124] sm:$0xf]
      %v284 = vld [vmem:[%s1 + $0x128] sm:$0xf]
      %v285 = vld [vmem:[%s1 + $0x12c] sm:$0xf]
      %v286 = vld [vmem:[%s1 + $0x130] sm:$0xf]
      %v287 = vld [vmem:[%s1 + $0x134] sm:$0xf]
      %v288 = vld [vmem:[%s1 + $0x138] sm:$0xf]
      %v289 = vld [vmem:[%s1 + $0x13c] sm:$0xf]
      %v290 = vld [vmem:[%s1 + $0x140] sm:$0xf]
      %v291 = vld [vmem:[%s1 + $0x144] sm:$0xf]
      %v292 = vld [vmem:[%s1 + $0x148] sm:$0xf]
      %v293 = vld [vmem:[%s1 + $0x14c] sm:$0xf]
      %v294 = vld [vmem:[%s1 + $0x150] sm:$0xf]
      %v295 = vld [vmem:[%s1 + $0x154] sm:$0xf]
      %v296 = vld [vmem:[%s1 + $0x158] sm:$0xf]
      %v297 = vld [vmem:[%s1 + $0x15c] sm:$0xf]
      %v298 = vld [vmem:[%s1 + $0x160] sm:$0xf]
      %v299 = vld [vmem:[%s1 + $0x164] sm:$0xf]
      %v300 = vld [vmem:[%s1 + $0x168] sm:$0xf]
      %v301 = vld [vmem:[%s1 + $0x16c] sm:$0xf]
      %v302 = vld [vmem:[%s1 + $0x170] sm:$0xf]
      %v303 = vld [vmem:[%s1 + $0x174] sm:$0xf]
      %v304 = vld [vmem:[%s1 + $0x178] sm:$0xf]
      %v305 = vld [vmem:[%s1 + $0x17c] sm:$0xf]
      %v306 = vld [vmem:[%s1 + $0x180] sm:$0xf]
      %v307 = vld [vmem:[%s1 + $0x184] sm:$0xf]
      %v308 = vld [vmem:[%s1 + $0x188] sm:$0xf]
      %v309 = vld [vmem:[%s1 + $0x18c] sm:$0xf]
      %v310 = vld [vmem:[%s1 + $0x190] sm:$0xf]
      %v311 = vld [vmem:[%s1 + $0x194] sm:$0xf]
      %v312 = vld [vmem:[%s1 + $0x198] sm:$0xf]
      %v313 = vld [vmem:[%s1 + $0x19c] sm:$0xf]
      %v314 = vld [vmem:[%s1 + $0x1a0] sm:$0xf]
      %v315 = vld [vmem:[%s1 + $0x1a4] sm:$0xf]
      %v316 = vld [vmem:[%s1 + $0x1a8] sm:$0xf]
      %v317 = vld [vmem:[%s1 + $0x1ac] sm:$0xf]
      %v318 = vld [vmem:[%s1 + $0x1b0] sm:$0xf]
      %v319 = vld [vmem:[%s1 + $0x1b4] sm:$0xf]
      %v320 = vld [vmem:[%s1 + $0x1b8] sm:$0xf]
      %v321 = vld [vmem:[%s1 + $0x1bc] sm:$0xf]
      %v322 = vld [vmem:[%s1 + $0x1c0] sm:$0xf]
      %v323 = vld [vmem:[%s1 + $0x1c4] sm:$0xf]
      %v324 = vld [vmem:[%s1 + $0x1c8] sm:$0xf]
      %v325 = vld [vmem:[%s1 + $0x1cc] sm:$0xf]
      %v326 = vld [vmem:[%s1 + $0x1d0] sm:$0xf]
      %v327 = vld [vmem:[%s1 + $0x1d4] sm:$0xf]
      %v328 = vld [vmem:[%s1 + $0x1d8] sm:$0xf]
      %v329 = vld [vmem:[%s1 + $0x1dc] sm:$0xf]
      %v330 = vld [vmem:[%s1 + $0x1e0] sm:$0xf]
      %v331 = vld [vmem:[%s1 + $0x1e4] sm:$0xf]
      %v332 = vld [vmem:[%s1 + $0x1e8] sm:$0xf]
      %v333 = vld [vmem:[%s1 + $0x1ec] sm:$0xf]
      %v334 = vld [vmem:[%s1 + $0x1f0] sm:$0xf]
      %v335 = vld [vmem:[%s1 + $0x1f4] sm:$0xf]
      %v336 = vld [vmem:[%s1 + $0x1f8] sm:$0xf]
      %v337 = vld [vmem:[%s1 + $0x1fc] sm:$0xf]
      %v338 = vld [vmem:[%s2] sm:$0x1]
      %v340 = vlaneseq
      %v341 = vshrl.u32 %v340, 7
      %v342 = vsub.s32 0, %v341
      %v343 = vrot.slane %v338, %v342
      %v377 = vunpack.c.l.b16 %v178
      %v378 = vunpack.c.h.b16 %v178
      %v379 = vunpack.c.l.b16 %v179
      %v380 = vunpack.c.h.b16 %v179
      %v381 = vunpack.c.l.b16 %v180
      %v382 = vunpack.c.h.b16 %v180
      %v383 = vunpack.c.l.b16 %v181
      %v384 = vunpack.c.h.b16 %v181
      %v385 = vunpack.c.l.b16 %v182
      %v386 = vunpack.c.h.b16 %v182
      %v387 = vunpack.c.l.b16 %v183
      %v388 = vunpack.c.h.b16 %v183
      %v389 = vunpack.c.l.b16 %v184
      %v390 = vunpack.c.h.b16 %v184
      %v391 = vunpack.c.l.b16 %v185
      %v392 = vunpack.c.h.b16 %v185
      %v393 = vunpack.c.l.b16 %v186
      %v394 = vunpack.c.h.b16 %v186
      %v395 = vunpack.c.l.b16 %v187
      %v396 = vunpack.c.h.b16 %v187
      %v397 = vunpack.c.l.b16 %v188
      %v398 = vunpack.c.h.b16 %v188
      %v399 = vunpack.c.l.b16 %v189
      %v400 = vunpack.c.h.b16 %v189
      %v401 = vunpack.c.l.b16 %v190
      %v402 = vunpack.c.h.b16 %v190
      %v403 = vunpack.c.l.b16 %v191
      %v404 = vunpack.c.h.b16 %v191
      %v405 = vunpack.c.l.b16 %v192
      %v406 = vunpack.c.h.b16 %v192
      %v407 = vunpack.c.l.b16 %v193
      %v408 = vunpack.c.h.b16 %v193
      %v409 = vunpack.c.l.b16 %v194
      %v410 = vunpack.c.h.b16 %v194
      %v411 = vunpack.c.l.b16 %v195
      %v412 = vunpack.c.h.b16 %v195
      %v413 = vunpack.c.l.b16 %v196
      %v414 = vunpack.c.h.b16 %v196
      %v415 = vunpack.c.l.b16 %v197
      %v416 = vunpack.c.h.b16 %v197
      %v417 = vunpack.c.l.b16 %v198
      %v418 = vunpack.c.h.b16 %v198
      %v419 = vunpack.c.l.b16 %v199
      %v420 = vunpack.c.h.b16 %v199
      %v421 = vunpack.c.l.b16 %v200
      %v422 = vunpack.c.h.b16 %v200
      %v423 = vunpack.c.l.b16 %v201
      %v424 = vunpack.c.h.b16 %v201
      %v425 = vunpack.c.l.b16 %v202
      %v426 = vunpack.c.h.b16 %v202
      %v427 = vunpack.c.l.b16 %v203
      %v428 = vunpack.c.h.b16 %v203
      %v429 = vunpack.c.l.b16 %v204
      %v430 = vunpack.c.h.b16 %v204
      %v431 = vunpack.c.l.b16 %v205
      %v432 = vunpack.c.h.b16 %v205
      %v433 = vunpack.c.l.b16 %v206
      %v434 = vunpack.c.h.b16 %v206
      %v435 = vunpack.c.l.b16 %v207
      %v436 = vunpack.c.h.b16 %v207
      %v437 = vunpack.c.l.b16 %v208
      %v438 = vunpack.c.h.b16 %v208
      %v439 = vunpack.c.l.b16 %v209
      %v440 = vunpack.c.h.b16 %v209
      %v441 = vpack.c.b16 %v385, %v377
      %v442 = vpack.c.b16 %v386, %v378
      %v443 = vpack.c.b16 %v387, %v379
      %v444 = vpack.c.b16 %v388, %v380
      %v445 = vpack.c.b16 %v389, %v381
      %v446 = vpack.c.b16 %v390, %v382
      %v447 = vpack.c.b16 %v391, %v383
      %v448 = vpack.c.b16 %v392, %v384
      %v449 = vpack.c.b16 %v401, %v393
      %v450 = vpack.c.b16 %v402, %v394
      %v451 = vpack.c.b16 %v403, %v395
      %v452 = vpack.c.b16 %v404, %v396
      %v453 = vpack.c.b16 %v405, %v397
      %v454 = vpack.c.b16 %v406, %v398
      %v455 = vpack.c.b16 %v407, %v399
      %v456 = vpack.c.b16 %v408, %v400
      %v457 = vpack.c.b16 %v417, %v409
      %v458 = vpack.c.b16 %v418, %v410
      %v459 = vpack.c.b16 %v419, %v411
      %v460 = vpack.c.b16 %v420, %v412
      %v461 = vpack.c.b16 %v421, %v413
      %v462 = vpack.c.b16 %v422, %v414
      %v463 = vpack.c.b16 %v423, %v415
      %v464 = vpack.c.b16 %v424, %v416
      %v465 = vpack.c.b16 %v433, %v425
      %v466 = vpack.c.b16 %v434, %v426
      %v467 = vpack.c.b16 %v435, %v427
      %v468 = vpack.c.b16 %v436, %v428
      %v469 = vpack.c.b16 %v437, %v429
      %v470 = vpack.c.b16 %v438, %v430
      %v471 = vpack.c.b16 %v439, %v431
      %v472 = vpack.c.b16 %v440, %v432
      %v633 = vunpack.c.l.b16 %v210
      %v634 = vunpack.c.l.b16 %v211
      %v635 = vunpack.c.l.b16 %v212
      %v636 = vunpack.c.l.b16 %v213
      %v637 = vunpack.c.l.b16 %v214
      %v638 = vunpack.c.l.b16 %v215
      %v639 = vunpack.c.l.b16 %v216
      %v640 = vunpack.c.l.b16 %v217
      %v641 = vunpack.c.l.b16 %v218
      %v642 = vunpack.c.l.b16 %v219
      %v643 = vunpack.c.l.b16 %v220
      %v644 = vunpack.c.l.b16 %v221
      %v645 = vunpack.c.l.b16 %v222
      %v646 = vunpack.c.l.b16 %v223
      %v647 = vunpack.c.l.b16 %v224
      %v648 = vunpack.c.l.b16 %v225
      %v649 = vunpack.c.l.b16 %v226
      %v650 = vunpack.c.l.b16 %v227
      %v651 = vunpack.c.l.b16 %v228
      %v652 = vunpack.c.l.b16 %v229
      %v653 = vunpack.c.l.b16 %v230
      %v654 = vunpack.c.l.b16 %v231
      %v655 = vunpack.c.l.b16 %v232
      %v656 = vunpack.c.l.b16 %v233
      %v657 = vunpack.c.l.b16 %v234
      %v658 = vunpack.c.l.b16 %v235
      %v659 = vunpack.c.l.b16 %v236
      %v660 = vunpack.c.l.b16 %v237
      %v661 = vunpack.c.l.b16 %v238
      %v662 = vunpack.c.l.b16 %v239
      %v663 = vunpack.c.l.b16 %v240
      %v664 = vunpack.c.l.b16 %v241
      %v665 = vunpack.c.l.b16 %v242
      %v666 = vunpack.c.l.b16 %v243
      %v667 = vunpack.c.l.b16 %v244
      %v668 = vunpack.c.l.b16 %v245
      %v669 = vunpack.c.l.b16 %v246
      %v670 = vunpack.c.l.b16 %v247
      %v671 = vunpack.c.l.b16 %v248
      %v672 = vunpack.c.l.b16 %v249
      %v673 = vunpack.c.l.b16 %v250
      %v674 = vunpack.c.l.b16 %v251
      %v675 = vunpack.c.l.b16 %v252
      %v676 = vunpack.c.l.b16 %v253
      %v677 = vunpack.c.l.b16 %v254
      %v678 = vunpack.c.l.b16 %v255
      %v679 = vunpack.c.l.b16 %v256
      %v680 = vunpack.c.l.b16 %v257
      %v681 = vunpack.c.l.b16 %v258
      %v682 = vunpack.c.l.b16 %v259
      %v683 = vunpack.c.l.b16 %v260
      %v684 = vunpack.c.l.b16 %v261
      %v685 = vunpack.c.l.b16 %v262
      %v686 = vunpack.c.l.b16 %v263
      %v687 = vunpack.c.l.b16 %v264
      %v688 = vunpack.c.l.b16 %v265
      %v689 = vunpack.c.l.b16 %v266
      %v690 = vunpack.c.l.b16 %v267
      %v691 = vunpack.c.l.b16 %v268
      %v692 = vunpack.c.l.b16 %v269
      %v693 = vunpack.c.l.b16 %v270
      %v694 = vunpack.c.l.b16 %v271
      %v695 = vunpack.c.l.b16 %v272
      %v696 = vunpack.c.l.b16 %v273
      %v697 = vunpack.c.l.b16 %v274
      %v698 = vunpack.c.l.b16 %v275
      %v699 = vunpack.c.l.b16 %v276
      %v700 = vunpack.c.l.b16 %v277
      %v701 = vunpack.c.l.b16 %v278
      %v702 = vunpack.c.l.b16 %v279
      %v703 = vunpack.c.l.b16 %v280
      %v704 = vunpack.c.l.b16 %v281
      %v705 = vunpack.c.l.b16 %v282
      %v706 = vunpack.c.l.b16 %v283
      %v707 = vunpack.c.l.b16 %v284
      %v708 = vunpack.c.l.b16 %v285
      %v709 = vunpack.c.l.b16 %v286
      %v710 = vunpack.c.l.b16 %v287
      %v711 = vunpack.c.l.b16 %v288
      %v712 = vunpack.c.l.b16 %v289
      %v713 = vunpack.c.l.b16 %v290
      %v714 = vunpack.c.l.b16 %v291
      %v715 = vunpack.c.l.b16 %v292
      %v716 = vunpack.c.l.b16 %v293
      %v717 = vunpack.c.l.b16 %v294
      %v718 = vunpack.c.l.b16 %v295
      %v719 = vunpack.c.l.b16 %v296
      %v720 = vunpack.c.l.b16 %v297
      %v721 = vunpack.c.l.b16 %v298
      %v722 = vunpack.c.l.b16 %v299
      %v723 = vunpack.c.l.b16 %v300
      %v724 = vunpack.c.l.b16 %v301
      %v725 = vunpack.c.l.b16 %v302
      %v726 = vunpack.c.l.b16 %v303
      %v727 = vunpack.c.l.b16 %v304
      %v728 = vunpack.c.l.b16 %v305
      %v729 = vunpack.c.l.b16 %v306
      %v730 = vunpack.c.l.b16 %v307
      %v731 = vunpack.c.l.b16 %v308
      %v732 = vunpack.c.l.b16 %v309
      %v733 = vunpack.c.l.b16 %v310
      %v734 = vunpack.c.l.b16 %v311
      %v735 = vunpack.c.l.b16 %v312
      %v736 = vunpack.c.l.b16 %v313
      %v737 = vunpack.c.l.b16 %v314
      %v738 = vunpack.c.l.b16 %v315
      %v739 = vunpack.c.l.b16 %v316
      %v740 = vunpack.c.l.b16 %v317
      %v741 = vunpack.c.l.b16 %v318
      %v742 = vunpack.c.l.b16 %v319
      %v743 = vunpack.c.l.b16 %v320
      %v744 = vunpack.c.l.b16 %v321
      %v745 = vunpack.c.l.b16 %v322
      %v746 = vunpack.c.l.b16 %v323
      %v747 = vunpack.c.l.b16 %v324
      %v748 = vunpack.c.l.b16 %v325
      %v749 = vunpack.c.l.b16 %v326
      %v750 = vunpack.c.l.b16 %v327
      %v751 = vunpack.c.l.b16 %v328
      %v752 = vunpack.c.l.b16 %v329
      %v753 = vunpack.c.l.b16 %v330
      %v754 = vunpack.c.l.b16 %v331
      %v755 = vunpack.c.l.b16 %v332
      %v756 = vunpack.c.l.b16 %v333
      %v757 = vunpack.c.l.b16 %v334
      %v758 = vunpack.c.l.b16 %v335
      %v759 = vunpack.c.l.b16 %v336
      %v760 = vunpack.c.l.b16 %v337
      %v761 = vpack.c.b16 %v634, %v633
      %v762 = vpack.c.b16 %v636, %v635
      %v763 = vpack.c.b16 %v638, %v637
      %v764 = vpack.c.b16 %v640, %v639
      %v765 = vpack.c.b16 %v642, %v641
      %v766 = vpack.c.b16 %v644, %v643
      %v767 = vpack.c.b16 %v646, %v645
      %v768 = vpack.c.b16 %v648, %v647
      %v769 = vpack.c.b16 %v650, %v649
      %v770 = vpack.c.b16 %v652, %v651
      %v771 = vpack.c.b16 %v654, %v653
      %v772 = vpack.c.b16 %v656, %v655
      %v773 = vpack.c.b16 %v658, %v657
      %v774 = vpack.c.b16 %v660, %v659
      %v775 = vpack.c.b16 %v662, %v661
      %v776 = vpack.c.b16 %v664, %v663
      %v777 = vpack.c.b16 %v666, %v665
      %v778 = vpack.c.b16 %v668, %v667
      %v779 = vpack.c.b16 %v670, %v669
      %v780 = vpack.c.b16 %v672, %v671
      %v781 = vpack.c.b16 %v674, %v673
      %v782 = vpack.c.b16 %v676, %v675
      %v783 = vpack.c.b16 %v678, %v677
      %v784 = vpack.c.b16 %v680, %v679
      %v785 = vpack.c.b16 %v682, %v681
      %v786 = vpack.c.b16 %v684, %v683
      %v787 = vpack.c.b16 %v686, %v685
      %v788 = vpack.c.b16 %v688, %v687
      %v789 = vpack.c.b16 %v690, %v689
      %v790 = vpack.c.b16 %v692, %v691
      %v791 = vpack.c.b16 %v694, %v693
      %v792 = vpack.c.b16 %v696, %v695
      %v793 = vpack.c.b16 %v698, %v697
      %v794 = vpack.c.b16 %v700, %v699
      %v795 = vpack.c.b16 %v702, %v701
      %v796 = vpack.c.b16 %v704, %v703
      %v797 = vpack.c.b16 %v706, %v705
      %v798 = vpack.c.b16 %v708, %v707
      %v799 = vpack.c.b16 %v710, %v709
      %v800 = vpack.c.b16 %v712, %v711
      %v801 = vpack.c.b16 %v714, %v713
      %v802 = vpack.c.b16 %v716, %v715
      %v803 = vpack.c.b16 %v718, %v717
      %v804 = vpack.c.b16 %v720, %v719
      %v805 = vpack.c.b16 %v722, %v721
      %v806 = vpack.c.b16 %v724, %v723
      %v807 = vpack.c.b16 %v726, %v725
      %v808 = vpack.c.b16 %v728, %v727
      %v809 = vpack.c.b16 %v730, %v729
      %v810 = vpack.c.b16 %v732, %v731
      %v811 = vpack.c.b16 %v734, %v733
      %v812 = vpack.c.b16 %v736, %v735
      %v813 = vpack.c.b16 %v738, %v737
      %v814 = vpack.c.b16 %v740, %v739
      %v815 = vpack.c.b16 %v742, %v741
      %v816 = vpack.c.b16 %v744, %v743
      %v817 = vpack.c.b16 %v746, %v745
      %v818 = vpack.c.b16 %v748, %v747
      %v819 = vpack.c.b16 %v750, %v749
      %v820 = vpack.c.b16 %v752, %v751
      %v821 = vpack.c.b16 %v754, %v753
      %v822 = vpack.c.b16 %v756, %v755
      %v823 = vpack.c.b16 %v758, %v757
      %v824 = vpack.c.b16 %v760, %v759
      %889 = vmatprep.subr.bf16.mxu0 0
      %890 = vmatpush1.bf16.msra.mxu0 %v768
      %891 = vmatprep.subr.bf16.mxu0 0
      %892 = vmatpush1.bf16.msra.mxu0 %v767
      %893 = vmatprep.subr.bf16.mxu0 0
      %894 = vmatpush1.bf16.msra.mxu0 %v766
      %895 = vmatprep.subr.bf16.mxu0 0
      %896 = vmatpush1.bf16.msra.mxu0 %v765
      %897 = vmatprep.subr.bf16.mxu0 0
      %898 = vmatpush1.bf16.msra.mxu0 %v764
      %899 = vmatprep.subr.bf16.mxu0 0
      %900 = vmatpush1.bf16.msra.mxu0 %v763
      %901 = vmatprep.subr.bf16.mxu0 0
      %902 = vmatpush1.bf16.msra.mxu0 %v762
      %903 = vmatprep.subr.bf16.mxu0 0
      %904 = vmatpush1.bf16.msra.mxu0 %v761
      %905 = vmatprep.subr.bf16.mxu0 0
      %906 = vmatpush2.bf16.msra.mxu0 %v776
      %907 = vmatprep.subr.bf16.mxu0 0
      %908 = vmatpush2.bf16.msra.mxu0 %v775
      %909 = vmatprep.subr.bf16.mxu0 0
      %910 = vmatpush2.bf16.msra.mxu0 %v774
      %911 = vmatprep.subr.bf16.mxu0 0
      %912 = vmatpush2.bf16.msra.mxu0 %v773
      %913 = vmatprep.subr.bf16.mxu0 0
      %914 = vmatpush2.bf16.msra.mxu0 %v772
      %915 = vmatprep.subr.bf16.mxu0 0
      %916 = vmatpush2.bf16.msra.mxu0 %v771
      %917 = vmatprep.subr.bf16.mxu0 0
      %918 = vmatpush2.bf16.msra.mxu0 %v770
      %919 = vmatprep.subr.bf16.mxu0 0
      %920 = vmatpush2.bf16.msra.mxu0 %v769
      %921 = vmatprep.mubr.bf16.mxu0 %v442
      %922 = vmatmul.mubr.bf16.gmra.mxu0 %v441
      %v923 = vpop.f32.mrf.mxu0
      %v924 = vadd.f32 %v343, %v923
      %v925 = vpop.f32.mrf.mxu0
      %v926 = vpop.f32.mrf.mxu0
      %v927 = vadd.f32 %v343, %v926
      %v928 = vpop.f32.mrf.mxu0
      %929 = vmatprep.mubr.bf16.mxu0 %v450
      %930 = vmatmul.mubr.bf16.gmra.mxu0 %v449
      %v931 = vpop.f32.mrf.mxu0
      %v932 = vadd.f32 %v343, %v931
      %v933 = vpop.f32.mrf.mxu0
      %v934 = vpop.f32.mrf.mxu0
      %v935 = vadd.f32 %v343, %v934
      %v936 = vpop.f32.mrf.mxu0
      %937 = vmatprep.mubr.bf16.mxu0 %v458
      %938 = vmatmul.mubr.bf16.gmra.mxu0 %v457
      %v939 = vpop.f32.mrf.mxu0
      %v940 = vadd.f32 %v343, %v939
      %v941 = vpop.f32.mrf.mxu0
      %v942 = vpop.f32.mrf.mxu0
      %v943 = vadd.f32 %v343, %v942
      %v944 = vpop.f32.mrf.mxu0
      %945 = vmatprep.mubr.bf16.mxu0 %v466
      %946 = vmatmul.mubr.bf16.gmra.mxu0 %v465
      %v947 = vpop.f32.mrf.mxu0
      %v948 = vadd.f32 %v343, %v947
      %v949 = vpop.f32.mrf.mxu0
      %v950 = vpop.f32.mrf.mxu0
      %v951 = vadd.f32 %v343, %v950
      %v952 = vpop.f32.mrf.mxu0
      %953 = vdwg.mxu0
      %954 = vmatprep.subr.bf16.mxu0 0
      %955 = vmatpush1.bf16.msra.mxu0 %v784
      %956 = vmatprep.subr.bf16.mxu0 0
      %957 = vmatpush1.bf16.msra.mxu0 %v783
      %958 = vmatprep.subr.bf16.mxu0 0
      %959 = vmatpush1.bf16.msra.mxu0 %v782
      %960 = vmatprep.subr.bf16.mxu0 0
      %961 = vmatpush1.bf16.msra.mxu0 %v781
      %962 = vmatprep.subr.bf16.mxu0 0
      %963 = vmatpush1.bf16.msra.mxu0 %v780
      %964 = vmatprep.subr.bf16.mxu0 0
      %965 = vmatpush1.bf16.msra.mxu0 %v779
      %966 = vmatprep.subr.bf16.mxu0 0
      %967 = vmatpush1.bf16.msra.mxu0 %v778
      %968 = vmatprep.subr.bf16.mxu0 0
      %969 = vmatpush1.bf16.msra.mxu0 %v777
      %970 = vmatprep.subr.bf16.mxu0 0
      %971 = vmatpush2.bf16.msra.mxu0 %v792
      %972 = vmatprep.subr.bf16.mxu0 0
      %973 = vmatpush2.bf16.msra.mxu0 %v791
      %974 = vmatprep.subr.bf16.mxu0 0
      %975 = vmatpush2.bf16.msra.mxu0 %v790
      %976 = vmatprep.subr.bf16.mxu0 0
      %977 = vmatpush2.bf16.msra.mxu0 %v789
      %978 = vmatprep.subr.bf16.mxu0 0
      %979 = vmatpush2.bf16.msra.mxu0 %v788
      %980 = vmatprep.subr.bf16.mxu0 0
      %981 = vmatpush2.bf16.msra.mxu0 %v787
      %982 = vmatprep.subr.bf16.mxu0 0
      %983 = vmatpush2.bf16.msra.mxu0 %v786
      %984 = vmatprep.subr.bf16.mxu0 0
      %985 = vmatpush2.bf16.msra.mxu0 %v785
      %986 = vmatprep.mubr.bf16.mxu0 %v444
      %987 = vmatmul.mubr.bf16.gmra.mxu0 %v443
      %v988 = vpop.f32.mrf.mxu0
      %v989 = vadd.f32 %v924, %v988
      %v990 = vpop.f32.mrf.mxu0
      %v991 = vpop.f32.mrf.mxu0
      %v992 = vadd.f32 %v927, %v991
      %v993 = vpop.f32.mrf.mxu0
      %994 = vmatprep.mubr.bf16.mxu0 %v452
      %995 = vmatmul.mubr.bf16.gmra.mxu0 %v451
      %v996 = vpop.f32.mrf.mxu0
      %v997 = vadd.f32 %v932, %v996
      %v998 = vpop.f32.mrf.mxu0
      %v999 = vpop.f32.mrf.mxu0
      %v1000 = vadd.f32 %v935, %v999
      %v1001 = vpop.f32.mrf.mxu0
      %1002 = vmatprep.mubr.bf16.mxu0 %v460
      %1003 = vmatmul.mubr.bf16.gmra.mxu0 %v459
      %v1004 = vpop.f32.mrf.mxu0
      %v1005 = vadd.f32 %v940, %v1004
      %v1006 = vpop.f32.mrf.mxu0
      %v1007 = vpop.f32.mrf.mxu0
      %v1008 = vadd.f32 %v943, %v1007
      %v1009 = vpop.f32.mrf.mxu0
      %1010 = vmatprep.mubr.bf16.mxu0 %v468
      %1011 = vmatmul.mubr.bf16.gmra.mxu0 %v467
      %v1012 = vpop.f32.mrf.mxu0
      %v1013 = vadd.f32 %v948, %v1012
      %v1014 = vpop.f32.mrf.mxu0
      %v1015 = vpop.f32.mrf.mxu0
      %v1016 = vadd.f32 %v951, %v1015
      %v1017 = vpop.f32.mrf.mxu0
      %1018 = vdwg.mxu0
      %1019 = vmatprep.subr.bf16.mxu0 0
      %1020 = vmatpush1.bf16.msra.mxu0 %v800
      %1021 = vmatprep.subr.bf16.mxu0 0
      %1022 = vmatpush1.bf16.msra.mxu0 %v799
      %1023 = vmatprep.subr.bf16.mxu0 0
      %1024 = vmatpush1.bf16.msra.mxu0 %v798
      %1025 = vmatprep.subr.bf16.mxu0 0
      %1026 = vmatpush1.bf16.msra.mxu0 %v797
      %1027 = vmatprep.subr.bf16.mxu0 0
      %1028 = vmatpush1.bf16.msra.mxu0 %v796
      %1029 = vmatprep.subr.bf16.mxu0 0
      %1030 = vmatpush1.bf16.msra.mxu0 %v795
      %1031 = vmatprep.subr.bf16.mxu0 0
      %1032 = vmatpush1.bf16.msra.mxu0 %v794
      %1033 = vmatprep.subr.bf16.mxu0 0
      %1034 = vmatpush1.bf16.msra.mxu0 %v793
      %1035 = vmatprep.subr.bf16.mxu0 0
      %1036 = vmatpush2.bf16.msra.mxu0 %v808
      %1037 = vmatprep.subr.bf16.mxu0 0
      %1038 = vmatpush2.bf16.msra.mxu0 %v807
      %1039 = vmatprep.subr.bf16.mxu0 0
      %1040 = vmatpush2.bf16.msra.mxu0 %v806
      %1041 = vmatprep.subr.bf16.mxu0 0
      %1042 = vmatpush2.bf16.msra.mxu0 %v805
      %1043 = vmatprep.subr.bf16.mxu0 0
      %1044 = vmatpush2.bf16.msra.mxu0 %v804
      %1045 = vmatprep.subr.bf16.mxu0 0
      %1046 = vmatpush2.bf16.msra.mxu0 %v803
      %1047 = vmatprep.subr.bf16.mxu0 0
      %1048 = vmatpush2.bf16.msra.mxu0 %v802
      %1049 = vmatprep.subr.bf16.mxu0 0
      %1050 = vmatpush2.bf16.msra.mxu0 %v801
      %1051 = vmatprep.mubr.bf16.mxu0 %v446
      %1052 = vmatmul.mubr.bf16.gmra.mxu0 %v445
      %v1053 = vpop.f32.mrf.mxu0
      %v1054 = vadd.f32 %v989, %v1053
      %v1055 = vpop.f32.mrf.mxu0
      %v1056 = vpop.f32.mrf.mxu0
      %v1057 = vadd.f32 %v992, %v1056
      %v1058 = vpop.f32.mrf.mxu0
      %1059 = vmatprep.mubr.bf16.mxu0 %v454
      %1060 = vmatmul.mubr.bf16.gmra.mxu0 %v453
      %v1061 = vpop.f32.mrf.mxu0
      %v1062 = vadd.f32 %v997, %v1061
      %v1063 = vpop.f32.mrf.mxu0
      %v1064 = vpop.f32.mrf.mxu0
      %v1065 = vadd.f32 %v1000, %v1064
      %v1066 = vpop.f32.mrf.mxu0
      %1067 = vmatprep.mubr.bf16.mxu0 %v462
      %1068 = vmatmul.mubr.bf16.gmra.mxu0 %v461
      %v1069 = vpop.f32.mrf.mxu0
      %v1070 = vadd.f32 %v1005, %v1069
      %v1071 = vpop.f32.mrf.mxu0
      %v1072 = vpop.f32.mrf.mxu0
      %v1073 = vadd.f32 %v1008, %v1072
      %v1074 = vpop.f32.mrf.mxu0
      %1075 = vmatprep.mubr.bf16.mxu0 %v470
      %1076 = vmatmul.mubr.bf16.gmra.mxu0 %v469
      %v1077 = vpop.f32.mrf.mxu0
      %v1078 = vadd.f32 %v1013, %v1077
      %v1079 = vpop.f32.mrf.mxu0
      %v1080 = vpop.f32.mrf.mxu0
      %v1081 = vadd.f32 %v1016, %v1080
      %v1082 = vpop.f32.mrf.mxu0
      %1083 = vdwg.mxu0
      %1084 = vmatprep.subr.bf16.mxu0 0
      %1085 = vmatpush1.bf16.msra.mxu0 %v816
      %1086 = vmatprep.subr.bf16.mxu0 0
      %1087 = vmatpush1.bf16.msra.mxu0 %v815
      %1088 = vmatprep.subr.bf16.mxu0 0
      %1089 = vmatpush1.bf16.msra.mxu0 %v814
      %1090 = vmatprep.subr.bf16.mxu0 0
      %1091 = vmatpush1.bf16.msra.mxu0 %v813
      %1092 = vmatprep.subr.bf16.mxu0 0
      %1093 = vmatpush1.bf16.msra.mxu0 %v812
      %1094 = vmatprep.subr.bf16.mxu0 0
      %1095 = vmatpush1.bf16.msra.mxu0 %v811
      %1096 = vmatprep.subr.bf16.mxu0 0
      %1097 = vmatpush1.bf16.msra.mxu0 %v810
      %1098 = vmatprep.subr.bf16.mxu0 0
      %1099 = vmatpush1.bf16.msra.mxu0 %v809
      %1100 = vmatprep.subr.bf16.mxu0 0
      %1101 = vmatpush2.bf16.msra.mxu0 %v824
      %1102 = vmatprep.subr.bf16.mxu0 0
      %1103 = vmatpush2.bf16.msra.mxu0 %v823
      %1104 = vmatprep.subr.bf16.mxu0 0
      %1105 = vmatpush2.bf16.msra.mxu0 %v822
      %1106 = vmatprep.subr.bf16.mxu0 0
      %1107 = vmatpush2.bf16.msra.mxu0 %v821
      %1108 = vmatprep.subr.bf16.mxu0 0
      %1109 = vmatpush2.bf16.msra.mxu0 %v820
      %1110 = vmatprep.subr.bf16.mxu0 0
      %1111 = vmatpush2.bf16.msra.mxu0 %v819
      %1112 = vmatprep.subr.bf16.mxu0 0
      %1113 = vmatpush2.bf16.msra.mxu0 %v818
      %1114 = vmatprep.subr.bf16.mxu0 0
      %1115 = vmatpush2.bf16.msra.mxu0 %v817
      %1116 = vmatprep.mubr.bf16.mxu0 %v448
      %1117 = vmatmul.mubr.bf16.gmra.mxu0 %v447
      %v1118 = vpop.f32.mrf.mxu0
      %v1119 = vadd.f32 %v1054, %v1118
      %v1120 = vpop.f32.mrf.mxu0
      %v1121 = vpop.f32.mrf.mxu0
      %v1122 = vadd.f32 %v1057, %v1121
      %v1123 = vpop.f32.mrf.mxu0
      %1124 = vmatprep.mubr.bf16.mxu0 %v456
      %1125 = vmatmul.mubr.bf16.gmra.mxu0 %v455
      %v1126 = vpop.f32.mrf.mxu0
      %v1127 = vadd.f32 %v1062, %v1126
      %v1128 = vpop.f32.mrf.mxu0
      %v1129 = vpop.f32.mrf.mxu0
      %v1130 = vadd.f32 %v1065, %v1129
      %v1131 = vpop.f32.mrf.mxu0
      %1132 = vmatprep.mubr.bf16.mxu0 %v464
      %1133 = vmatmul.mubr.bf16.gmra.mxu0 %v463
      %v1134 = vpop.f32.mrf.mxu0
      %v1135 = vadd.f32 %v1070, %v1134
      %v1136 = vpop.f32.mrf.mxu0
      %v1137 = vpop.f32.mrf.mxu0
      %v1138 = vadd.f32 %v1073, %v1137
      %v1139 = vpop.f32.mrf.mxu0
      %1140 = vmatprep.mubr.bf16.mxu0 %v472
      %1141 = vmatmul.mubr.bf16.gmra.mxu0 %v471
      %v1142 = vpop.f32.mrf.mxu0
      %v1143 = vadd.f32 %v1078, %v1142
      %v1144 = vpop.f32.mrf.mxu0
      %v1145 = vpop.f32.mrf.mxu0
      %v1146 = vadd.f32 %v1081, %v1145
      %v1147 = vpop.f32.mrf.mxu0
      %1148 = vdwg.mxu0
      %v1149 = vmax.f32 %v1119, 0.0
      %v1150 = vmax.f32 %v1122, 0.0
      %v1151 = vmax.f32 %v1127, 0.0
      %v1152 = vmax.f32 %v1130, 0.0
      %v1153 = vmax.f32 %v1135, 0.0
      %v1154 = vmax.f32 %v1138, 0.0
      %v1155 = vmax.f32 %v1143, 0.0
      %v1156 = vmax.f32 %v1146, 0.0
      %v1157 = vpack.c.bf16 %v1150, %v1149
      %v1158 = vpack.c.bf16 %v1152, %v1151
      %v1159 = vpack.c.bf16 %v1154, %v1153
      %v1160 = vpack.c.bf16 %v1156, %v1155
      %v1165 = vunpack.c.l.b16 %v1157
      %v1166 = vunpack.c.h.b16 %v1157
      %v1167 = vunpack.c.l.b16 %v1158
      %v1168 = vunpack.c.h.b16 %v1158
      %v1169 = vunpack.c.l.b16 %v1159
      %v1170 = vunpack.c.h.b16 %v1159
      %v1171 = vunpack.c.l.b16 %v1160
      %v1172 = vunpack.c.h.b16 %v1160
      %v1173 = vpack.c.b16 %v1165, %v1165
      %v1174 = vpack.c.b16 %v1166, %v1166
      %v1175 = vpack.c.b16 %v1167, %v1167
      %v1176 = vpack.c.b16 %v1168, %v1168
      %v1177 = vpack.c.b16 %v1169, %v1169
      %v1178 = vpack.c.b16 %v1170, %v1170
      %v1179 = vpack.c.b16 %v1171, %v1171
      %v1180 = vpack.c.b16 %v1172, %v1172
      %vm1189 = vcmask 519168
      %1190 = vst.msk [vmem:[%s175] sm:$0xf] %vm1189, %v1173
      %1191 = vst.msk [vmem:[%s175 + $0x4] sm:$0xf] %vm1189, %v1174
      %1192 = vst.msk [vmem:[%s175 + $0x8] sm:$0xf] %vm1189, %v1175
      %1193 = vst.msk [vmem:[%s175 + $0xc] sm:$0xf] %vm1189, %v1176
      %1194 = vst.msk [vmem:[%s175 + $0x10] sm:$0xf] %vm1189, %v1177
      %1195 = vst.msk [vmem:[%s175 + $0x14] sm:$0xf] %vm1189, %v1178
      %1196 = vst.msk [vmem:[%s175 + $0x18] sm:$0xf] %vm1189, %v1179
      %1197 = vst.msk [vmem:[%s175 + $0x1c] sm:$0xf] %vm1189, %v1180
      %s1198 = smul.u32 8, %s14
      %p1199 = scmp.lt.s32.totalorder %s1198, 15
      %s1200 = scalar_select %p1199, %s1198, 15
      %s1201 = smul.addr %s1200, 4
      %s1202 = scalar_lea.vmem %s3, %s1201
      // Predicated region
      $region33: #{conv_decoder_forward.5} parent=31 // pred_check
        %p1203 = pneg %p100
      $region34: #{conv_decoder_forward.5} parent=31 // pred_check_branch
        %1205 = sbr.rel (%p1203) target = $region36
      $region35: #{conv_decoder_forward.5} parent=31 // pred_region
        %s1206 = smul.u32 8, %s14
      $region36: #{conv_decoder_forward.5} parent=31 // pred_fallthru
        _
    $region32: #{conv_decoder_forward.5} parent=5 // pred_fallthru
      _
    %p1207 = scmp.le.s32.totalorder 2, %s9
    // Predicated region
    $region37: #{conv_decoder_forward.5} parent=5 // pred_check
      %p1208 = pneg %p1207
    $region38: #{conv_decoder_forward.5} parent=5 // pred_check_branch
      %1210 = sbr.rel (%p1208) target = $region40
    $region39: #{conv_decoder_forward.5} parent=5 // pred_region
      %s1211 = ssub.s32 %s9, 2
      // Predicated region
      $region41: #{conv_decoder_forward.5} parent=39 // pred_check
        %p1212 = pneg %p106
      $region42: #{conv_decoder_forward.5} parent=39 // pred_check_branch
        %1214 = sbr.rel (%p1212) target = $region44
      $region43: #{conv_decoder_forward.5} parent=39 // pred_region
        %s1215 = smul.u32 8, %s15
        %p1216 = scmp.lt.s32.totalorder %s1215, 15
        %s1217 = scalar_select %p1216, %s1215, 15
        %s1218 = smul.addr %s1217, 4
        %s1219 = scalar_lea.vmem %s3, %s1218
      $region44: #{conv_decoder_forward.5} parent=39 // pred_fallthru
        _
    $region40: #{conv_decoder_forward.5} parent=5 // pred_fallthru
      _
  $region6: #{conv_decoder_forward.5} parent=0 // loop_footer
    %s13 = sadd.s32 1, %s9
  $region7: #{conv_decoder_forward.5} parent=0 // loop_footer_branch
    %8 = sbr.rel target = $region3
  $region8: #{conv_decoder_forward.5} parent=0 // loop_exit
    _

// kernel: conv_decoder_forward.4
$region0: #{conv_decoder_forward.4}
  #allocation0 [shape = 'u32[]', space=smem, size = 0x4, offset = 0x4, fixed_abs, tag = 'smem constant byte address 0x4 - core index']
  #allocation1 [shape = 'u32[144,128]{1,0:T(1,128)}', space=vmem, size = 0x12000, scoped, tag = 'internal scratch']
  %s0 = inlined_call_operand.vmem [shape: bf16[8,128], index: 0, kind: input, shape index: {}]
  %s1 = inlined_call_operand.vmem [shape: bf16[128,512], index: 1, kind: input, shape index: {}]
  %s2 = inlined_call_operand.hbm [shape: f32[1,512], index: 2, kind: input, shape index: {}]
  %s3 = inlined_call_operand.hbm [shape: bf16[512,1024], index: 3, kind: input, shape index: {}]
  %s4 = inlined_call_operand.hbm [shape: f32[1,1024], index: 4, kind: input, shape index: {}]
  %s5 = inlined_call_operand.vmem [shape: bf16[8,1024], index: 5, kind: output, shape index: {}]
  %s6 = sld [smem:[#allocation0]]
  $region42: #{conv_decoder_forward.4} parent=0
    _
  %s8 = ssub.s32 1, %s6
  %s9 = scalar_select 0, %s8, %s6
  $region1: #{conv_decoder_forward.4} parent=0
    #allocation2 [shape = 'u8[2048]{0}', space=vmem, size = 0x800, scoped, tag = 'input window, operand 2, single buffered']
    #allocation3 [shape = 's32[1]{0}', space=sflag, size = 0x4, scoped, tag = 'scoped memory for conv_decoder_forward.4']
    #allocation4 [shape = 'u8[1048576]{0}', space=vmem, size = 0x100000, scoped, tag = 'input window, operand 3, single buffered']
    #allocation5 [shape = 's32[1]{0}', space=sflag, size = 0x4, scoped, tag = 'scoped memory for conv_decoder_forward.4']
    #allocation6 [shape = 'u8[4096]{0}', space=vmem, size = 0x1000, scoped, tag = 'input window, operand 4, single buffered']
    %10 = vsyncpa [#allocation3], 0
    %11 = vsyncpa [#allocation5], 0
    // Predicated region
    $region2: #{conv_decoder_forward.4} parent=1 // pred_check
      _
    $region3: #{conv_decoder_forward.4} parent=1 // pred_check_branch
      %13 = sbr.rel (0) target = $region5
    $region4: #{conv_decoder_forward.4} parent=1 // pred_region
      _
    $region5: #{conv_decoder_forward.4} parent=1 // pred_fallthru
      _
    // Predicated region
    $region6: #{conv_decoder_forward.4} parent=1 // pred_check
      _
    $region7: #{conv_decoder_forward.4} parent=1 // pred_check_branch
      %15 = sbr.rel (0) target = $region9
    $region8: #{conv_decoder_forward.4} parent=1 // pred_region
      _
    $region9: #{conv_decoder_forward.4} parent=1 // pred_fallthru
      _
    // Predicated region
    $region10: #{conv_decoder_forward.4} parent=1 // pred_check
      _
    $region11: #{conv_decoder_forward.4} parent=1 // pred_check_branch
      %17 = sbr.rel (0) target = $region13
    $region12: #{conv_decoder_forward.4} parent=1 // pred_region
      %s19 = ssub.s32 64, 64
      %20 = vsyncadd [#allocation3], %s19
      %s22 = sshll.u32 [#allocation2], 4
      %s23 = int_to_ptr.vmem [resolvable:$true] %s22
      %25 = dma.hbm_to_vmem [thread:$0]  %s2, 64, %s23, [#allocation3]
    $region13: #{conv_decoder_forward.4} parent=1 // pred_fallthru
      _
    // Predicated region
    $region14: #{conv_decoder_forward.4} parent=1 // pred_check
      _
    $region15: #{conv_decoder_forward.4} parent=1 // pred_check_branch
      %27 = sbr.rel (0) target = $region17
    $region16: #{conv_decoder_forward.4} parent=1 // pred_region
      %s29 = ssub.s32 32768, 32768
      %30 = vsyncadd [#allocation5], %s29
      %s31 = sshll.u32 [#allocation4], 4
      %s32 = int_to_ptr.vmem [resolvable:$true] %s31
      %37 = dma.hbm_to_vmem [thread:$0]  %s3, 32768, %s32, [#allocation5], 512, 512, 32
    $region17: #{conv_decoder_forward.4} parent=1 // pred_fallthru
      _
    // Predicated region
    $region18: #{conv_decoder_forward.4} parent=1 // pred_check
      _
    $region19: #{conv_decoder_forward.4} parent=1 // pred_check_branch
      %39 = sbr.rel (0) target = $region21
    $region20: #{conv_decoder_forward.4} parent=1 // pred_region
      %s41 = ssub.s32 128, 128
      %42 = vsyncadd [#allocation5], %s41
      %s44 = sshll.u32 [#allocation6], 4
      %s45 = int_to_ptr.vmem [resolvable:$true] %s44
      %47 = dma.hbm_to_vmem [thread:$0]  %s4, 128, %s45, [#allocation5]
    $region21: #{conv_decoder_forward.4} parent=1 // pred_fallthru
      _
    // Predicated region
    $region22: #{conv_decoder_forward.4} parent=1 // pred_check
      _
    $region23: #{conv_decoder_forward.4} parent=1 // pred_check_branch
      %49 = sbr.rel (0) target = $region25
    $region24: #{conv_decoder_forward.4} parent=1 // pred_region
      %50 = dma.done [#allocation3], 64
    $region25: #{conv_decoder_forward.4} parent=1 // pred_fallthru
      _
    // Predicated region
    $region26: #{conv_decoder_forward.4} parent=1 // pred_check
      _
    $region27: #{conv_decoder_forward.4} parent=1 // pred_check_branch
      %52 = sbr.rel (0) target = $region29
    $region28: #{conv_decoder_forward.4} parent=1 // pred_region
      %53 = dma.done [#allocation5], 32768
    $region29: #{conv_decoder_forward.4} parent=1 // pred_fallthru
      _
    // Predicated region
    $region30: #{conv_decoder_forward.4} parent=1 // pred_check
      _
    $region31: #{conv_decoder_forward.4} parent=1 // pred_check_branch
      %55 = sbr.rel (0) target = $region33
    $region32: #{conv_decoder_forward.4} parent=1 // pred_region
      %56 = dma.done [#allocation5], 128
    $region33: #{conv_decoder_forward.4} parent=1 // pred_fallthru
      _
    %v58 = vld [vmem:[%s0] sm:$0xf]
    %v59 = vld [vmem:[%s1] sm:$0xff]
    %v60 = vld [vmem:[%s1 + $0x8] sm:$0xff]
    %v61 = vld [vmem:[%s1 + $0x10] sm:$0xff]
    %v62 = vld [vmem:[%s1 + $0x18] sm:$0xff]
    %v63 = vld [vmem:[%s1 + $0x20] sm:$0xff]
    %v64 = vld [vmem:[%s1 + $0x28] sm:$0xff]
    %v65 = vld [vmem:[%s1 + $0x30] sm:$0xff]
    %v66 = vld [vmem:[%s1 + $0x38] sm:$0xff]
    %v67 = vld [vmem:[%s1 + $0x40] sm:$0xff]
    %v68 = vld [vmem:[%s1 + $0x48] sm:$0xff]
    %v69 = vld [vmem:[%s1 + $0x50] sm:$0xff]
    %v70 = vld [vmem:[%s1 + $0x58] sm:$0xff]
    %v71 = vld [vmem:[%s1 + $0x60] sm:$0xff]
    %v72 = vld [vmem:[%s1 + $0x68] sm:$0xff]
    %v73 = vld [vmem:[%s1 + $0x70] sm:$0xff]
    %v74 = vld [vmem:[%s1 + $0x78] sm:$0xff]
    %v75 = vld [vmem:[%s1 + $0x80] sm:$0xff]
    %v76 = vld [vmem:[%s1 + $0x88] sm:$0xff]
    %v77 = vld [vmem:[%s1 + $0x90] sm:$0xff]
    %v78 = vld [vmem:[%s1 + $0x98] sm:$0xff]
    %v79 = vld [vmem:[%s1 + $0xa0] sm:$0xff]
    %v80 = vld [vmem:[%s1 + $0xa8] sm:$0xff]
    %v81 = vld [vmem:[%s1 + $0xb0] sm:$0xff]
    %v82 = vld [vmem:[%s1 + $0xb8] sm:$0xff]
    %v83 = vld [vmem:[%s1 + $0xc0] sm:$0xff]
    %v84 = vld [vmem:[%s1 + $0xc8] sm:$0xff]
    %v85 = vld [vmem:[%s1 + $0xd0] sm:$0xff]
    %v86 = vld [vmem:[%s1 + $0xd8] sm:$0xff]
    %v87 = vld [vmem:[%s1 + $0xe0] sm:$0xff]
    %v88 = vld [vmem:[%s1 + $0xe8] sm:$0xff]
    %v89 = vld [vmem:[%s1 + $0xf0] sm:$0xff]
    %v90 = vld [vmem:[%s1 + $0xf8] sm:$0xff]
    %v91 = vld [vmem:[#allocation2] sm:$0xf]
    %v93 = vlaneseq
    %v94 = vshrl.u32 %v93, 7
    %v95 = vsub.s32 0, %v94
    %v96 = vrot.slane %v91, %v95
    %v97 = vlaneseq
    %v98 = vshrl.u32 %v97, 7
    %v99 = vsub.s32 1, %v98
    %v100 = vrot.slane %v91, %v99
    %v101 = vlaneseq
    %v102 = vshrl.u32 %v101, 7
    %v103 = vsub.s32 2, %v102
    %v104 = vrot.slane %v91, %v103
    %v105 = vlaneseq
    %v106 = vshrl.u32 %v105, 7
    %v107 = vsub.s32 3, %v106
    %v108 = vrot.slane %v91, %v107
    %v145 = vunpack.c.l.b16 %v59
    %v146 = vunpack.c.h.b16 %v59
    %v147 = vunpack.c.l.b16 %v60
    %v148 = vunpack.c.h.b16 %v60
    %v149 = vunpack.c.l.b16 %v61
    %v150 = vunpack.c.h.b16 %v61
    %v151 = vunpack.c.l.b16 %v62
    %v152 = vunpack.c.h.b16 %v62
    %v153 = vunpack.c.l.b16 %v63
    %v154 = vunpack.c.h.b16 %v63
    %v155 = vunpack.c.l.b16 %v64
    %v156 = vunpack.c.h.b16 %v64
    %v157 = vunpack.c.l.b16 %v65
    %v158 = vunpack.c.h.b16 %v65
    %v159 = vunpack.c.l.b16 %v66
    %v160 = vunpack.c.h.b16 %v66
    %v161 = vunpack.c.l.b16 %v67
    %v162 = vunpack.c.h.b16 %v67
    %v163 = vunpack.c.l.b16 %v68
    %v164 = vunpack.c.h.b16 %v68
    %v165 = vunpack.c.l.b16 %v69
    %v166 = vunpack.c.h.b16 %v69
    %v167 = vunpack.c.l.b16 %v70
    %v168 = vunpack.c.h.b16 %v70
    %v169 = vunpack.c.l.b16 %v71
    %v170 = vunpack.c.h.b16 %v71
    %v171 = vunpack.c.l.b16 %v72
    %v172 = vunpack.c.h.b16 %v72
    %v173 = vunpack.c.l.b16 %v73
    %v174 = vunpack.c.h.b16 %v73
    %v175 = vunpack.c.l.b16 %v74
    %v176 = vunpack.c.h.b16 %v74
    %v177 = vunpack.c.l.b16 %v75
    %v178 = vunpack.c.h.b16 %v75
    %v179 = vunpack.c.l.b16 %v76
    %v180 = vunpack.c.h.b16 %v76
    %v181 = vunpack.c.l.b16 %v77
    %v182 = vunpack.c.h.b16 %v77
    %v183 = vunpack.c.l.b16 %v78
    %v184 = vunpack.c.h.b16 %v78
    %v185 = vunpack.c.l.b16 %v79
    %v186 = vunpack.c.h.b16 %v79
    %v187 = vunpack.c.l.b16 %v80
    %v188 = vunpack.c.h.b16 %v80
    %v189 = vunpack.c.l.b16 %v81
    %v190 = vunpack.c.h.b16 %v81
    %v191 = vunpack.c.l.b16 %v82
    %v192 = vunpack.c.h.b16 %v82
    %v193 = vunpack.c.l.b16 %v83
    %v194 = vunpack.c.h.b16 %v83
    %v195 = vunpack.c.l.b16 %v84
    %v196 = vunpack.c.h.b16 %v84
    %v197 = vunpack.c.l.b16 %v85
    %v198 = vunpack.c.h.b16 %v85
    %v199 = vunpack.c.l.b16 %v86
    %v200 = vunpack.c.h.b16 %v86
    %v201 = vunpack.c.l.b16 %v87
    %v202 = vunpack.c.h.b16 %v87
    %v203 = vunpack.c.l.b16 %v88
    %v204 = vunpack.c.h.b16 %v88
    %v205 = vunpack.c.l.b16 %v89
    %v206 = vunpack.c.h.b16 %v89
    %v207 = vunpack.c.l.b16 %v90
    %v208 = vunpack.c.h.b16 %v90
    %v209 = vpack.c.b16 %v149, %v145
    %v210 = vpack.c.b16 %v150, %v146
    %v211 = vpack.c.b16 %v151, %v147
    %v212 = vpack.c.b16 %v152, %v148
    %v213 = vpack.c.b16 %v157, %v153
    %v214 = vpack.c.b16 %v158, %v154
    %v215 = vpack.c.b16 %v159, %v155
    %v216 = vpack.c.b16 %v160, %v156
    %v217 = vpack.c.b16 %v165, %v161
    %v218 = vpack.c.b16 %v166, %v162
    %v219 = vpack.c.b16 %v167, %v163
    %v220 = vpack.c.b16 %v168, %v164
    %v221 = vpack.c.b16 %v173, %v169
    %v222 = vpack.c.b16 %v174, %v170
    %v223 = vpack.c.b16 %v175, %v171
    %v224 = vpack.c.b16 %v176, %v172
    %v225 = vpack.c.b16 %v181, %v177
    %v226 = vpack.c.b16 %v182, %v178
    %v227 = vpack.c.b16 %v183, %v179
    %v228 = vpack.c.b16 %v184, %v180
    %v229 = vpack.c.b16 %v189, %v185
    %v230 = vpack.c.b16 %v190, %v186
    %v231 = vpack.c.b16 %v191, %v187
    %v232 = vpack.c.b16 %v192, %v188
    %v233 = vpack.c.b16 %v197, %v193
    %v234 = vpack.c.b16 %v198, %v194
    %v235 = vpack.c.b16 %v199, %v195
    %v236 = vpack.c.b16 %v200, %v196
    %v237 = vpack.c.b16 %v205, %v201
    %v238 = vpack.c.b16 %v206, %v202
    %v239 = vpack.c.b16 %v207, %v203
    %v240 = vpack.c.b16 %v208, %v204
    %273 = vmatprep.subr.bf16.mxu0 %v238
    %274 = vmatpush1.bf16.msra.mxu0 %v237
    %275 = vmatprep.subr.bf16.mxu0 %v234
    %276 = vmatpush1.bf16.msra.mxu0 %v233
    %277 = vmatprep.subr.bf16.mxu0 %v230
    %278 = vmatpush1.bf16.msra.mxu0 %v229
    %279 = vmatprep.subr.bf16.mxu0 %v226
    %280 = vmatpush1.bf16.msra.mxu0 %v225
    %281 = vmatprep.subr.bf16.mxu0 %v222
    %282 = vmatpush1.bf16.msra.mxu0 %v221
    %283 = vmatprep.subr.bf16.mxu0 %v218
    %284 = vmatpush1.bf16.msra.mxu0 %v217
    %285 = vmatprep.subr.bf16.mxu0 %v214
    %286 = vmatpush1.bf16.msra.mxu0 %v213
    %287 = vmatprep.subr.bf16.mxu0 %v210
    %288 = vmatpush1.bf16.msra.mxu0 %v209
    %289 = vmatprep.subr.bf16.mxu0 0
    %290 = vmatpush2.bf16.msra.mxu0 0
    %291 = vmatprep.subr.bf16.mxu0 0
    %292 = vmatpush2.bf16.msra.mxu0 0
    %293 = vmatprep.subr.bf16.mxu0 0
    %294 = vmatpush2.bf16.msra.mxu0 0
    %295 = vmatprep.subr.bf16.mxu0 0
    %296 = vmatpush2.bf16.msra.mxu0 0
    %297 = vmatprep.subr.bf16.mxu0 0
    %298 = vmatpush2.bf16.msra.mxu0 0
    %299 = vmatprep.subr.bf16.mxu0 0
    %300 = vmatpush2.bf16.msra.mxu0 0
    %301 = vmatprep.subr.bf16.mxu0 0
    %302 = vmatpush2.bf16.msra.mxu0 0
    %303 = vmatprep.subr.bf16.mxu0 0
    %304 = vmatpush2.bf16.msra.mxu0 0
    %305 = vmatprep.mubr.bf16.mxu0 0
    %306 = vmatmul.mubr.bf16.gmra.mxu0 %v58
    %v307 = vpop.f32.mrf.mxu0
    %v308 = vadd.f32 %v96, %v307
    %v309 = vpop.f32.mrf.mxu0
    %v310 = vadd.f32 %v100, %v309
    %v311 = vpop.f32.mrf.mxu0
    %v312 = vpop.f32.mrf.mxu0
    %313 = vdwg.mxu0
    %314 = vmatprep.subr.bf16.mxu0 %v240
    %315 = vmatpush1.bf16.msra.mxu0 %v239
    %316 = vmatprep.subr.bf16.mxu0 %v236
    %317 = vmatpush1.bf16.msra.mxu0 %v235
    %318 = vmatprep.subr.bf16.mxu0 %v232
    %319 = vmatpush1.bf16.msra.mxu0 %v231
    %320 = vmatprep.subr.bf16.mxu0 %v228
    %321 = vmatpush1.bf16.msra.mxu0 %v227
    %322 = vmatprep.subr.bf16.mxu0 %v224
    %323 = vmatpush1.bf16.msra.mxu0 %v223
    %324 = vmatprep.subr.bf16.mxu0 %v220
    %325 = vmatpush1.bf16.msra.mxu0 %v219
    %326 = vmatprep.subr.bf16.mxu0 %v216
    %327 = vmatpush1.bf16.msra.mxu0 %v215
    %328 = vmatprep.subr.bf16.mxu0 %v212
    %329 = vmatpush1.bf16.msra.mxu0 %v211
    %330 = vmatprep.subr.bf16.mxu0 0
    %331 = vmatpush2.bf16.msra.mxu0 0
    %332 = vmatprep.subr.bf16.mxu0 0
    %333 = vmatpush2.bf16.msra.mxu0 0
    %334 = vmatprep.subr.bf16.mxu0 0
    %335 = vmatpush2.bf16.msra.mxu0 0
    %336 = vmatprep.subr.bf16.mxu0 0
    %337 = vmatpush2.bf16.msra.mxu0 0
    %338 = vmatprep.subr.bf16.mxu0 0
    %339 = vmatpush2.bf16.msra.mxu0 0
    %340 = vmatprep.subr.bf16.mxu0 0
    %341 = vmatpush2.bf16.msra.mxu0 0
    %342 = vmatprep.subr.bf16.mxu0 0
    %343 = vmatpush2.bf16.msra.mxu0 0
    %344 = vmatprep.subr.bf16.mxu0 0
    %345 = vmatpush2.bf16.msra.mxu0 0
    %346 = vmatprep.mubr.bf16.mxu0 0
    %347 = vmatmul.mubr.bf16.gmra.mxu0 %v58
    %v348 = vpop.f32.mrf.mxu0
    %v349 = vadd.f32 %v104, %v348
    %v350 = vpop.f32.mrf.mxu0
    %v351 = vadd.f32 %v108, %v350
    %v352 = vpop.f32.mrf.mxu0
    %v353 = vpop.f32.mrf.mxu0
    %354 = vdwg.mxu0
    %v355 = vmax.f32 %v308, 0.0
    %v356 = vmax.f32 %v310, 0.0
    %v357 = vmax.f32 %v349, 0.0
    %v358 = vmax.f32 %v351, 0.0
    %v359 = vpack.c.bf16 %v355, %v355
    %v360 = vpack.c.bf16 %v356, %v356
    %v361 = vpack.c.bf16 %v357, %v357
    %v362 = vpack.c.bf16 %v358, %v358
    %v363 = vld [vmem:[#allocation4] sm:$0xff]
    %v364 = vld [vmem:[#allocation4 + $0x8] sm:$0xff]
    %v365 = vld [vmem:[#allocation4 + $0x10] sm:$0xff]
    %v366 = vld [vmem:[#allocation4 + $0x18] sm:$0xff]
    %v367 = vld [vmem:[#allocation4 + $0x20] sm:$0xff]
    %v368 = vld [vmem:[#allocation4 + $0x28] sm:$0xff]
    %v369 = vld [vmem:[#allocation4 + $0x30] sm:$0xff]
    %v370 = vld [vmem:[#allocation4 + $0x38] sm:$0xff]
    %v371 = vld [vmem:[#allocation4 + $0x40] sm:$0xff]
    %v372 = vld [vmem:[#allocation4 + $0x48] sm:$0xff]
    %v373 = vld [vmem:[#allocation4 + $0x50] sm:$0xff]
    %v374 = vld [vmem:[#allocation4 + $0x58] sm:$0xff]
    %v375 = vld [vmem:[#allocation4 + $0x60] sm:$0xff]
    %v376 = vld [vmem:[#allocation4 + $0x68] sm:$0xff]
    %v377 = vld [vmem:[#allocation4 + $0x70] sm:$0xff]
    %v378 = vld [vmem:[#allocation4 + $0x78] sm:$0xff]
    %v379 = vld [vmem:[#allocation4 + $0x80] sm:$0xff]
    %v380 = vld [vmem:[#allocation4 + $0x88] sm:$0xff]
    %v381 = vld [vmem:[#allocation4 + $0x90] sm:$0xff]
    %v382 = vld [vmem:[#allocation4 + $0x98] sm:$0xff]
    %v383 = vld [vmem:[#allocation4 + $0xa0] sm:$0xff]
    %v384 = vld [vmem:[#allocation4 + $0xa8] sm:$0xff]
    %v385 = vld [vmem:[#allocation4 + $0xb0] sm:$0xff]
    %v386 = vld [vmem:[#allocation4 + $0xb8] sm:$0xff]
    %v387 = vld [vmem:[#allocation4 + $0xc0] sm:$0xff]
    %v388 = vld [vmem:[#allocation4 + $0xc8] sm:$0xff]
    %v389 = vld [vmem:[#allocation4 + $0xd0] sm:$0xff]
    %v390 = vld [vmem:[#allocation4 + $0xd8] sm:$0xff]
    %v391 = vld [vmem:[#allocation4 + $0xe0] sm:$0xff]
    %v392 = vld [vmem:[#allocation4 + $0xe8] sm:$0xff]
    %v393 = vld [vmem:[#allocation4 + $0xf0] sm:$0xff]
    %v394 = vld [vmem:[#allocation4 + $0xf8] sm:$0xff]
    %v395 = vld [vmem:[#allocation4 + $0x100] sm:$0xff]
    %v396 = vld [vmem:[#allocation4 + $0x108] sm:$0xff]
    %v397 = vld [vmem:[#allocation4 + $0x110] sm:$0xff]
    %v398 = vld [vmem:[#allocation4 + $0x118] sm:$0xff]
    %v399 = vld [vmem:[#allocation4 + $0x120] sm:$0xff]
    %v400 = vld [vmem:[#allocation4 + $0x128] sm:$0xff]
    %v401 = vld [vmem:[#allocation4 + $0x130] sm:$0xff]
    %v402 = vld [vmem:[#allocation4 + $0x138] sm:$0xff]
    %v403 = vld [vmem:[#allocation4 + $0x140] sm:$0xff]
    %v404 = vld [vmem:[#allocation4 + $0x148] sm:$0xff]
    %v405 = vld [vmem:[#allocation4 + $0x150] sm:$0xff]
    %v406 = vld [vmem:[#allocation4 + $0x158] sm:$0xff]
    %v407 = vld [vmem:[#allocation4 + $0x160] sm:$0xff]
    %v408 = vld [vmem:[#allocation4 + $0x168] sm:$0xff]
    %v409 = vld [vmem:[#allocation4 + $0x170] sm:$0xff]
    %v410 = vld [vmem:[#allocation4 + $0x178] sm:$0xff]
    %v411 = vld [vmem:[#allocation4 + $0x180] sm:$0xff]
    %v412 = vld [vmem:[#allocation4 + $0x188] sm:$0xff]
    %v413 = vld [vmem:[#allocation4 + $0x190] sm:$0xff]
    %v414 = vld [vmem:[#allocation4 + $0x198] sm:$0xff]
    %v415 = vld [vmem:[#allocation4 + $0x1a0] sm:$0xff]
    %v416 = vld [vmem:[#allocation4 + $0x1a8] sm:$0xff]
    %v417 = vld [vmem:[#allocation4 + $0x1b0] sm:$0xff]
    %v418 = vld [vmem:[#allocation4 + $0x1b8] sm:$0xff]
    %v419 = vld [vmem:[#allocation4 + $0x1c0] sm:$0xff]
    %v420 = vld [vmem:[#allocation4 + $0x1c8] sm:$0xff]
    %v421 = vld [vmem:[#allocation4 + $0x1d0] sm:$0xff]
    %v422 = vld [vmem:[#allocation4 + $0x1d8] sm:$0xff]
    %v423 = vld [vmem:[#allocation4 + $0x1e0] sm:$0xff]
    %v424 = vld [vmem:[#allocation4 + $0x1e8] sm:$0xff]
    %v425 = vld [vmem:[#allocation4 + $0x1f0] sm:$0xff]
    %v426 = vld [vmem:[#allocation4 + $0x1f8] sm:$0xff]
    %v427 = vld [vmem:[#allocation4 + $0x200] sm:$0xff]
    %v428 = vld [vmem:[#allocation4 + $0x208] sm:$0xff]
    %v429 = vld [vmem:[#allocation4 + $0x210] sm:$0xff]
    %v430 = vld [vmem:[#allocation4 + $0x218] sm:$0xff]
    %v431 = vld [vmem:[#allocation4 + $0x220] sm:$0xff]
    %v432 = vld [vmem:[#allocation4 + $0x228] sm:$0xff]
    %v433 = vld [vmem:[#allocation4 + $0x230] sm:$0xff]
    %v434 = vld [vmem:[#allocation4 + $0x238] sm:$0xff]
    %v435 = vld [vmem:[#allocation4 + $0x240] sm:$0xff]
    %v436 = vld [vmem:[#allocation4 + $0x248] sm:$0xff]
    %v437 = vld [vmem:[#allocation4 + $0x250] sm:$0xff]
    %v438 = vld [vmem:[#allocation4 + $0x258] sm:$0xff]
    %v439 = vld [vmem:[#allocation4 + $0x260] sm:$0xff]
    %v440 = vld [vmem:[#allocation4 + $0x268] sm:$0xff]
    %v441 = vld [vmem:[#allocation4 + $0x270] sm:$0xff]
    %v442 = vld [vmem:[#allocation4 + $0x278] sm:$0xff]
    %v443 = vld [vmem:[#allocation4 + $0x280] sm:$0xff]
    %v444 = vld [vmem:[#allocation4 + $0x288] sm:$0xff]
    %v445 = vld [vmem:[#allocation4 + $0x290] sm:$0xff]
    %v446 = vld [vmem:[#allocation4 + $0x298] sm:$0xff]
    %v447 = vld [vmem:[#allocation4 + $0x2a0] sm:$0xff]
    %v448 = vld [vmem:[#allocation4 + $0x2a8] sm:$0xff]
    %v449 = vld [vmem:[#allocation4 + $0x2b0] sm:$0xff]
    %v450 = vld [vmem:[#allocation4 + $0x2b8] sm:$0xff]
    %v451 = vld [vmem:[#allocation4 + $0x2c0] sm:$0xff]
    %v452 = vld [vmem:[#allocation4 + $0x2c8] sm:$0xff]
    %v453 = vld [vmem:[#allocation4 + $0x2d0] sm:$0xff]
    %v454 = vld [vmem:[#allocation4 + $0x2d8] sm:$0xff]
    %v455 = vld [vmem:[#allocation4 + $0x2e0] sm:$0xff]
    %v456 = vld [vmem:[#allocation4 + $0x2e8] sm:$0xff]
    %v457 = vld [vmem:[#allocation4 + $0x2f0] sm:$0xff]
    %v458 = vld [vmem:[#allocation4 + $0x2f8] sm:$0xff]
    %v459 = vld [vmem:[#allocation4 + $0x300] sm:$0xff]
    %v460 = vld [vmem:[#allocation4 + $0x308] sm:$0xff]
    %v461 = vld [vmem:[#allocation4 + $0x310] sm:$0xff]
    %v462 = vld [vmem:[#allocation4 + $0x318] sm:$0xff]
    %v463 = vld [vmem:[#allocation4 + $0x320] sm:$0xff]
    %v464 = vld [vmem:[#allocation4 + $0x328] sm:$0xff]
    %v465 = vld [vmem:[#allocation4 + $0x330] sm:$0xff]
    %v466 = vld [vmem:[#allocation4 + $0x338] sm:$0xff]
    %v467 = vld [vmem:[#allocation4 + $0x340] sm:$0xff]
    %v468 = vld [vmem:[#allocation4 + $0x348] sm:$0xff]
    %v469 = vld [vmem:[#allocation4 + $0x350] sm:$0xff]
    %v470 = vld [vmem:[#allocation4 + $0x358] sm:$0xff]
    %v471 = vld [vmem:[#allocation4 + $0x360] sm:$0xff]
    %v472 = vld [vmem:[#allocation4 + $0x368] sm:$0xff]
    %v473 = vld [vmem:[#allocation4 + $0x370] sm:$0xff]
    %v474 = vld [vmem:[#allocation4 + $0x378] sm:$0xff]
    %v475 = vld [vmem:[#allocation4 + $0x380] sm:$0xff]
    %v476 = vld [vmem:[#allocation4 + $0x388] sm:$0xff]
    %v477 = vld [vmem:[#allocation4 + $0x390] sm:$0xff]
    %v478 = vld [vmem:[#allocation4 + $0x398] sm:$0xff]
    %v479 = vld [vmem:[#allocation4 + $0x3a0] sm:$0xff]
    %v480 = vld [vmem:[#allocation4 + $0x3a8] sm:$0xff]
    %v481 = vld [vmem:[#allocation4 + $0x3b0] sm:$0xff]
    %v482 = vld [vmem:[#allocation4 + $0x3b8] sm:$0xff]
    %v483 = vld [vmem:[#allocation4 + $0x3c0] sm:$0xff]
    %v484 = vld [vmem:[#allocation4 + $0x3c8] sm:$0xff]
    %v485 = vld [vmem:[#allocation4 + $0x3d0] sm:$0xff]
    %v486 = vld [vmem:[#allocation4 + $0x3d8] sm:$0xff]
    %v487 = vld [vmem:[#allocation4 + $0x3e0] sm:$0xff]
    %v488 = vld [vmem:[#allocation4 + $0x3e8] sm:$0xff]
    %v489 = vld [vmem:[#allocation4 + $0x3f0] sm:$0xff]
    %v490 = vld [vmem:[#allocation4 + $0x3f8] sm:$0xff]
    %v491 = vld [vmem:[#allocation4 + $0x400] sm:$0xff]
    %v492 = vld [vmem:[#allocation4 + $0x408] sm:$0xff]
    %v493 = vld [vmem:[#allocation4 + $0x410] sm:$0xff]
    %v494 = vld [vmem:[#allocation4 + $0x418] sm:$0xff]
    %v495 = vld [vmem:[#allocation4 + $0x420] sm:$0xff]
    %v496 = vld [vmem:[#allocation4 + $0x428] sm:$0xff]
    %v497 = vld [vmem:[#allocation4 + $0x430] sm:$0xff]
    %v498 = vld [vmem:[#allocation4 + $0x438] sm:$0xff]
    %v499 = vld [vmem:[#allocation4 + $0x440] sm:$0xff]
    %v500 = vld [vmem:[#allocation4 + $0x448] sm:$0xff]
    %v501 = vld [vmem:[#allocation4 + $0x450] sm:$0xff]
    %v502 = vld [vmem:[#allocation4 + $0x458] sm:$0xff]
    %v503 = vld [vmem:[#allocation4 + $0x460] sm:$0xff]
    %v504 = vld [vmem:[#allocation4 + $0x468] sm:$0xff]
    %v505 = vld [vmem:[#allocation4 + $0x470] sm:$0xff]
    %v506 = vld [vmem:[#allocation4 + $0x478] sm:$0xff]
    %v507 = vld [vmem:[#allocation4 + $0x480] sm:$0xff]
    %v508 = vld [vmem:[#allocation4 + $0x488] sm:$0xff]
    %v509 = vld [vmem:[#allocation4 + $0x490] sm:$0xff]
    %v510 = vld [vmem:[#allocation4 + $0x498] sm:$0xff]
    %v511 = vld [vmem:[#allocation4 + $0x4a0] sm:$0xff]
    %v512 = vld [vmem:[#allocation4 + $0x4a8] sm:$0xff]
    %v513 = vld [vmem:[#allocation4 + $0x4b0] sm:$0xff]
    %v514 = vld [vmem:[#allocation4 + $0x4b8] sm:$0xff]
    %v515 = vld [vmem:[#allocation4 + $0x4c0] sm:$0xff]
    %v516 = vld [vmem:[#allocation4 + $0x4c8] sm:$0xff]
    %v517 = vld [vmem:[#allocation4 + $0x4d0] sm:$0xff]
    %v518 = vld [vmem:[#allocation4 + $0x4d8] sm:$0xff]
    %v519 = vld [vmem:[#allocation4 + $0x4e0] sm:$0xff]
    %v520 = vld [vmem:[#allocation4 + $0x4e8] sm:$0xff]
    %v521 = vld [vmem:[#allocation4 + $0x4f0] sm:$0xff]
    %v522 = vld [vmem:[#allocation4 + $0x4f8] sm:$0xff]
    %v523 = vld [vmem:[#allocation4 + $0x500] sm:$0xff]
    %v524 = vld [vmem:[#allocation4 + $0x508] sm:$0xff]
    %v525 = vld [vmem:[#allocation4 + $0x510] sm:$0xff]
    %v526 = vld [vmem:[#allocation4 + $0x518] sm:$0xff]
    %v527 = vld [vmem:[#allocation4 + $0x520] sm:$0xff]
    %v528 = vld [vmem:[#allocation4 + $0x528] sm:$0xff]
    %v529 = vld [vmem:[#allocation4 + $0x530] sm:$0xff]
    %v530 = vld [vmem:[#allocation4 + $0x538] sm:$0xff]
    %v531 = vld [vmem:[#allocation4 + $0x540] sm:$0xff]
    %v532 = vld [vmem:[#allocation4 + $0x548] sm:$0xff]
    %v533 = vld [vmem:[#allocation4 + $0x550] sm:$0xff]
    %v534 = vld [vmem:[#allocation4 + $0x558] sm:$0xff]
    %v535 = vld [vmem:[#allocation4 + $0x560] sm:$0xff]
    %v536 = vld [vmem:[#allocation4 + $0x568] sm:$0xff]
    %v537 = vld [vmem:[#allocation4 + $0x570] sm:$0xff]
    %v538 = vld [vmem:[#allocation4 + $0x578] sm:$0xff]
    %v539 = vld [vmem:[#allocation4 + $0x580] sm:$0xff]
    %v540 = vld [vmem:[#allocation4 + $0x588] sm:$0xff]
    %v541 = vld [vmem:[#allocation4 + $0x590] sm:$0xff]
    %v542 = vld [vmem:[#allocation4 + $0x598] sm:$0xff]
    %v543 = vld [vmem:[#allocation4 + $0x5a0] sm:$0xff]
    %v544 = vld [vmem:[#allocation4 + $0x5a8] sm:$0xff]
    %v545 = vld [vmem:[#allocation4 + $0x5b0] sm:$0xff]
    %v546 = vld [vmem:[#allocation4 + $0x5b8] sm:$0xff]
    %v547 = vld [vmem:[#allocation4 + $0x5c0] sm:$0xff]
    %v548 = vld [vmem:[#allocation4 + $0x5c8] sm:$0xff]
    %v549 = vld [vmem:[#allocation4 + $0x5d0] sm:$0xff]
    %v550 = vld [vmem:[#allocation4 + $0x5d8] sm:$0xff]
    %v551 = vld [vmem:[#allocation4 + $0x5e0] sm:$0xff]
    %v552 = vld [vmem:[#allocation4 + $0x5e8] sm:$0xff]
    %v553 = vld [vmem:[#allocation4 + $0x5f0] sm:$0xff]
    %v554 = vld [vmem:[#allocation4 + $0x5f8] sm:$0xff]
    %v555 = vld [vmem:[#allocation4 + $0x600] sm:$0xff]
    %v556 = vld [vmem:[#allocation4 + $0x608] sm:$0xff]
    %v557 = vld [vmem:[#allocation4 + $0x610] sm:$0xff]
    %v558 = vld [vmem:[#allocation4 + $0x618] sm:$0xff]
    %v559 = vld [vmem:[#allocation4 + $0x620] sm:$0xff]
    %v560 = vld [vmem:[#allocation4 + $0x628] sm:$0xff]
    %v561 = vld [vmem:[#allocation4 + $0x630] sm:$0xff]
    %v562 = vld [vmem:[#allocation4 + $0x638] sm:$0xff]
    %v563 = vld [vmem:[#allocation4 + $0x640] sm:$0xff]
    %v564 = vld [vmem:[#allocation4 + $0x648] sm:$0xff]
    %v565 = vld [vmem:[#allocation4 + $0x650] sm:$0xff]
    %v566 = vld [vmem:[#allocation4 + $0x658] sm:$0xff]
    %v567 = vld [vmem:[#allocation4 + $0x660] sm:$0xff]
    %v568 = vld [vmem:[#allocation4 + $0x668] sm:$0xff]
    %v569 = vld [vmem:[#allocation4 + $0x670] sm:$0xff]
    %v570 = vld [vmem:[#allocation4 + $0x678] sm:$0xff]
    %v571 = vld [vmem:[#allocation4 + $0x680] sm:$0xff]
    %v572 = vld [vmem:[#allocation4 + $0x688] sm:$0xff]
    %v573 = vld [vmem:[#allocation4 + $0x690] sm:$0xff]
    %v574 = vld [vmem:[#allocation4 + $0x698] sm:$0xff]
    %v575 = vld [vmem:[#allocation4 + $0x6a0] sm:$0xff]
    %v576 = vld [vmem:[#allocation4 + $0x6a8] sm:$0xff]
    %v577 = vld [vmem:[#allocation4 + $0x6b0] sm:$0xff]
    %v578 = vld [vmem:[#allocation4 + $0x6b8] sm:$0xff]
    %v579 = vld [vmem:[#allocation4 + $0x6c0] sm:$0xff]
    %v580 = vld [vmem:[#allocation4 + $0x6c8] sm:$0xff]
    %v581 = vld [vmem:[#allocation4 + $0x6d0] sm:$0xff]
    %v582 = vld [vmem:[#allocation4 + $0x6d8] sm:$0xff]
    %v583 = vld [vmem:[#allocation4 + $0x6e0] sm:$0xff]
    %v584 = vld [vmem:[#allocation4 + $0x6e8] sm:$0xff]
    %v585 = vld [vmem:[#allocation4 + $0x6f0] sm:$0xff]
    %v586 = vld [vmem:[#allocation4 + $0x6f8] sm:$0xff]
    %v587 = vld [vmem:[#allocation4 + $0x700] sm:$0xff]
    %v588 = vld [vmem:[#allocation4 + $0x708] sm:$0xff]
    %v589 = vld [vmem:[#allocation4 + $0x710] sm:$0xff]
    %v590 = vld [vmem:[#allocation4 + $0x718] sm:$0xff]
    %v591 = vld [vmem:[#allocation4 + $0x720] sm:$0xff]
    %v592 = vld [vmem:[#allocation4 + $0x728] sm:$0xff]
    %v593 = vld [vmem:[#allocation4 + $0x730] sm:$0xff]
    %v594 = vld [vmem:[#allocation4 + $0x738] sm:$0xff]
    %v595 = vld [vmem:[#allocation4 + $0x740] sm:$0xff]
    %v596 = vld [vmem:[#allocation4 + $0x748] sm:$0xff]
    %v597 = vld [vmem:[#allocation4 + $0x750] sm:$0xff]
    %v598 = vld [vmem:[#allocation4 + $0x758] sm:$0xff]
    %v599 = vld [vmem:[#allocation4 + $0x760] sm:$0xff]
    %v600 = vld [vmem:[#allocation4 + $0x768] sm:$0xff]
    %v601 = vld [vmem:[#allocation4 + $0x770] sm:$0xff]
    %v602 = vld [vmem:[#allocation4 + $0x778] sm:$0xff]
    %v603 = vld [vmem:[#allocation4 + $0x780] sm:$0xff]
    %v604 = vld [vmem:[#allocation4 + $0x788] sm:$0xff]
    %v605 = vld [vmem:[#allocation4 + $0x790] sm:$0xff]
    %v606 = vld [vmem:[#allocation4 + $0x798] sm:$0xff]
    %v607 = vld [vmem:[#allocation4 + $0x7a0] sm:$0xff]
    %v608 = vld [vmem:[#allocation4 + $0x7a8] sm:$0xff]
    %v609 = vld [vmem:[#allocation4 + $0x7b0] sm:$0xff]
    %v610 = vld [vmem:[#allocation4 + $0x7b8] sm:$0xff]
    %v611 = vld [vmem:[#allocation4 + $0x7c0] sm:$0xff]
    %v612 = vld [vmem:[#allocation4 + $0x7c8] sm:$0xff]
    %v613 = vld [vmem:[#allocation4 + $0x7d0] sm:$0xff]
    %v614 = vld [vmem:[#allocation4 + $0x7d8] sm:$0xff]
    %v615 = vld [vmem:[#allocation4 + $0x7e0] sm:$0xff]
    %v616 = vld [vmem:[#allocation4 + $0x7e8] sm:$0xff]
    %v617 = vld [vmem:[#allocation4 + $0x7f0] sm:$0xff]
    %v618 = vld [vmem:[#allocation4 + $0x7f8] sm:$0xff]
    %v619 = vld [vmem:[#allocation6] sm:$0xff]
    %v621 = vlaneseq
    %v622 = vshrl.u32 %v621, 7
    %v623 = vsub.s32 0, %v622
    %v624 = vrot.slane %v619, %v623
    %v625 = vlaneseq
    %v626 = vshrl.u32 %v625, 7
    %v627 = vsub.s32 1, %v626
    %v628 = vrot.slane %v619, %v627
    %v629 = vlaneseq
    %v630 = vshrl.u32 %v629, 7
    %v631 = vsub.s32 2, %v630
    %v632 = vrot.slane %v619, %v631
    %v633 = vlaneseq
    %v634 = vshrl.u32 %v633, 7
    %v635 = vsub.s32 3, %v634
    %v636 = vrot.slane %v619, %v635
    %v637 = vlaneseq
    %v638 = vshrl.u32 %v637, 7
    %v639 = vsub.s32 4, %v638
    %v640 = vrot.slane %v619, %v639
    %v641 = vlaneseq
    %v642 = vshrl.u32 %v641, 7
    %v643 = vsub.s32 5, %v642
    %v644 = vrot.slane %v619, %v643
    %v645 = vlaneseq
    %v646 = vshrl.u32 %v645, 7
    %v647 = vsub.s32 6, %v646
    %v648 = vrot.slane %v619, %v647
    %v649 = vlaneseq
    %v650 = vshrl.u32 %v649, 7
    %v651 = vsub.s32 7, %v650
    %v652 = vrot.slane %v619, %v651
    %v917 = vunpack.c.l.b16 %v363
    %v918 = vunpack.c.h.b16 %v363
    %v919 = vunpack.c.l.b16 %v364
    %v920 = vunpack.c.h.b16 %v364
    %v921 = vunpack.c.l.b16 %v365
    %v922 = vunpack.c.h.b16 %v365
    %v923 = vunpack.c.l.b16 %v366
    %v924 = vunpack.c.h.b16 %v366
    %v925 = vunpack.c.l.b16 %v367
    %v926 = vunpack.c.h.b16 %v367
    %v927 = vunpack.c.l.b16 %v368
    %v928 = vunpack.c.h.b16 %v368
    %v929 = vunpack.c.l.b16 %v369
    %v930 = vunpack.c.h.b16 %v369
    %v931 = vunpack.c.l.b16 %v370
    %v932 = vunpack.c.h.b16 %v370
    %v933 = vunpack.c.l.b16 %v371
    %v934 = vunpack.c.h.b16 %v371
    %v935 = vunpack.c.l.b16 %v372
    %v936 = vunpack.c.h.b16 %v372
    %v937 = vunpack.c.l.b16 %v373
    %v938 = vunpack.c.h.b16 %v373
    %v939 = vunpack.c.l.b16 %v374
    %v940 = vunpack.c.h.b16 %v374
    %v941 = vunpack.c.l.b16 %v375
    %v942 = vunpack.c.h.b16 %v375
    %v943 = vunpack.c.l.b16 %v376
    %v944 = vunpack.c.h.b16 %v376
    %v945 = vunpack.c.l.b16 %v377
    %v946 = vunpack.c.h.b16 %v377
    %v947 = vunpack.c.l.b16 %v378
    %v948 = vunpack.c.h.b16 %v378
    %v949 = vunpack.c.l.b16 %v379
    %v950 = vunpack.c.h.b16 %v379
    %v951 = vunpack.c.l.b16 %v380
    %v952 = vunpack.c.h.b16 %v380
    %v953 = vunpack.c.l.b16 %v381
    %v954 = vunpack.c.h.b16 %v381
    %v955 = vunpack.c.l.b16 %v382
    %v956 = vunpack.c.h.b16 %v382
    %v957 = vunpack.c.l.b16 %v383
    %v958 = vunpack.c.h.b16 %v383
    %v959 = vunpack.c.l.b16 %v384
    %v960 = vunpack.c.h.b16 %v384
    %v961 = vunpack.c.l.b16 %v385
    %v962 = vunpack.c.h.b16 %v385
    %v963 = vunpack.c.l.b16 %v386
    %v964 = vunpack.c.h.b16 %v386
    %v965 = vunpack.c.l.b16 %v387
    %v966 = vunpack.c.h.b16 %v387
    %v967 = vunpack.c.l.b16 %v388
    %v968 = vunpack.c.h.b16 %v388
    %v969 = vunpack.c.l.b16 %v389
    %v970 = vunpack.c.h.b16 %v389
    %v971 = vunpack.c.l.b16 %v390
    %v972 = vunpack.c.h.b16 %v390
    %v973 = vunpack.c.l.b16 %v391
    %v974 = vunpack.c.h.b16 %v391
    %v975 = vunpack.c.l.b16 %v392
    %v976 = vunpack.c.h.b16 %v392
    %v977 = vunpack.c.l.b16 %v393
    %v978 = vunpack.c.h.b16 %v393
    %v979 = vunpack.c.l.b16 %v394
    %v980 = vunpack.c.h.b16 %v394
    %v981 = vunpack.c.l.b16 %v395
    %v982 = vunpack.c.h.b16 %v395
    %v983 = vunpack.c.l.b16 %v396
    %v984 = vunpack.c.h.b16 %v396
    %v985 = vunpack.c.l.b16 %v397
    %v986 = vunpack.c.h.b16 %v397
    %v987 = vunpack.c.l.b16 %v398
    %v988 = vunpack.c.h.b16 %v398
    %v989 = vunpack.c.l.b16 %v399
    %v990 = vunpack.c.h.b16 %v399
    %v991 = vunpack.c.l.b16 %v400
    %v992 = vunpack.c.h.b16 %v400
    %v993 = vunpack.c.l.b16 %v401
    %v994 = vunpack.c.h.b16 %v401
    %v995 = vunpack.c.l.b16 %v402
    %v996 = vunpack.c.h.b16 %v402
    %v997 = vunpack.c.l.b16 %v403
    %v998 = vunpack.c.h.b16 %v403
    %v999 = vunpack.c.l.b16 %v404
    %v1000 = vunpack.c.h.b16 %v404
    %v1001 = vunpack.c.l.b16 %v405
    %v1002 = vunpack.c.h.b16 %v405
    %v1003 = vunpack.c.l.b16 %v406
    %v1004 = vunpack.c.h.b16 %v406
    %v1005 = vunpack.c.l.b16 %v407
    %v1006 = vunpack.c.h.b16 %v407
    %v1007 = vunpack.c.l.b16 %v408
    %v1008 = vunpack.c.h.b16 %v408
    %v1009 = vunpack.c.l.b16 %v409
    %v1010 = vunpack.c.h.b16 %v409
    %v1011 = vunpack.c.l.b16 %v410
    %v1012 = vunpack.c.h.b16 %v410
    %v1013 = vunpack.c.l.b16 %v411
    %v1014 = vunpack.c.h.b16 %v411
    %v1015 = vunpack.c.l.b16 %v412
    %v1016 = vunpack.c.h.b16 %v412
    %v1017 = vunpack.c.l.b16 %v413
    %v1018 = vunpack.c.h.b16 %v413
    %v1019 = vunpack.c.l.b16 %v414
    %v1020 = vunpack.c.h.b16 %v414
    %v1021 = vunpack.c.l.b16 %v415
    %v1022 = vunpack.c.h.b16 %v415
    %v1023 = vunpack.c.l.b16 %v416
    %v1024 = vunpack.c.h.b16 %v416
    %v1025 = vunpack.c.l.b16 %v417
    %v1026 = vunpack.c.h.b16 %v417
    %v1027 = vunpack.c.l.b16 %v418
    %v1028 = vunpack.c.h.b16 %v418
    %v1029 = vunpack.c.l.b16 %v419
    %v1030 = vunpack.c.h.b16 %v419
    %v1031 = vunpack.c.l.b16 %v420
    %v1032 = vunpack.c.h.b16 %v420
    %v1033 = vunpack.c.l.b16 %v421
    %v1034 = vunpack.c.h.b16 %v421
    %v1035 = vunpack.c.l.b16 %v422
    %v1036 = vunpack.c.h.b16 %v422
    %v1037 = vunpack.c.l.b16 %v423
    %v1038 = vunpack.c.h.b16 %v423
    %v1039 = vunpack.c.l.b16 %v424
    %v1040 = vunpack.c.h.b16 %v424
    %v1041 = vunpack.c.l.b16 %v425
    %v1042 = vunpack.c.h.b16 %v425
    %v1043 = vunpack.c.l.b16 %v426
    %v1044 = vunpack.c.h.b16 %v426
    %v1045 = vunpack.c.l.b16 %v427
    %v1046 = vunpack.c.h.b16 %v427
    %v1047 = vunpack.c.l.b16 %v428
    %v1048 = vunpack.c.h.b16 %v428
    %v1049 = vunpack.c.l.b16 %v429
    %v1050 = vunpack.c.h.b16 %v429
    %v1051 = vunpack.c.l.b16 %v430
    %v1052 = vunpack.c.h.b16 %v430
    %v1053 = vunpack.c.l.b16 %v431
    %v1054 = vunpack.c.h.b16 %v431
    %v1055 = vunpack.c.l.b16 %v432
    %v1056 = vunpack.c.h.b16 %v432
    %v1057 = vunpack.c.l.b16 %v433
    %v1058 = vunpack.c.h.b16 %v433
    %v1059 = vunpack.c.l.b16 %v434
    %v1060 = vunpack.c.h.b16 %v434
    %v1061 = vunpack.c.l.b16 %v435
    %v1062 = vunpack.c.h.b16 %v435
    %v1063 = vunpack.c.l.b16 %v436
    %v1064 = vunpack.c.h.b16 %v436
    %v1065 = vunpack.c.l.b16 %v437
    %v1066 = vunpack.c.h.b16 %v437
    %v1067 = vunpack.c.l.b16 %v438
    %v1068 = vunpack.c.h.b16 %v438
    %v1069 = vunpack.c.l.b16 %v439
    %v1070 = vunpack.c.h.b16 %v439
    %v1071 = vunpack.c.l.b16 %v440
    %v1072 = vunpack.c.h.b16 %v440
    %v1073 = vunpack.c.l.b16 %v441
    %v1074 = vunpack.c.h.b16 %v441
    %v1075 = vunpack.c.l.b16 %v442
    %v1076 = vunpack.c.h.b16 %v442
    %v1077 = vunpack.c.l.b16 %v443
    %v1078 = vunpack.c.h.b16 %v443
    %v1079 = vunpack.c.l.b16 %v444
    %v1080 = vunpack.c.h.b16 %v444
    %v1081 = vunpack.c.l.b16 %v445
    %v1082 = vunpack.c.h.b16 %v445
    %v1083 = vunpack.c.l.b16 %v446
    %v1084 = vunpack.c.h.b16 %v446
    %v1085 = vunpack.c.l.b16 %v447
    %v1086 = vunpack.c.h.b16 %v447
    %v1087 = vunpack.c.l.b16 %v448
    %v1088 = vunpack.c.h.b16 %v448
    %v1089 = vunpack.c.l.b16 %v449
    %v1090 = vunpack.c.h.b16 %v449
    %v1091 = vunpack.c.l.b16 %v450
    %v1092 = vunpack.c.h.b16 %v450
    %v1093 = vunpack.c.l.b16 %v451
    %v1094 = vunpack.c.h.b16 %v451
    %v1095 = vunpack.c.l.b16 %v452
    %v1096 = vunpack.c.h.b16 %v452
    %v1097 = vunpack.c.l.b16 %v453
    %v1098 = vunpack.c.h.b16 %v453
    %v1099 = vunpack.c.l.b16 %v454
    %v1100 = vunpack.c.h.b16 %v454
    %v1101 = vunpack.c.l.b16 %v455
    %v1102 = vunpack.c.h.b16 %v455
    %v1103 = vunpack.c.l.b16 %v456
    %v1104 = vunpack.c.h.b16 %v456
    %v1105 = vunpack.c.l.b16 %v457
    %v1106 = vunpack.c.h.b16 %v457
    %v1107 = vunpack.c.l.b16 %v458
    %v1108 = vunpack.c.h.b16 %v458
    %v1109 = vunpack.c.l.b16 %v459
    %v1110 = vunpack.c.h.b16 %v459
    %v1111 = vunpack.c.l.b16 %v460
    %v1112 = vunpack.c.h.b16 %v460
    %v1113 = vunpack.c.l.b16 %v461
    %v1114 = vunpack.c.h.b16 %v461
    %v1115 = vunpack.c.l.b16 %v462
    %v1116 = vunpack.c.h.b16 %v462
    %v1117 = vunpack.c.l.b16 %v463
    %v1118 = vunpack.c.h.b16 %v463
    %v1119 = vunpack.c.l.b16 %v464
    %v1120 = vunpack.c.h.b16 %v464
    %v1121 = vunpack.c.l.b16 %v465
    %v1122 = vunpack.c.h.b16 %v465
    %v1123 = vunpack.c.l.b16 %v466
    %v1124 = vunpack.c.h.b16 %v466
    %v1125 = vunpack.c.l.b16 %v467
    %v1126 = vunpack.c.h.b16 %v467
    %v1127 = vunpack.c.l.b16 %v468
    %v1128 = vunpack.c.h.b16 %v468
    %v1129 = vunpack.c.l.b16 %v469
    %v1130 = vunpack.c.h.b16 %v469
    %v1131 = vunpack.c.l.b16 %v470
    %v1132 = vunpack.c.h.b16 %v470
    %v1133 = vunpack.c.l.b16 %v471
    %v1134 = vunpack.c.h.b16 %v471
    %v1135 = vunpack.c.l.b16 %v472
    %v1136 = vunpack.c.h.b16 %v472
    %v1137 = vunpack.c.l.b16 %v473
    %v1138 = vunpack.c.h.b16 %v473
    %v1139 = vunpack.c.l.b16 %v474
    %v1140 = vunpack.c.h.b16 %v474
    %v1141 = vunpack.c.l.b16 %v475
    %v1142 = vunpack.c.h.b16 %v475
    %v1143 = vunpack.c.l.b16 %v476
    %v1144 = vunpack.c.h.b16 %v476
    %v1145 = vunpack.c.l.b16 %v477
    %v1146 = vunpack.c.h.b16 %v477
    %v1147 = vunpack.c.l.b16 %v478
    %v1148 = vunpack.c.h.b16 %v478
    %v1149 = vunpack.c.l.b16 %v479
    %v1150 = vunpack.c.h.b16 %v479
    %v1151 = vunpack.c.l.b16 %v480
    %v1152 = vunpack.c.h.b16 %v480
    %v1153 = vunpack.c.l.b16 %v481
    %v1154 = vunpack.c.h.b16 %v481
    %v1155 = vunpack.c.l.b16 %v482
    %v1156 = vunpack.c.h.b16 %v482
    %v1157 = vunpack.c.l.b16 %v483
    %v1158 = vunpack.c.h.b16 %v483
    %v1159 = vunpack.c.l.b16 %v484
    %v1160 = vunpack.c.h.b16 %v484
    %v1161 = vunpack.c.l.b16 %v485
    %v1162 = vunpack.c.h.b16 %v485
    %v1163 = vunpack.c.l.b16 %v486
    %v1164 = vunpack.c.h.b16 %v486
    %v1165 = vunpack.c.l.b16 %v487
    %v1166 = vunpack.c.h.b16 %v487
    %v1167 = vunpack.c.l.b16 %v488
    %v1168 = vunpack.c.h.b16 %v488
    %v1169 = vunpack.c.l.b16 %v489
    %v1170 = vunpack.c.h.b16 %v489
    %v1171 = vunpack.c.l.b16 %v490
    %v1172 = vunpack.c.h.b16 %v490
    %v1173 = vunpack.c.l.b16 %v491
    %v1174 = vunpack.c.h.b16 %v491
    %v1175 = vunpack.c.l.b16 %v492
    %v1176 = vunpack.c.h.b16 %v492
    %v1177 = vunpack.c.l.b16 %v493
    %v1178 = vunpack.c.h.b16 %v493
    %v1179 = vunpack.c.l.b16 %v494
    %v1180 = vunpack.c.h.b16 %v494
    %v1181 = vunpack.c.l.b16 %v495
    %v1182 = vunpack.c.h.b16 %v495
    %v1183 = vunpack.c.l.b16 %v496
    %v1184 = vunpack.c.h.b16 %v496
    %v1185 = vunpack.c.l.b16 %v497
    %v1186 = vunpack.c.h.b16 %v497
    %v1187 = vunpack.c.l.b16 %v498
    %v1188 = vunpack.c.h.b16 %v498
    %v1189 = vunpack.c.l.b16 %v499
    %v1190 = vunpack.c.h.b16 %v499
    %v1191 = vunpack.c.l.b16 %v500
    %v1192 = vunpack.c.h.b16 %v500
    %v1193 = vunpack.c.l.b16 %v501
    %v1194 = vunpack.c.h.b16 %v501
    %v1195 = vunpack.c.l.b16 %v502
    %v1196 = vunpack.c.h.b16 %v502
    %v1197 = vunpack.c.l.b16 %v503
    %v1198 = vunpack.c.h.b16 %v503
    %v1199 = vunpack.c.l.b16 %v504
    %v1200 = vunpack.c.h.b16 %v504
    %v1201 = vunpack.c.l.b16 %v505
    %v1202 = vunpack.c.h.b16 %v505
    %v1203 = vunpack.c.l.b16 %v506
    %v1204 = vunpack.c.h.b16 %v506
    %v1205 = vunpack.c.l.b16 %v507
    %v1206 = vunpack.c.h.b16 %v507
    %v1207 = vunpack.c.l.b16 %v508
    %v1208 = vunpack.c.h.b16 %v508
    %v1209 = vunpack.c.l.b16 %v509
    %v1210 = vunpack.c.h.b16 %v509
    %v1211 = vunpack.c.l.b16 %v510
    %v1212 = vunpack.c.h.b16 %v510
    %v1213 = vunpack.c.l.b16 %v511
    %v1214 = vunpack.c.h.b16 %v511
    %v1215 = vunpack.c.l.b16 %v512
    %v1216 = vunpack.c.h.b16 %v512
    %v1217 = vunpack.c.l.b16 %v513
    %v1218 = vunpack.c.h.b16 %v513
    %v1219 = vunpack.c.l.b16 %v514
    %v1220 = vunpack.c.h.b16 %v514
    %v1221 = vunpack.c.l.b16 %v515
    %v1222 = vunpack.c.h.b16 %v515
    %v1223 = vunpack.c.l.b16 %v516
    %v1224 = vunpack.c.h.b16 %v516
    %v1225 = vunpack.c.l.b16 %v517
    %v1226 = vunpack.c.h.b16 %v517
    %v1227 = vunpack.c.l.b16 %v518
    %v1228 = vunpack.c.h.b16 %v518
    %v1229 = vunpack.c.l.b16 %v519
    %v1230 = vunpack.c.h.b16 %v519
    %v1231 = vunpack.c.l.b16 %v520
    %v1232 = vunpack.c.h.b16 %v520
    %v1233 = vunpack.c.l.b16 %v521
    %v1234 = vunpack.c.h.b16 %v521
    %v1235 = vunpack.c.l.b16 %v522
    %v1236 = vunpack.c.h.b16 %v522
    %v1237 = vunpack.c.l.b16 %v523
    %v1238 = vunpack.c.h.b16 %v523
    %v1239 = vunpack.c.l.b16 %v524
    %v1240 = vunpack.c.h.b16 %v524
    %v1241 = vunpack.c.l.b16 %v525
    %v1242 = vunpack.c.h.b16 %v525
    %v1243 = vunpack.c.l.b16 %v526
    %v1244 = vunpack.c.h.b16 %v526
    %v1245 = vunpack.c.l.b16 %v527
    %v1246 = vunpack.c.h.b16 %v527
    %v1247 = vunpack.c.l.b16 %v528
    %v1248 = vunpack.c.h.b16 %v528
    %v1249 = vunpack.c.l.b16 %v529
    %v1250 = vunpack.c.h.b16 %v529
    %v1251 = vunpack.c.l.b16 %v530
    %v1252 = vunpack.c.h.b16 %v530
    %v1253 = vunpack.c.l.b16 %v531
    %v1254 = vunpack.c.h.b16 %v531
    %v1255 = vunpack.c.l.b16 %v532
    %v1256 = vunpack.c.h.b16 %v532
    %v1257 = vunpack.c.l.b16 %v533
    %v1258 = vunpack.c.h.b16 %v533
    %v1259 = vunpack.c.l.b16 %v534
    %v1260 = vunpack.c.h.b16 %v534
    %v1261 = vunpack.c.l.b16 %v535
    %v1262 = vunpack.c.h.b16 %v535
    %v1263 = vunpack.c.l.b16 %v536
    %v1264 = vunpack.c.h.b16 %v536
    %v1265 = vunpack.c.l.b16 %v537
    %v1266 = vunpack.c.h.b16 %v537
    %v1267 = vunpack.c.l.b16 %v538
    %v1268 = vunpack.c.h.b16 %v538
    %v1269 = vunpack.c.l.b16 %v539
    %v1270 = vunpack.c.h.b16 %v539
    %v1271 = vunpack.c.l.b16 %v540
    %v1272 = vunpack.c.h.b16 %v540
    %v1273 = vunpack.c.l.b16 %v541
    %v1274 = vunpack.c.h.b16 %v541
    %v1275 = vunpack.c.l.b16 %v542
    %v1276 = vunpack.c.h.b16 %v542
    %v1277 = vunpack.c.l.b16 %v543
    %v1278 = vunpack.c.h.b16 %v543
    %v1279 = vunpack.c.l.b16 %v544
    %v1280 = vunpack.c.h.b16 %v544
    %v1281 = vunpack.c.l.b16 %v545
    %v1282 = vunpack.c.h.b16 %v545
    %v1283 = vunpack.c.l.b16 %v546
    %v1284 = vunpack.c.h.b16 %v546
    %v1285 = vunpack.c.l.b16 %v547
    %v1286 = vunpack.c.h.b16 %v547
    %v1287 = vunpack.c.l.b16 %v548
    %v1288 = vunpack.c.h.b16 %v548
    %v1289 = vunpack.c.l.b16 %v549
    %v1290 = vunpack.c.h.b16 %v549
    %v1291 = vunpack.c.l.b16 %v550
    %v1292 = vunpack.c.h.b16 %v550
    %v1293 = vunpack.c.l.b16 %v551
    %v1294 = vunpack.c.h.b16 %v551
    %v1295 = vunpack.c.l.b16 %v552
    %v1296 = vunpack.c.h.b16 %v552
    %v1297 = vunpack.c.l.b16 %v553
    %v1298 = vunpack.c.h.b16 %v553
    %v1299 = vunpack.c.l.b16 %v554
    %v1300 = vunpack.c.h.b16 %v554
    %v1301 = vunpack.c.l.b16 %v555
    %v1302 = vunpack.c.h.b16 %v555
    %v1303 = vunpack.c.l.b16 %v556
    %v1304 = vunpack.c.h.b16 %v556
    %v1305 = vunpack.c.l.b16 %v557
    %v1306 = vunpack.c.h.b16 %v557
    %v1307 = vunpack.c.l.b16 %v558
    %v1308 = vunpack.c.h.b16 %v558
    %v1309 = vunpack.c.l.b16 %v559
    %v1310 = vunpack.c.h.b16 %v559
    %v1311 = vunpack.c.l.b16 %v560
    %v1312 = vunpack.c.h.b16 %v560
    %v1313 = vunpack.c.l.b16 %v561
    %v1314 = vunpack.c.h.b16 %v561
    %v1315 = vunpack.c.l.b16 %v562
    %v1316 = vunpack.c.h.b16 %v562
    %v1317 = vunpack.c.l.b16 %v563
    %v1318 = vunpack.c.h.b16 %v563
    %v1319 = vunpack.c.l.b16 %v564
    %v1320 = vunpack.c.h.b16 %v564
    %v1321 = vunpack.c.l.b16 %v565
    %v1322 = vunpack.c.h.b16 %v565
    %v1323 = vunpack.c.l.b16 %v566
    %v1324 = vunpack.c.h.b16 %v566
    %v1325 = vunpack.c.l.b16 %v567
    %v1326 = vunpack.c.h.b16 %v567
    %v1327 = vunpack.c.l.b16 %v568
    %v1328 = vunpack.c.h.b16 %v568
    %v1329 = vunpack.c.l.b16 %v569
    %v1330 = vunpack.c.h.b16 %v569
    %v1331 = vunpack.c.l.b16 %v570
    %v1332 = vunpack.c.h.b16 %v570
    %v1333 = vunpack.c.l.b16 %v571
    %v1334 = vunpack.c.h.b16 %v571
    %v1335 = vunpack.c.l.b16 %v572
    %v1336 = vunpack.c.h.b16 %v572
    %v1337 = vunpack.c.l.b16 %v573
    %v1338 = vunpack.c.h.b16 %v573
    %v1339 = vunpack.c.l.b16 %v574
    %v1340 = vunpack.c.h.b16 %v574
    %v1341 = vunpack.c.l.b16 %v575
    %v1342 = vunpack.c.h.b16 %v575
    %v1343 = vunpack.c.l.b16 %v576
    %v1344 = vunpack.c.h.b16 %v576
    %v1345 = vunpack.c.l.b16 %v577
    %v1346 = vunpack.c.h.b16 %v577
    %v1347 = vunpack.c.l.b16 %v578
    %v1348 = vunpack.c.h.b16 %v578
    %v1349 = vunpack.c.l.b16 %v579
    %v1350 = vunpack.c.h.b16 %v579
    %v1351 = vunpack.c.l.b16 %v580
    %v1352 = vunpack.c.h.b16 %v580
    %v1353 = vunpack.c.l.b16 %v581
    %v1354 = vunpack.c.h.b16 %v581
    %v1355 = vunpack.c.l.b16 %v582
    %v1356 = vunpack.c.h.b16 %v582
    %v1357 = vunpack.c.l.b16 %v583
    %v1358 = vunpack.c.h.b16 %v583
    %v1359 = vunpack.c.l.b16 %v584
    %v1360 = vunpack.c.h.b16 %v584
    %v1361 = vunpack.c.l.b16 %v585
    %v1362 = vunpack.c.h.b16 %v585
    %v1363 = vunpack.c.l.b16 %v586
    %v1364 = vunpack.c.h.b16 %v586
    %v1365 = vunpack.c.l.b16 %v587
    %v1366 = vunpack.c.h.b16 %v587
    %v1367 = vunpack.c.l.b16 %v588
    %v1368 = vunpack.c.h.b16 %v588
    %v1369 = vunpack.c.l.b16 %v589
    %v1370 = vunpack.c.h.b16 %v589
    %v1371 = vunpack.c.l.b16 %v590
    %v1372 = vunpack.c.h.b16 %v590
    %v1373 = vunpack.c.l.b16 %v591
    %v1374 = vunpack.c.h.b16 %v591
    %v1375 = vunpack.c.l.b16 %v592
    %v1376 = vunpack.c.h.b16 %v592
    %v1377 = vunpack.c.l.b16 %v593
    %v1378 = vunpack.c.h.b16 %v593
    %v1379 = vunpack.c.l.b16 %v594
    %v1380 = vunpack.c.h.b16 %v594
    %v1381 = vunpack.c.l.b16 %v595
    %v1382 = vunpack.c.h.b16 %v595
    %v1383 = vunpack.c.l.b16 %v596
    %v1384 = vunpack.c.h.b16 %v596
    %v1385 = vunpack.c.l.b16 %v597
    %v1386 = vunpack.c.h.b16 %v597
    %v1387 = vunpack.c.l.b16 %v598
    %v1388 = vunpack.c.h.b16 %v598
    %v1389 = vunpack.c.l.b16 %v599
    %v1390 = vunpack.c.h.b16 %v599
    %v1391 = vunpack.c.l.b16 %v600
    %v1392 = vunpack.c.h.b16 %v600
    %v1393 = vunpack.c.l.b16 %v601
    %v1394 = vunpack.c.h.b16 %v601
    %v1395 = vunpack.c.l.b16 %v602
    %v1396 = vunpack.c.h.b16 %v602
    %v1397 = vunpack.c.l.b16 %v603
    %v1398 = vunpack.c.h.b16 %v603
    %v1399 = vunpack.c.l.b16 %v604
    %v1400 = vunpack.c.h.b16 %v604
    %v1401 = vunpack.c.l.b16 %v605
    %v1402 = vunpack.c.h.b16 %v605
    %v1403 = vunpack.c.l.b16 %v606
    %v1404 = vunpack.c.h.b16 %v606
    %v1405 = vunpack.c.l.b16 %v607
    %v1406 = vunpack.c.h.b16 %v607
    %v1407 = vunpack.c.l.b16 %v608
    %v1408 = vunpack.c.h.b16 %v608
    %v1409 = vunpack.c.l.b16 %v609
    %v1410 = vunpack.c.h.b16 %v609
    %v1411 = vunpack.c.l.b16 %v610
    %v1412 = vunpack.c.h.b16 %v610
    %v1413 = vunpack.c.l.b16 %v611
    %v1414 = vunpack.c.h.b16 %v611
    %v1415 = vunpack.c.l.b16 %v612
    %v1416 = vunpack.c.h.b16 %v612
    %v1417 = vunpack.c.l.b16 %v613
    %v1418 = vunpack.c.h.b16 %v613
    %v1419 = vunpack.c.l.b16 %v614
    %v1420 = vunpack.c.h.b16 %v614
    %v1421 = vunpack.c.l.b16 %v615
    %v1422 = vunpack.c.h.b16 %v615
    %v1423 = vunpack.c.l.b16 %v616
    %v1424 = vunpack.c.h.b16 %v616
    %v1425 = vunpack.c.l.b16 %v617
    %v1426 = vunpack.c.h.b16 %v617
    %v1427 = vunpack.c.l.b16 %v618
    %v1428 = vunpack.c.h.b16 %v618
    %v1429 = vpack.c.b16 %v925, %v917
    %v1430 = vpack.c.b16 %v926, %v918
    %v1431 = vpack.c.b16 %v927, %v919
    %v1432 = vpack.c.b16 %v928, %v920
    %v1433 = vpack.c.b16 %v929, %v921
    %v1434 = vpack.c.b16 %v930, %v922
    %v1435 = vpack.c.b16 %v931, %v923
    %v1436 = vpack.c.b16 %v932, %v924
    %v1437 = vpack.c.b16 %v941, %v933
    %v1438 = vpack.c.b16 %v942, %v934
    %v1439 = vpack.c.b16 %v943, %v935
    %v1440 = vpack.c.b16 %v944, %v936
    %v1441 = vpack.c.b16 %v945, %v937
    %v1442 = vpack.c.b16 %v946, %v938
    %v1443 = vpack.c.b16 %v947, %v939
    %v1444 = vpack.c.b16 %v948, %v940
    %v1445 = vpack.c.b16 %v957, %v949
    %v1446 = vpack.c.b16 %v958, %v950
    %v1447 = vpack.c.b16 %v959, %v951
    %v1448 = vpack.c.b16 %v960, %v952
    %v1449 = vpack.c.b16 %v961, %v953
    %v1450 = vpack.c.b16 %v962, %v954
    %v1451 = vpack.c.b16 %v963, %v955
    %v1452 = vpack.c.b16 %v964, %v956
    %v1453 = vpack.c.b16 %v973, %v965
    %v1454 = vpack.c.b16 %v974, %v966
    %v1455 = vpack.c.b16 %v975, %v967
    %v1456 = vpack.c.b16 %v976, %v968
    %v1457 = vpack.c.b16 %v977, %v969
    %v1458 = vpack.c.b16 %v978, %v970
    %v1459 = vpack.c.b16 %v979, %v971
    %v1460 = vpack.c.b16 %v980, %v972
    %v1461 = vpack.c.b16 %v989, %v981
    %v1462 = vpack.c.b16 %v990, %v982
    %v1463 = vpack.c.b16 %v991, %v983
    %v1464 = vpack.c.b16 %v992, %v984
    %v1465 = vpack.c.b16 %v993, %v985
    %v1466 = vpack.c.b16 %v994, %v986
    %v1467 = vpack.c.b16 %v995, %v987
    %v1468 = vpack.c.b16 %v996, %v988
    %v1469 = vpack.c.b16 %v1005, %v997
    %v1470 = vpack.c.b16 %v1006, %v998
    %v1471 = vpack.c.b16 %v1007, %v999
    %v1472 = vpack.c.b16 %v1008, %v1000
    %v1473 = vpack.c.b16 %v1009, %v1001
    %v1474 = vpack.c.b16 %v1010, %v1002
    %v1475 = vpack.c.b16 %v1011, %v1003
    %v1476 = vpack.c.b16 %v1012, %v1004
    %v1477 = vpack.c.b16 %v1021, %v1013
    %v1478 = vpack.c.b16 %v1022, %v1014
    %v1479 = vpack.c.b16 %v1023, %v1015
    %v1480 = vpack.c.b16 %v1024, %v1016
    %v1481 = vpack.c.b16 %v1025, %v1017
    %v1482 = vpack.c.b16 %v1026, %v1018
    %v1483 = vpack.c.b16 %v1027, %v1019
    %v1484 = vpack.c.b16 %v1028, %v1020
    %v1485 = vpack.c.b16 %v1037, %v1029
    %v1486 = vpack.c.b16 %v1038, %v1030
    %v1487 = vpack.c.b16 %v1039, %v1031
    %v1488 = vpack.c.b16 %v1040, %v1032
    %v1489 = vpack.c.b16 %v1041, %v1033
    %v1490 = vpack.c.b16 %v1042, %v1034
    %v1491 = vpack.c.b16 %v1043, %v1035
    %v1492 = vpack.c.b16 %v1044, %v1036
    %v1493 = vpack.c.b16 %v1053, %v1045
    %v1494 = vpack.c.b16 %v1054, %v1046
    %v1495 = vpack.c.b16 %v1055, %v1047
    %v1496 = vpack.c.b16 %v1056, %v1048
    %v1497 = vpack.c.b16 %v1057, %v1049
    %v1498 = vpack.c.b16 %v1058, %v1050
    %v1499 = vpack.c.b16 %v1059, %v1051
    %v1500 = vpack.c.b16 %v1060, %v1052
    %v1501 = vpack.c.b16 %v1069, %v1061
    %v1502 = vpack.c.b16 %v1070, %v1062
    %v1503 = vpack.c.b16 %v1071, %v1063
    %v1504 = vpack.c.b16 %v1072, %v1064
    %v1505 = vpack.c.b16 %v1073, %v1065
    %v1506 = vpack.c.b16 %v1074, %v1066
    %v1507 = vpack.c.b16 %v1075, %v1067
    %v1508 = vpack.c.b16 %v1076, %v1068
    %v1509 = vpack.c.b16 %v1085, %v1077
    %v1510 = vpack.c.b16 %v1086, %v1078
    %v1511 = vpack.c.b16 %v1087, %v1079
    %v1512 = vpack.c.b16 %v1088, %v1080
    %v1513 = vpack.c.b16 %v1089, %v1081
    %v1514 = vpack.c.b16 %v1090, %v1082
    %v1515 = vpack.c.b16 %v1091, %v1083
    %v1516 = vpack.c.b16 %v1092, %v1084
    %v1517 = vpack.c.b16 %v1101, %v1093
    %v1518 = vpack.c.b16 %v1102, %v1094
    %v1519 = vpack.c.b16 %v1103, %v1095
    %v1520 = vpack.c.b16 %v1104, %v1096
    %v1521 = vpack.c.b16 %v1105, %v1097
    %v1522 = vpack.c.b16 %v1106, %v1098
    %v1523 = vpack.c.b16 %v1107, %v1099
    %v1524 = vpack.c.b16 %v1108, %v1100
    %v1525 = vpack.c.b16 %v1117, %v1109
    %v1526 = vpack.c.b16 %v1118, %v1110
    %v1527 = vpack.c.b16 %v1119, %v1111
    %v1528 = vpack.c.b16 %v1120, %v1112
    %v1529 = vpack.c.b16 %v1121, %v1113
    %v1530 = vpack.c.b16 %v1122, %v1114
    %v1531 = vpack.c.b16 %v1123, %v1115
    %v1532 = vpack.c.b16 %v1124, %v1116
    %v1533 = vpack.c.b16 %v1133, %v1125
    %v1534 = vpack.c.b16 %v1134, %v1126
    %v1535 = vpack.c.b16 %v1135, %v1127
    %v1536 = vpack.c.b16 %v1136, %v1128
    %v1537 = vpack.c.b16 %v1137, %v1129
    %v1538 = vpack.c.b16 %v1138, %v1130
    %v1539 = vpack.c.b16 %v1139, %v1131
    %v1540 = vpack.c.b16 %v1140, %v1132
    %v1541 = vpack.c.b16 %v1149, %v1141
    %v1542 = vpack.c.b16 %v1150, %v1142
    %v1543 = vpack.c.b16 %v1151, %v1143
    %v1544 = vpack.c.b16 %v1152, %v1144
    %v1545 = vpack.c.b16 %v1153, %v1145
    %v1546 = vpack.c.b16 %v1154, %v1146
    %v1547 = vpack.c.b16 %v1155, %v1147
    %v1548 = vpack.c.b16 %v1156, %v1148
    %v1549 = vpack.c.b16 %v1165, %v1157
    %v1550 = vpack.c.b16 %v1166, %v1158
    %v1551 = vpack.c.b16 %v1167, %v1159
    %v1552 = vpack.c.b16 %v1168, %v1160
    %v1553 = vpack.c.b16 %v1169, %v1161
    %v1554 = vpack.c.b16 %v1170, %v1162
    %v1555 = vpack.c.b16 %v1171, %v1163
    %v1556 = vpack.c.b16 %v1172, %v1164
    %v1557 = vpack.c.b16 %v1181, %v1173
    %v1558 = vpack.c.b16 %v1182, %v1174
    %v1559 = vpack.c.b16 %v1183, %v1175
    %v1560 = vpack.c.b16 %v1184, %v1176
    %v1561 = vpack.c.b16 %v1185, %v1177
    %v1562 = vpack.c.b16 %v1186, %v1178
    %v1563 = vpack.c.b16 %v1187, %v1179
    %v1564 = vpack.c.b16 %v1188, %v1180
    %v1565 = vpack.c.b16 %v1197, %v1189
    %v1566 = vpack.c.b16 %v1198, %v1190
    %v1567 = vpack.c.b16 %v1199, %v1191
    %v1568 = vpack.c.b16 %v1200, %v1192
    %v1569 = vpack.c.b16 %v1201, %v1193
    %v1570 = vpack.c.b16 %v1202, %v1194
    %v1571 = vpack.c.b16 %v1203, %v1195
    %v1572 = vpack.c.b16 %v1204, %v1196
    %v1573 = vpack.c.b16 %v1213, %v1205
    %v1574 = vpack.c.b16 %v1214, %v1206
    %v1575 = vpack.c.b16 %v1215, %v1207
    %v1576 = vpack.c.b16 %v1216, %v1208
    %v1577 = vpack.c.b16 %v1217, %v1209
    %v1578 = vpack.c.b16 %v1218, %v1210
    %v1579 = vpack.c.b16 %v1219, %v1211
    %v1580 = vpack.c.b16 %v1220, %v1212
    %v1581 = vpack.c.b16 %v1229, %v1221
    %v1582 = vpack.c.b16 %v1230, %v1222
    %v1583 = vpack.c.b16 %v1231, %v1223
    %v1584 = vpack.c.b16 %v1232, %v1224
    %v1585 = vpack.c.b16 %v1233, %v1225
    %v1586 = vpack.c.b16 %v1234, %v1226
    %v1587 = vpack.c.b16 %v1235, %v1227
    %v1588 = vpack.c.b16 %v1236, %v1228
    %v1589 = vpack.c.b16 %v1245, %v1237
    %v1590 = vpack.c.b16 %v1246, %v1238
    %v1591 = vpack.c.b16 %v1247, %v1239
    %v1592 = vpack.c.b16 %v1248, %v1240
    %v1593 = vpack.c.b16 %v1249, %v1241
    %v1594 = vpack.c.b16 %v1250, %v1242
    %v1595 = vpack.c.b16 %v1251, %v1243
    %v1596 = vpack.c.b16 %v1252, %v1244
    %v1597 = vpack.c.b16 %v1261, %v1253
    %v1598 = vpack.c.b16 %v1262, %v1254
    %v1599 = vpack.c.b16 %v1263, %v1255
    %v1600 = vpack.c.b16 %v1264, %v1256
    %v1601 = vpack.c.b16 %v1265, %v1257
    %v1602 = vpack.c.b16 %v1266, %v1258
    %v1603 = vpack.c.b16 %v1267, %v1259
    %v1604 = vpack.c.b16 %v1268, %v1260
    %v1605 = vpack.c.b16 %v1277, %v1269
    %v1606 = vpack.c.b16 %v1278, %v1270
    %v1607 = vpack.c.b16 %v1279, %v1271
    %v1608 = vpack.c.b16 %v1280, %v1272
    %v1609 = vpack.c.b16 %v1281, %v1273
    %v1610 = vpack.c.b16 %v1282, %v1274
    %v1611 = vpack.c.b16 %v1283, %v1275
    %v1612 = vpack.c.b16 %v1284, %v1276
    %v1613 = vpack.c.b16 %v1293, %v1285
    %v1614 = vpack.c.b16 %v1294, %v1286
    %v1615 = vpack.c.b16 %v1295, %v1287
    %v1616 = vpack.c.b16 %v1296, %v1288
    %v1617 = vpack.c.b16 %v1297, %v1289
    %v1618 = vpack.c.b16 %v1298, %v1290
    %v1619 = vpack.c.b16 %v1299, %v1291
    %v1620 = vpack.c.b16 %v1300, %v1292
    %v1621 = vpack.c.b16 %v1309, %v1301
    %v1622 = vpack.c.b16 %v1310, %v1302
    %v1623 = vpack.c.b16 %v1311, %v1303
    %v1624 = vpack.c.b16 %v1312, %v1304
    %v1625 = vpack.c.b16 %v1313, %v1305
    %v1626 = vpack.c.b16 %v1314, %v1306
    %v1627 = vpack.c.b16 %v1315, %v1307
    %v1628 = vpack.c.b16 %v1316, %v1308
    %v1629 = vpack.c.b16 %v1325, %v1317
    %v1630 = vpack.c.b16 %v1326, %v1318
    %v1631 = vpack.c.b16 %v1327, %v1319
    %v1632 = vpack.c.b16 %v1328, %v1320
    %v1633 = vpack.c.b16 %v1329, %v1321
    %v1634 = vpack.c.b16 %v1330, %v1322
    %v1635 = vpack.c.b16 %v1331, %v1323
    %v1636 = vpack.c.b16 %v1332, %v1324
    %v1637 = vpack.c.b16 %v1341, %v1333
    %v1638 = vpack.c.b16 %v1342, %v1334
    %v1639 = vpack.c.b16 %v1343, %v1335
    %v1640 = vpack.c.b16 %v1344, %v1336
    %v1641 = vpack.c.b16 %v1345, %v1337
    %v1642 = vpack.c.b16 %v1346, %v1338
    %v1643 = vpack.c.b16 %v1347, %v1339
    %v1644 = vpack.c.b16 %v1348, %v1340
    %v1645 = vpack.c.b16 %v1357, %v1349
    %v1646 = vpack.c.b16 %v1358, %v1350
    %v1647 = vpack.c.b16 %v1359, %v1351
    %v1648 = vpack.c.b16 %v1360, %v1352
    %v1649 = vpack.c.b16 %v1361, %v1353
    %v1650 = vpack.c.b16 %v1362, %v1354
    %v1651 = vpack.c.b16 %v1363, %v1355
    %v1652 = vpack.c.b16 %v1364, %v1356
    %v1653 = vpack.c.b16 %v1373, %v1365
    %v1654 = vpack.c.b16 %v1374, %v1366
    %v1655 = vpack.c.b16 %v1375, %v1367
    %v1656 = vpack.c.b16 %v1376, %v1368
    %v1657 = vpack.c.b16 %v1377, %v1369
    %v1658 = vpack.c.b16 %v1378, %v1370
    %v1659 = vpack.c.b16 %v1379, %v1371
    %v1660 = vpack.c.b16 %v1380, %v1372
    %v1661 = vpack.c.b16 %v1389, %v1381
    %v1662 = vpack.c.b16 %v1390, %v1382
    %v1663 = vpack.c.b16 %v1391, %v1383
    %v1664 = vpack.c.b16 %v1392, %v1384
    %v1665 = vpack.c.b16 %v1393, %v1385
    %v1666 = vpack.c.b16 %v1394, %v1386
    %v1667 = vpack.c.b16 %v1395, %v1387
    %v1668 = vpack.c.b16 %v1396, %v1388
    %v1669 = vpack.c.b16 %v1405, %v1397
    %v1670 = vpack.c.b16 %v1406, %v1398
    %v1671 = vpack.c.b16 %v1407, %v1399
    %v1672 = vpack.c.b16 %v1408, %v1400
    %v1673 = vpack.c.b16 %v1409, %v1401
    %v1674 = vpack.c.b16 %v1410, %v1402
    %v1675 = vpack.c.b16 %v1411, %v1403
    %v1676 = vpack.c.b16 %v1412, %v1404
    %v1677 = vpack.c.b16 %v1421, %v1413
    %v1678 = vpack.c.b16 %v1422, %v1414
    %v1679 = vpack.c.b16 %v1423, %v1415
    %v1680 = vpack.c.b16 %v1424, %v1416
    %v1681 = vpack.c.b16 %v1425, %v1417
    %v1682 = vpack.c.b16 %v1426, %v1418
    %v1683 = vpack.c.b16 %v1427, %v1419
    %v1684 = vpack.c.b16 %v1428, %v1420
    %1941 = vmatprep.subr.bf16.mxu0 %v1486
    %1942 = vmatpush1.bf16.msra.mxu0 %v1485
    %1943 = vmatprep.subr.bf16.mxu0 %v1478
    %1944 = vmatpush1.bf16.msra.mxu0 %v1477
    %1945 = vmatprep.subr.bf16.mxu0 %v1470
    %1946 = vmatpush1.bf16.msra.mxu0 %v1469
    %1947 = vmatprep.subr.bf16.mxu0 %v1462
    %1948 = vmatpush1.bf16.msra.mxu0 %v1461
    %1949 = vmatprep.subr.bf16.mxu0 %v1454
    %1950 = vmatpush1.bf16.msra.mxu0 %v1453
    %1951 = vmatprep.subr.bf16.mxu0 %v1446
    %1952 = vmatpush1.bf16.msra.mxu0 %v1445
    %1953 = vmatprep.subr.bf16.mxu0 %v1438
    %1954 = vmatpush1.bf16.msra.mxu0 %v1437
    %1955 = vmatprep.subr.bf16.mxu0 %v1430
    %1956 = vmatpush1.bf16.msra.mxu0 %v1429
    %1957 = vmatprep.subr.bf16.mxu0 %v1550
    %1958 = vmatpush2.bf16.msra.mxu0 %v1549
    %1959 = vmatprep.subr.bf16.mxu0 %v1542
    %1960 = vmatpush2.bf16.msra.mxu0 %v1541
    %1961 = vmatprep.subr.bf16.mxu0 %v1534
    %1962 = vmatpush2.bf16.msra.mxu0 %v1533
    %1963 = vmatprep.subr.bf16.mxu0 %v1526
    %1964 = vmatpush2.bf16.msra.mxu0 %v1525
    %1965 = vmatprep.subr.bf16.mxu0 %v1518
    %1966 = vmatpush2.bf16.msra.mxu0 %v1517
    %1967 = vmatprep.subr.bf16.mxu0 %v1510
    %1968 = vmatpush2.bf16.msra.mxu0 %v1509
    %1969 = vmatprep.subr.bf16.mxu0 %v1502
    %1970 = vmatpush2.bf16.msra.mxu0 %v1501
    %1971 = vmatprep.subr.bf16.mxu0 %v1494
    %1972 = vmatpush2.bf16.msra.mxu0 %v1493
    %1973 = vmatprep.mubr.bf16.mxu0 %v360
    %1974 = vmatmul.mubr.bf16.gmra.mxu0 %v359
    %v1975 = vpop.f32.mrf.mxu0
    %v1976 = vadd.f32 %v624, %v1975
    %v1977 = vpop.f32.mrf.mxu0
    %v1978 = vadd.f32 %v628, %v1977
    %v1979 = vpop.f32.mrf.mxu0
    %v1980 = vpop.f32.mrf.mxu0
    %1981 = vdwg.mxu0
    %1982 = vmatprep.subr.bf16.mxu0 %v1614
    %1983 = vmatpush1.bf16.msra.mxu0 %v1613
    %1984 = vmatprep.subr.bf16.mxu0 %v1606
    %1985 = vmatpush1.bf16.msra.mxu0 %v1605
    %1986 = vmatprep.subr.bf16.mxu0 %v1598
    %1987 = vmatpush1.bf16.msra.mxu0 %v1597
    %1988 = vmatprep.subr.bf16.mxu0 %v1590
    %1989 = vmatpush1.bf16.msra.mxu0 %v1589
    %1990 = vmatprep.subr.bf16.mxu0 %v1582
    %1991 = vmatpush1.bf16.msra.mxu0 %v1581
    %1992 = vmatprep.subr.bf16.mxu0 %v1574
    %1993 = vmatpush1.bf16.msra.mxu0 %v1573
    %1994 = vmatprep.subr.bf16.mxu0 %v1566
    %1995 = vmatpush1.bf16.msra.mxu0 %v1565
    %1996 = vmatprep.subr.bf16.mxu0 %v1558
    %1997 = vmatpush1.bf16.msra.mxu0 %v1557
    %1998 = vmatprep.subr.bf16.mxu0 %v1678
    %1999 = vmatpush2.bf16.msra.mxu0 %v1677
    %2000 = vmatprep.subr.bf16.mxu0 %v1670
    %2001 = vmatpush2.bf16.msra.mxu0 %v1669
    %2002 = vmatprep.subr.bf16.mxu0 %v1662
    %2003 = vmatpush2.bf16.msra.mxu0 %v1661
    %2004 = vmatprep.subr.bf16.mxu0 %v1654
    %2005 = vmatpush2.bf16.msra.mxu0 %v1653
    %2006 = vmatprep.subr.bf16.mxu0 %v1646
    %2007 = vmatpush2.bf16.msra.mxu0 %v1645
    %2008 = vmatprep.subr.bf16.mxu0 %v1638
    %2009 = vmatpush2.bf16.msra.mxu0 %v1637
    %2010 = vmatprep.subr.bf16.mxu0 %v1630
    %2011 = vmatpush2.bf16.msra.mxu0 %v1629
    %2012 = vmatprep.subr.bf16.mxu0 %v1622
    %2013 = vmatpush2.bf16.msra.mxu0 %v1621
    %2014 = vmatprep.mubr.bf16.mxu0 %v362
    %2015 = vmatmul.mubr.bf16.gmra.mxu0 %v361
    %v2016 = vpop.f32.mrf.mxu0
    %v2017 = vadd.f32 %v1976, %v2016
    %v2018 = vpop.f32.mrf.mxu0
    %v2019 = vadd.f32 %v1978, %v2018
    %v2020 = vpop.f32.mrf.mxu0
    %v2021 = vpop.f32.mrf.mxu0
    %2022 = vdwg.mxu0
    %2023 = vmatprep.subr.bf16.mxu0 %v1488
    %2024 = vmatpush1.bf16.msra.mxu0 %v1487
    %2025 = vmatprep.subr.bf16.mxu0 %v1480
    %2026 = vmatpush1.bf16.msra.mxu0 %v1479
    %2027 = vmatprep.subr.bf16.mxu0 %v1472
    %2028 = vmatpush1.bf16.msra.mxu0 %v1471
    %2029 = vmatprep.subr.bf16.mxu0 %v1464
    %2030 = vmatpush1.bf16.msra.mxu0 %v1463
    %2031 = vmatprep.subr.bf16.mxu0 %v1456
    %2032 = vmatpush1.bf16.msra.mxu0 %v1455
    %2033 = vmatprep.subr.bf16.mxu0 %v1448
    %2034 = vmatpush1.bf16.msra.mxu0 %v1447
    %2035 = vmatprep.subr.bf16.mxu0 %v1440
    %2036 = vmatpush1.bf16.msra.mxu0 %v1439
    %2037 = vmatprep.subr.bf16.mxu0 %v1432
    %2038 = vmatpush1.bf16.msra.mxu0 %v1431
    %2039 = vmatprep.subr.bf16.mxu0 %v1552
    %2040 = vmatpush2.bf16.msra.mxu0 %v1551
    %2041 = vmatprep.subr.bf16.mxu0 %v1544
    %2042 = vmatpush2.bf16.msra.mxu0 %v1543
    %2043 = vmatprep.subr.bf16.mxu0 %v1536
    %2044 = vmatpush2.bf16.msra.mxu0 %v1535
    %2045 = vmatprep.subr.bf16.mxu0 %v1528
    %2046 = vmatpush2.bf16.msra.mxu0 %v1527
    %2047 = vmatprep.subr.bf16.mxu0 %v1520
    %2048 = vmatpush2.bf16.msra.mxu0 %v1519
    %2049 = vmatprep.subr.bf16.mxu0 %v1512
    %2050 = vmatpush2.bf16.msra.mxu0 %v1511
    %2051 = vmatprep.subr.bf16.mxu0 %v1504
    %2052 = vmatpush2.bf16.msra.mxu0 %v1503
    %2053 = vmatprep.subr.bf16.mxu0 %v1496
    %2054 = vmatpush2.bf16.msra.mxu0 %v1495
    %2055 = vmatprep.mubr.bf16.mxu0 %v360
    %2056 = vmatmul.mubr.bf16.gmra.mxu0 %v359
    %v2057 = vpop.f32.mrf.mxu0
    %v2058 = vadd.f32 %v632, %v2057
    %v2059 = vpop.f32.mrf.mxu0
    %v2060 = vadd.f32 %v636, %v2059
    %v2061 = vpop.f32.mrf.mxu0
    %v2062 = vpop.f32.mrf.mxu0
    %2063 = vdwg.mxu0
    %2064 = vmatprep.subr.bf16.mxu0 %v1616
    %2065 = vmatpush1.bf16.msra.mxu0 %v1615
    %2066 = vmatprep.subr.bf16.mxu0 %v1608
    %2067 = vmatpush1.bf16.msra.mxu0 %v1607
    %2068 = vmatprep.subr.bf16.mxu0 %v1600
    %2069 = vmatpush1.bf16.msra.mxu0 %v1599
    %2070 = vmatprep.subr.bf16.mxu0 %v1592
    %2071 = vmatpush1.bf16.msra.mxu0 %v1591
    %2072 = vmatprep.subr.bf16.mxu0 %v1584
    %2073 = vmatpush1.bf16.msra.mxu0 %v1583
    %2074 = vmatprep.subr.bf16.mxu0 %v1576
    %2075 = vmatpush1.bf16.msra.mxu0 %v1575
    %2076 = vmatprep.subr.bf16.mxu0 %v1568
    %2077 = vmatpush1.bf16.msra.mxu0 %v1567
    %2078 = vmatprep.subr.bf16.mxu0 %v1560
    %2079 = vmatpush1.bf16.msra.mxu0 %v1559
    %2080 = vmatprep.subr.bf16.mxu0 %v1680
    %2081 = vmatpush2.bf16.msra.mxu0 %v1679
    %2082 = vmatprep.subr.bf16.mxu0 %v1672
    %2083 = vmatpush2.bf16.msra.mxu0 %v1671
    %2084 = vmatprep.subr.bf16.mxu0 %v1664
    %2085 = vmatpush2.bf16.msra.mxu0 %v1663
    %2086 = vmatprep.subr.bf16.mxu0 %v1656
    %2087 = vmatpush2.bf16.msra.mxu0 %v1655
    %2088 = vmatprep.subr.bf16.mxu0 %v1648
    %2089 = vmatpush2.bf16.msra.mxu0 %v1647
    %2090 = vmatprep.subr.bf16.mxu0 %v1640
    %2091 = vmatpush2.bf16.msra.mxu0 %v1639
    %2092 = vmatprep.subr.bf16.mxu0 %v1632
    %2093 = vmatpush2.bf16.msra.mxu0 %v1631
    %2094 = vmatprep.subr.bf16.mxu0 %v1624
    %2095 = vmatpush2.bf16.msra.mxu0 %v1623
    %2096 = vmatprep.mubr.bf16.mxu0 %v362
    %2097 = vmatmul.mubr.bf16.gmra.mxu0 %v361
    %v2098 = vpop.f32.mrf.mxu0
    %v2099 = vadd.f32 %v2058, %v2098
    %v2100 = vpop.f32.mrf.mxu0
    %v2101 = vadd.f32 %v2060, %v2100
    %v2102 = vpop.f32.mrf.mxu0
    %v2103 = vpop.f32.mrf.mxu0
    %2104 = vdwg.mxu0
    %2105 = vmatprep.subr.bf16.mxu0 %v1490
    %2106 = vmatpush1.bf16.msra.mxu0 %v1489
    %2107 = vmatprep.subr.bf16.mxu0 %v1482
    %2108 = vmatpush1.bf16.msra.mxu0 %v1481
    %2109 = vmatprep.subr.bf16.mxu0 %v1474
    %2110 = vmatpush1.bf16.msra.mxu0 %v1473
    %2111 = vmatprep.subr.bf16.mxu0 %v1466
    %2112 = vmatpush1.bf16.msra.mxu0 %v1465
    %2113 = vmatprep.subr.bf16.mxu0 %v1458
    %2114 = vmatpush1.bf16.msra.mxu0 %v1457
    %2115 = vmatprep.subr.bf16.mxu0 %v1450
    %2116 = vmatpush1.bf16.msra.mxu0 %v1449
    %2117 = vmatprep.subr.bf16.mxu0 %v1442
    %2118 = vmatpush1.bf16.msra.mxu0 %v1441
    %2119 = vmatprep.subr.bf16.mxu0 %v1434
    %2120 = vmatpush1.bf16.msra.mxu0 %v1433
    %2121 = vmatprep.subr.bf16.mxu0 %v1554
    %2122 = vmatpush2.bf16.msra.mxu0 %v1553
    %2123 = vmatprep.subr.bf16.mxu0 %v1546
    %2124 = vmatpush2.bf16.msra.mxu0 %v1545
    %2125 = vmatprep.subr.bf16.mxu0 %v1538
    %2126 = vmatpush2.bf16.msra.mxu0 %v1537
    %2127 = vmatprep.subr.bf16.mxu0 %v1530
    %2128 = vmatpush2.bf16.msra.mxu0 %v1529
    %2129 = vmatprep.subr.bf16.mxu0 %v1522
    %2130 = vmatpush2.bf16.msra.mxu0 %v1521
    %2131 = vmatprep.subr.bf16.mxu0 %v1514
    %2132 = vmatpush2.bf16.msra.mxu0 %v1513
    %2133 = vmatprep.subr.bf16.mxu0 %v1506
    %2134 = vmatpush2.bf16.msra.mxu0 %v1505
    %2135 = vmatprep.subr.bf16.mxu0 %v1498
    %2136 = vmatpush2.bf16.msra.mxu0 %v1497
    %2137 = vmatprep.mubr.bf16.mxu0 %v360
    %2138 = vmatmul.mubr.bf16.gmra.mxu0 %v359
    %v2139 = vpop.f32.mrf.mxu0
    %v2140 = vadd.f32 %v640, %v2139
    %v2141 = vpop.f32.mrf.mxu0
    %v2142 = vadd.f32 %v644, %v2141
    %v2143 = vpop.f32.mrf.mxu0
    %v2144 = vpop.f32.mrf.mxu0
    %2145 = vdwg.mxu0
    %2146 = vmatprep.subr.bf16.mxu0 %v1618
    %2147 = vmatpush1.bf16.msra.mxu0 %v1617
    %2148 = vmatprep.subr.bf16.mxu0 %v1610
    %2149 = vmatpush1.bf16.msra.mxu0 %v1609
    %2150 = vmatprep.subr.bf16.mxu0 %v1602
    %2151 = vmatpush1.bf16.msra.mxu0 %v1601
    %2152 = vmatprep.subr.bf16.mxu0 %v1594
    %2153 = vmatpush1.bf16.msra.mxu0 %v1593
    %2154 = vmatprep.subr.bf16.mxu0 %v1586
    %2155 = vmatpush1.bf16.msra.mxu0 %v1585
    %2156 = vmatprep.subr.bf16.mxu0 %v1578
    %2157 = vmatpush1.bf16.msra.mxu0 %v1577
    %2158 = vmatprep.subr.bf16.mxu0 %v1570
    %2159 = vmatpush1.bf16.msra.mxu0 %v1569
    %2160 = vmatprep.subr.bf16.mxu0 %v1562
    %2161 = vmatpush1.bf16.msra.mxu0 %v1561
    %2162 = vmatprep.subr.bf16.mxu0 %v1682
    %2163 = vmatpush2.bf16.msra.mxu0 %v1681
    %2164 = vmatprep.subr.bf16.mxu0 %v1674
    %2165 = vmatpush2.bf16.msra.mxu0 %v1673
    %2166 = vmatprep.subr.bf16.mxu0 %v1666
    %2167 = vmatpush2.bf16.msra.mxu0 %v1665
    %2168 = vmatprep.subr.bf16.mxu0 %v1658
    %2169 = vmatpush2.bf16.msra.mxu0 %v1657
    %2170 = vmatprep.subr.bf16.mxu0 %v1650
    %2171 = vmatpush2.bf16.msra.mxu0 %v1649
    %2172 = vmatprep.subr.bf16.mxu0 %v1642
    %2173 = vmatpush2.bf16.msra.mxu0 %v1641
    %2174 = vmatprep.subr.bf16.mxu0 %v1634
    %2175 = vmatpush2.bf16.msra.mxu0 %v1633
    %2176 = vmatprep.subr.bf16.mxu0 %v1626
    %2177 = vmatpush2.bf16.msra.mxu0 %v1625
    %2178 = vmatprep.mubr.bf16.mxu0 %v362
    %2179 = vmatmul.mubr.bf16.gmra.mxu0 %v361
    %v2180 = vpop.f32.mrf.mxu0
    %v2181 = vadd.f32 %v2140, %v2180
    %v2182 = vpop.f32.mrf.mxu0
    %v2183 = vadd.f32 %v2142, %v2182
    %v2184 = vpop.f32.mrf.mxu0
    %v2185 = vpop.f32.mrf.mxu0
    %2186 = vdwg.mxu0
    %2187 = vmatprep.subr.bf16.mxu0 %v1492
    %2188 = vmatpush1.bf16.msra.mxu0 %v1491
    %2189 = vmatprep.subr.bf16.mxu0 %v1484
    %2190 = vmatpush1.bf16.msra.mxu0 %v1483
    %2191 = vmatprep.subr.bf16.mxu0 %v1476
    %2192 = vmatpush1.bf16.msra.mxu0 %v1475
    %2193 = vmatprep.subr.bf16.mxu0 %v1468
    %2194 = vmatpush1.bf16.msra.mxu0 %v1467
    %2195 = vmatprep.subr.bf16.mxu0 %v1460
    %2196 = vmatpush1.bf16.msra.mxu0 %v1459
    %2197 = vmatprep.subr.bf16.mxu0 %v1452
    %2198 = vmatpush1.bf16.msra.mxu0 %v1451
    %2199 = vmatprep.subr.bf16.mxu0 %v1444
    %2200 = vmatpush1.bf16.msra.mxu0 %v1443
    %2201 = vmatprep.subr.bf16.mxu0 %v1436
    %2202 = vmatpush1.bf16.msra.mxu0 %v1435
    %2203 = vmatprep.subr.bf16.mxu0 %v1556
    %2204 = vmatpush2.bf16.msra.mxu0 %v1555
    %2205 = vmatprep.subr.bf16.mxu0 %v1548
    %2206 = vmatpush2.bf16.msra.mxu0 %v1547
    %2207 = vmatprep.subr.bf16.mxu0 %v1540
    %2208 = vmatpush2.bf16.msra.mxu0 %v1539
    %2209 = vmatprep.subr.bf16.mxu0 %v1532
    %2210 = vmatpush2.bf16.msra.mxu0 %v1531
    %2211 = vmatprep.subr.bf16.mxu0 %v1524
    %2212 = vmatpush2.bf16.msra.mxu0 %v1523
    %2213 = vmatprep.subr.bf16.mxu0 %v1516
    %2214 = vmatpush2.bf16.msra.mxu0 %v1515
    %2215 = vmatprep.subr.bf16.mxu0 %v1508
    %2216 = vmatpush2.bf16.msra.mxu0 %v1507
    %2217 = vmatprep.subr.bf16.mxu0 %v1500
    %2218 = vmatpush2.bf16.msra.mxu0 %v1499
    %2219 = vmatprep.mubr.bf16.mxu0 %v360
    %2220 = vmatmul.mubr.bf16.gmra.mxu0 %v359
    %v2221 = vpop.f32.mrf.mxu0
    %v2222 = vadd.f32 %v648, %v2221
    %v2223 = vpop.f32.mrf.mxu0
    %v2224 = vadd.f32 %v652, %v2223
    %v2225 = vpop.f32.mrf.mxu0
    %v2226 = vpop.f32.mrf.mxu0
    %2227 = vdwg.mxu0
    %2228 = vmatprep.subr.bf16.mxu0 %v1620
    %2229 = vmatpush1.bf16.msra.mxu0 %v1619
    %2230 = vmatprep.subr.bf16.mxu0 %v1612
    %2231 = vmatpush1.bf16.msra.mxu0 %v1611
    %2232 = vmatprep.subr.bf16.mxu0 %v1604
    %2233 = vmatpush1.bf16.msra.mxu0 %v1603
    %2234 = vmatprep.subr.bf16.mxu0 %v1596
    %2235 = vmatpush1.bf16.msra.mxu0 %v1595
    %2236 = vmatprep.subr.bf16.mxu0 %v1588
    %2237 = vmatpush1.bf16.msra.mxu0 %v1587
    %2238 = vmatprep.subr.bf16.mxu0 %v1580
    %2239 = vmatpush1.bf16.msra.mxu0 %v1579
    %2240 = vmatprep.subr.bf16.mxu0 %v1572
    %2241 = vmatpush1.bf16.msra.mxu0 %v1571
    %2242 = vmatprep.subr.bf16.mxu0 %v1564
    %2243 = vmatpush1.bf16.msra.mxu0 %v1563
    %2244 = vmatprep.subr.bf16.mxu0 %v1684
    %2245 = vmatpush2.bf16.msra.mxu0 %v1683
    %2246 = vmatprep.subr.bf16.mxu0 %v1676
    %2247 = vmatpush2.bf16.msra.mxu0 %v1675
    %2248 = vmatprep.subr.bf16.mxu0 %v1668
    %2249 = vmatpush2.bf16.msra.mxu0 %v1667
    %2250 = vmatprep.subr.bf16.mxu0 %v1660
    %2251 = vmatpush2.bf16.msra.mxu0 %v1659
    %2252 = vmatprep.subr.bf16.mxu0 %v1652
    %2253 = vmatpush2.bf16.msra.mxu0 %v1651
    %2254 = vmatprep.subr.bf16.mxu0 %v1644
    %2255 = vmatpush2.bf16.msra.mxu0 %v1643
    %2256 = vmatprep.subr.bf16.mxu0 %v1636
    %2257 = vmatpush2.bf16.msra.mxu0 %v1635
    %2258 = vmatprep.subr.bf16.mxu0 %v1628
    %2259 = vmatpush2.bf16.msra.mxu0 %v1627
    %2260 = vmatprep.mubr.bf16.mxu0 %v362
    %2261 = vmatmul.mubr.bf16.gmra.mxu0 %v361
    %v2262 = vpop.f32.mrf.mxu0
    %v2263 = vadd.f32 %v2222, %v2262
    %v2264 = vpop.f32.mrf.mxu0
    %v2265 = vadd.f32 %v2224, %v2264
    %v2266 = vpop.f32.mrf.mxu0
    %v2267 = vpop.f32.mrf.mxu0
    %2268 = vdwg.mxu0
    %v2269 = vmax.f32 %v2017, 0.0
    %v2270 = vmax.f32 %v2019, 0.0
    %v2271 = vmax.f32 %v2099, 0.0
    %v2272 = vmax.f32 %v2101, 0.0
    %v2273 = vmax.f32 %v2181, 0.0
    %v2274 = vmax.f32 %v2183, 0.0
    %v2275 = vmax.f32 %v2263, 0.0
    %v2276 = vmax.f32 %v2265, 0.0
    %v2277 = vpack.c.bf16 %v2269, %v2269
    %v2278 = vpack.c.bf16 %v2270, %v2270
    %v2279 = vpack.c.bf16 %v2271, %v2271
    %v2280 = vpack.c.bf16 %v2272, %v2272
    %v2281 = vpack.c.bf16 %v2273, %v2273
    %v2282 = vpack.c.bf16 %v2274, %v2274
    %v2283 = vpack.c.bf16 %v2275, %v2275
    %v2284 = vpack.c.bf16 %v2276, %v2276
    %v2293 = vunpack.c.l.b16 %v2277
    %v2294 = vunpack.c.l.b16 %v2278
    %v2295 = vunpack.c.l.b16 %v2279
    %v2296 = vunpack.c.l.b16 %v2280
    %v2297 = vunpack.c.l.b16 %v2281
    %v2298 = vunpack.c.l.b16 %v2282
    %v2299 = vunpack.c.l.b16 %v2283
    %v2300 = vunpack.c.l.b16 %v2284
    %v2301 = vpack.c.b16 %v2294, %v2293
    %v2302 = vpack.c.b16 %v2296, %v2295
    %v2303 = vpack.c.b16 %v2298, %v2297
    %v2304 = vpack.c.b16 %v2300, %v2299
    %2309 = vst [vmem:[%s5] sm:$0xff] %v2301
    %2310 = vst [vmem:[%s5 + $0x8] sm:$0xff] %v2302
    %2311 = vst [vmem:[%s5 + $0x10] sm:$0xff] %v2303
    %2312 = vst [vmem:[%s5 + $0x18] sm:$0xff] %v2304
    // Predicated region
    $region34: #{conv_decoder_forward.4} parent=1 // pred_check
      _
    $region35: #{conv_decoder_forward.4} parent=1 // pred_check_branch
      %2314 = sbr.rel (0) target = $region37
    $region36: #{conv_decoder_forward.4} parent=1 // pred_region
      _
    $region37: #{conv_decoder_forward.4} parent=1 // pred_fallthru
      _
    // Predicated region
    $region38: #{conv_decoder_forward.4} parent=1 // pred_check
      _
    $region39: #{conv_decoder_forward.4} parent=1 // pred_check_branch
      %2316 = sbr.rel (0) target = $region41
    $region40: #{conv_decoder_forward.4} parent=1 // pred_region
      _
    $region41: #{conv_decoder_forward.4} parent=1 // pred_fallthru
      _
    %2317 = vsyncpa [#allocation3], 1
    %2318 = vsyncpa [#allocation5], 1

// kernel: conv_decoder_forward.6
$region0: #{conv_decoder_forward.6}
  #allocation0 [shape = 'u32[]', space=smem, size = 0x4, offset = 0x4, fixed_abs, tag = 'smem constant byte address 0x4 - core index']
  #allocation1 [shape = 'u32[144,128]{1,0:T(1,128)}', space=vmem, size = 0x12000, scoped, tag = 'internal scratch']
  %s0 = inlined_call_operand.vmem [shape: bf16[512,1024], index: 0, kind: input, shape index: {}]
  %s1 = inlined_call_operand.vmem [shape: bf16[1024,32], index: 1, kind: input, shape index: {}]
  %s2 = inlined_call_operand.vmem [shape: f32[1,32], index: 2, kind: input, shape index: {}]
  %s3 = inlined_call_operand.vmem [shape: bf16[512,32], index: 3, kind: output, shape index: {}]
  %s4 = sld [smem:[#allocation0]]
  $region45: #{conv_decoder_forward.6} parent=0
    _
  %s6 = ssub.s32 1, %s4
  %s7 = scalar_select 0, %s6, %s4
  loop: start=0, step=1, limit=4
  $region2: #{conv_decoder_forward.6} parent=0 // loop_pre_header
    _
  $region3: #{conv_decoder_forward.6} parent=0 // loop_header
    %s9 = sphi 0, %s13
    %p10 = scmp.ge.s32.totalorder %s9, 4
    %s19 = sphi 0, %s21
    %s22 = sphi 0, %s19
    %s23 = sphi 0, %s22
    %s39 = sphi 0, %s23
    %s43 = sphi 0, %s43
    %s45 = sphi 0, %s43
    %s46 = sphi 0, %s45
    %s60 = sphi 0, %s46
    %s64 = sphi 0, %s64
    %s66 = sphi 0, %s64
    %s67 = sphi 0, %s66
    %s81 = sphi 0, %s67
    %s87 = sphi 0, %s89
    %s90 = sphi 0, %s87
    %s91 = sphi 0, %s90
    %s107 = sphi 0, %s91
  $region4: #{conv_decoder_forward.6} parent=0 // loop_header_branch
    %12 = sbr.rel (%p10) target = $region8
  $region5: #{conv_decoder_forward.6} parent=0 // loop_body
    %s14 = ssub.s32 %s9, 1
    %s15 = ssub.s32 %s9, 2
    %s16 = sadd.s32 %s9, 1
    %s17 = ssub.s32 %s9, %s16
    %p18 = scmp.eq.s32.totalorder %s17, 0
    %s20 = sadd.s32 %s19, 1
    %s21 = scalar_select %p18, %s19, %s20
    %p24 = pneg %p18
    %p25 = scmp.eq.s32.totalorder %s9, 1
    %p26 = por %p24, %p25
    %p27 = scmp.ne.s32.totalorder %s19, %s22
    %p28 = scmp.eq.s32.totalorder %s9, 0
    %p29 = por %p27, %p28
    %p30 = scmp.ne.s32.totalorder %s19, %s22
    %p31 = scmp.eq.s32.totalorder %s14, 1
    %p32 = por %p30, %p31
    %p33 = scmp.ne.s32.totalorder %s22, %s23
    %p34 = scmp.eq.s32.totalorder %s14, 0
    %p35 = por %p33, %p34
    %p36 = scmp.ne.s32.totalorder %s22, %s23
    %p37 = scmp.eq.s32.totalorder %s15, 1
    %p38 = por %p36, %p37
    %p40 = scmp.ne.s32.totalorder %s23, %s39
    %p41 = scmp.eq.s32.totalorder %s15, 0
    %p42 = por %p40, %p41
    %s44 = sadd.s32 %s43, 1
    %p47 = scmp.eq.s32.totalorder %s9, 1
    %p48 = scmp.ne.s32.totalorder %s43, %s45
    %p49 = scmp.eq.s32.totalorder %s9, 0
    %p50 = por %p48, %p49
    %p51 = scmp.ne.s32.totalorder %s43, %s45
    %p52 = scmp.eq.s32.totalorder %s14, 1
    %p53 = por %p51, %p52
    %p54 = scmp.ne.s32.totalorder %s45, %s46
    %p55 = scmp.eq.s32.totalorder %s14, 0
    %p56 = por %p54, %p55
    %p57 = scmp.ne.s32.totalorder %s45, %s46
    %p58 = scmp.eq.s32.totalorder %s15, 1
    %p59 = por %p57, %p58
    %p61 = scmp.ne.s32.totalorder %s46, %s60
    %p62 = scmp.eq.s32.totalorder %s15, 0
    %p63 = por %p61, %p62
    %s65 = sadd.s32 %s64, 1
    %p68 = scmp.eq.s32.totalorder %s9, 1
    %p69 = scmp.ne.s32.totalorder %s64, %s66
    %p70 = scmp.eq.s32.totalorder %s9, 0
    %p71 = por %p69, %p70
    %p72 = scmp.ne.s32.totalorder %s64, %s66
    %p73 = scmp.eq.s32.totalorder %s14, 1
    %p74 = por %p72, %p73
    %p75 = scmp.ne.s32.totalorder %s66, %s67
    %p76 = scmp.eq.s32.totalorder %s14, 0
    %p77 = por %p75, %p76
    %p78 = scmp.ne.s32.totalorder %s66, %s67
    %p79 = scmp.eq.s32.totalorder %s15, 1
    %p80 = por %p78, %p79
    %p82 = scmp.ne.s32.totalorder %s67, %s81
    %p83 = scmp.eq.s32.totalorder %s15, 0
    %p84 = por %p82, %p83
    %s85 = ssub.s32 %s9, %s16
    %p86 = scmp.eq.s32.totalorder %s85, 0
    %s88 = sadd.s32 %s87, 1
    %s89 = scalar_select %p86, %s87, %s88
    %p92 = pneg %p86
    %p93 = scmp.eq.s32.totalorder %s9, 1
    %p94 = por %p92, %p93
    %p95 = scmp.ne.s32.totalorder %s87, %s90
    %p96 = scmp.eq.s32.totalorder %s9, 0
    %p97 = por %p95, %p96
    %p98 = scmp.ne.s32.totalorder %s87, %s90
    %p99 = scmp.eq.s32.totalorder %s14, 1
    %p100 = por %p98, %p99
    %p101 = scmp.ne.s32.totalorder %s90, %s91
    %p102 = scmp.eq.s32.totalorder %s14, 0
    %p103 = por %p101, %p102
    %p104 = scmp.ne.s32.totalorder %s90, %s91
    %p105 = scmp.eq.s32.totalorder %s15, 1
    %p106 = por %p104, %p105
    %p108 = scmp.ne.s32.totalorder %s91, %s107
    %p109 = scmp.eq.s32.totalorder %s15, 0
    %p110 = por %p108, %p109
    %p111 = scmp.le.s32.totalorder 1, %s9
    %p112 = scmp.lt.s32.totalorder %s9, 3
    %p113 = pnand %p111, %p112
    %p114 = pneg %p113
    // Predicated region
    $region9: #{conv_decoder_forward.6} parent=5 // pred_check
      _
    $region10: #{conv_decoder_forward.6} parent=5 // pred_check_branch
      %116 = sbr.rel (%p113) target = $region12
    $region11: #{conv_decoder_forward.6} parent=5 // pred_region
      %s117 = ssub.s32 %s9, 1
      // Predicated region
      $region13: #{conv_decoder_forward.6} parent=11 // pred_check
        %p118 = pneg %p56
      $region14: #{conv_decoder_forward.6} parent=11 // pred_check_branch
        %120 = sbr.rel (%p118) target = $region16
      $region15: #{conv_decoder_forward.6} parent=11 // pred_region
        _
      $region16: #{conv_decoder_forward.6} parent=11 // pred_fallthru
        _
      // Predicated region
      $region17: #{conv_decoder_forward.6} parent=11 // pred_check
        %p121 = pneg %p77
      $region18: #{conv_decoder_forward.6} parent=11 // pred_check_branch
        %123 = sbr.rel (%p121) target = $region20
      $region19: #{conv_decoder_forward.6} parent=11 // pred_region
        _
      $region20: #{conv_decoder_forward.6} parent=11 // pred_fallthru
        _
    $region12: #{conv_decoder_forward.6} parent=5 // pred_fallthru
      _
    %p124 = scmp.lt.s32.totalorder %s9, 2
    // Predicated region
    $region21: #{conv_decoder_forward.6} parent=5 // pred_check
      %p125 = pneg %p124
    $region22: #{conv_decoder_forward.6} parent=5 // pred_check_branch
      %127 = sbr.rel (%p125) target = $region24
    $region23: #{conv_decoder_forward.6} parent=5 // pred_region
      // Predicated region
      $region25: #{conv_decoder_forward.6} parent=23 // pred_check
        %p128 = pneg %p29
      $region26: #{conv_decoder_forward.6} parent=23 // pred_check_branch
        %130 = sbr.rel (%p128) target = $region28
      $region27: #{conv_decoder_forward.6} parent=23 // pred_region
        %s131 = smul.u32 32, %s9
        %p132 = scmp.lt.s32.totalorder %s131, 63
        %s133 = scalar_select %p132, %s131, 63
        %s134 = smul.addr %s133, 8
        %s135 = smul.addr %s134, 4
        %s136 = scalar_lea.vmem %s0, %s135
        %s137 = smul.u32 32, %s9
      $region28: #{conv_decoder_forward.6} parent=23 // pred_fallthru
        _
    $region24: #{conv_decoder_forward.6} parent=5 // pred_fallthru
      _
    %p138 = scmp.le.s32.totalorder 1, %s9
    %p139 = scmp.lt.s32.totalorder %s9, 3
    %p140 = pnand %p138, %p139
    %p141 = pneg %p140
    // Predicated region
    $region29: #{conv_decoder_forward.6} parent=5 // pred_check
      _
    $region30: #{conv_decoder_forward.6} parent=5 // pred_check_branch
      %143 = sbr.rel (%p140) target = $region32
    $region31: #{conv_decoder_forward.6} parent=5 // pred_region
      %s144 = ssub.s32 %s9, 1
      %s145 = smul.u32 32, %s14
      %p146 = scmp.lt.s32.totalorder %s145, 63
      %s147 = scalar_select %p146, %s145, 63
      %s148 = smul.addr %s147, 8
      %s149 = smul.addr %s148, 4
      %s150 = scalar_lea.vmem %s0, %s149
      %p151 = pneg %p35
      %p152 = pneg %p32
      %p153 = pneg %p56
      %p154 = pneg %p53
      %p155 = pneg %p77
      %p156 = pneg %p74
      %p157 = pneg %p103
      %p158 = pneg %p100
      %s159 = smul.u32 32, %s14
      %p160 = scmp.lt.s32.totalorder %s159, 63
      %s161 = scalar_select %p160, %s159, 63
      %s162 = smul.addr %s161, 4
      %s163 = scalar_lea.vmem %s3, %s162
      %s164 = smul.u32 32, %s14
      %p165 = scmp.lt.s32.totalorder %s164, 63
      %s166 = scalar_select %p165, %s164, 63
      %s167 = smul.addr %s166, 8
      %s168 = smul.addr %s167, 4
      %s169 = scalar_lea.vmem %s0, %s168
      %s170 = smul.u32 32, %s14
      %s171 = smul.u32 32, %s14
      %p172 = scmp.lt.s32.totalorder %s171, 63
      %s173 = scalar_select %p172, %s171, 63
      %s174 = smul.addr %s173, 4
      %s175 = scalar_lea.vmem %s3, %s174
      %s176 = smul.u32 32, %s14
      %v178 = vld [vmem:[%s169] sm:$0xff]
      %v179 = vld [vmem:[%s169 + $0x8] sm:$0xff]
      %v180 = vld [vmem:[%s169 + $0x10] sm:$0xff]
      %v181 = vld [vmem:[%s169 + $0x18] sm:$0xff]
      %v182 = vld [vmem:[%s169 + $0x20] sm:$0xff]
      %v183 = vld [vmem:[%s169 + $0x28] sm:$0xff]
      %v184 = vld [vmem:[%s169 + $0x30] sm:$0xff]
      %v185 = vld [vmem:[%s169 + $0x38] sm:$0xff]
      %v186 = vld [vmem:[%s169 + $0x40] sm:$0xff]
      %v187 = vld [vmem:[%s169 + $0x48] sm:$0xff]
      %v188 = vld [vmem:[%s169 + $0x50] sm:$0xff]
      %v189 = vld [vmem:[%s169 + $0x58] sm:$0xff]
      %v190 = vld [vmem:[%s169 + $0x60] sm:$0xff]
      %v191 = vld [vmem:[%s169 + $0x68] sm:$0xff]
      %v192 = vld [vmem:[%s169 + $0x70] sm:$0xff]
      %v193 = vld [vmem:[%s169 + $0x78] sm:$0xff]
      %v194 = vld [vmem:[%s169 + $0x80] sm:$0xff]
      %v195 = vld [vmem:[%s169 + $0x88] sm:$0xff]
      %v196 = vld [vmem:[%s169 + $0x90] sm:$0xff]
      %v197 = vld [vmem:[%s169 + $0x98] sm:$0xff]
      %v198 = vld [vmem:[%s169 + $0xa0] sm:$0xff]
      %v199 = vld [vmem:[%s169 + $0xa8] sm:$0xff]
      %v200 = vld [vmem:[%s169 + $0xb0] sm:$0xff]
      %v201 = vld [vmem:[%s169 + $0xb8] sm:$0xff]
      %v202 = vld [vmem:[%s169 + $0xc0] sm:$0xff]
      %v203 = vld [vmem:[%s169 + $0xc8] sm:$0xff]
      %v204 = vld [vmem:[%s169 + $0xd0] sm:$0xff]
      %v205 = vld [vmem:[%s169 + $0xd8] sm:$0xff]
      %v206 = vld [vmem:[%s169 + $0xe0] sm:$0xff]
      %v207 = vld [vmem:[%s169 + $0xe8] sm:$0xff]
      %v208 = vld [vmem:[%s169 + $0xf0] sm:$0xff]
      %v209 = vld [vmem:[%s169 + $0xf8] sm:$0xff]
      %v210 = vld [vmem:[%s169 + $0x100] sm:$0xff]
      %v211 = vld [vmem:[%s169 + $0x108] sm:$0xff]
      %v212 = vld [vmem:[%s169 + $0x110] sm:$0xff]
      %v213 = vld [vmem:[%s169 + $0x118] sm:$0xff]
      %v214 = vld [vmem:[%s169 + $0x120] sm:$0xff]
      %v215 = vld [vmem:[%s169 + $0x128] sm:$0xff]
      %v216 = vld [vmem:[%s169 + $0x130] sm:$0xff]
      %v217 = vld [vmem:[%s169 + $0x138] sm:$0xff]
      %v218 = vld [vmem:[%s169 + $0x140] sm:$0xff]
      %v219 = vld [vmem:[%s169 + $0x148] sm:$0xff]
      %v220 = vld [vmem:[%s169 + $0x150] sm:$0xff]
      %v221 = vld [vmem:[%s169 + $0x158] sm:$0xff]
      %v222 = vld [vmem:[%s169 + $0x160] sm:$0xff]
      %v223 = vld [vmem:[%s169 + $0x168] sm:$0xff]
      %v224 = vld [vmem:[%s169 + $0x170] sm:$0xff]
      %v225 = vld [vmem:[%s169 + $0x178] sm:$0xff]
      %v226 = vld [vmem:[%s169 + $0x180] sm:$0xff]
      %v227 = vld [vmem:[%s169 + $0x188] sm:$0xff]
      %v228 = vld [vmem:[%s169 + $0x190] sm:$0xff]
      %v229 = vld [vmem:[%s169 + $0x198] sm:$0xff]
      %v230 = vld [vmem:[%s169 + $0x1a0] sm:$0xff]
      %v231 = vld [vmem:[%s169 + $0x1a8] sm:$0xff]
      %v232 = vld [vmem:[%s169 + $0x1b0] sm:$0xff]
      %v233 = vld [vmem:[%s169 + $0x1b8] sm:$0xff]
      %v234 = vld [vmem:[%s169 + $0x1c0] sm:$0xff]
      %v235 = vld [vmem:[%s169 + $0x1c8] sm:$0xff]
      %v236 = vld [vmem:[%s169 + $0x1d0] sm:$0xff]
      %v237 = vld [vmem:[%s169 + $0x1d8] sm:$0xff]
      %v238 = vld [vmem:[%s169 + $0x1e0] sm:$0xff]
      %v239 = vld [vmem:[%s169 + $0x1e8] sm:$0xff]
      %v240 = vld [vmem:[%s169 + $0x1f0] sm:$0xff]
      %v241 = vld [vmem:[%s169 + $0x1f8] sm:$0xff]
      %v242 = vld [vmem:[%s169 + $0x200] sm:$0xff]
      %v243 = vld [vmem:[%s169 + $0x208] sm:$0xff]
      %v244 = vld [vmem:[%s169 + $0x210] sm:$0xff]
      %v245 = vld [vmem:[%s169 + $0x218] sm:$0xff]
      %v246 = vld [vmem:[%s169 + $0x220] sm:$0xff]
      %v247 = vld [vmem:[%s169 + $0x228] sm:$0xff]
      %v248 = vld [vmem:[%s169 + $0x230] sm:$0xff]
      %v249 = vld [vmem:[%s169 + $0x238] sm:$0xff]
      %v250 = vld [vmem:[%s169 + $0x240] sm:$0xff]
      %v251 = vld [vmem:[%s169 + $0x248] sm:$0xff]
      %v252 = vld [vmem:[%s169 + $0x250] sm:$0xff]
      %v253 = vld [vmem:[%s169 + $0x258] sm:$0xff]
      %v254 = vld [vmem:[%s169 + $0x260] sm:$0xff]
      %v255 = vld [vmem:[%s169 + $0x268] sm:$0xff]
      %v256 = vld [vmem:[%s169 + $0x270] sm:$0xff]
      %v257 = vld [vmem:[%s169 + $0x278] sm:$0xff]
      %v258 = vld [vmem:[%s169 + $0x280] sm:$0xff]
      %v259 = vld [vmem:[%s169 + $0x288] sm:$0xff]
      %v260 = vld [vmem:[%s169 + $0x290] sm:$0xff]
      %v261 = vld [vmem:[%s169 + $0x298] sm:$0xff]
      %v262 = vld [vmem:[%s169 + $0x2a0] sm:$0xff]
      %v263 = vld [vmem:[%s169 + $0x2a8] sm:$0xff]
      %v264 = vld [vmem:[%s169 + $0x2b0] sm:$0xff]
      %v265 = vld [vmem:[%s169 + $0x2b8] sm:$0xff]
      %v266 = vld [vmem:[%s169 + $0x2c0] sm:$0xff]
      %v267 = vld [vmem:[%s169 + $0x2c8] sm:$0xff]
      %v268 = vld [vmem:[%s169 + $0x2d0] sm:$0xff]
      %v269 = vld [vmem:[%s169 + $0x2d8] sm:$0xff]
      %v270 = vld [vmem:[%s169 + $0x2e0] sm:$0xff]
      %v271 = vld [vmem:[%s169 + $0x2e8] sm:$0xff]
      %v272 = vld [vmem:[%s169 + $0x2f0] sm:$0xff]
      %v273 = vld [vmem:[%s169 + $0x2f8] sm:$0xff]
      %v274 = vld [vmem:[%s169 + $0x300] sm:$0xff]
      %v275 = vld [vmem:[%s169 + $0x308] sm:$0xff]
      %v276 = vld [vmem:[%s169 + $0x310] sm:$0xff]
      %v277 = vld [vmem:[%s169 + $0x318] sm:$0xff]
      %v278 = vld [vmem:[%s169 + $0x320] sm:$0xff]
      %v279 = vld [vmem:[%s169 + $0x328] sm:$0xff]
      %v280 = vld [vmem:[%s169 + $0x330] sm:$0xff]
      %v281 = vld [vmem:[%s169 + $0x338] sm:$0xff]
      %v282 = vld [vmem:[%s169 + $0x340] sm:$0xff]
      %v283 = vld [vmem:[%s169 + $0x348] sm:$0xff]
      %v284 = vld [vmem:[%s169 + $0x350] sm:$0xff]
      %v285 = vld [vmem:[%s169 + $0x358] sm:$0xff]
      %v286 = vld [vmem:[%s169 + $0x360] sm:$0xff]
      %v287 = vld [vmem:[%s169 + $0x368] sm:$0xff]
      %v288 = vld [vmem:[%s169 + $0x370] sm:$0xff]
      %v289 = vld [vmem:[%s169 + $0x378] sm:$0xff]
      %v290 = vld [vmem:[%s169 + $0x380] sm:$0xff]
      %v291 = vld [vmem:[%s169 + $0x388] sm:$0xff]
      %v292 = vld [vmem:[%s169 + $0x390] sm:$0xff]
      %v293 = vld [vmem:[%s169 + $0x398] sm:$0xff]
      %v294 = vld [vmem:[%s169 + $0x3a0] sm:$0xff]
      %v295 = vld [vmem:[%s169 + $0x3a8] sm:$0xff]
      %v296 = vld [vmem:[%s169 + $0x3b0] sm:$0xff]
      %v297 = vld [vmem:[%s169 + $0x3b8] sm:$0xff]
      %v298 = vld [vmem:[%s169 + $0x3c0] sm:$0xff]
      %v299 = vld [vmem:[%s169 + $0x3c8] sm:$0xff]
      %v300 = vld [vmem:[%s169 + $0x3d0] sm:$0xff]
      %v301 = vld [vmem:[%s169 + $0x3d8] sm:$0xff]
      %v302 = vld [vmem:[%s169 + $0x3e0] sm:$0xff]
      %v303 = vld [vmem:[%s169 + $0x3e8] sm:$0xff]
      %v304 = vld [vmem:[%s169 + $0x3f0] sm:$0xff]
      %v305 = vld [vmem:[%s169 + $0x3f8] sm:$0xff]
      %v306 = vld [vmem:[%s1] sm:$0xf]
      %v307 = vld [vmem:[%s1 + $0x4] sm:$0xf]
      %v308 = vld [vmem:[%s1 + $0x8] sm:$0xf]
      %v309 = vld [vmem:[%s1 + $0xc] sm:$0xf]
      %v310 = vld [vmem:[%s1 + $0x10] sm:$0xf]
      %v311 = vld [vmem:[%s1 + $0x14] sm:$0xf]
      %v312 = vld [vmem:[%s1 + $0x18] sm:$0xf]
      %v313 = vld [vmem:[%s1 + $0x1c] sm:$0xf]
      %v314 = vld [vmem:[%s1 + $0x20] sm:$0xf]
      %v315 = vld [vmem:[%s1 + $0x24] sm:$0xf]
      %v316 = vld [vmem:[%s1 + $0x28] sm:$0xf]
      %v317 = vld [vmem:[%s1 + $0x2c] sm:$0xf]
      %v318 = vld [vmem:[%s1 + $0x30] sm:$0xf]
      %v319 = vld [vmem:[%s1 + $0x34] sm:$0xf]
      %v320 = vld [vmem:[%s1 + $0x38] sm:$0xf]
      %v321 = vld [vmem:[%s1 + $0x3c] sm:$0xf]
      %v322 = vld [vmem:[%s1 + $0x40] sm:$0xf]
      %v323 = vld [vmem:[%s1 + $0x44] sm:$0xf]
      %v324 = vld [vmem:[%s1 + $0x48] sm:$0xf]
      %v325 = vld [vmem:[%s1 + $0x4c] sm:$0xf]
      %v326 = vld [vmem:[%s1 + $0x50] sm:$0xf]
      %v327 = vld [vmem:[%s1 + $0x54] sm:$0xf]
      %v328 = vld [vmem:[%s1 + $0x58] sm:$0xf]
      %v329 = vld [vmem:[%s1 + $0x5c] sm:$0xf]
      %v330 = vld [vmem:[%s1 + $0x60] sm:$0xf]
      %v331 = vld [vmem:[%s1 + $0x64] sm:$0xf]
      %v332 = vld [vmem:[%s1 + $0x68] sm:$0xf]
      %v333 = vld [vmem:[%s1 + $0x6c] sm:$0xf]
      %v334 = vld [vmem:[%s1 + $0x70] sm:$0xf]
      %v335 = vld [vmem:[%s1 + $0x74] sm:$0xf]
      %v336 = vld [vmem:[%s1 + $0x78] sm:$0xf]
      %v337 = vld [vmem:[%s1 + $0x7c] sm:$0xf]
      %v338 = vld [vmem:[%s1 + $0x80] sm:$0xf]
      %v339 = vld [vmem:[%s1 + $0x84] sm:$0xf]
      %v340 = vld [vmem:[%s1 + $0x88] sm:$0xf]
      %v341 = vld [vmem:[%s1 + $0x8c] sm:$0xf]
      %v342 = vld [vmem:[%s1 + $0x90] sm:$0xf]
      %v343 = vld [vmem:[%s1 + $0x94] sm:$0xf]
      %v344 = vld [vmem:[%s1 + $0x98] sm:$0xf]
      %v345 = vld [vmem:[%s1 + $0x9c] sm:$0xf]
      %v346 = vld [vmem:[%s1 + $0xa0] sm:$0xf]
      %v347 = vld [vmem:[%s1 + $0xa4] sm:$0xf]
      %v348 = vld [vmem:[%s1 + $0xa8] sm:$0xf]
      %v349 = vld [vmem:[%s1 + $0xac] sm:$0xf]
      %v350 = vld [vmem:[%s1 + $0xb0] sm:$0xf]
      %v351 = vld [vmem:[%s1 + $0xb4] sm:$0xf]
      %v352 = vld [vmem:[%s1 + $0xb8] sm:$0xf]
      %v353 = vld [vmem:[%s1 + $0xbc] sm:$0xf]
      %v354 = vld [vmem:[%s1 + $0xc0] sm:$0xf]
      %v355 = vld [vmem:[%s1 + $0xc4] sm:$0xf]
      %v356 = vld [vmem:[%s1 + $0xc8] sm:$0xf]
      %v357 = vld [vmem:[%s1 + $0xcc] sm:$0xf]
      %v358 = vld [vmem:[%s1 + $0xd0] sm:$0xf]
      %v359 = vld [vmem:[%s1 + $0xd4] sm:$0xf]
      %v360 = vld [vmem:[%s1 + $0xd8] sm:$0xf]
      %v361 = vld [vmem:[%s1 + $0xdc] sm:$0xf]
      %v362 = vld [vmem:[%s1 + $0xe0] sm:$0xf]
      %v363 = vld [vmem:[%s1 + $0xe4] sm:$0xf]
      %v364 = vld [vmem:[%s1 + $0xe8] sm:$0xf]
      %v365 = vld [vmem:[%s1 + $0xec] sm:$0xf]
      %v366 = vld [vmem:[%s1 + $0xf0] sm:$0xf]
      %v367 = vld [vmem:[%s1 + $0xf4] sm:$0xf]
      %v368 = vld [vmem:[%s1 + $0xf8] sm:$0xf]
      %v369 = vld [vmem:[%s1 + $0xfc] sm:$0xf]
      %v370 = vld [vmem:[%s1 + $0x100] sm:$0xf]
      %v371 = vld [vmem:[%s1 + $0x104] sm:$0xf]
      %v372 = vld [vmem:[%s1 + $0x108] sm:$0xf]
      %v373 = vld [vmem:[%s1 + $0x10c] sm:$0xf]
      %v374 = vld [vmem:[%s1 + $0x110] sm:$0xf]
      %v375 = vld [vmem:[%s1 + $0x114] sm:$0xf]
      %v376 = vld [vmem:[%s1 + $0x118] sm:$0xf]
      %v377 = vld [vmem:[%s1 + $0x11c] sm:$0xf]
      %v378 = vld [vmem:[%s1 + $0x120] sm:$0xf]
      %v379 = vld [vmem:[%s1 + $0x124] sm:$0xf]
      %v380 = vld [vmem:[%s1 + $0x128] sm:$0xf]
      %v381 = vld [vmem:[%s1 + $0x12c] sm:$0xf]
      %v382 = vld [vmem:[%s1 + $0x130] sm:$0xf]
      %v383 = vld [vmem:[%s1 + $0x134] sm:$0xf]
      %v384 = vld [vmem:[%s1 + $0x138] sm:$0xf]
      %v385 = vld [vmem:[%s1 + $0x13c] sm:$0xf]
      %v386 = vld [vmem:[%s1 + $0x140] sm:$0xf]
      %v387 = vld [vmem:[%s1 + $0x144] sm:$0xf]
      %v388 = vld [vmem:[%s1 + $0x148] sm:$0xf]
      %v389 = vld [vmem:[%s1 + $0x14c] sm:$0xf]
      %v390 = vld [vmem:[%s1 + $0x150] sm:$0xf]
      %v391 = vld [vmem:[%s1 + $0x154] sm:$0xf]
      %v392 = vld [vmem:[%s1 + $0x158] sm:$0xf]
      %v393 = vld [vmem:[%s1 + $0x15c] sm:$0xf]
      %v394 = vld [vmem:[%s1 + $0x160] sm:$0xf]
      %v395 = vld [vmem:[%s1 + $0x164] sm:$0xf]
      %v396 = vld [vmem:[%s1 + $0x168] sm:$0xf]
      %v397 = vld [vmem:[%s1 + $0x16c] sm:$0xf]
      %v398 = vld [vmem:[%s1 + $0x170] sm:$0xf]
      %v399 = vld [vmem:[%s1 + $0x174] sm:$0xf]
      %v400 = vld [vmem:[%s1 + $0x178] sm:$0xf]
      %v401 = vld [vmem:[%s1 + $0x17c] sm:$0xf]
      %v402 = vld [vmem:[%s1 + $0x180] sm:$0xf]
      %v403 = vld [vmem:[%s1 + $0x184] sm:$0xf]
      %v404 = vld [vmem:[%s1 + $0x188] sm:$0xf]
      %v405 = vld [vmem:[%s1 + $0x18c] sm:$0xf]
      %v406 = vld [vmem:[%s1 + $0x190] sm:$0xf]
      %v407 = vld [vmem:[%s1 + $0x194] sm:$0xf]
      %v408 = vld [vmem:[%s1 + $0x198] sm:$0xf]
      %v409 = vld [vmem:[%s1 + $0x19c] sm:$0xf]
      %v410 = vld [vmem:[%s1 + $0x1a0] sm:$0xf]
      %v411 = vld [vmem:[%s1 + $0x1a4] sm:$0xf]
      %v412 = vld [vmem:[%s1 + $0x1a8] sm:$0xf]
      %v413 = vld [vmem:[%s1 + $0x1ac] sm:$0xf]
      %v414 = vld [vmem:[%s1 + $0x1b0] sm:$0xf]
      %v415 = vld [vmem:[%s1 + $0x1b4] sm:$0xf]
      %v416 = vld [vmem:[%s1 + $0x1b8] sm:$0xf]
      %v417 = vld [vmem:[%s1 + $0x1bc] sm:$0xf]
      %v418 = vld [vmem:[%s1 + $0x1c0] sm:$0xf]
      %v419 = vld [vmem:[%s1 + $0x1c4] sm:$0xf]
      %v420 = vld [vmem:[%s1 + $0x1c8] sm:$0xf]
      %v421 = vld [vmem:[%s1 + $0x1cc] sm:$0xf]
      %v422 = vld [vmem:[%s1 + $0x1d0] sm:$0xf]
      %v423 = vld [vmem:[%s1 + $0x1d4] sm:$0xf]
      %v424 = vld [vmem:[%s1 + $0x1d8] sm:$0xf]
      %v425 = vld [vmem:[%s1 + $0x1dc] sm:$0xf]
      %v426 = vld [vmem:[%s1 + $0x1e0] sm:$0xf]
      %v427 = vld [vmem:[%s1 + $0x1e4] sm:$0xf]
      %v428 = vld [vmem:[%s1 + $0x1e8] sm:$0xf]
      %v429 = vld [vmem:[%s1 + $0x1ec] sm:$0xf]
      %v430 = vld [vmem:[%s1 + $0x1f0] sm:$0xf]
      %v431 = vld [vmem:[%s1 + $0x1f4] sm:$0xf]
      %v432 = vld [vmem:[%s1 + $0x1f8] sm:$0xf]
      %v433 = vld [vmem:[%s1 + $0x1fc] sm:$0xf]
      %v434 = vld [vmem:[%s2] sm:$0x1]
      %v436 = vlaneseq
      %v437 = vshrl.u32 %v436, 7
      %v438 = vsub.s32 0, %v437
      %v439 = vrot.slane %v434, %v438
      %v569 = vunpack.c.l.b16 %v178
      %v570 = vunpack.c.h.b16 %v178
      %v571 = vunpack.c.l.b16 %v179
      %v572 = vunpack.c.h.b16 %v179
      %v573 = vunpack.c.l.b16 %v180
      %v574 = vunpack.c.h.b16 %v180
      %v575 = vunpack.c.l.b16 %v181
      %v576 = vunpack.c.h.b16 %v181
      %v577 = vunpack.c.l.b16 %v182
      %v578 = vunpack.c.h.b16 %v182
      %v579 = vunpack.c.l.b16 %v183
      %v580 = vunpack.c.h.b16 %v183
      %v581 = vunpack.c.l.b16 %v184
      %v582 = vunpack.c.h.b16 %v184
      %v583 = vunpack.c.l.b16 %v185
      %v584 = vunpack.c.h.b16 %v185
      %v585 = vunpack.c.l.b16 %v186
      %v586 = vunpack.c.h.b16 %v186
      %v587 = vunpack.c.l.b16 %v187
      %v588 = vunpack.c.h.b16 %v187
      %v589 = vunpack.c.l.b16 %v188
      %v590 = vunpack.c.h.b16 %v188
      %v591 = vunpack.c.l.b16 %v189
      %v592 = vunpack.c.h.b16 %v189
      %v593 = vunpack.c.l.b16 %v190
      %v594 = vunpack.c.h.b16 %v190
      %v595 = vunpack.c.l.b16 %v191
      %v596 = vunpack.c.h.b16 %v191
      %v597 = vunpack.c.l.b16 %v192
      %v598 = vunpack.c.h.b16 %v192
      %v599 = vunpack.c.l.b16 %v193
      %v600 = vunpack.c.h.b16 %v193
      %v601 = vunpack.c.l.b16 %v194
      %v602 = vunpack.c.h.b16 %v194
      %v603 = vunpack.c.l.b16 %v195
      %v604 = vunpack.c.h.b16 %v195
      %v605 = vunpack.c.l.b16 %v196
      %v606 = vunpack.c.h.b16 %v196
      %v607 = vunpack.c.l.b16 %v197
      %v608 = vunpack.c.h.b16 %v197
      %v609 = vunpack.c.l.b16 %v198
      %v610 = vunpack.c.h.b16 %v198
      %v611 = vunpack.c.l.b16 %v199
      %v612 = vunpack.c.h.b16 %v199
      %v613 = vunpack.c.l.b16 %v200
      %v614 = vunpack.c.h.b16 %v200
      %v615 = vunpack.c.l.b16 %v201
      %v616 = vunpack.c.h.b16 %v201
      %v617 = vunpack.c.l.b16 %v202
      %v618 = vunpack.c.h.b16 %v202
      %v619 = vunpack.c.l.b16 %v203
      %v620 = vunpack.c.h.b16 %v203
      %v621 = vunpack.c.l.b16 %v204
      %v622 = vunpack.c.h.b16 %v204
      %v623 = vunpack.c.l.b16 %v205
      %v624 = vunpack.c.h.b16 %v205
      %v625 = vunpack.c.l.b16 %v206
      %v626 = vunpack.c.h.b16 %v206
      %v627 = vunpack.c.l.b16 %v207
      %v628 = vunpack.c.h.b16 %v207
      %v629 = vunpack.c.l.b16 %v208
      %v630 = vunpack.c.h.b16 %v208
      %v631 = vunpack.c.l.b16 %v209
      %v632 = vunpack.c.h.b16 %v209
      %v633 = vunpack.c.l.b16 %v210
      %v634 = vunpack.c.h.b16 %v210
      %v635 = vunpack.c.l.b16 %v211
      %v636 = vunpack.c.h.b16 %v211
      %v637 = vunpack.c.l.b16 %v212
      %v638 = vunpack.c.h.b16 %v212
      %v639 = vunpack.c.l.b16 %v213
      %v640 = vunpack.c.h.b16 %v213
      %v641 = vunpack.c.l.b16 %v214
      %v642 = vunpack.c.h.b16 %v214
      %v643 = vunpack.c.l.b16 %v215
      %v644 = vunpack.c.h.b16 %v215
      %v645 = vunpack.c.l.b16 %v216
      %v646 = vunpack.c.h.b16 %v216
      %v647 = vunpack.c.l.b16 %v217
      %v648 = vunpack.c.h.b16 %v217
      %v649 = vunpack.c.l.b16 %v218
      %v650 = vunpack.c.h.b16 %v218
      %v651 = vunpack.c.l.b16 %v219
      %v652 = vunpack.c.h.b16 %v219
      %v653 = vunpack.c.l.b16 %v220
      %v654 = vunpack.c.h.b16 %v220
      %v655 = vunpack.c.l.b16 %v221
      %v656 = vunpack.c.h.b16 %v221
      %v657 = vunpack.c.l.b16 %v222
      %v658 = vunpack.c.h.b16 %v222
      %v659 = vunpack.c.l.b16 %v223
      %v660 = vunpack.c.h.b16 %v223
      %v661 = vunpack.c.l.b16 %v224
      %v662 = vunpack.c.h.b16 %v224
      %v663 = vunpack.c.l.b16 %v225
      %v664 = vunpack.c.h.b16 %v225
      %v665 = vunpack.c.l.b16 %v226
      %v666 = vunpack.c.h.b16 %v226
      %v667 = vunpack.c.l.b16 %v227
      %v668 = vunpack.c.h.b16 %v227
      %v669 = vunpack.c.l.b16 %v228
      %v670 = vunpack.c.h.b16 %v228
      %v671 = vunpack.c.l.b16 %v229
      %v672 = vunpack.c.h.b16 %v229
      %v673 = vunpack.c.l.b16 %v230
      %v674 = vunpack.c.h.b16 %v230
      %v675 = vunpack.c.l.b16 %v231
      %v676 = vunpack.c.h.b16 %v231
      %v677 = vunpack.c.l.b16 %v232
      %v678 = vunpack.c.h.b16 %v232
      %v679 = vunpack.c.l.b16 %v233
      %v680 = vunpack.c.h.b16 %v233
      %v681 = vunpack.c.l.b16 %v234
      %v682 = vunpack.c.h.b16 %v234
      %v683 = vunpack.c.l.b16 %v235
      %v684 = vunpack.c.h.b16 %v235
      %v685 = vunpack.c.l.b16 %v236
      %v686 = vunpack.c.h.b16 %v236
      %v687 = vunpack.c.l.b16 %v237
      %v688 = vunpack.c.h.b16 %v237
      %v689 = vunpack.c.l.b16 %v238
      %v690 = vunpack.c.h.b16 %v238
      %v691 = vunpack.c.l.b16 %v239
      %v692 = vunpack.c.h.b16 %v239
      %v693 = vunpack.c.l.b16 %v240
      %v694 = vunpack.c.h.b16 %v240
      %v695 = vunpack.c.l.b16 %v241
      %v696 = vunpack.c.h.b16 %v241
      %v697 = vunpack.c.l.b16 %v242
      %v698 = vunpack.c.h.b16 %v242
      %v699 = vunpack.c.l.b16 %v243
      %v700 = vunpack.c.h.b16 %v243
      %v701 = vunpack.c.l.b16 %v244
      %v702 = vunpack.c.h.b16 %v244
      %v703 = vunpack.c.l.b16 %v245
      %v704 = vunpack.c.h.b16 %v245
      %v705 = vunpack.c.l.b16 %v246
      %v706 = vunpack.c.h.b16 %v246
      %v707 = vunpack.c.l.b16 %v247
      %v708 = vunpack.c.h.b16 %v247
      %v709 = vunpack.c.l.b16 %v248
      %v710 = vunpack.c.h.b16 %v248
      %v711 = vunpack.c.l.b16 %v249
      %v712 = vunpack.c.h.b16 %v249
      %v713 = vunpack.c.l.b16 %v250
      %v714 = vunpack.c.h.b16 %v250
      %v715 = vunpack.c.l.b16 %v251
      %v716 = vunpack.c.h.b16 %v251
      %v717 = vunpack.c.l.b16 %v252
      %v718 = vunpack.c.h.b16 %v252
      %v719 = vunpack.c.l.b16 %v253
      %v720 = vunpack.c.h.b16 %v253
      %v721 = vunpack.c.l.b16 %v254
      %v722 = vunpack.c.h.b16 %v254
      %v723 = vunpack.c.l.b16 %v255
      %v724 = vunpack.c.h.b16 %v255
      %v725 = vunpack.c.l.b16 %v256
      %v726 = vunpack.c.h.b16 %v256
      %v727 = vunpack.c.l.b16 %v257
      %v728 = vunpack.c.h.b16 %v257
      %v729 = vunpack.c.l.b16 %v258
      %v730 = vunpack.c.h.b16 %v258
      %v731 = vunpack.c.l.b16 %v259
      %v732 = vunpack.c.h.b16 %v259
      %v733 = vunpack.c.l.b16 %v260
      %v734 = vunpack.c.h.b16 %v260
      %v735 = vunpack.c.l.b16 %v261
      %v736 = vunpack.c.h.b16 %v261
      %v737 = vunpack.c.l.b16 %v262
      %v738 = vunpack.c.h.b16 %v262
      %v739 = vunpack.c.l.b16 %v263
      %v740 = vunpack.c.h.b16 %v263
      %v741 = vunpack.c.l.b16 %v264
      %v742 = vunpack.c.h.b16 %v264
      %v743 = vunpack.c.l.b16 %v265
      %v744 = vunpack.c.h.b16 %v265
      %v745 = vunpack.c.l.b16 %v266
      %v746 = vunpack.c.h.b16 %v266
      %v747 = vunpack.c.l.b16 %v267
      %v748 = vunpack.c.h.b16 %v267
      %v749 = vunpack.c.l.b16 %v268
      %v750 = vunpack.c.h.b16 %v268
      %v751 = vunpack.c.l.b16 %v269
      %v752 = vunpack.c.h.b16 %v269
      %v753 = vunpack.c.l.b16 %v270
      %v754 = vunpack.c.h.b16 %v270
      %v755 = vunpack.c.l.b16 %v271
      %v756 = vunpack.c.h.b16 %v271
      %v757 = vunpack.c.l.b16 %v272
      %v758 = vunpack.c.h.b16 %v272
      %v759 = vunpack.c.l.b16 %v273
      %v760 = vunpack.c.h.b16 %v273
      %v761 = vunpack.c.l.b16 %v274
      %v762 = vunpack.c.h.b16 %v274
      %v763 = vunpack.c.l.b16 %v275
      %v764 = vunpack.c.h.b16 %v275
      %v765 = vunpack.c.l.b16 %v276
      %v766 = vunpack.c.h.b16 %v276
      %v767 = vunpack.c.l.b16 %v277
      %v768 = vunpack.c.h.b16 %v277
      %v769 = vunpack.c.l.b16 %v278
      %v770 = vunpack.c.h.b16 %v278
      %v771 = vunpack.c.l.b16 %v279
      %v772 = vunpack.c.h.b16 %v279
      %v773 = vunpack.c.l.b16 %v280
      %v774 = vunpack.c.h.b16 %v280
      %v775 = vunpack.c.l.b16 %v281
      %v776 = vunpack.c.h.b16 %v281
      %v777 = vunpack.c.l.b16 %v282
      %v778 = vunpack.c.h.b16 %v282
      %v779 = vunpack.c.l.b16 %v283
      %v780 = vunpack.c.h.b16 %v283
      %v781 = vunpack.c.l.b16 %v284
      %v782 = vunpack.c.h.b16 %v284
      %v783 = vunpack.c.l.b16 %v285
      %v784 = vunpack.c.h.b16 %v285
      %v785 = vunpack.c.l.b16 %v286
      %v786 = vunpack.c.h.b16 %v286
      %v787 = vunpack.c.l.b16 %v287
      %v788 = vunpack.c.h.b16 %v287
      %v789 = vunpack.c.l.b16 %v288
      %v790 = vunpack.c.h.b16 %v288
      %v791 = vunpack.c.l.b16 %v289
      %v792 = vunpack.c.h.b16 %v289
      %v793 = vunpack.c.l.b16 %v290
      %v794 = vunpack.c.h.b16 %v290
      %v795 = vunpack.c.l.b16 %v291
      %v796 = vunpack.c.h.b16 %v291
      %v797 = vunpack.c.l.b16 %v292
      %v798 = vunpack.c.h.b16 %v292
      %v799 = vunpack.c.l.b16 %v293
      %v800 = vunpack.c.h.b16 %v293
      %v801 = vunpack.c.l.b16 %v294
      %v802 = vunpack.c.h.b16 %v294
      %v803 = vunpack.c.l.b16 %v295
      %v804 = vunpack.c.h.b16 %v295
      %v805 = vunpack.c.l.b16 %v296
      %v806 = vunpack.c.h.b16 %v296
      %v807 = vunpack.c.l.b16 %v297
      %v808 = vunpack.c.h.b16 %v297
      %v809 = vunpack.c.l.b16 %v298
      %v810 = vunpack.c.h.b16 %v298
      %v811 = vunpack.c.l.b16 %v299
      %v812 = vunpack.c.h.b16 %v299
      %v813 = vunpack.c.l.b16 %v300
      %v814 = vunpack.c.h.b16 %v300
      %v815 = vunpack.c.l.b16 %v301
      %v816 = vunpack.c.h.b16 %v301
      %v817 = vunpack.c.l.b16 %v302
      %v818 = vunpack.c.h.b16 %v302
      %v819 = vunpack.c.l.b16 %v303
      %v820 = vunpack.c.h.b16 %v303
      %v821 = vunpack.c.l.b16 %v304
      %v822 = vunpack.c.h.b16 %v304
      %v823 = vunpack.c.l.b16 %v305
      %v824 = vunpack.c.h.b16 %v305
      %v825 = vpack.c.b16 %v577, %v569
      %v826 = vpack.c.b16 %v578, %v570
      %v827 = vpack.c.b16 %v579, %v571
      %v828 = vpack.c.b16 %v580, %v572
      %v829 = vpack.c.b16 %v581, %v573
      %v830 = vpack.c.b16 %v582, %v574
      %v831 = vpack.c.b16 %v583, %v575
      %v832 = vpack.c.b16 %v584, %v576
      %v833 = vpack.c.b16 %v593, %v585
      %v834 = vpack.c.b16 %v594, %v586
      %v835 = vpack.c.b16 %v595, %v587
      %v836 = vpack.c.b16 %v596, %v588
      %v837 = vpack.c.b16 %v597, %v589
      %v838 = vpack.c.b16 %v598, %v590
      %v839 = vpack.c.b16 %v599, %v591
      %v840 = vpack.c.b16 %v600, %v592
      %v841 = vpack.c.b16 %v609, %v601
      %v842 = vpack.c.b16 %v610, %v602
      %v843 = vpack.c.b16 %v611, %v603
      %v844 = vpack.c.b16 %v612, %v604
      %v845 = vpack.c.b16 %v613, %v605
      %v846 = vpack.c.b16 %v614, %v606
      %v847 = vpack.c.b16 %v615, %v607
      %v848 = vpack.c.b16 %v616, %v608
      %v849 = vpack.c.b16 %v625, %v617
      %v850 = vpack.c.b16 %v626, %v618
      %v851 = vpack.c.b16 %v627, %v619
      %v852 = vpack.c.b16 %v628, %v620
      %v853 = vpack.c.b16 %v629, %v621
      %v854 = vpack.c.b16 %v630, %v622
      %v855 = vpack.c.b16 %v631, %v623
      %v856 = vpack.c.b16 %v632, %v624
      %v857 = vpack.c.b16 %v641, %v633
      %v858 = vpack.c.b16 %v642, %v634
      %v859 = vpack.c.b16 %v643, %v635
      %v860 = vpack.c.b16 %v644, %v636
      %v861 = vpack.c.b16 %v645, %v637
      %v862 = vpack.c.b16 %v646, %v638
      %v863 = vpack.c.b16 %v647, %v639
      %v864 = vpack.c.b16 %v648, %v640
      %v865 = vpack.c.b16 %v657, %v649
      %v866 = vpack.c.b16 %v658, %v650
      %v867 = vpack.c.b16 %v659, %v651
      %v868 = vpack.c.b16 %v660, %v652
      %v869 = vpack.c.b16 %v661, %v653
      %v870 = vpack.c.b16 %v662, %v654
      %v871 = vpack.c.b16 %v663, %v655
      %v872 = vpack.c.b16 %v664, %v656
      %v873 = vpack.c.b16 %v673, %v665
      %v874 = vpack.c.b16 %v674, %v666
      %v875 = vpack.c.b16 %v675, %v667
      %v876 = vpack.c.b16 %v676, %v668
      %v877 = vpack.c.b16 %v677, %v669
      %v878 = vpack.c.b16 %v678, %v670
      %v879 = vpack.c.b16 %v679, %v671
      %v880 = vpack.c.b16 %v680, %v672
      %v881 = vpack.c.b16 %v689, %v681
      %v882 = vpack.c.b16 %v690, %v682
      %v883 = vpack.c.b16 %v691, %v683
      %v884 = vpack.c.b16 %v692, %v684
      %v885 = vpack.c.b16 %v693, %v685
      %v886 = vpack.c.b16 %v694, %v686
      %v887 = vpack.c.b16 %v695, %v687
      %v888 = vpack.c.b16 %v696, %v688
      %v889 = vpack.c.b16 %v705, %v697
      %v890 = vpack.c.b16 %v706, %v698
      %v891 = vpack.c.b16 %v707, %v699
      %v892 = vpack.c.b16 %v708, %v700
      %v893 = vpack.c.b16 %v709, %v701
      %v894 = vpack.c.b16 %v710, %v702
      %v895 = vpack.c.b16 %v711, %v703
      %v896 = vpack.c.b16 %v712, %v704
      %v897 = vpack.c.b16 %v721, %v713
      %v898 = vpack.c.b16 %v722, %v714
      %v899 = vpack.c.b16 %v723, %v715
      %v900 = vpack.c.b16 %v724, %v716
      %v901 = vpack.c.b16 %v725, %v717
      %v902 = vpack.c.b16 %v726, %v718
      %v903 = vpack.c.b16 %v727, %v719
      %v904 = vpack.c.b16 %v728, %v720
      %v905 = vpack.c.b16 %v737, %v729
      %v906 = vpack.c.b16 %v738, %v730
      %v907 = vpack.c.b16 %v739, %v731
      %v908 = vpack.c.b16 %v740, %v732
      %v909 = vpack.c.b16 %v741, %v733
      %v910 = vpack.c.b16 %v742, %v734
      %v911 = vpack.c.b16 %v743, %v735
      %v912 = vpack.c.b16 %v744, %v736
      %v913 = vpack.c.b16 %v753, %v745
      %v914 = vpack.c.b16 %v754, %v746
      %v915 = vpack.c.b16 %v755, %v747
      %v916 = vpack.c.b16 %v756, %v748
      %v917 = vpack.c.b16 %v757, %v749
      %v918 = vpack.c.b16 %v758, %v750
      %v919 = vpack.c.b16 %v759, %v751
      %v920 = vpack.c.b16 %v760, %v752
      %v921 = vpack.c.b16 %v769, %v761
      %v922 = vpack.c.b16 %v770, %v762
      %v923 = vpack.c.b16 %v771, %v763
      %v924 = vpack.c.b16 %v772, %v764
      %v925 = vpack.c.b16 %v773, %v765
      %v926 = vpack.c.b16 %v774, %v766
      %v927 = vpack.c.b16 %v775, %v767
      %v928 = vpack.c.b16 %v776, %v768
      %v929 = vpack.c.b16 %v785, %v777
      %v930 = vpack.c.b16 %v786, %v778
      %v931 = vpack.c.b16 %v787, %v779
      %v932 = vpack.c.b16 %v788, %v780
      %v933 = vpack.c.b16 %v789, %v781
      %v934 = vpack.c.b16 %v790, %v782
      %v935 = vpack.c.b16 %v791, %v783
      %v936 = vpack.c.b16 %v792, %v784
      %v937 = vpack.c.b16 %v801, %v793
      %v938 = vpack.c.b16 %v802, %v794
      %v939 = vpack.c.b16 %v803, %v795
      %v940 = vpack.c.b16 %v804, %v796
      %v941 = vpack.c.b16 %v805, %v797
      %v942 = vpack.c.b16 %v806, %v798
      %v943 = vpack.c.b16 %v807, %v799
      %v944 = vpack.c.b16 %v808, %v800
      %v945 = vpack.c.b16 %v817, %v809
      %v946 = vpack.c.b16 %v818, %v810
      %v947 = vpack.c.b16 %v819, %v811
      %v948 = vpack.c.b16 %v820, %v812
      %v949 = vpack.c.b16 %v821, %v813
      %v950 = vpack.c.b16 %v822, %v814
      %v951 = vpack.c.b16 %v823, %v815
      %v952 = vpack.c.b16 %v824, %v816
      %v1209 = vunpack.c.l.b16 %v306
      %v1210 = vunpack.c.l.b16 %v307
      %v1211 = vunpack.c.l.b16 %v308
      %v1212 = vunpack.c.l.b16 %v309
      %v1213 = vunpack.c.l.b16 %v310
      %v1214 = vunpack.c.l.b16 %v311
      %v1215 = vunpack.c.l.b16 %v312
      %v1216 = vunpack.c.l.b16 %v313
      %v1217 = vunpack.c.l.b16 %v314
      %v1218 = vunpack.c.l.b16 %v315
      %v1219 = vunpack.c.l.b16 %v316
      %v1220 = vunpack.c.l.b16 %v317
      %v1221 = vunpack.c.l.b16 %v318
      %v1222 = vunpack.c.l.b16 %v319
      %v1223 = vunpack.c.l.b16 %v320
      %v1224 = vunpack.c.l.b16 %v321
      %v1225 = vunpack.c.l.b16 %v322
      %v1226 = vunpack.c.l.b16 %v323
      %v1227 = vunpack.c.l.b16 %v324
      %v1228 = vunpack.c.l.b16 %v325
      %v1229 = vunpack.c.l.b16 %v326
      %v1230 = vunpack.c.l.b16 %v327
      %v1231 = vunpack.c.l.b16 %v328
      %v1232 = vunpack.c.l.b16 %v329
      %v1233 = vunpack.c.l.b16 %v330
      %v1234 = vunpack.c.l.b16 %v331
      %v1235 = vunpack.c.l.b16 %v332
      %v1236 = vunpack.c.l.b16 %v333
      %v1237 = vunpack.c.l.b16 %v334
      %v1238 = vunpack.c.l.b16 %v335
      %v1239 = vunpack.c.l.b16 %v336
      %v1240 = vunpack.c.l.b16 %v337
      %v1241 = vunpack.c.l.b16 %v338
      %v1242 = vunpack.c.l.b16 %v339
      %v1243 = vunpack.c.l.b16 %v340
      %v1244 = vunpack.c.l.b16 %v341
      %v1245 = vunpack.c.l.b16 %v342
      %v1246 = vunpack.c.l.b16 %v343
      %v1247 = vunpack.c.l.b16 %v344
      %v1248 = vunpack.c.l.b16 %v345
      %v1249 = vunpack.c.l.b16 %v346
      %v1250 = vunpack.c.l.b16 %v347
      %v1251 = vunpack.c.l.b16 %v348
      %v1252 = vunpack.c.l.b16 %v349
      %v1253 = vunpack.c.l.b16 %v350
      %v1254 = vunpack.c.l.b16 %v351
      %v1255 = vunpack.c.l.b16 %v352
      %v1256 = vunpack.c.l.b16 %v353
      %v1257 = vunpack.c.l.b16 %v354
      %v1258 = vunpack.c.l.b16 %v355
      %v1259 = vunpack.c.l.b16 %v356
      %v1260 = vunpack.c.l.b16 %v357
      %v1261 = vunpack.c.l.b16 %v358
      %v1262 = vunpack.c.l.b16 %v359
      %v1263 = vunpack.c.l.b16 %v360
      %v1264 = vunpack.c.l.b16 %v361
      %v1265 = vunpack.c.l.b16 %v362
      %v1266 = vunpack.c.l.b16 %v363
      %v1267 = vunpack.c.l.b16 %v364
      %v1268 = vunpack.c.l.b16 %v365
      %v1269 = vunpack.c.l.b16 %v366
      %v1270 = vunpack.c.l.b16 %v367
      %v1271 = vunpack.c.l.b16 %v368
      %v1272 = vunpack.c.l.b16 %v369
      %v1273 = vunpack.c.l.b16 %v370
      %v1274 = vunpack.c.l.b16 %v371
      %v1275 = vunpack.c.l.b16 %v372
      %v1276 = vunpack.c.l.b16 %v373
      %v1277 = vunpack.c.l.b16 %v374
      %v1278 = vunpack.c.l.b16 %v375
      %v1279 = vunpack.c.l.b16 %v376
      %v1280 = vunpack.c.l.b16 %v377
      %v1281 = vunpack.c.l.b16 %v378
      %v1282 = vunpack.c.l.b16 %v379
      %v1283 = vunpack.c.l.b16 %v380
      %v1284 = vunpack.c.l.b16 %v381
      %v1285 = vunpack.c.l.b16 %v382
      %v1286 = vunpack.c.l.b16 %v383
      %v1287 = vunpack.c.l.b16 %v384
      %v1288 = vunpack.c.l.b16 %v385
      %v1289 = vunpack.c.l.b16 %v386
      %v1290 = vunpack.c.l.b16 %v387
      %v1291 = vunpack.c.l.b16 %v388
      %v1292 = vunpack.c.l.b16 %v389
      %v1293 = vunpack.c.l.b16 %v390
      %v1294 = vunpack.c.l.b16 %v391
      %v1295 = vunpack.c.l.b16 %v392
      %v1296 = vunpack.c.l.b16 %v393
      %v1297 = vunpack.c.l.b16 %v394
      %v1298 = vunpack.c.l.b16 %v395
      %v1299 = vunpack.c.l.b16 %v396
      %v1300 = vunpack.c.l.b16 %v397
      %v1301 = vunpack.c.l.b16 %v398
      %v1302 = vunpack.c.l.b16 %v399
      %v1303 = vunpack.c.l.b16 %v400
      %v1304 = vunpack.c.l.b16 %v401
      %v1305 = vunpack.c.l.b16 %v402
      %v1306 = vunpack.c.l.b16 %v403
      %v1307 = vunpack.c.l.b16 %v404
      %v1308 = vunpack.c.l.b16 %v405
      %v1309 = vunpack.c.l.b16 %v406
      %v1310 = vunpack.c.l.b16 %v407
      %v1311 = vunpack.c.l.b16 %v408
      %v1312 = vunpack.c.l.b16 %v409
      %v1313 = vunpack.c.l.b16 %v410
      %v1314 = vunpack.c.l.b16 %v411
      %v1315 = vunpack.c.l.b16 %v412
      %v1316 = vunpack.c.l.b16 %v413
      %v1317 = vunpack.c.l.b16 %v414
      %v1318 = vunpack.c.l.b16 %v415
      %v1319 = vunpack.c.l.b16 %v416
      %v1320 = vunpack.c.l.b16 %v417
      %v1321 = vunpack.c.l.b16 %v418
      %v1322 = vunpack.c.l.b16 %v419
      %v1323 = vunpack.c.l.b16 %v420
      %v1324 = vunpack.c.l.b16 %v421
      %v1325 = vunpack.c.l.b16 %v422
      %v1326 = vunpack.c.l.b16 %v423
      %v1327 = vunpack.c.l.b16 %v424
      %v1328 = vunpack.c.l.b16 %v425
      %v1329 = vunpack.c.l.b16 %v426
      %v1330 = vunpack.c.l.b16 %v427
      %v1331 = vunpack.c.l.b16 %v428
      %v1332 = vunpack.c.l.b16 %v429
      %v1333 = vunpack.c.l.b16 %v430
      %v1334 = vunpack.c.l.b16 %v431
      %v1335 = vunpack.c.l.b16 %v432
      %v1336 = vunpack.c.l.b16 %v433
      %v1337 = vpack.c.b16 %v1210, %v1209
      %v1338 = vpack.c.b16 %v1212, %v1211
      %v1339 = vpack.c.b16 %v1214, %v1213
      %v1340 = vpack.c.b16 %v1216, %v1215
      %v1341 = vpack.c.b16 %v1218, %v1217
      %v1342 = vpack.c.b16 %v1220, %v1219
      %v1343 = vpack.c.b16 %v1222, %v1221
      %v1344 = vpack.c.b16 %v1224, %v1223
      %v1345 = vpack.c.b16 %v1226, %v1225
      %v1346 = vpack.c.b16 %v1228, %v1227
      %v1347 = vpack.c.b16 %v1230, %v1229
      %v1348 = vpack.c.b16 %v1232, %v1231
      %v1349 = vpack.c.b16 %v1234, %v1233
      %v1350 = vpack.c.b16 %v1236, %v1235
      %v1351 = vpack.c.b16 %v1238, %v1237
      %v1352 = vpack.c.b16 %v1240, %v1239
      %v1353 = vpack.c.b16 %v1242, %v1241
      %v1354 = vpack.c.b16 %v1244, %v1243
      %v1355 = vpack.c.b16 %v1246, %v1245
      %v1356 = vpack.c.b16 %v1248, %v1247
      %v1357 = vpack.c.b16 %v1250, %v1249
      %v1358 = vpack.c.b16 %v1252, %v1251
      %v1359 = vpack.c.b16 %v1254, %v1253
      %v1360 = vpack.c.b16 %v1256, %v1255
      %v1361 = vpack.c.b16 %v1258, %v1257
      %v1362 = vpack.c.b16 %v1260, %v1259
      %v1363 = vpack.c.b16 %v1262, %v1261
      %v1364 = vpack.c.b16 %v1264, %v1263
      %v1365 = vpack.c.b16 %v1266, %v1265
      %v1366 = vpack.c.b16 %v1268, %v1267
      %v1367 = vpack.c.b16 %v1270, %v1269
      %v1368 = vpack.c.b16 %v1272, %v1271
      %v1369 = vpack.c.b16 %v1274, %v1273
      %v1370 = vpack.c.b16 %v1276, %v1275
      %v1371 = vpack.c.b16 %v1278, %v1277
      %v1372 = vpack.c.b16 %v1280, %v1279
      %v1373 = vpack.c.b16 %v1282, %v1281
      %v1374 = vpack.c.b16 %v1284, %v1283
      %v1375 = vpack.c.b16 %v1286, %v1285
      %v1376 = vpack.c.b16 %v1288, %v1287
      %v1377 = vpack.c.b16 %v1290, %v1289
      %v1378 = vpack.c.b16 %v1292, %v1291
      %v1379 = vpack.c.b16 %v1294, %v1293
      %v1380 = vpack.c.b16 %v1296, %v1295
      %v1381 = vpack.c.b16 %v1298, %v1297
      %v1382 = vpack.c.b16 %v1300, %v1299
      %v1383 = vpack.c.b16 %v1302, %v1301
      %v1384 = vpack.c.b16 %v1304, %v1303
      %v1385 = vpack.c.b16 %v1306, %v1305
      %v1386 = vpack.c.b16 %v1308, %v1307
      %v1387 = vpack.c.b16 %v1310, %v1309
      %v1388 = vpack.c.b16 %v1312, %v1311
      %v1389 = vpack.c.b16 %v1314, %v1313
      %v1390 = vpack.c.b16 %v1316, %v1315
      %v1391 = vpack.c.b16 %v1318, %v1317
      %v1392 = vpack.c.b16 %v1320, %v1319
      %v1393 = vpack.c.b16 %v1322, %v1321
      %v1394 = vpack.c.b16 %v1324, %v1323
      %v1395 = vpack.c.b16 %v1326, %v1325
      %v1396 = vpack.c.b16 %v1328, %v1327
      %v1397 = vpack.c.b16 %v1330, %v1329
      %v1398 = vpack.c.b16 %v1332, %v1331
      %v1399 = vpack.c.b16 %v1334, %v1333
      %v1400 = vpack.c.b16 %v1336, %v1335
      %1465 = vmatprep.subr.bf16.mxu0 0
      %1466 = vmatpush1.bf16.msra.mxu0 %v1344
      %1467 = vmatprep.subr.bf16.mxu0 0
      %1468 = vmatpush1.bf16.msra.mxu0 %v1343
      %1469 = vmatprep.subr.bf16.mxu0 0
      %1470 = vmatpush1.bf16.msra.mxu0 %v1342
      %1471 = vmatprep.subr.bf16.mxu0 0
      %1472 = vmatpush1.bf16.msra.mxu0 %v1341
      %1473 = vmatprep.subr.bf16.mxu0 0
      %1474 = vmatpush1.bf16.msra.mxu0 %v1340
      %1475 = vmatprep.subr.bf16.mxu0 0
      %1476 = vmatpush1.bf16.msra.mxu0 %v1339
      %1477 = vmatprep.subr.bf16.mxu0 0
      %1478 = vmatpush1.bf16.msra.mxu0 %v1338
      %1479 = vmatprep.subr.bf16.mxu0 0
      %1480 = vmatpush1.bf16.msra.mxu0 %v1337
      %1481 = vmatprep.subr.bf16.mxu0 0
      %1482 = vmatpush2.bf16.msra.mxu0 %v1352
      %1483 = vmatprep.subr.bf16.mxu0 0
      %1484 = vmatpush2.bf16.msra.mxu0 %v1351
      %1485 = vmatprep.subr.bf16.mxu0 0
      %1486 = vmatpush2.bf16.msra.mxu0 %v1350
      %1487 = vmatprep.subr.bf16.mxu0 0
      %1488 = vmatpush2.bf16.msra.mxu0 %v1349
      %1489 = vmatprep.subr.bf16.mxu0 0
      %1490 = vmatpush2.bf16.msra.mxu0 %v1348
      %1491 = vmatprep.subr.bf16.mxu0 0
      %1492 = vmatpush2.bf16.msra.mxu0 %v1347
      %1493 = vmatprep.subr.bf16.mxu0 0
      %1494 = vmatpush2.bf16.msra.mxu0 %v1346
      %1495 = vmatprep.subr.bf16.mxu0 0
      %1496 = vmatpush2.bf16.msra.mxu0 %v1345
      %1497 = vmatprep.mubr.bf16.mxu0 %v826
      %1498 = vmatmul.mubr.bf16.gmra.mxu0 %v825
      %v1499 = vpop.f32.mrf.mxu0
      %v1500 = vadd.f32 %v439, %v1499
      %v1501 = vpop.f32.mrf.mxu0
      %v1502 = vpop.f32.mrf.mxu0
      %v1503 = vadd.f32 %v439, %v1502
      %v1504 = vpop.f32.mrf.mxu0
      %1505 = vmatprep.mubr.bf16.mxu0 %v834
      %1506 = vmatmul.mubr.bf16.gmra.mxu0 %v833
      %v1507 = vpop.f32.mrf.mxu0
      %v1508 = vadd.f32 %v439, %v1507
      %v1509 = vpop.f32.mrf.mxu0
      %v1510 = vpop.f32.mrf.mxu0
      %v1511 = vadd.f32 %v439, %v1510
      %v1512 = vpop.f32.mrf.mxu0
      %1513 = vmatprep.mubr.bf16.mxu0 %v842
      %1514 = vmatmul.mubr.bf16.gmra.mxu0 %v841
      %v1515 = vpop.f32.mrf.mxu0
      %v1516 = vadd.f32 %v439, %v1515
      %v1517 = vpop.f32.mrf.mxu0
      %v1518 = vpop.f32.mrf.mxu0
      %v1519 = vadd.f32 %v439, %v1518
      %v1520 = vpop.f32.mrf.mxu0
      %1521 = vmatprep.mubr.bf16.mxu0 %v850
      %1522 = vmatmul.mubr.bf16.gmra.mxu0 %v849
      %v1523 = vpop.f32.mrf.mxu0
      %v1524 = vadd.f32 %v439, %v1523
      %v1525 = vpop.f32.mrf.mxu0
      %v1526 = vpop.f32.mrf.mxu0
      %v1527 = vadd.f32 %v439, %v1526
      %v1528 = vpop.f32.mrf.mxu0
      %1529 = vmatprep.mubr.bf16.mxu0 %v858
      %1530 = vmatmul.mubr.bf16.gmra.mxu0 %v857
      %v1531 = vpop.f32.mrf.mxu0
      %v1532 = vadd.f32 %v439, %v1531
      %v1533 = vpop.f32.mrf.mxu0
      %v1534 = vpop.f32.mrf.mxu0
      %v1535 = vadd.f32 %v439, %v1534
      %v1536 = vpop.f32.mrf.mxu0
      %1537 = vmatprep.mubr.bf16.mxu0 %v866
      %1538 = vmatmul.mubr.bf16.gmra.mxu0 %v865
      %v1539 = vpop.f32.mrf.mxu0
      %v1540 = vadd.f32 %v439, %v1539
      %v1541 = vpop.f32.mrf.mxu0
      %v1542 = vpop.f32.mrf.mxu0
      %v1543 = vadd.f32 %v439, %v1542
      %v1544 = vpop.f32.mrf.mxu0
      %1545 = vmatprep.mubr.bf16.mxu0 %v874
      %1546 = vmatmul.mubr.bf16.gmra.mxu0 %v873
      %v1547 = vpop.f32.mrf.mxu0
      %v1548 = vadd.f32 %v439, %v1547
      %v1549 = vpop.f32.mrf.mxu0
      %v1550 = vpop.f32.mrf.mxu0
      %v1551 = vadd.f32 %v439, %v1550
      %v1552 = vpop.f32.mrf.mxu0
      %1553 = vmatprep.mubr.bf16.mxu0 %v882
      %1554 = vmatmul.mubr.bf16.gmra.mxu0 %v881
      %v1555 = vpop.f32.mrf.mxu0
      %v1556 = vadd.f32 %v439, %v1555
      %v1557 = vpop.f32.mrf.mxu0
      %v1558 = vpop.f32.mrf.mxu0
      %v1559 = vadd.f32 %v439, %v1558
      %v1560 = vpop.f32.mrf.mxu0
      %1561 = vmatprep.mubr.bf16.mxu0 %v890
      %1562 = vmatmul.mubr.bf16.gmra.mxu0 %v889
      %v1563 = vpop.f32.mrf.mxu0
      %v1564 = vadd.f32 %v439, %v1563
      %v1565 = vpop.f32.mrf.mxu0
      %v1566 = vpop.f32.mrf.mxu0
      %v1567 = vadd.f32 %v439, %v1566
      %v1568 = vpop.f32.mrf.mxu0
      %1569 = vmatprep.mubr.bf16.mxu0 %v898
      %1570 = vmatmul.mubr.bf16.gmra.mxu0 %v897
      %v1571 = vpop.f32.mrf.mxu0
      %v1572 = vadd.f32 %v439, %v1571
      %v1573 = vpop.f32.mrf.mxu0
      %v1574 = vpop.f32.mrf.mxu0
      %v1575 = vadd.f32 %v439, %v1574
      %v1576 = vpop.f32.mrf.mxu0
      %1577 = vmatprep.mubr.bf16.mxu0 %v906
      %1578 = vmatmul.mubr.bf16.gmra.mxu0 %v905
      %v1579 = vpop.f32.mrf.mxu0
      %v1580 = vadd.f32 %v439, %v1579
      %v1581 = vpop.f32.mrf.mxu0
      %v1582 = vpop.f32.mrf.mxu0
      %v1583 = vadd.f32 %v439, %v1582
      %v1584 = vpop.f32.mrf.mxu0
      %1585 = vmatprep.mubr.bf16.mxu0 %v914
      %1586 = vmatmul.mubr.bf16.gmra.mxu0 %v913
      %v1587 = vpop.f32.mrf.mxu0
      %v1588 = vadd.f32 %v439, %v1587
      %v1589 = vpop.f32.mrf.mxu0
      %v1590 = vpop.f32.mrf.mxu0
      %v1591 = vadd.f32 %v439, %v1590
      %v1592 = vpop.f32.mrf.mxu0
      %1593 = vmatprep.mubr.bf16.mxu0 %v922
      %1594 = vmatmul.mubr.bf16.gmra.mxu0 %v921
      %v1595 = vpop.f32.mrf.mxu0
      %v1596 = vadd.f32 %v439, %v1595
      %v1597 = vpop.f32.mrf.mxu0
      %v1598 = vpop.f32.mrf.mxu0
      %v1599 = vadd.f32 %v439, %v1598
      %v1600 = vpop.f32.mrf.mxu0
      %1601 = vmatprep.mubr.bf16.mxu0 %v930
      %1602 = vmatmul.mubr.bf16.gmra.mxu0 %v929
      %v1603 = vpop.f32.mrf.mxu0
      %v1604 = vadd.f32 %v439, %v1603
      %v1605 = vpop.f32.mrf.mxu0
      %v1606 = vpop.f32.mrf.mxu0
      %v1607 = vadd.f32 %v439, %v1606
      %v1608 = vpop.f32.mrf.mxu0
      %1609 = vmatprep.mubr.bf16.mxu0 %v938
      %1610 = vmatmul.mubr.bf16.gmra.mxu0 %v937
      %v1611 = vpop.f32.mrf.mxu0
      %v1612 = vadd.f32 %v439, %v1611
      %v1613 = vpop.f32.mrf.mxu0
      %v1614 = vpop.f32.mrf.mxu0
      %v1615 = vadd.f32 %v439, %v1614
      %v1616 = vpop.f32.mrf.mxu0
      %1617 = vmatprep.mubr.bf16.mxu0 %v946
      %1618 = vmatmul.mubr.bf16.gmra.mxu0 %v945
      %v1619 = vpop.f32.mrf.mxu0
      %v1620 = vadd.f32 %v439, %v1619
      %v1621 = vpop.f32.mrf.mxu0
      %v1622 = vpop.f32.mrf.mxu0
      %v1623 = vadd.f32 %v439, %v1622
      %v1624 = vpop.f32.mrf.mxu0
      %1625 = vdwg.mxu0
      %1626 = vmatprep.subr.bf16.mxu0 0
      %1627 = vmatpush1.bf16.msra.mxu0 %v1360
      %1628 = vmatprep.subr.bf16.mxu0 0
      %1629 = vmatpush1.bf16.msra.mxu0 %v1359
      %1630 = vmatprep.subr.bf16.mxu0 0
      %1631 = vmatpush1.bf16.msra.mxu0 %v1358
      %1632 = vmatprep.subr.bf16.mxu0 0
      %1633 = vmatpush1.bf16.msra.mxu0 %v1357
      %1634 = vmatprep.subr.bf16.mxu0 0
      %1635 = vmatpush1.bf16.msra.mxu0 %v1356
      %1636 = vmatprep.subr.bf16.mxu0 0
      %1637 = vmatpush1.bf16.msra.mxu0 %v1355
      %1638 = vmatprep.subr.bf16.mxu0 0
      %1639 = vmatpush1.bf16.msra.mxu0 %v1354
      %1640 = vmatprep.subr.bf16.mxu0 0
      %1641 = vmatpush1.bf16.msra.mxu0 %v1353
      %1642 = vmatprep.subr.bf16.mxu0 0
      %1643 = vmatpush2.bf16.msra.mxu0 %v1368
      %1644 = vmatprep.subr.bf16.mxu0 0
      %1645 = vmatpush2.bf16.msra.mxu0 %v1367
      %1646 = vmatprep.subr.bf16.mxu0 0
      %1647 = vmatpush2.bf16.msra.mxu0 %v1366
      %1648 = vmatprep.subr.bf16.mxu0 0
      %1649 = vmatpush2.bf16.msra.mxu0 %v1365
      %1650 = vmatprep.subr.bf16.mxu0 0
      %1651 = vmatpush2.bf16.msra.mxu0 %v1364
      %1652 = vmatprep.subr.bf16.mxu0 0
      %1653 = vmatpush2.bf16.msra.mxu0 %v1363
      %1654 = vmatprep.subr.bf16.mxu0 0
      %1655 = vmatpush2.bf16.msra.mxu0 %v1362
      %1656 = vmatprep.subr.bf16.mxu0 0
      %1657 = vmatpush2.bf16.msra.mxu0 %v1361
      %1658 = vmatprep.mubr.bf16.mxu0 %v828
      %1659 = vmatmul.mubr.bf16.gmra.mxu0 %v827
      %v1660 = vpop.f32.mrf.mxu0
      %v1661 = vadd.f32 %v1500, %v1660
      %v1662 = vpop.f32.mrf.mxu0
      %v1663 = vpop.f32.mrf.mxu0
      %v1664 = vadd.f32 %v1503, %v1663
      %v1665 = vpop.f32.mrf.mxu0
      %1666 = vmatprep.mubr.bf16.mxu0 %v836
      %1667 = vmatmul.mubr.bf16.gmra.mxu0 %v835
      %v1668 = vpop.f32.mrf.mxu0
      %v1669 = vadd.f32 %v1508, %v1668
      %v1670 = vpop.f32.mrf.mxu0
      %v1671 = vpop.f32.mrf.mxu0
      %v1672 = vadd.f32 %v1511, %v1671
      %v1673 = vpop.f32.mrf.mxu0
      %1674 = vmatprep.mubr.bf16.mxu0 %v844
      %1675 = vmatmul.mubr.bf16.gmra.mxu0 %v843
      %v1676 = vpop.f32.mrf.mxu0
      %v1677 = vadd.f32 %v1516, %v1676
      %v1678 = vpop.f32.mrf.mxu0
      %v1679 = vpop.f32.mrf.mxu0
      %v1680 = vadd.f32 %v1519, %v1679
      %v1681 = vpop.f32.mrf.mxu0
      %1682 = vmatprep.mubr.bf16.mxu0 %v852
      %1683 = vmatmul.mubr.bf16.gmra.mxu0 %v851
      %v1684 = vpop.f32.mrf.mxu0
      %v1685 = vadd.f32 %v1524, %v1684
      %v1686 = vpop.f32.mrf.mxu0
      %v1687 = vpop.f32.mrf.mxu0
      %v1688 = vadd.f32 %v1527, %v1687
      %v1689 = vpop.f32.mrf.mxu0
      %1690 = vmatprep.mubr.bf16.mxu0 %v860
      %1691 = vmatmul.mubr.bf16.gmra.mxu0 %v859
      %v1692 = vpop.f32.mrf.mxu0
      %v1693 = vadd.f32 %v1532, %v1692
      %v1694 = vpop.f32.mrf.mxu0
      %v1695 = vpop.f32.mrf.mxu0
      %v1696 = vadd.f32 %v1535, %v1695
      %v1697 = vpop.f32.mrf.mxu0
      %1698 = vmatprep.mubr.bf16.mxu0 %v868
      %1699 = vmatmul.mubr.bf16.gmra.mxu0 %v867
      %v1700 = vpop.f32.mrf.mxu0
      %v1701 = vadd.f32 %v1540, %v1700
      %v1702 = vpop.f32.mrf.mxu0
      %v1703 = vpop.f32.mrf.mxu0
      %v1704 = vadd.f32 %v1543, %v1703
      %v1705 = vpop.f32.mrf.mxu0
      %1706 = vmatprep.mubr.bf16.mxu0 %v876
      %1707 = vmatmul.mubr.bf16.gmra.mxu0 %v875
      %v1708 = vpop.f32.mrf.mxu0
      %v1709 = vadd.f32 %v1548, %v1708
      %v1710 = vpop.f32.mrf.mxu0
      %v1711 = vpop.f32.mrf.mxu0
      %v1712 = vadd.f32 %v1551, %v1711
      %v1713 = vpop.f32.mrf.mxu0
      %1714 = vmatprep.mubr.bf16.mxu0 %v884
      %1715 = vmatmul.mubr.bf16.gmra.mxu0 %v883
      %v1716 = vpop.f32.mrf.mxu0
      %v1717 = vadd.f32 %v1556, %v1716
      %v1718 = vpop.f32.mrf.mxu0
      %v1719 = vpop.f32.mrf.mxu0
      %v1720 = vadd.f32 %v1559, %v1719
      %v1721 = vpop.f32.mrf.mxu0
      %1722 = vmatprep.mubr.bf16.mxu0 %v892
      %1723 = vmatmul.mubr.bf16.gmra.mxu0 %v891
      %v1724 = vpop.f32.mrf.mxu0
      %v1725 = vadd.f32 %v1564, %v1724
      %v1726 = vpop.f32.mrf.mxu0
      %v1727 = vpop.f32.mrf.mxu0
      %v1728 = vadd.f32 %v1567, %v1727
      %v1729 = vpop.f32.mrf.mxu0
      %1730 = vmatprep.mubr.bf16.mxu0 %v900
      %1731 = vmatmul.mubr.bf16.gmra.mxu0 %v899
      %v1732 = vpop.f32.mrf.mxu0
      %v1733 = vadd.f32 %v1572, %v1732
      %v1734 = vpop.f32.mrf.mxu0
      %v1735 = vpop.f32.mrf.mxu0
      %v1736 = vadd.f32 %v1575, %v1735
      %v1737 = vpop.f32.mrf.mxu0
      %1738 = vmatprep.mubr.bf16.mxu0 %v908
      %1739 = vmatmul.mubr.bf16.gmra.mxu0 %v907
      %v1740 = vpop.f32.mrf.mxu0
      %v1741 = vadd.f32 %v1580, %v1740
      %v1742 = vpop.f32.mrf.mxu0
      %v1743 = vpop.f32.mrf.mxu0
      %v1744 = vadd.f32 %v1583, %v1743
      %v1745 = vpop.f32.mrf.mxu0
      %1746 = vmatprep.mubr.bf16.mxu0 %v916
      %1747 = vmatmul.mubr.bf16.gmra.mxu0 %v915
      %v1748 = vpop.f32.mrf.mxu0
      %v1749 = vadd.f32 %v1588, %v1748
      %v1750 = vpop.f32.mrf.mxu0
      %v1751 = vpop.f32.mrf.mxu0
      %v1752 = vadd.f32 %v1591, %v1751
      %v1753 = vpop.f32.mrf.mxu0
      %1754 = vmatprep.mubr.bf16.mxu0 %v924
      %1755 = vmatmul.mubr.bf16.gmra.mxu0 %v923
      %v1756 = vpop.f32.mrf.mxu0
      %v1757 = vadd.f32 %v1596, %v1756
      %v1758 = vpop.f32.mrf.mxu0
      %v1759 = vpop.f32.mrf.mxu0
      %v1760 = vadd.f32 %v1599, %v1759
      %v1761 = vpop.f32.mrf.mxu0
      %1762 = vmatprep.mubr.bf16.mxu0 %v932
      %1763 = vmatmul.mubr.bf16.gmra.mxu0 %v931
      %v1764 = vpop.f32.mrf.mxu0
      %v1765 = vadd.f32 %v1604, %v1764
      %v1766 = vpop.f32.mrf.mxu0
      %v1767 = vpop.f32.mrf.mxu0
      %v1768 = vadd.f32 %v1607, %v1767
      %v1769 = vpop.f32.mrf.mxu0
      %1770 = vmatprep.mubr.bf16.mxu0 %v940
      %1771 = vmatmul.mubr.bf16.gmra.mxu0 %v939
      %v1772 = vpop.f32.mrf.mxu0
      %v1773 = vadd.f32 %v1612, %v1772
      %v1774 = vpop.f32.mrf.mxu0
      %v1775 = vpop.f32.mrf.mxu0
      %v1776 = vadd.f32 %v1615, %v1775
      %v1777 = vpop.f32.mrf.mxu0
      %1778 = vmatprep.mubr.bf16.mxu0 %v948
      %1779 = vmatmul.mubr.bf16.gmra.mxu0 %v947
      %v1780 = vpop.f32.mrf.mxu0
      %v1781 = vadd.f32 %v1620, %v1780
      %v1782 = vpop.f32.mrf.mxu0
      %v1783 = vpop.f32.mrf.mxu0
      %v1784 = vadd.f32 %v1623, %v1783
      %v1785 = vpop.f32.mrf.mxu0
      %1786 = vdwg.mxu0
      %1787 = vmatprep.subr.bf16.mxu0 0
      %1788 = vmatpush1.bf16.msra.mxu0 %v1376
      %1789 = vmatprep.subr.bf16.mxu0 0
      %1790 = vmatpush1.bf16.msra.mxu0 %v1375
      %1791 = vmatprep.subr.bf16.mxu0 0
      %1792 = vmatpush1.bf16.msra.mxu0 %v1374
      %1793 = vmatprep.subr.bf16.mxu0 0
      %1794 = vmatpush1.bf16.msra.mxu0 %v1373
      %1795 = vmatprep.subr.bf16.mxu0 0
      %1796 = vmatpush1.bf16.msra.mxu0 %v1372
      %1797 = vmatprep.subr.bf16.mxu0 0
      %1798 = vmatpush1.bf16.msra.mxu0 %v1371
      %1799 = vmatprep.subr.bf16.mxu0 0
      %1800 = vmatpush1.bf16.msra.mxu0 %v1370
      %1801 = vmatprep.subr.bf16.mxu0 0
      %1802 = vmatpush1.bf16.msra.mxu0 %v1369
      %1803 = vmatprep.subr.bf16.mxu0 0
      %1804 = vmatpush2.bf16.msra.mxu0 %v1384
      %1805 = vmatprep.subr.bf16.mxu0 0
      %1806 = vmatpush2.bf16.msra.mxu0 %v1383
      %1807 = vmatprep.subr.bf16.mxu0 0
      %1808 = vmatpush2.bf16.msra.mxu0 %v1382
      %1809 = vmatprep.subr.bf16.mxu0 0
      %1810 = vmatpush2.bf16.msra.mxu0 %v1381
      %1811 = vmatprep.subr.bf16.mxu0 0
      %1812 = vmatpush2.bf16.msra.mxu0 %v1380
      %1813 = vmatprep.subr.bf16.mxu0 0
      %1814 = vmatpush2.bf16.msra.mxu0 %v1379
      %1815 = vmatprep.subr.bf16.mxu0 0
      %1816 = vmatpush2.bf16.msra.mxu0 %v1378
      %1817 = vmatprep.subr.bf16.mxu0 0
      %1818 = vmatpush2.bf16.msra.mxu0 %v1377
      %1819 = vmatprep.mubr.bf16.mxu0 %v830
      %1820 = vmatmul.mubr.bf16.gmra.mxu0 %v829
      %v1821 = vpop.f32.mrf.mxu0
      %v1822 = vadd.f32 %v1661, %v1821
      %v1823 = vpop.f32.mrf.mxu0
      %v1824 = vpop.f32.mrf.mxu0
      %v1825 = vadd.f32 %v1664, %v1824
      %v1826 = vpop.f32.mrf.mxu0
      %1827 = vmatprep.mubr.bf16.mxu0 %v838
      %1828 = vmatmul.mubr.bf16.gmra.mxu0 %v837
      %v1829 = vpop.f32.mrf.mxu0
      %v1830 = vadd.f32 %v1669, %v1829
      %v1831 = vpop.f32.mrf.mxu0
      %v1832 = vpop.f32.mrf.mxu0
      %v1833 = vadd.f32 %v1672, %v1832
      %v1834 = vpop.f32.mrf.mxu0
      %1835 = vmatprep.mubr.bf16.mxu0 %v846
      %1836 = vmatmul.mubr.bf16.gmra.mxu0 %v845
      %v1837 = vpop.f32.mrf.mxu0
      %v1838 = vadd.f32 %v1677, %v1837
      %v1839 = vpop.f32.mrf.mxu0
      %v1840 = vpop.f32.mrf.mxu0
      %v1841 = vadd.f32 %v1680, %v1840
      %v1842 = vpop.f32.mrf.mxu0
      %1843 = vmatprep.mubr.bf16.mxu0 %v854
      %1844 = vmatmul.mubr.bf16.gmra.mxu0 %v853
      %v1845 = vpop.f32.mrf.mxu0
      %v1846 = vadd.f32 %v1685, %v1845
      %v1847 = vpop.f32.mrf.mxu0
      %v1848 = vpop.f32.mrf.mxu0
      %v1849 = vadd.f32 %v1688, %v1848
      %v1850 = vpop.f32.mrf.mxu0
      %1851 = vmatprep.mubr.bf16.mxu0 %v862
      %1852 = vmatmul.mubr.bf16.gmra.mxu0 %v861
      %v1853 = vpop.f32.mrf.mxu0
      %v1854 = vadd.f32 %v1693, %v1853
      %v1855 = vpop.f32.mrf.mxu0
      %v1856 = vpop.f32.mrf.mxu0
      %v1857 = vadd.f32 %v1696, %v1856
      %v1858 = vpop.f32.mrf.mxu0
      %1859 = vmatprep.mubr.bf16.mxu0 %v870
      %1860 = vmatmul.mubr.bf16.gmra.mxu0 %v869
      %v1861 = vpop.f32.mrf.mxu0
      %v1862 = vadd.f32 %v1701, %v1861
      %v1863 = vpop.f32.mrf.mxu0
      %v1864 = vpop.f32.mrf.mxu0
      %v1865 = vadd.f32 %v1704, %v1864
      %v1866 = vpop.f32.mrf.mxu0
      %1867 = vmatprep.mubr.bf16.mxu0 %v878
      %1868 = vmatmul.mubr.bf16.gmra.mxu0 %v877
      %v1869 = vpop.f32.mrf.mxu0
      %v1870 = vadd.f32 %v1709, %v1869
      %v1871 = vpop.f32.mrf.mxu0
      %v1872 = vpop.f32.mrf.mxu0
      %v1873 = vadd.f32 %v1712, %v1872
      %v1874 = vpop.f32.mrf.mxu0
      %1875 = vmatprep.mubr.bf16.mxu0 %v886
      %1876 = vmatmul.mubr.bf16.gmra.mxu0 %v885
      %v1877 = vpop.f32.mrf.mxu0
      %v1878 = vadd.f32 %v1717, %v1877
      %v1879 = vpop.f32.mrf.mxu0
      %v1880 = vpop.f32.mrf.mxu0
      %v1881 = vadd.f32 %v1720, %v1880
      %v1882 = vpop.f32.mrf.mxu0
      %1883 = vmatprep.mubr.bf16.mxu0 %v894
      %1884 = vmatmul.mubr.bf16.gmra.mxu0 %v893
      %v1885 = vpop.f32.mrf.mxu0
      %v1886 = vadd.f32 %v1725, %v1885
      %v1887 = vpop.f32.mrf.mxu0
      %v1888 = vpop.f32.mrf.mxu0
      %v1889 = vadd.f32 %v1728, %v1888
      %v1890 = vpop.f32.mrf.mxu0
      %1891 = vmatprep.mubr.bf16.mxu0 %v902
      %1892 = vmatmul.mubr.bf16.gmra.mxu0 %v901
      %v1893 = vpop.f32.mrf.mxu0
      %v1894 = vadd.f32 %v1733, %v1893
      %v1895 = vpop.f32.mrf.mxu0
      %v1896 = vpop.f32.mrf.mxu0
      %v1897 = vadd.f32 %v1736, %v1896
      %v1898 = vpop.f32.mrf.mxu0
      %1899 = vmatprep.mubr.bf16.mxu0 %v910
      %1900 = vmatmul.mubr.bf16.gmra.mxu0 %v909
      %v1901 = vpop.f32.mrf.mxu0
      %v1902 = vadd.f32 %v1741, %v1901
      %v1903 = vpop.f32.mrf.mxu0
      %v1904 = vpop.f32.mrf.mxu0
      %v1905 = vadd.f32 %v1744, %v1904
      %v1906 = vpop.f32.mrf.mxu0
      %1907 = vmatprep.mubr.bf16.mxu0 %v918
      %1908 = vmatmul.mubr.bf16.gmra.mxu0 %v917
      %v1909 = vpop.f32.mrf.mxu0
      %v1910 = vadd.f32 %v1749, %v1909
      %v1911 = vpop.f32.mrf.mxu0
      %v1912 = vpop.f32.mrf.mxu0
      %v1913 = vadd.f32 %v1752, %v1912
      %v1914 = vpop.f32.mrf.mxu0
      %1915 = vmatprep.mubr.bf16.mxu0 %v926
      %1916 = vmatmul.mubr.bf16.gmra.mxu0 %v925
      %v1917 = vpop.f32.mrf.mxu0
      %v1918 = vadd.f32 %v1757, %v1917
      %v1919 = vpop.f32.mrf.mxu0
      %v1920 = vpop.f32.mrf.mxu0
      %v1921 = vadd.f32 %v1760, %v1920
      %v1922 = vpop.f32.mrf.mxu0
      %1923 = vmatprep.mubr.bf16.mxu0 %v934
      %1924 = vmatmul.mubr.bf16.gmra.mxu0 %v933
      %v1925 = vpop.f32.mrf.mxu0
      %v1926 = vadd.f32 %v1765, %v1925
      %v1927 = vpop.f32.mrf.mxu0
      %v1928 = vpop.f32.mrf.mxu0
      %v1929 = vadd.f32 %v1768, %v1928
      %v1930 = vpop.f32.mrf.mxu0
      %1931 = vmatprep.mubr.bf16.mxu0 %v942
      %1932 = vmatmul.mubr.bf16.gmra.mxu0 %v941
      %v1933 = vpop.f32.mrf.mxu0
      %v1934 = vadd.f32 %v1773, %v1933
      %v1935 = vpop.f32.mrf.mxu0
      %v1936 = vpop.f32.mrf.mxu0
      %v1937 = vadd.f32 %v1776, %v1936
      %v1938 = vpop.f32.mrf.mxu0
      %1939 = vmatprep.mubr.bf16.mxu0 %v950
      %1940 = vmatmul.mubr.bf16.gmra.mxu0 %v949
      %v1941 = vpop.f32.mrf.mxu0
      %v1942 = vadd.f32 %v1781, %v1941
      %v1943 = vpop.f32.mrf.mxu0
      %v1944 = vpop.f32.mrf.mxu0
      %v1945 = vadd.f32 %v1784, %v1944
      %v1946 = vpop.f32.mrf.mxu0
      %1947 = vdwg.mxu0
      %1948 = vmatprep.subr.bf16.mxu0 0
      %1949 = vmatpush1.bf16.msra.mxu0 %v1392
      %1950 = vmatprep.subr.bf16.mxu0 0
      %1951 = vmatpush1.bf16.msra.mxu0 %v1391
      %1952 = vmatprep.subr.bf16.mxu0 0
      %1953 = vmatpush1.bf16.msra.mxu0 %v1390
      %1954 = vmatprep.subr.bf16.mxu0 0
      %1955 = vmatpush1.bf16.msra.mxu0 %v1389
      %1956 = vmatprep.subr.bf16.mxu0 0
      %1957 = vmatpush1.bf16.msra.mxu0 %v1388
      %1958 = vmatprep.subr.bf16.mxu0 0
      %1959 = vmatpush1.bf16.msra.mxu0 %v1387
      %1960 = vmatprep.subr.bf16.mxu0 0
      %1961 = vmatpush1.bf16.msra.mxu0 %v1386
      %1962 = vmatprep.subr.bf16.mxu0 0
      %1963 = vmatpush1.bf16.msra.mxu0 %v1385
      %1964 = vmatprep.subr.bf16.mxu0 0
      %1965 = vmatpush2.bf16.msra.mxu0 %v1400
      %1966 = vmatprep.subr.bf16.mxu0 0
      %1967 = vmatpush2.bf16.msra.mxu0 %v1399
      %1968 = vmatprep.subr.bf16.mxu0 0
      %1969 = vmatpush2.bf16.msra.mxu0 %v1398
      %1970 = vmatprep.subr.bf16.mxu0 0
      %1971 = vmatpush2.bf16.msra.mxu0 %v1397
      %1972 = vmatprep.subr.bf16.mxu0 0
      %1973 = vmatpush2.bf16.msra.mxu0 %v1396
      %1974 = vmatprep.subr.bf16.mxu0 0
      %1975 = vmatpush2.bf16.msra.mxu0 %v1395
      %1976 = vmatprep.subr.bf16.mxu0 0
      %1977 = vmatpush2.bf16.msra.mxu0 %v1394
      %1978 = vmatprep.subr.bf16.mxu0 0
      %1979 = vmatpush2.bf16.msra.mxu0 %v1393
      %1980 = vmatprep.mubr.bf16.mxu0 %v832
      %1981 = vmatmul.mubr.bf16.gmra.mxu0 %v831
      %v1982 = vpop.f32.mrf.mxu0
      %v1983 = vadd.f32 %v1822, %v1982
      %v1984 = vpop.f32.mrf.mxu0
      %v1985 = vpop.f32.mrf.mxu0
      %v1986 = vadd.f32 %v1825, %v1985
      %v1987 = vpop.f32.mrf.mxu0
      %1988 = vmatprep.mubr.bf16.mxu0 %v840
      %1989 = vmatmul.mubr.bf16.gmra.mxu0 %v839
      %v1990 = vpop.f32.mrf.mxu0
      %v1991 = vadd.f32 %v1830, %v1990
      %v1992 = vpop.f32.mrf.mxu0
      %v1993 = vpop.f32.mrf.mxu0
      %v1994 = vadd.f32 %v1833, %v1993
      %v1995 = vpop.f32.mrf.mxu0
      %1996 = vmatprep.mubr.bf16.mxu0 %v848
      %1997 = vmatmul.mubr.bf16.gmra.mxu0 %v847
      %v1998 = vpop.f32.mrf.mxu0
      %v1999 = vadd.f32 %v1838, %v1998
      %v2000 = vpop.f32.mrf.mxu0
      %v2001 = vpop.f32.mrf.mxu0
      %v2002 = vadd.f32 %v1841, %v2001
      %v2003 = vpop.f32.mrf.mxu0
      %2004 = vmatprep.mubr.bf16.mxu0 %v856
      %2005 = vmatmul.mubr.bf16.gmra.mxu0 %v855
      %v2006 = vpop.f32.mrf.mxu0
      %v2007 = vadd.f32 %v1846, %v2006
      %v2008 = vpop.f32.mrf.mxu0
      %v2009 = vpop.f32.mrf.mxu0
      %v2010 = vadd.f32 %v1849, %v2009
      %v2011 = vpop.f32.mrf.mxu0
      %2012 = vmatprep.mubr.bf16.mxu0 %v864
      %2013 = vmatmul.mubr.bf16.gmra.mxu0 %v863
      %v2014 = vpop.f32.mrf.mxu0
      %v2015 = vadd.f32 %v1854, %v2014
      %v2016 = vpop.f32.mrf.mxu0
      %v2017 = vpop.f32.mrf.mxu0
      %v2018 = vadd.f32 %v1857, %v2017
      %v2019 = vpop.f32.mrf.mxu0
      %2020 = vmatprep.mubr.bf16.mxu0 %v872
      %2021 = vmatmul.mubr.bf16.gmra.mxu0 %v871
      %v2022 = vpop.f32.mrf.mxu0
      %v2023 = vadd.f32 %v1862, %v2022
      %v2024 = vpop.f32.mrf.mxu0
      %v2025 = vpop.f32.mrf.mxu0
      %v2026 = vadd.f32 %v1865, %v2025
      %v2027 = vpop.f32.mrf.mxu0
      %2028 = vmatprep.mubr.bf16.mxu0 %v880
      %2029 = vmatmul.mubr.bf16.gmra.mxu0 %v879
      %v2030 = vpop.f32.mrf.mxu0
      %v2031 = vadd.f32 %v1870, %v2030
      %v2032 = vpop.f32.mrf.mxu0
      %v2033 = vpop.f32.mrf.mxu0
      %v2034 = vadd.f32 %v1873, %v2033
      %v2035 = vpop.f32.mrf.mxu0
      %2036 = vmatprep.mubr.bf16.mxu0 %v888
      %2037 = vmatmul.mubr.bf16.gmra.mxu0 %v887
      %v2038 = vpop.f32.mrf.mxu0
      %v2039 = vadd.f32 %v1878, %v2038
      %v2040 = vpop.f32.mrf.mxu0
      %v2041 = vpop.f32.mrf.mxu0
      %v2042 = vadd.f32 %v1881, %v2041
      %v2043 = vpop.f32.mrf.mxu0
      %2044 = vmatprep.mubr.bf16.mxu0 %v896
      %2045 = vmatmul.mubr.bf16.gmra.mxu0 %v895
      %v2046 = vpop.f32.mrf.mxu0
      %v2047 = vadd.f32 %v1886, %v2046
      %v2048 = vpop.f32.mrf.mxu0
      %v2049 = vpop.f32.mrf.mxu0
      %v2050 = vadd.f32 %v1889, %v2049
      %v2051 = vpop.f32.mrf.mxu0
      %2052 = vmatprep.mubr.bf16.mxu0 %v904
      %2053 = vmatmul.mubr.bf16.gmra.mxu0 %v903
      %v2054 = vpop.f32.mrf.mxu0
      %v2055 = vadd.f32 %v1894, %v2054
      %v2056 = vpop.f32.mrf.mxu0
      %v2057 = vpop.f32.mrf.mxu0
      %v2058 = vadd.f32 %v1897, %v2057
      %v2059 = vpop.f32.mrf.mxu0
      %2060 = vmatprep.mubr.bf16.mxu0 %v912
      %2061 = vmatmul.mubr.bf16.gmra.mxu0 %v911
      %v2062 = vpop.f32.mrf.mxu0
      %v2063 = vadd.f32 %v1902, %v2062
      %v2064 = vpop.f32.mrf.mxu0
      %v2065 = vpop.f32.mrf.mxu0
      %v2066 = vadd.f32 %v1905, %v2065
      %v2067 = vpop.f32.mrf.mxu0
      %2068 = vmatprep.mubr.bf16.mxu0 %v920
      %2069 = vmatmul.mubr.bf16.gmra.mxu0 %v919
      %v2070 = vpop.f32.mrf.mxu0
      %v2071 = vadd.f32 %v1910, %v2070
      %v2072 = vpop.f32.mrf.mxu0
      %v2073 = vpop.f32.mrf.mxu0
      %v2074 = vadd.f32 %v1913, %v2073
      %v2075 = vpop.f32.mrf.mxu0
      %2076 = vmatprep.mubr.bf16.mxu0 %v928
      %2077 = vmatmul.mubr.bf16.gmra.mxu0 %v927
      %v2078 = vpop.f32.mrf.mxu0
      %v2079 = vadd.f32 %v1918, %v2078
      %v2080 = vpop.f32.mrf.mxu0
      %v2081 = vpop.f32.mrf.mxu0
      %v2082 = vadd.f32 %v1921, %v2081
      %v2083 = vpop.f32.mrf.mxu0
      %2084 = vmatprep.mubr.bf16.mxu0 %v936
      %2085 = vmatmul.mubr.bf16.gmra.mxu0 %v935
      %v2086 = vpop.f32.mrf.mxu0
      %v2087 = vadd.f32 %v1926, %v2086
      %v2088 = vpop.f32.mrf.mxu0
      %v2089 = vpop.f32.mrf.mxu0
      %v2090 = vadd.f32 %v1929, %v2089
      %v2091 = vpop.f32.mrf.mxu0
      %2092 = vmatprep.mubr.bf16.mxu0 %v944
      %2093 = vmatmul.mubr.bf16.gmra.mxu0 %v943
      %v2094 = vpop.f32.mrf.mxu0
      %v2095 = vadd.f32 %v1934, %v2094
      %v2096 = vpop.f32.mrf.mxu0
      %v2097 = vpop.f32.mrf.mxu0
      %v2098 = vadd.f32 %v1937, %v2097
      %v2099 = vpop.f32.mrf.mxu0
      %2100 = vmatprep.mubr.bf16.mxu0 %v952
      %2101 = vmatmul.mubr.bf16.gmra.mxu0 %v951
      %v2102 = vpop.f32.mrf.mxu0
      %v2103 = vadd.f32 %v1942, %v2102
      %v2104 = vpop.f32.mrf.mxu0
      %v2105 = vpop.f32.mrf.mxu0
      %v2106 = vadd.f32 %v1945, %v2105
      %v2107 = vpop.f32.mrf.mxu0
      %2108 = vdwg.mxu0
      %v2109 = vmax.f32 %v1983, 0.0
      %v2110 = vmax.f32 %v1986, 0.0
      %v2111 = vmax.f32 %v1991, 0.0
      %v2112 = vmax.f32 %v1994, 0.0
      %v2113 = vmax.f32 %v1999, 0.0
      %v2114 = vmax.f32 %v2002, 0.0
      %v2115 = vmax.f32 %v2007, 0.0
      %v2116 = vmax.f32 %v2010, 0.0
      %v2117 = vmax.f32 %v2015, 0.0
      %v2118 = vmax.f32 %v2018, 0.0
      %v2119 = vmax.f32 %v2023, 0.0
      %v2120 = vmax.f32 %v2026, 0.0
      %v2121 = vmax.f32 %v2031, 0.0
      %v2122 = vmax.f32 %v2034, 0.0
      %v2123 = vmax.f32 %v2039, 0.0
      %v2124 = vmax.f32 %v2042, 0.0
      %v2125 = vmax.f32 %v2047, 0.0
      %v2126 = vmax.f32 %v2050, 0.0
      %v2127 = vmax.f32 %v2055, 0.0
      %v2128 = vmax.f32 %v2058, 0.0
      %v2129 = vmax.f32 %v2063, 0.0
      %v2130 = vmax.f32 %v2066, 0.0
      %v2131 = vmax.f32 %v2071, 0.0
      %v2132 = vmax.f32 %v2074, 0.0
      %v2133 = vmax.f32 %v2079, 0.0
      %v2134 = vmax.f32 %v2082, 0.0
      %v2135 = vmax.f32 %v2087, 0.0
      %v2136 = vmax.f32 %v2090, 0.0
      %v2137 = vmax.f32 %v2095, 0.0
      %v2138 = vmax.f32 %v2098, 0.0
      %v2139 = vmax.f32 %v2103, 0.0
      %v2140 = vmax.f32 %v2106, 0.0
      %v2141 = vpack.c.bf16 %v2110, %v2109
      %v2142 = vpack.c.bf16 %v2112, %v2111
      %v2143 = vpack.c.bf16 %v2114, %v2113
      %v2144 = vpack.c.bf16 %v2116, %v2115
      %v2145 = vpack.c.bf16 %v2118, %v2117
      %v2146 = vpack.c.bf16 %v2120, %v2119
      %v2147 = vpack.c.bf16 %v2122, %v2121
      %v2148 = vpack.c.bf16 %v2124, %v2123
      %v2149 = vpack.c.bf16 %v2126, %v2125
      %v2150 = vpack.c.bf16 %v2128, %v2127
      %v2151 = vpack.c.bf16 %v2130, %v2129
      %v2152 = vpack.c.bf16 %v2132, %v2131
      %v2153 = vpack.c.bf16 %v2134, %v2133
      %v2154 = vpack.c.bf16 %v2136, %v2135
      %v2155 = vpack.c.bf16 %v2138, %v2137
      %v2156 = vpack.c.bf16 %v2140, %v2139
      %v2173 = vunpack.c.l.b16 %v2141
      %v2174 = vunpack.c.h.b16 %v2141
      %v2175 = vunpack.c.l.b16 %v2142
      %v2176 = vunpack.c.h.b16 %v2142
      %v2177 = vunpack.c.l.b16 %v2143
      %v2178 = vunpack.c.h.b16 %v2143
      %v2179 = vunpack.c.l.b16 %v2144
      %v2180 = vunpack.c.h.b16 %v2144
      %v2181 = vunpack.c.l.b16 %v2145
      %v2182 = vunpack.c.h.b16 %v2145
      %v2183 = vunpack.c.l.b16 %v2146
      %v2184 = vunpack.c.h.b16 %v2146
      %v2185 = vunpack.c.l.b16 %v2147
      %v2186 = vunpack.c.h.b16 %v2147
      %v2187 = vunpack.c.l.b16 %v2148
      %v2188 = vunpack.c.h.b16 %v2148
      %v2189 = vunpack.c.l.b16 %v2149
      %v2190 = vunpack.c.h.b16 %v2149
      %v2191 = vunpack.c.l.b16 %v2150
      %v2192 = vunpack.c.h.b16 %v2150
      %v2193 = vunpack.c.l.b16 %v2151
      %v2194 = vunpack.c.h.b16 %v2151
      %v2195 = vunpack.c.l.b16 %v2152
      %v2196 = vunpack.c.h.b16 %v2152
      %v2197 = vunpack.c.l.b16 %v2153
      %v2198 = vunpack.c.h.b16 %v2153
      %v2199 = vunpack.c.l.b16 %v2154
      %v2200 = vunpack.c.h.b16 %v2154
      %v2201 = vunpack.c.l.b16 %v2155
      %v2202 = vunpack.c.h.b16 %v2155
      %v2203 = vunpack.c.l.b16 %v2156
      %v2204 = vunpack.c.h.b16 %v2156
      %v2205 = vpack.c.b16 %v2173, %v2173
      %v2206 = vpack.c.b16 %v2174, %v2174
      %v2207 = vpack.c.b16 %v2175, %v2175
      %v2208 = vpack.c.b16 %v2176, %v2176
      %v2209 = vpack.c.b16 %v2177, %v2177
      %v2210 = vpack.c.b16 %v2178, %v2178
      %v2211 = vpack.c.b16 %v2179, %v2179
      %v2212 = vpack.c.b16 %v2180, %v2180
      %v2213 = vpack.c.b16 %v2181, %v2181
      %v2214 = vpack.c.b16 %v2182, %v2182
      %v2215 = vpack.c.b16 %v2183, %v2183
      %v2216 = vpack.c.b16 %v2184, %v2184
      %v2217 = vpack.c.b16 %v2185, %v2185
      %v2218 = vpack.c.b16 %v2186, %v2186
      %v2219 = vpack.c.b16 %v2187, %v2187
      %v2220 = vpack.c.b16 %v2188, %v2188
      %v2221 = vpack.c.b16 %v2189, %v2189
      %v2222 = vpack.c.b16 %v2190, %v2190
      %v2223 = vpack.c.b16 %v2191, %v2191
      %v2224 = vpack.c.b16 %v2192, %v2192
      %v2225 = vpack.c.b16 %v2193, %v2193
      %v2226 = vpack.c.b16 %v2194, %v2194
      %v2227 = vpack.c.b16 %v2195, %v2195
      %v2228 = vpack.c.b16 %v2196, %v2196
      %v2229 = vpack.c.b16 %v2197, %v2197
      %v2230 = vpack.c.b16 %v2198, %v2198
      %v2231 = vpack.c.b16 %v2199, %v2199
      %v2232 = vpack.c.b16 %v2200, %v2200
      %v2233 = vpack.c.b16 %v2201, %v2201
      %v2234 = vpack.c.b16 %v2202, %v2202
      %v2235 = vpack.c.b16 %v2203, %v2203
      %v2236 = vpack.c.b16 %v2204, %v2204
      %vm2269 = vcmask 257024
      %2270 = vst.msk [vmem:[%s175] sm:$0xf] %vm2269, %v2205
      %2271 = vst.msk [vmem:[%s175 + $0x4] sm:$0xf] %vm2269, %v2206
      %2272 = vst.msk [vmem:[%s175 + $0x8] sm:$0xf] %vm2269, %v2207
      %2273 = vst.msk [vmem:[%s175 + $0xc] sm:$0xf] %vm2269, %v2208
      %2274 = vst.msk [vmem:[%s175 + $0x10] sm:$0xf] %vm2269, %v2209
      %2275 = vst.msk [vmem:[%s175 + $0x14] sm:$0xf] %vm2269, %v2210
      %2276 = vst.msk [vmem:[%s175 + $0x18] sm:$0xf] %vm2269, %v2211
      %2277 = vst.msk [vmem:[%s175 + $0x1c] sm:$0xf] %vm2269, %v2212
      %2278 = vst.msk [vmem:[%s175 + $0x20] sm:$0xf] %vm2269, %v2213
      %2279 = vst.msk [vmem:[%s175 + $0x24] sm:$0xf] %vm2269, %v2214
      %2280 = vst.msk [vmem:[%s175 + $0x28] sm:$0xf] %vm2269, %v2215
      %2281 = vst.msk [vmem:[%s175 + $0x2c] sm:$0xf] %vm2269, %v2216
      %2282 = vst.msk [vmem:[%s175 + $0x30] sm:$0xf] %vm2269, %v2217
      %2283 = vst.msk [vmem:[%s175 + $0x34] sm:$0xf] %vm2269, %v2218
      %2284 = vst.msk [vmem:[%s175 + $0x38] sm:$0xf] %vm2269, %v2219
      %2285 = vst.msk [vmem:[%s175 + $0x3c] sm:$0xf] %vm2269, %v2220
      %2286 = vst.msk [vmem:[%s175 + $0x40] sm:$0xf] %vm2269, %v2221
      %2287 = vst.msk [vmem:[%s175 + $0x44] sm:$0xf] %vm2269, %v2222
      %2288 = vst.msk [vmem:[%s175 + $0x48] sm:$0xf] %vm2269, %v2223
      %2289 = vst.msk [vmem:[%s175 + $0x4c] sm:$0xf] %vm2269, %v2224
      %2290 = vst.msk [vmem:[%s175 + $0x50] sm:$0xf] %vm2269, %v2225
      %2291 = vst.msk [vmem:[%s175 + $0x54] sm:$0xf] %vm2269, %v2226
      %2292 = vst.msk [vmem:[%s175 + $0x58] sm:$0xf] %vm2269, %v2227
      %2293 = vst.msk [vmem:[%s175 + $0x5c] sm:$0xf] %vm2269, %v2228
      %2294 = vst.msk [vmem:[%s175 + $0x60] sm:$0xf] %vm2269, %v2229
      %2295 = vst.msk [vmem:[%s175 + $0x64] sm:$0xf] %vm2269, %v2230
      %2296 = vst.msk [vmem:[%s175 + $0x68] sm:$0xf] %vm2269, %v2231
      %2297 = vst.msk [vmem:[%s175 + $0x6c] sm:$0xf] %vm2269, %v2232
      %2298 = vst.msk [vmem:[%s175 + $0x70] sm:$0xf] %vm2269, %v2233
      %2299 = vst.msk [vmem:[%s175 + $0x74] sm:$0xf] %vm2269, %v2234
      %2300 = vst.msk [vmem:[%s175 + $0x78] sm:$0xf] %vm2269, %v2235
      %2301 = vst.msk [vmem:[%s175 + $0x7c] sm:$0xf] %vm2269, %v2236
      %s2302 = smul.u32 32, %s14
      %p2303 = scmp.lt.s32.totalorder %s2302, 63
      %s2304 = scalar_select %p2303, %s2302, 63
      %s2305 = smul.addr %s2304, 4
      %s2306 = scalar_lea.vmem %s3, %s2305
      // Predicated region
      $region33: #{conv_decoder_forward.6} parent=31 // pred_check
        %p2307 = pneg %p100
      $region34: #{conv_decoder_forward.6} parent=31 // pred_check_branch
        %2309 = sbr.rel (%p2307) target = $region36
      $region35: #{conv_decoder_forward.6} parent=31 // pred_region
        %s2310 = smul.u32 32, %s14
      $region36: #{conv_decoder_forward.6} parent=31 // pred_fallthru
        _
    $region32: #{conv_decoder_forward.6} parent=5 // pred_fallthru
      _
    %p2311 = scmp.le.s32.totalorder 2, %s9
    // Predicated region
    $region37: #{conv_decoder_forward.6} parent=5 // pred_check
      %p2312 = pneg %p2311
    $region38: #{conv_decoder_forward.6} parent=5 // pred_check_branch
      %2314 = sbr.rel (%p2312) target = $region40
    $region39: #{conv_decoder_forward.6} parent=5 // pred_region
      %s2315 = ssub.s32 %s9, 2
      // Predicated region
      $region41: #{conv_decoder_forward.6} parent=39 // pred_check
        %p2316 = pneg %p106
      $region42: #{conv_decoder_forward.6} parent=39 // pred_check_branch
        %2318 = sbr.rel (%p2316) target = $region44
      $region43: #{conv_decoder_forward.6} parent=39 // pred_region
        %s2319 = smul.u32 32, %s15
        %p2320 = scmp.lt.s32.totalorder %s2319, 63
        %s2321 = scalar_select %p2320, %s2319, 63
        %s2322 = smul.addr %s2321, 4
        %s2323 = scalar_lea.vmem %s3, %s2322
      $region44: #{conv_decoder_forward.6} parent=39 // pred_fallthru
        _
    $region40: #{conv_decoder_forward.6} parent=5 // pred_fallthru
      _
  $region6: #{conv_decoder_forward.6} parent=0 // loop_footer
    %s13 = sadd.s32 1, %s9
  $region7: #{conv_decoder_forward.6} parent=0 // loop_footer_branch
    %8 = sbr.rel target = $region3
  $region8: #{conv_decoder_forward.6} parent=0 // loop_exit
    _

// kernel: conv_decoder_forward.7
$region0: #{conv_decoder_forward.7}
  #allocation0 [shape = 'u32[]', space=smem, size = 0x4, offset = 0x4, fixed_abs, tag = 'smem constant byte address 0x4 - core index']
  #allocation1 [shape = 'u32[144,128]{1,0:T(1,128)}', space=vmem, size = 0x12000, scoped, tag = 'internal scratch']
  %s0 = inlined_call_operand.vmem [shape: bf16[2048,512], index: 0, kind: input, shape index: {}]
  %s1 = inlined_call_operand.vmem [shape: bf16[512,8], index: 1, kind: input, shape index: {}]
  %s2 = inlined_call_operand.vmem [shape: f32[1,8], index: 2, kind: input, shape index: {}]
  %s3 = inlined_call_operand.vmem [shape: f32[2048,8], index: 3, kind: output, shape index: {}]
  %s4 = sld [smem:[#allocation0]]
  $region45: #{conv_decoder_forward.7} parent=0
    _
  %s6 = ssub.s32 1, %s4
  %s7 = scalar_select 0, %s6, %s4
  loop: start=0, step=1, limit=6
  $region2: #{conv_decoder_forward.7} parent=0 // loop_pre_header
    _
  $region3: #{conv_decoder_forward.7} parent=0 // loop_header
    %s9 = sphi 0, %s13
    %p10 = scmp.ge.s32.totalorder %s9, 6
    %s19 = sphi 0, %s21
    %s22 = sphi 0, %s19
    %s23 = sphi 0, %s22
    %s39 = sphi 0, %s23
    %s43 = sphi 0, %s43
    %s45 = sphi 0, %s43
    %s46 = sphi 0, %s45
    %s60 = sphi 0, %s46
    %s64 = sphi 0, %s64
    %s66 = sphi 0, %s64
    %s67 = sphi 0, %s66
    %s81 = sphi 0, %s67
    %s87 = sphi 0, %s89
    %s90 = sphi 0, %s87
    %s91 = sphi 0, %s90
    %s107 = sphi 0, %s91
  $region4: #{conv_decoder_forward.7} parent=0 // loop_header_branch
    %12 = sbr.rel (%p10) target = $region8
  $region5: #{conv_decoder_forward.7} parent=0 // loop_body
    %s14 = ssub.s32 %s9, 1
    %s15 = ssub.s32 %s9, 2
    %s16 = sadd.s32 %s9, 1
    %s17 = ssub.s32 %s9, %s16
    %p18 = scmp.eq.s32.totalorder %s17, 0
    %s20 = sadd.s32 %s19, 1
    %s21 = scalar_select %p18, %s19, %s20
    %p24 = pneg %p18
    %p25 = scmp.eq.s32.totalorder %s9, 3
    %p26 = por %p24, %p25
    %p27 = scmp.ne.s32.totalorder %s19, %s22
    %p28 = scmp.eq.s32.totalorder %s9, 0
    %p29 = por %p27, %p28
    %p30 = scmp.ne.s32.totalorder %s19, %s22
    %p31 = scmp.eq.s32.totalorder %s14, 3
    %p32 = por %p30, %p31
    %p33 = scmp.ne.s32.totalorder %s22, %s23
    %p34 = scmp.eq.s32.totalorder %s14, 0
    %p35 = por %p33, %p34
    %p36 = scmp.ne.s32.totalorder %s22, %s23
    %p37 = scmp.eq.s32.totalorder %s15, 3
    %p38 = por %p36, %p37
    %p40 = scmp.ne.s32.totalorder %s23, %s39
    %p41 = scmp.eq.s32.totalorder %s15, 0
    %p42 = por %p40, %p41
    %s44 = sadd.s32 %s43, 1
    %p47 = scmp.eq.s32.totalorder %s9, 3
    %p48 = scmp.ne.s32.totalorder %s43, %s45
    %p49 = scmp.eq.s32.totalorder %s9, 0
    %p50 = por %p48, %p49
    %p51 = scmp.ne.s32.totalorder %s43, %s45
    %p52 = scmp.eq.s32.totalorder %s14, 3
    %p53 = por %p51, %p52
    %p54 = scmp.ne.s32.totalorder %s45, %s46
    %p55 = scmp.eq.s32.totalorder %s14, 0
    %p56 = por %p54, %p55
    %p57 = scmp.ne.s32.totalorder %s45, %s46
    %p58 = scmp.eq.s32.totalorder %s15, 3
    %p59 = por %p57, %p58
    %p61 = scmp.ne.s32.totalorder %s46, %s60
    %p62 = scmp.eq.s32.totalorder %s15, 0
    %p63 = por %p61, %p62
    %s65 = sadd.s32 %s64, 1
    %p68 = scmp.eq.s32.totalorder %s9, 3
    %p69 = scmp.ne.s32.totalorder %s64, %s66
    %p70 = scmp.eq.s32.totalorder %s9, 0
    %p71 = por %p69, %p70
    %p72 = scmp.ne.s32.totalorder %s64, %s66
    %p73 = scmp.eq.s32.totalorder %s14, 3
    %p74 = por %p72, %p73
    %p75 = scmp.ne.s32.totalorder %s66, %s67
    %p76 = scmp.eq.s32.totalorder %s14, 0
    %p77 = por %p75, %p76
    %p78 = scmp.ne.s32.totalorder %s66, %s67
    %p79 = scmp.eq.s32.totalorder %s15, 3
    %p80 = por %p78, %p79
    %p82 = scmp.ne.s32.totalorder %s67, %s81
    %p83 = scmp.eq.s32.totalorder %s15, 0
    %p84 = por %p82, %p83
    %s85 = ssub.s32 %s9, %s16
    %p86 = scmp.eq.s32.totalorder %s85, 0
    %s88 = sadd.s32 %s87, 1
    %s89 = scalar_select %p86, %s87, %s88
    %p92 = pneg %p86
    %p93 = scmp.eq.s32.totalorder %s9, 3
    %p94 = por %p92, %p93
    %p95 = scmp.ne.s32.totalorder %s87, %s90
    %p96 = scmp.eq.s32.totalorder %s9, 0
    %p97 = por %p95, %p96
    %p98 = scmp.ne.s32.totalorder %s87, %s90
    %p99 = scmp.eq.s32.totalorder %s14, 3
    %p100 = por %p98, %p99
    %p101 = scmp.ne.s32.totalorder %s90, %s91
    %p102 = scmp.eq.s32.totalorder %s14, 0
    %p103 = por %p101, %p102
    %p104 = scmp.ne.s32.totalorder %s90, %s91
    %p105 = scmp.eq.s32.totalorder %s15, 3
    %p106 = por %p104, %p105
    %p108 = scmp.ne.s32.totalorder %s91, %s107
    %p109 = scmp.eq.s32.totalorder %s15, 0
    %p110 = por %p108, %p109
    %p111 = scmp.le.s32.totalorder 1, %s9
    %p112 = scmp.lt.s32.totalorder %s9, 5
    %p113 = pnand %p111, %p112
    %p114 = pneg %p113
    // Predicated region
    $region9: #{conv_decoder_forward.7} parent=5 // pred_check
      _
    $region10: #{conv_decoder_forward.7} parent=5 // pred_check_branch
      %116 = sbr.rel (%p113) target = $region12
    $region11: #{conv_decoder_forward.7} parent=5 // pred_region
      %s117 = ssub.s32 %s9, 1
      // Predicated region
      $region13: #{conv_decoder_forward.7} parent=11 // pred_check
        %p118 = pneg %p56
      $region14: #{conv_decoder_forward.7} parent=11 // pred_check_branch
        %120 = sbr.rel (%p118) target = $region16
      $region15: #{conv_decoder_forward.7} parent=11 // pred_region
        _
      $region16: #{conv_decoder_forward.7} parent=11 // pred_fallthru
        _
      // Predicated region
      $region17: #{conv_decoder_forward.7} parent=11 // pred_check
        %p121 = pneg %p77
      $region18: #{conv_decoder_forward.7} parent=11 // pred_check_branch
        %123 = sbr.rel (%p121) target = $region20
      $region19: #{conv_decoder_forward.7} parent=11 // pred_region
        _
      $region20: #{conv_decoder_forward.7} parent=11 // pred_fallthru
        _
    $region12: #{conv_decoder_forward.7} parent=5 // pred_fallthru
      _
    %p124 = scmp.lt.s32.totalorder %s9, 4
    // Predicated region
    $region21: #{conv_decoder_forward.7} parent=5 // pred_check
      %p125 = pneg %p124
    $region22: #{conv_decoder_forward.7} parent=5 // pred_check_branch
      %127 = sbr.rel (%p125) target = $region24
    $region23: #{conv_decoder_forward.7} parent=5 // pred_region
      // Predicated region
      $region25: #{conv_decoder_forward.7} parent=23 // pred_check
        %p128 = pneg %p29
      $region26: #{conv_decoder_forward.7} parent=23 // pred_check_branch
        %130 = sbr.rel (%p128) target = $region28
      $region27: #{conv_decoder_forward.7} parent=23 // pred_region
        %s131 = smul.u32 64, %s9
        %p132 = scmp.lt.s32.totalorder %s131, 255
        %s133 = scalar_select %p132, %s131, 255
        %s134 = smul.addr %s133, 4
        %s135 = smul.addr %s134, 4
        %s136 = scalar_lea.vmem %s0, %s135
        %s137 = smul.u32 64, %s9
      $region28: #{conv_decoder_forward.7} parent=23 // pred_fallthru
        _
    $region24: #{conv_decoder_forward.7} parent=5 // pred_fallthru
      _
    %p138 = scmp.le.s32.totalorder 1, %s9
    %p139 = scmp.lt.s32.totalorder %s9, 5
    %p140 = pnand %p138, %p139
    %p141 = pneg %p140
    // Predicated region
    $region29: #{conv_decoder_forward.7} parent=5 // pred_check
      _
    $region30: #{conv_decoder_forward.7} parent=5 // pred_check_branch
      %143 = sbr.rel (%p140) target = $region32
    $region31: #{conv_decoder_forward.7} parent=5 // pred_region
      %s144 = ssub.s32 %s9, 1
      %s145 = smul.u32 64, %s14
      %p146 = scmp.lt.s32.totalorder %s145, 255
      %s147 = scalar_select %p146, %s145, 255
      %s148 = smul.addr %s147, 4
      %s149 = smul.addr %s148, 4
      %s150 = scalar_lea.vmem %s0, %s149
      %p151 = pneg %p35
      %p152 = pneg %p32
      %p153 = pneg %p56
      %p154 = pneg %p53
      %p155 = pneg %p77
      %p156 = pneg %p74
      %p157 = pneg %p103
      %p158 = pneg %p100
      %s159 = smul.u32 64, %s14
      %p160 = scmp.lt.s32.totalorder %s159, 255
      %s161 = scalar_select %p160, %s159, 255
      %s162 = smul.addr %s161, 8
      %s163 = scalar_lea.vmem %s3, %s162
      %s164 = smul.u32 64, %s14
      %p165 = scmp.lt.s32.totalorder %s164, 255
      %s166 = scalar_select %p165, %s164, 255
      %s167 = smul.addr %s166, 4
      %s168 = smul.addr %s167, 4
      %s169 = scalar_lea.vmem %s0, %s168
      %s170 = smul.u32 64, %s14
      %s171 = smul.u32 64, %s14
      %p172 = scmp.lt.s32.totalorder %s171, 255
      %s173 = scalar_select %p172, %s171, 255
      %s174 = smul.addr %s173, 8
      %s175 = scalar_lea.vmem %s3, %s174
      %s176 = smul.u32 64, %s14
      %v178 = vld [vmem:[%s169] sm:$0xff]
      %v179 = vld [vmem:[%s169 + $0x8] sm:$0xff]
      %v180 = vld [vmem:[%s169 + $0x10] sm:$0xff]
      %v181 = vld [vmem:[%s169 + $0x18] sm:$0xff]
      %v182 = vld [vmem:[%s169 + $0x20] sm:$0xff]
      %v183 = vld [vmem:[%s169 + $0x28] sm:$0xff]
      %v184 = vld [vmem:[%s169 + $0x30] sm:$0xff]
      %v185 = vld [vmem:[%s169 + $0x38] sm:$0xff]
      %v186 = vld [vmem:[%s169 + $0x40] sm:$0xff]
      %v187 = vld [vmem:[%s169 + $0x48] sm:$0xff]
      %v188 = vld [vmem:[%s169 + $0x50] sm:$0xff]
      %v189 = vld [vmem:[%s169 + $0x58] sm:$0xff]
      %v190 = vld [vmem:[%s169 + $0x60] sm:$0xff]
      %v191 = vld [vmem:[%s169 + $0x68] sm:$0xff]
      %v192 = vld [vmem:[%s169 + $0x70] sm:$0xff]
      %v193 = vld [vmem:[%s169 + $0x78] sm:$0xff]
      %v194 = vld [vmem:[%s169 + $0x80] sm:$0xff]
      %v195 = vld [vmem:[%s169 + $0x88] sm:$0xff]
      %v196 = vld [vmem:[%s169 + $0x90] sm:$0xff]
      %v197 = vld [vmem:[%s169 + $0x98] sm:$0xff]
      %v198 = vld [vmem:[%s169 + $0xa0] sm:$0xff]
      %v199 = vld [vmem:[%s169 + $0xa8] sm:$0xff]
      %v200 = vld [vmem:[%s169 + $0xb0] sm:$0xff]
      %v201 = vld [vmem:[%s169 + $0xb8] sm:$0xff]
      %v202 = vld [vmem:[%s169 + $0xc0] sm:$0xff]
      %v203 = vld [vmem:[%s169 + $0xc8] sm:$0xff]
      %v204 = vld [vmem:[%s169 + $0xd0] sm:$0xff]
      %v205 = vld [vmem:[%s169 + $0xd8] sm:$0xff]
      %v206 = vld [vmem:[%s169 + $0xe0] sm:$0xff]
      %v207 = vld [vmem:[%s169 + $0xe8] sm:$0xff]
      %v208 = vld [vmem:[%s169 + $0xf0] sm:$0xff]
      %v209 = vld [vmem:[%s169 + $0xf8] sm:$0xff]
      %v210 = vld [vmem:[%s169 + $0x100] sm:$0xff]
      %v211 = vld [vmem:[%s169 + $0x108] sm:$0xff]
      %v212 = vld [vmem:[%s169 + $0x110] sm:$0xff]
      %v213 = vld [vmem:[%s169 + $0x118] sm:$0xff]
      %v214 = vld [vmem:[%s169 + $0x120] sm:$0xff]
      %v215 = vld [vmem:[%s169 + $0x128] sm:$0xff]
      %v216 = vld [vmem:[%s169 + $0x130] sm:$0xff]
      %v217 = vld [vmem:[%s169 + $0x138] sm:$0xff]
      %v218 = vld [vmem:[%s169 + $0x140] sm:$0xff]
      %v219 = vld [vmem:[%s169 + $0x148] sm:$0xff]
      %v220 = vld [vmem:[%s169 + $0x150] sm:$0xff]
      %v221 = vld [vmem:[%s169 + $0x158] sm:$0xff]
      %v222 = vld [vmem:[%s169 + $0x160] sm:$0xff]
      %v223 = vld [vmem:[%s169 + $0x168] sm:$0xff]
      %v224 = vld [vmem:[%s169 + $0x170] sm:$0xff]
      %v225 = vld [vmem:[%s169 + $0x178] sm:$0xff]
      %v226 = vld [vmem:[%s169 + $0x180] sm:$0xff]
      %v227 = vld [vmem:[%s169 + $0x188] sm:$0xff]
      %v228 = vld [vmem:[%s169 + $0x190] sm:$0xff]
      %v229 = vld [vmem:[%s169 + $0x198] sm:$0xff]
      %v230 = vld [vmem:[%s169 + $0x1a0] sm:$0xff]
      %v231 = vld [vmem:[%s169 + $0x1a8] sm:$0xff]
      %v232 = vld [vmem:[%s169 + $0x1b0] sm:$0xff]
      %v233 = vld [vmem:[%s169 + $0x1b8] sm:$0xff]
      %v234 = vld [vmem:[%s169 + $0x1c0] sm:$0xff]
      %v235 = vld [vmem:[%s169 + $0x1c8] sm:$0xff]
      %v236 = vld [vmem:[%s169 + $0x1d0] sm:$0xff]
      %v237 = vld [vmem:[%s169 + $0x1d8] sm:$0xff]
      %v238 = vld [vmem:[%s169 + $0x1e0] sm:$0xff]
      %v239 = vld [vmem:[%s169 + $0x1e8] sm:$0xff]
      %v240 = vld [vmem:[%s169 + $0x1f0] sm:$0xff]
      %v241 = vld [vmem:[%s169 + $0x1f8] sm:$0xff]
      %v242 = vld [vmem:[%s169 + $0x200] sm:$0xff]
      %v243 = vld [vmem:[%s169 + $0x208] sm:$0xff]
      %v244 = vld [vmem:[%s169 + $0x210] sm:$0xff]
      %v245 = vld [vmem:[%s169 + $0x218] sm:$0xff]
      %v246 = vld [vmem:[%s169 + $0x220] sm:$0xff]
      %v247 = vld [vmem:[%s169 + $0x228] sm:$0xff]
      %v248 = vld [vmem:[%s169 + $0x230] sm:$0xff]
      %v249 = vld [vmem:[%s169 + $0x238] sm:$0xff]
      %v250 = vld [vmem:[%s169 + $0x240] sm:$0xff]
      %v251 = vld [vmem:[%s169 + $0x248] sm:$0xff]
      %v252 = vld [vmem:[%s169 + $0x250] sm:$0xff]
      %v253 = vld [vmem:[%s169 + $0x258] sm:$0xff]
      %v254 = vld [vmem:[%s169 + $0x260] sm:$0xff]
      %v255 = vld [vmem:[%s169 + $0x268] sm:$0xff]
      %v256 = vld [vmem:[%s169 + $0x270] sm:$0xff]
      %v257 = vld [vmem:[%s169 + $0x278] sm:$0xff]
      %v258 = vld [vmem:[%s169 + $0x280] sm:$0xff]
      %v259 = vld [vmem:[%s169 + $0x288] sm:$0xff]
      %v260 = vld [vmem:[%s169 + $0x290] sm:$0xff]
      %v261 = vld [vmem:[%s169 + $0x298] sm:$0xff]
      %v262 = vld [vmem:[%s169 + $0x2a0] sm:$0xff]
      %v263 = vld [vmem:[%s169 + $0x2a8] sm:$0xff]
      %v264 = vld [vmem:[%s169 + $0x2b0] sm:$0xff]
      %v265 = vld [vmem:[%s169 + $0x2b8] sm:$0xff]
      %v266 = vld [vmem:[%s169 + $0x2c0] sm:$0xff]
      %v267 = vld [vmem:[%s169 + $0x2c8] sm:$0xff]
      %v268 = vld [vmem:[%s169 + $0x2d0] sm:$0xff]
      %v269 = vld [vmem:[%s169 + $0x2d8] sm:$0xff]
      %v270 = vld [vmem:[%s169 + $0x2e0] sm:$0xff]
      %v271 = vld [vmem:[%s169 + $0x2e8] sm:$0xff]
      %v272 = vld [vmem:[%s169 + $0x2f0] sm:$0xff]
      %v273 = vld [vmem:[%s169 + $0x2f8] sm:$0xff]
      %v274 = vld [vmem:[%s169 + $0x300] sm:$0xff]
      %v275 = vld [vmem:[%s169 + $0x308] sm:$0xff]
      %v276 = vld [vmem:[%s169 + $0x310] sm:$0xff]
      %v277 = vld [vmem:[%s169 + $0x318] sm:$0xff]
      %v278 = vld [vmem:[%s169 + $0x320] sm:$0xff]
      %v279 = vld [vmem:[%s169 + $0x328] sm:$0xff]
      %v280 = vld [vmem:[%s169 + $0x330] sm:$0xff]
      %v281 = vld [vmem:[%s169 + $0x338] sm:$0xff]
      %v282 = vld [vmem:[%s169 + $0x340] sm:$0xff]
      %v283 = vld [vmem:[%s169 + $0x348] sm:$0xff]
      %v284 = vld [vmem:[%s169 + $0x350] sm:$0xff]
      %v285 = vld [vmem:[%s169 + $0x358] sm:$0xff]
      %v286 = vld [vmem:[%s169 + $0x360] sm:$0xff]
      %v287 = vld [vmem:[%s169 + $0x368] sm:$0xff]
      %v288 = vld [vmem:[%s169 + $0x370] sm:$0xff]
      %v289 = vld [vmem:[%s169 + $0x378] sm:$0xff]
      %v290 = vld [vmem:[%s169 + $0x380] sm:$0xff]
      %v291 = vld [vmem:[%s169 + $0x388] sm:$0xff]
      %v292 = vld [vmem:[%s169 + $0x390] sm:$0xff]
      %v293 = vld [vmem:[%s169 + $0x398] sm:$0xff]
      %v294 = vld [vmem:[%s169 + $0x3a0] sm:$0xff]
      %v295 = vld [vmem:[%s169 + $0x3a8] sm:$0xff]
      %v296 = vld [vmem:[%s169 + $0x3b0] sm:$0xff]
      %v297 = vld [vmem:[%s169 + $0x3b8] sm:$0xff]
      %v298 = vld [vmem:[%s169 + $0x3c0] sm:$0xff]
      %v299 = vld [vmem:[%s169 + $0x3c8] sm:$0xff]
      %v300 = vld [vmem:[%s169 + $0x3d0] sm:$0xff]
      %v301 = vld [vmem:[%s169 + $0x3d8] sm:$0xff]
      %v302 = vld [vmem:[%s169 + $0x3e0] sm:$0xff]
      %v303 = vld [vmem:[%s169 + $0x3e8] sm:$0xff]
      %v304 = vld [vmem:[%s169 + $0x3f0] sm:$0xff]
      %v305 = vld [vmem:[%s169 + $0x3f8] sm:$0xff]
      %v306 = vld [vmem:[%s1] sm:$0xf]
      %v307 = vld [vmem:[%s1 + $0x4] sm:$0xf]
      %v308 = vld [vmem:[%s1 + $0x8] sm:$0xf]
      %v309 = vld [vmem:[%s1 + $0xc] sm:$0xf]
      %v310 = vld [vmem:[%s1 + $0x10] sm:$0xf]
      %v311 = vld [vmem:[%s1 + $0x14] sm:$0xf]
      %v312 = vld [vmem:[%s1 + $0x18] sm:$0xf]
      %v313 = vld [vmem:[%s1 + $0x1c] sm:$0xf]
      %v314 = vld [vmem:[%s1 + $0x20] sm:$0xf]
      %v315 = vld [vmem:[%s1 + $0x24] sm:$0xf]
      %v316 = vld [vmem:[%s1 + $0x28] sm:$0xf]
      %v317 = vld [vmem:[%s1 + $0x2c] sm:$0xf]
      %v318 = vld [vmem:[%s1 + $0x30] sm:$0xf]
      %v319 = vld [vmem:[%s1 + $0x34] sm:$0xf]
      %v320 = vld [vmem:[%s1 + $0x38] sm:$0xf]
      %v321 = vld [vmem:[%s1 + $0x3c] sm:$0xf]
      %v322 = vld [vmem:[%s1 + $0x40] sm:$0xf]
      %v323 = vld [vmem:[%s1 + $0x44] sm:$0xf]
      %v324 = vld [vmem:[%s1 + $0x48] sm:$0xf]
      %v325 = vld [vmem:[%s1 + $0x4c] sm:$0xf]
      %v326 = vld [vmem:[%s1 + $0x50] sm:$0xf]
      %v327 = vld [vmem:[%s1 + $0x54] sm:$0xf]
      %v328 = vld [vmem:[%s1 + $0x58] sm:$0xf]
      %v329 = vld [vmem:[%s1 + $0x5c] sm:$0xf]
      %v330 = vld [vmem:[%s1 + $0x60] sm:$0xf]
      %v331 = vld [vmem:[%s1 + $0x64] sm:$0xf]
      %v332 = vld [vmem:[%s1 + $0x68] sm:$0xf]
      %v333 = vld [vmem:[%s1 + $0x6c] sm:$0xf]
      %v334 = vld [vmem:[%s1 + $0x70] sm:$0xf]
      %v335 = vld [vmem:[%s1 + $0x74] sm:$0xf]
      %v336 = vld [vmem:[%s1 + $0x78] sm:$0xf]
      %v337 = vld [vmem:[%s1 + $0x7c] sm:$0xf]
      %v338 = vld [vmem:[%s1 + $0x80] sm:$0xf]
      %v339 = vld [vmem:[%s1 + $0x84] sm:$0xf]
      %v340 = vld [vmem:[%s1 + $0x88] sm:$0xf]
      %v341 = vld [vmem:[%s1 + $0x8c] sm:$0xf]
      %v342 = vld [vmem:[%s1 + $0x90] sm:$0xf]
      %v343 = vld [vmem:[%s1 + $0x94] sm:$0xf]
      %v344 = vld [vmem:[%s1 + $0x98] sm:$0xf]
      %v345 = vld [vmem:[%s1 + $0x9c] sm:$0xf]
      %v346 = vld [vmem:[%s1 + $0xa0] sm:$0xf]
      %v347 = vld [vmem:[%s1 + $0xa4] sm:$0xf]
      %v348 = vld [vmem:[%s1 + $0xa8] sm:$0xf]
      %v349 = vld [vmem:[%s1 + $0xac] sm:$0xf]
      %v350 = vld [vmem:[%s1 + $0xb0] sm:$0xf]
      %v351 = vld [vmem:[%s1 + $0xb4] sm:$0xf]
      %v352 = vld [vmem:[%s1 + $0xb8] sm:$0xf]
      %v353 = vld [vmem:[%s1 + $0xbc] sm:$0xf]
      %v354 = vld [vmem:[%s1 + $0xc0] sm:$0xf]
      %v355 = vld [vmem:[%s1 + $0xc4] sm:$0xf]
      %v356 = vld [vmem:[%s1 + $0xc8] sm:$0xf]
      %v357 = vld [vmem:[%s1 + $0xcc] sm:$0xf]
      %v358 = vld [vmem:[%s1 + $0xd0] sm:$0xf]
      %v359 = vld [vmem:[%s1 + $0xd4] sm:$0xf]
      %v360 = vld [vmem:[%s1 + $0xd8] sm:$0xf]
      %v361 = vld [vmem:[%s1 + $0xdc] sm:$0xf]
      %v362 = vld [vmem:[%s1 + $0xe0] sm:$0xf]
      %v363 = vld [vmem:[%s1 + $0xe4] sm:$0xf]
      %v364 = vld [vmem:[%s1 + $0xe8] sm:$0xf]
      %v365 = vld [vmem:[%s1 + $0xec] sm:$0xf]
      %v366 = vld [vmem:[%s1 + $0xf0] sm:$0xf]
      %v367 = vld [vmem:[%s1 + $0xf4] sm:$0xf]
      %v368 = vld [vmem:[%s1 + $0xf8] sm:$0xf]
      %v369 = vld [vmem:[%s1 + $0xfc] sm:$0xf]
      %v370 = vld [vmem:[%s2] sm:$0x1]
      %v372 = vlaneseq
      %v373 = vshrl.u32 %v372, 7
      %v374 = vsub.s32 0, %v373
      %v375 = vrot.slane %v370, %v374
      %v505 = vunpack.c.l.b16 %v178
      %v506 = vunpack.c.h.b16 %v178
      %v507 = vunpack.c.l.b16 %v179
      %v508 = vunpack.c.h.b16 %v179
      %v509 = vunpack.c.l.b16 %v180
      %v510 = vunpack.c.h.b16 %v180
      %v511 = vunpack.c.l.b16 %v181
      %v512 = vunpack.c.h.b16 %v181
      %v513 = vunpack.c.l.b16 %v182
      %v514 = vunpack.c.h.b16 %v182
      %v515 = vunpack.c.l.b16 %v183
      %v516 = vunpack.c.h.b16 %v183
      %v517 = vunpack.c.l.b16 %v184
      %v518 = vunpack.c.h.b16 %v184
      %v519 = vunpack.c.l.b16 %v185
      %v520 = vunpack.c.h.b16 %v185
      %v521 = vunpack.c.l.b16 %v186
      %v522 = vunpack.c.h.b16 %v186
      %v523 = vunpack.c.l.b16 %v187
      %v524 = vunpack.c.h.b16 %v187
      %v525 = vunpack.c.l.b16 %v188
      %v526 = vunpack.c.h.b16 %v188
      %v527 = vunpack.c.l.b16 %v189
      %v528 = vunpack.c.h.b16 %v189
      %v529 = vunpack.c.l.b16 %v190
      %v530 = vunpack.c.h.b16 %v190
      %v531 = vunpack.c.l.b16 %v191
      %v532 = vunpack.c.h.b16 %v191
      %v533 = vunpack.c.l.b16 %v192
      %v534 = vunpack.c.h.b16 %v192
      %v535 = vunpack.c.l.b16 %v193
      %v536 = vunpack.c.h.b16 %v193
      %v537 = vunpack.c.l.b16 %v194
      %v538 = vunpack.c.h.b16 %v194
      %v539 = vunpack.c.l.b16 %v195
      %v540 = vunpack.c.h.b16 %v195
      %v541 = vunpack.c.l.b16 %v196
      %v542 = vunpack.c.h.b16 %v196
      %v543 = vunpack.c.l.b16 %v197
      %v544 = vunpack.c.h.b16 %v197
      %v545 = vunpack.c.l.b16 %v198
      %v546 = vunpack.c.h.b16 %v198
      %v547 = vunpack.c.l.b16 %v199
      %v548 = vunpack.c.h.b16 %v199
      %v549 = vunpack.c.l.b16 %v200
      %v550 = vunpack.c.h.b16 %v200
      %v551 = vunpack.c.l.b16 %v201
      %v552 = vunpack.c.h.b16 %v201
      %v553 = vunpack.c.l.b16 %v202
      %v554 = vunpack.c.h.b16 %v202
      %v555 = vunpack.c.l.b16 %v203
      %v556 = vunpack.c.h.b16 %v203
      %v557 = vunpack.c.l.b16 %v204
      %v558 = vunpack.c.h.b16 %v204
      %v559 = vunpack.c.l.b16 %v205
      %v560 = vunpack.c.h.b16 %v205
      %v561 = vunpack.c.l.b16 %v206
      %v562 = vunpack.c.h.b16 %v206
      %v563 = vunpack.c.l.b16 %v207
      %v564 = vunpack.c.h.b16 %v207
      %v565 = vunpack.c.l.b16 %v208
      %v566 = vunpack.c.h.b16 %v208
      %v567 = vunpack.c.l.b16 %v209
      %v568 = vunpack.c.h.b16 %v209
      %v569 = vunpack.c.l.b16 %v210
      %v570 = vunpack.c.h.b16 %v210
      %v571 = vunpack.c.l.b16 %v211
      %v572 = vunpack.c.h.b16 %v211
      %v573 = vunpack.c.l.b16 %v212
      %v574 = vunpack.c.h.b16 %v212
      %v575 = vunpack.c.l.b16 %v213
      %v576 = vunpack.c.h.b16 %v213
      %v577 = vunpack.c.l.b16 %v214
      %v578 = vunpack.c.h.b16 %v214
      %v579 = vunpack.c.l.b16 %v215
      %v580 = vunpack.c.h.b16 %v215
      %v581 = vunpack.c.l.b16 %v216
      %v582 = vunpack.c.h.b16 %v216
      %v583 = vunpack.c.l.b16 %v217
      %v584 = vunpack.c.h.b16 %v217
      %v585 = vunpack.c.l.b16 %v218
      %v586 = vunpack.c.h.b16 %v218
      %v587 = vunpack.c.l.b16 %v219
      %v588 = vunpack.c.h.b16 %v219
      %v589 = vunpack.c.l.b16 %v220
      %v590 = vunpack.c.h.b16 %v220
      %v591 = vunpack.c.l.b16 %v221
      %v592 = vunpack.c.h.b16 %v221
      %v593 = vunpack.c.l.b16 %v222
      %v594 = vunpack.c.h.b16 %v222
      %v595 = vunpack.c.l.b16 %v223
      %v596 = vunpack.c.h.b16 %v223
      %v597 = vunpack.c.l.b16 %v224
      %v598 = vunpack.c.h.b16 %v224
      %v599 = vunpack.c.l.b16 %v225
      %v600 = vunpack.c.h.b16 %v225
      %v601 = vunpack.c.l.b16 %v226
      %v602 = vunpack.c.h.b16 %v226
      %v603 = vunpack.c.l.b16 %v227
      %v604 = vunpack.c.h.b16 %v227
      %v605 = vunpack.c.l.b16 %v228
      %v606 = vunpack.c.h.b16 %v228
      %v607 = vunpack.c.l.b16 %v229
      %v608 = vunpack.c.h.b16 %v229
      %v609 = vunpack.c.l.b16 %v230
      %v610 = vunpack.c.h.b16 %v230
      %v611 = vunpack.c.l.b16 %v231
      %v612 = vunpack.c.h.b16 %v231
      %v613 = vunpack.c.l.b16 %v232
      %v614 = vunpack.c.h.b16 %v232
      %v615 = vunpack.c.l.b16 %v233
      %v616 = vunpack.c.h.b16 %v233
      %v617 = vunpack.c.l.b16 %v234
      %v618 = vunpack.c.h.b16 %v234
      %v619 = vunpack.c.l.b16 %v235
      %v620 = vunpack.c.h.b16 %v235
      %v621 = vunpack.c.l.b16 %v236
      %v622 = vunpack.c.h.b16 %v236
      %v623 = vunpack.c.l.b16 %v237
      %v624 = vunpack.c.h.b16 %v237
      %v625 = vunpack.c.l.b16 %v238
      %v626 = vunpack.c.h.b16 %v238
      %v627 = vunpack.c.l.b16 %v239
      %v628 = vunpack.c.h.b16 %v239
      %v629 = vunpack.c.l.b16 %v240
      %v630 = vunpack.c.h.b16 %v240
      %v631 = vunpack.c.l.b16 %v241
      %v632 = vunpack.c.h.b16 %v241
      %v633 = vunpack.c.l.b16 %v242
      %v634 = vunpack.c.h.b16 %v242
      %v635 = vunpack.c.l.b16 %v243
      %v636 = vunpack.c.h.b16 %v243
      %v637 = vunpack.c.l.b16 %v244
      %v638 = vunpack.c.h.b16 %v244
      %v639 = vunpack.c.l.b16 %v245
      %v640 = vunpack.c.h.b16 %v245
      %v641 = vunpack.c.l.b16 %v246
      %v642 = vunpack.c.h.b16 %v246
      %v643 = vunpack.c.l.b16 %v247
      %v644 = vunpack.c.h.b16 %v247
      %v645 = vunpack.c.l.b16 %v248
      %v646 = vunpack.c.h.b16 %v248
      %v647 = vunpack.c.l.b16 %v249
      %v648 = vunpack.c.h.b16 %v249
      %v649 = vunpack.c.l.b16 %v250
      %v650 = vunpack.c.h.b16 %v250
      %v651 = vunpack.c.l.b16 %v251
      %v652 = vunpack.c.h.b16 %v251
      %v653 = vunpack.c.l.b16 %v252
      %v654 = vunpack.c.h.b16 %v252
      %v655 = vunpack.c.l.b16 %v253
      %v656 = vunpack.c.h.b16 %v253
      %v657 = vunpack.c.l.b16 %v254
      %v658 = vunpack.c.h.b16 %v254
      %v659 = vunpack.c.l.b16 %v255
      %v660 = vunpack.c.h.b16 %v255
      %v661 = vunpack.c.l.b16 %v256
      %v662 = vunpack.c.h.b16 %v256
      %v663 = vunpack.c.l.b16 %v257
      %v664 = vunpack.c.h.b16 %v257
      %v665 = vunpack.c.l.b16 %v258
      %v666 = vunpack.c.h.b16 %v258
      %v667 = vunpack.c.l.b16 %v259
      %v668 = vunpack.c.h.b16 %v259
      %v669 = vunpack.c.l.b16 %v260
      %v670 = vunpack.c.h.b16 %v260
      %v671 = vunpack.c.l.b16 %v261
      %v672 = vunpack.c.h.b16 %v261
      %v673 = vunpack.c.l.b16 %v262
      %v674 = vunpack.c.h.b16 %v262
      %v675 = vunpack.c.l.b16 %v263
      %v676 = vunpack.c.h.b16 %v263
      %v677 = vunpack.c.l.b16 %v264
      %v678 = vunpack.c.h.b16 %v264
      %v679 = vunpack.c.l.b16 %v265
      %v680 = vunpack.c.h.b16 %v265
      %v681 = vunpack.c.l.b16 %v266
      %v682 = vunpack.c.h.b16 %v266
      %v683 = vunpack.c.l.b16 %v267
      %v684 = vunpack.c.h.b16 %v267
      %v685 = vunpack.c.l.b16 %v268
      %v686 = vunpack.c.h.b16 %v268
      %v687 = vunpack.c.l.b16 %v269
      %v688 = vunpack.c.h.b16 %v269
      %v689 = vunpack.c.l.b16 %v270
      %v690 = vunpack.c.h.b16 %v270
      %v691 = vunpack.c.l.b16 %v271
      %v692 = vunpack.c.h.b16 %v271
      %v693 = vunpack.c.l.b16 %v272
      %v694 = vunpack.c.h.b16 %v272
      %v695 = vunpack.c.l.b16 %v273
      %v696 = vunpack.c.h.b16 %v273
      %v697 = vunpack.c.l.b16 %v274
      %v698 = vunpack.c.h.b16 %v274
      %v699 = vunpack.c.l.b16 %v275
      %v700 = vunpack.c.h.b16 %v275
      %v701 = vunpack.c.l.b16 %v276
      %v702 = vunpack.c.h.b16 %v276
      %v703 = vunpack.c.l.b16 %v277
      %v704 = vunpack.c.h.b16 %v277
      %v705 = vunpack.c.l.b16 %v278
      %v706 = vunpack.c.h.b16 %v278
      %v707 = vunpack.c.l.b16 %v279
      %v708 = vunpack.c.h.b16 %v279
      %v709 = vunpack.c.l.b16 %v280
      %v710 = vunpack.c.h.b16 %v280
      %v711 = vunpack.c.l.b16 %v281
      %v712 = vunpack.c.h.b16 %v281
      %v713 = vunpack.c.l.b16 %v282
      %v714 = vunpack.c.h.b16 %v282
      %v715 = vunpack.c.l.b16 %v283
      %v716 = vunpack.c.h.b16 %v283
      %v717 = vunpack.c.l.b16 %v284
      %v718 = vunpack.c.h.b16 %v284
      %v719 = vunpack.c.l.b16 %v285
      %v720 = vunpack.c.h.b16 %v285
      %v721 = vunpack.c.l.b16 %v286
      %v722 = vunpack.c.h.b16 %v286
      %v723 = vunpack.c.l.b16 %v287
      %v724 = vunpack.c.h.b16 %v287
      %v725 = vunpack.c.l.b16 %v288
      %v726 = vunpack.c.h.b16 %v288
      %v727 = vunpack.c.l.b16 %v289
      %v728 = vunpack.c.h.b16 %v289
      %v729 = vunpack.c.l.b16 %v290
      %v730 = vunpack.c.h.b16 %v290
      %v731 = vunpack.c.l.b16 %v291
      %v732 = vunpack.c.h.b16 %v291
      %v733 = vunpack.c.l.b16 %v292
      %v734 = vunpack.c.h.b16 %v292
      %v735 = vunpack.c.l.b16 %v293
      %v736 = vunpack.c.h.b16 %v293
      %v737 = vunpack.c.l.b16 %v294
      %v738 = vunpack.c.h.b16 %v294
      %v739 = vunpack.c.l.b16 %v295
      %v740 = vunpack.c.h.b16 %v295
      %v741 = vunpack.c.l.b16 %v296
      %v742 = vunpack.c.h.b16 %v296
      %v743 = vunpack.c.l.b16 %v297
      %v744 = vunpack.c.h.b16 %v297
      %v745 = vunpack.c.l.b16 %v298
      %v746 = vunpack.c.h.b16 %v298
      %v747 = vunpack.c.l.b16 %v299
      %v748 = vunpack.c.h.b16 %v299
      %v749 = vunpack.c.l.b16 %v300
      %v750 = vunpack.c.h.b16 %v300
      %v751 = vunpack.c.l.b16 %v301
      %v752 = vunpack.c.h.b16 %v301
      %v753 = vunpack.c.l.b16 %v302
      %v754 = vunpack.c.h.b16 %v302
      %v755 = vunpack.c.l.b16 %v303
      %v756 = vunpack.c.h.b16 %v303
      %v757 = vunpack.c.l.b16 %v304
      %v758 = vunpack.c.h.b16 %v304
      %v759 = vunpack.c.l.b16 %v305
      %v760 = vunpack.c.h.b16 %v305
      %v761 = vpack.c.b16 %v509, %v505
      %v762 = vpack.c.b16 %v510, %v506
      %v763 = vpack.c.b16 %v511, %v507
      %v764 = vpack.c.b16 %v512, %v508
      %v765 = vpack.c.b16 %v517, %v513
      %v766 = vpack.c.b16 %v518, %v514
      %v767 = vpack.c.b16 %v519, %v515
      %v768 = vpack.c.b16 %v520, %v516
      %v769 = vpack.c.b16 %v525, %v521
      %v770 = vpack.c.b16 %v526, %v522
      %v771 = vpack.c.b16 %v527, %v523
      %v772 = vpack.c.b16 %v528, %v524
      %v773 = vpack.c.b16 %v533, %v529
      %v774 = vpack.c.b16 %v534, %v530
      %v775 = vpack.c.b16 %v535, %v531
      %v776 = vpack.c.b16 %v536, %v532
      %v777 = vpack.c.b16 %v541, %v537
      %v778 = vpack.c.b16 %v542, %v538
      %v779 = vpack.c.b16 %v543, %v539
      %v780 = vpack.c.b16 %v544, %v540
      %v781 = vpack.c.b16 %v549, %v545
      %v782 = vpack.c.b16 %v550, %v546
      %v783 = vpack.c.b16 %v551, %v547
      %v784 = vpack.c.b16 %v552, %v548
      %v785 = vpack.c.b16 %v557, %v553
      %v786 = vpack.c.b16 %v558, %v554
      %v787 = vpack.c.b16 %v559, %v555
      %v788 = vpack.c.b16 %v560, %v556
      %v789 = vpack.c.b16 %v565, %v561
      %v790 = vpack.c.b16 %v566, %v562
      %v791 = vpack.c.b16 %v567, %v563
      %v792 = vpack.c.b16 %v568, %v564
      %v793 = vpack.c.b16 %v573, %v569
      %v794 = vpack.c.b16 %v574, %v570
      %v795 = vpack.c.b16 %v575, %v571
      %v796 = vpack.c.b16 %v576, %v572
      %v797 = vpack.c.b16 %v581, %v577
      %v798 = vpack.c.b16 %v582, %v578
      %v799 = vpack.c.b16 %v583, %v579
      %v800 = vpack.c.b16 %v584, %v580
      %v801 = vpack.c.b16 %v589, %v585
      %v802 = vpack.c.b16 %v590, %v586
      %v803 = vpack.c.b16 %v591, %v587
      %v804 = vpack.c.b16 %v592, %v588
      %v805 = vpack.c.b16 %v597, %v593
      %v806 = vpack.c.b16 %v598, %v594
      %v807 = vpack.c.b16 %v599, %v595
      %v808 = vpack.c.b16 %v600, %v596
      %v809 = vpack.c.b16 %v605, %v601
      %v810 = vpack.c.b16 %v606, %v602
      %v811 = vpack.c.b16 %v607, %v603
      %v812 = vpack.c.b16 %v608, %v604
      %v813 = vpack.c.b16 %v613, %v609
      %v814 = vpack.c.b16 %v614, %v610
      %v815 = vpack.c.b16 %v615, %v611
      %v816 = vpack.c.b16 %v616, %v612
      %v817 = vpack.c.b16 %v621, %v617
      %v818 = vpack.c.b16 %v622, %v618
      %v819 = vpack.c.b16 %v623, %v619
      %v820 = vpack.c.b16 %v624, %v620
      %v821 = vpack.c.b16 %v629, %v625
      %v822 = vpack.c.b16 %v630, %v626
      %v823 = vpack.c.b16 %v631, %v627
      %v824 = vpack.c.b16 %v632, %v628
      %v825 = vpack.c.b16 %v637, %v633
      %v826 = vpack.c.b16 %v638, %v634
      %v827 = vpack.c.b16 %v639, %v635
      %v828 = vpack.c.b16 %v640, %v636
      %v829 = vpack.c.b16 %v645, %v641
      %v830 = vpack.c.b16 %v646, %v642
      %v831 = vpack.c.b16 %v647, %v643
      %v832 = vpack.c.b16 %v648, %v644
      %v833 = vpack.c.b16 %v653, %v649
      %v834 = vpack.c.b16 %v654, %v650
      %v835 = vpack.c.b16 %v655, %v651
      %v836 = vpack.c.b16 %v656, %v652
      %v837 = vpack.c.b16 %v661, %v657
      %v838 = vpack.c.b16 %v662, %v658
      %v839 = vpack.c.b16 %v663, %v659
      %v840 = vpack.c.b16 %v664, %v660
      %v841 = vpack.c.b16 %v669, %v665
      %v842 = vpack.c.b16 %v670, %v666
      %v843 = vpack.c.b16 %v671, %v667
      %v844 = vpack.c.b16 %v672, %v668
      %v845 = vpack.c.b16 %v677, %v673
      %v846 = vpack.c.b16 %v678, %v674
      %v847 = vpack.c.b16 %v679, %v675
      %v848 = vpack.c.b16 %v680, %v676
      %v849 = vpack.c.b16 %v685, %v681
      %v850 = vpack.c.b16 %v686, %v682
      %v851 = vpack.c.b16 %v687, %v683
      %v852 = vpack.c.b16 %v688, %v684
      %v853 = vpack.c.b16 %v693, %v689
      %v854 = vpack.c.b16 %v694, %v690
      %v855 = vpack.c.b16 %v695, %v691
      %v856 = vpack.c.b16 %v696, %v692
      %v857 = vpack.c.b16 %v701, %v697
      %v858 = vpack.c.b16 %v702, %v698
      %v859 = vpack.c.b16 %v703, %v699
      %v860 = vpack.c.b16 %v704, %v700
      %v861 = vpack.c.b16 %v709, %v705
      %v862 = vpack.c.b16 %v710, %v706
      %v863 = vpack.c.b16 %v711, %v707
      %v864 = vpack.c.b16 %v712, %v708
      %v865 = vpack.c.b16 %v717, %v713
      %v866 = vpack.c.b16 %v718, %v714
      %v867 = vpack.c.b16 %v719, %v715
      %v868 = vpack.c.b16 %v720, %v716
      %v869 = vpack.c.b16 %v725, %v721
      %v870 = vpack.c.b16 %v726, %v722
      %v871 = vpack.c.b16 %v727, %v723
      %v872 = vpack.c.b16 %v728, %v724
      %v873 = vpack.c.b16 %v733, %v729
      %v874 = vpack.c.b16 %v734, %v730
      %v875 = vpack.c.b16 %v735, %v731
      %v876 = vpack.c.b16 %v736, %v732
      %v877 = vpack.c.b16 %v741, %v737
      %v878 = vpack.c.b16 %v742, %v738
      %v879 = vpack.c.b16 %v743, %v739
      %v880 = vpack.c.b16 %v744, %v740
      %v881 = vpack.c.b16 %v749, %v745
      %v882 = vpack.c.b16 %v750, %v746
      %v883 = vpack.c.b16 %v751, %v747
      %v884 = vpack.c.b16 %v752, %v748
      %v885 = vpack.c.b16 %v757, %v753
      %v886 = vpack.c.b16 %v758, %v754
      %v887 = vpack.c.b16 %v759, %v755
      %v888 = vpack.c.b16 %v760, %v756
      %v1081 = vunpack.c.l.b16 %v306
      %v1082 = vunpack.c.l.b16 %v307
      %v1083 = vunpack.c.l.b16 %v308
      %v1084 = vunpack.c.l.b16 %v309
      %v1085 = vunpack.c.l.b16 %v310
      %v1086 = vunpack.c.l.b16 %v311
      %v1087 = vunpack.c.l.b16 %v312
      %v1088 = vunpack.c.l.b16 %v313
      %v1089 = vunpack.c.l.b16 %v314
      %v1090 = vunpack.c.l.b16 %v315
      %v1091 = vunpack.c.l.b16 %v316
      %v1092 = vunpack.c.l.b16 %v317
      %v1093 = vunpack.c.l.b16 %v318
      %v1094 = vunpack.c.l.b16 %v319
      %v1095 = vunpack.c.l.b16 %v320
      %v1096 = vunpack.c.l.b16 %v321
      %v1097 = vunpack.c.l.b16 %v322
      %v1098 = vunpack.c.l.b16 %v323
      %v1099 = vunpack.c.l.b16 %v324
      %v1100 = vunpack.c.l.b16 %v325
      %v1101 = vunpack.c.l.b16 %v326
      %v1102 = vunpack.c.l.b16 %v327
      %v1103 = vunpack.c.l.b16 %v328
      %v1104 = vunpack.c.l.b16 %v329
      %v1105 = vunpack.c.l.b16 %v330
      %v1106 = vunpack.c.l.b16 %v331
      %v1107 = vunpack.c.l.b16 %v332
      %v1108 = vunpack.c.l.b16 %v333
      %v1109 = vunpack.c.l.b16 %v334
      %v1110 = vunpack.c.l.b16 %v335
      %v1111 = vunpack.c.l.b16 %v336
      %v1112 = vunpack.c.l.b16 %v337
      %v1113 = vunpack.c.l.b16 %v338
      %v1114 = vunpack.c.l.b16 %v339
      %v1115 = vunpack.c.l.b16 %v340
      %v1116 = vunpack.c.l.b16 %v341
      %v1117 = vunpack.c.l.b16 %v342
      %v1118 = vunpack.c.l.b16 %v343
      %v1119 = vunpack.c.l.b16 %v344
      %v1120 = vunpack.c.l.b16 %v345
      %v1121 = vunpack.c.l.b16 %v346
      %v1122 = vunpack.c.l.b16 %v347
      %v1123 = vunpack.c.l.b16 %v348
      %v1124 = vunpack.c.l.b16 %v349
      %v1125 = vunpack.c.l.b16 %v350
      %v1126 = vunpack.c.l.b16 %v351
      %v1127 = vunpack.c.l.b16 %v352
      %v1128 = vunpack.c.l.b16 %v353
      %v1129 = vunpack.c.l.b16 %v354
      %v1130 = vunpack.c.l.b16 %v355
      %v1131 = vunpack.c.l.b16 %v356
      %v1132 = vunpack.c.l.b16 %v357
      %v1133 = vunpack.c.l.b16 %v358
      %v1134 = vunpack.c.l.b16 %v359
      %v1135 = vunpack.c.l.b16 %v360
      %v1136 = vunpack.c.l.b16 %v361
      %v1137 = vunpack.c.l.b16 %v362
      %v1138 = vunpack.c.l.b16 %v363
      %v1139 = vunpack.c.l.b16 %v364
      %v1140 = vunpack.c.l.b16 %v365
      %v1141 = vunpack.c.l.b16 %v366
      %v1142 = vunpack.c.l.b16 %v367
      %v1143 = vunpack.c.l.b16 %v368
      %v1144 = vunpack.c.l.b16 %v369
      %v1145 = vpack.c.b16 %v1082, %v1081
      %v1146 = vpack.c.b16 %v1084, %v1083
      %v1147 = vpack.c.b16 %v1086, %v1085
      %v1148 = vpack.c.b16 %v1088, %v1087
      %v1149 = vpack.c.b16 %v1090, %v1089
      %v1150 = vpack.c.b16 %v1092, %v1091
      %v1151 = vpack.c.b16 %v1094, %v1093
      %v1152 = vpack.c.b16 %v1096, %v1095
      %v1153 = vpack.c.b16 %v1098, %v1097
      %v1154 = vpack.c.b16 %v1100, %v1099
      %v1155 = vpack.c.b16 %v1102, %v1101
      %v1156 = vpack.c.b16 %v1104, %v1103
      %v1157 = vpack.c.b16 %v1106, %v1105
      %v1158 = vpack.c.b16 %v1108, %v1107
      %v1159 = vpack.c.b16 %v1110, %v1109
      %v1160 = vpack.c.b16 %v1112, %v1111
      %v1161 = vpack.c.b16 %v1114, %v1113
      %v1162 = vpack.c.b16 %v1116, %v1115
      %v1163 = vpack.c.b16 %v1118, %v1117
      %v1164 = vpack.c.b16 %v1120, %v1119
      %v1165 = vpack.c.b16 %v1122, %v1121
      %v1166 = vpack.c.b16 %v1124, %v1123
      %v1167 = vpack.c.b16 %v1126, %v1125
      %v1168 = vpack.c.b16 %v1128, %v1127
      %v1169 = vpack.c.b16 %v1130, %v1129
      %v1170 = vpack.c.b16 %v1132, %v1131
      %v1171 = vpack.c.b16 %v1134, %v1133
      %v1172 = vpack.c.b16 %v1136, %v1135
      %v1173 = vpack.c.b16 %v1138, %v1137
      %v1174 = vpack.c.b16 %v1140, %v1139
      %v1175 = vpack.c.b16 %v1142, %v1141
      %v1176 = vpack.c.b16 %v1144, %v1143
      %1209 = vmatprep.subr.bf16.mxu0 0
      %1210 = vmatpush1.bf16.msra.mxu0 %v1152
      %1211 = vmatprep.subr.bf16.mxu0 0
      %1212 = vmatpush1.bf16.msra.mxu0 %v1151
      %1213 = vmatprep.subr.bf16.mxu0 0
      %1214 = vmatpush1.bf16.msra.mxu0 %v1150
      %1215 = vmatprep.subr.bf16.mxu0 0
      %1216 = vmatpush1.bf16.msra.mxu0 %v1149
      %1217 = vmatprep.subr.bf16.mxu0 0
      %1218 = vmatpush1.bf16.msra.mxu0 %v1148
      %1219 = vmatprep.subr.bf16.mxu0 0
      %1220 = vmatpush1.bf16.msra.mxu0 %v1147
      %1221 = vmatprep.subr.bf16.mxu0 0
      %1222 = vmatpush1.bf16.msra.mxu0 %v1146
      %1223 = vmatprep.subr.bf16.mxu0 0
      %1224 = vmatpush1.bf16.msra.mxu0 %v1145
      %1225 = vmatprep.subr.bf16.mxu0 0
      %1226 = vmatpush2.bf16.msra.mxu0 %v1160
      %1227 = vmatprep.subr.bf16.mxu0 0
      %1228 = vmatpush2.bf16.msra.mxu0 %v1159
      %1229 = vmatprep.subr.bf16.mxu0 0
      %1230 = vmatpush2.bf16.msra.mxu0 %v1158
      %1231 = vmatprep.subr.bf16.mxu0 0
      %1232 = vmatpush2.bf16.msra.mxu0 %v1157
      %1233 = vmatprep.subr.bf16.mxu0 0
      %1234 = vmatpush2.bf16.msra.mxu0 %v1156
      %1235 = vmatprep.subr.bf16.mxu0 0
      %1236 = vmatpush2.bf16.msra.mxu0 %v1155
      %1237 = vmatprep.subr.bf16.mxu0 0
      %1238 = vmatpush2.bf16.msra.mxu0 %v1154
      %1239 = vmatprep.subr.bf16.mxu0 0
      %1240 = vmatpush2.bf16.msra.mxu0 %v1153
      %1241 = vmatprep.mubr.bf16.mxu0 %v762
      %1242 = vmatmul.mubr.bf16.gmra.mxu0 %v761
      %v1243 = vpop.f32.mrf.mxu0
      %v1244 = vadd.f32 %v375, %v1243
      %v1245 = vpop.f32.mrf.mxu0
      %v1246 = vpop.f32.mrf.mxu0
      %v1247 = vadd.f32 %v375, %v1246
      %v1248 = vpop.f32.mrf.mxu0
      %1249 = vmatprep.mubr.bf16.mxu0 %v766
      %1250 = vmatmul.mubr.bf16.gmra.mxu0 %v765
      %v1251 = vpop.f32.mrf.mxu0
      %v1252 = vadd.f32 %v375, %v1251
      %v1253 = vpop.f32.mrf.mxu0
      %v1254 = vpop.f32.mrf.mxu0
      %v1255 = vadd.f32 %v375, %v1254
      %v1256 = vpop.f32.mrf.mxu0
      %1257 = vmatprep.mubr.bf16.mxu0 %v770
      %1258 = vmatmul.mubr.bf16.gmra.mxu0 %v769
      %v1259 = vpop.f32.mrf.mxu0
      %v1260 = vadd.f32 %v375, %v1259
      %v1261 = vpop.f32.mrf.mxu0
      %v1262 = vpop.f32.mrf.mxu0
      %v1263 = vadd.f32 %v375, %v1262
      %v1264 = vpop.f32.mrf.mxu0
      %1265 = vmatprep.mubr.bf16.mxu0 %v774
      %1266 = vmatmul.mubr.bf16.gmra.mxu0 %v773
      %v1267 = vpop.f32.mrf.mxu0
      %v1268 = vadd.f32 %v375, %v1267
      %v1269 = vpop.f32.mrf.mxu0
      %v1270 = vpop.f32.mrf.mxu0
      %v1271 = vadd.f32 %v375, %v1270
      %v1272 = vpop.f32.mrf.mxu0
      %1273 = vmatprep.mubr.bf16.mxu0 %v778
      %1274 = vmatmul.mubr.bf16.gmra.mxu0 %v777
      %v1275 = vpop.f32.mrf.mxu0
      %v1276 = vadd.f32 %v375, %v1275
      %v1277 = vpop.f32.mrf.mxu0
      %v1278 = vpop.f32.mrf.mxu0
      %v1279 = vadd.f32 %v375, %v1278
      %v1280 = vpop.f32.mrf.mxu0
      %1281 = vmatprep.mubr.bf16.mxu0 %v782
      %1282 = vmatmul.mubr.bf16.gmra.mxu0 %v781
      %v1283 = vpop.f32.mrf.mxu0
      %v1284 = vadd.f32 %v375, %v1283
      %v1285 = vpop.f32.mrf.mxu0
      %v1286 = vpop.f32.mrf.mxu0
      %v1287 = vadd.f32 %v375, %v1286
      %v1288 = vpop.f32.mrf.mxu0
      %1289 = vmatprep.mubr.bf16.mxu0 %v786
      %1290 = vmatmul.mubr.bf16.gmra.mxu0 %v785
      %v1291 = vpop.f32.mrf.mxu0
      %v1292 = vadd.f32 %v375, %v1291
      %v1293 = vpop.f32.mrf.mxu0
      %v1294 = vpop.f32.mrf.mxu0
      %v1295 = vadd.f32 %v375, %v1294
      %v1296 = vpop.f32.mrf.mxu0
      %1297 = vmatprep.mubr.bf16.mxu0 %v790
      %1298 = vmatmul.mubr.bf16.gmra.mxu0 %v789
      %v1299 = vpop.f32.mrf.mxu0
      %v1300 = vadd.f32 %v375, %v1299
      %v1301 = vpop.f32.mrf.mxu0
      %v1302 = vpop.f32.mrf.mxu0
      %v1303 = vadd.f32 %v375, %v1302
      %v1304 = vpop.f32.mrf.mxu0
      %1305 = vmatprep.mubr.bf16.mxu0 %v794
      %1306 = vmatmul.mubr.bf16.gmra.mxu0 %v793
      %v1307 = vpop.f32.mrf.mxu0
      %v1308 = vadd.f32 %v375, %v1307
      %v1309 = vpop.f32.mrf.mxu0
      %v1310 = vpop.f32.mrf.mxu0
      %v1311 = vadd.f32 %v375, %v1310
      %v1312 = vpop.f32.mrf.mxu0
      %1313 = vmatprep.mubr.bf16.mxu0 %v798
      %1314 = vmatmul.mubr.bf16.gmra.mxu0 %v797
      %v1315 = vpop.f32.mrf.mxu0
      %v1316 = vadd.f32 %v375, %v1315
      %v1317 = vpop.f32.mrf.mxu0
      %v1318 = vpop.f32.mrf.mxu0
      %v1319 = vadd.f32 %v375, %v1318
      %v1320 = vpop.f32.mrf.mxu0
      %1321 = vmatprep.mubr.bf16.mxu0 %v802
      %1322 = vmatmul.mubr.bf16.gmra.mxu0 %v801
      %v1323 = vpop.f32.mrf.mxu0
      %v1324 = vadd.f32 %v375, %v1323
      %v1325 = vpop.f32.mrf.mxu0
      %v1326 = vpop.f32.mrf.mxu0
      %v1327 = vadd.f32 %v375, %v1326
      %v1328 = vpop.f32.mrf.mxu0
      %1329 = vmatprep.mubr.bf16.mxu0 %v806
      %1330 = vmatmul.mubr.bf16.gmra.mxu0 %v805
      %v1331 = vpop.f32.mrf.mxu0
      %v1332 = vadd.f32 %v375, %v1331
      %v1333 = vpop.f32.mrf.mxu0
      %v1334 = vpop.f32.mrf.mxu0
      %v1335 = vadd.f32 %v375, %v1334
      %v1336 = vpop.f32.mrf.mxu0
      %1337 = vmatprep.mubr.bf16.mxu0 %v810
      %1338 = vmatmul.mubr.bf16.gmra.mxu0 %v809
      %v1339 = vpop.f32.mrf.mxu0
      %v1340 = vadd.f32 %v375, %v1339
      %v1341 = vpop.f32.mrf.mxu0
      %v1342 = vpop.f32.mrf.mxu0
      %v1343 = vadd.f32 %v375, %v1342
      %v1344 = vpop.f32.mrf.mxu0
      %1345 = vmatprep.mubr.bf16.mxu0 %v814
      %1346 = vmatmul.mubr.bf16.gmra.mxu0 %v813
      %v1347 = vpop.f32.mrf.mxu0
      %v1348 = vadd.f32 %v375, %v1347
      %v1349 = vpop.f32.mrf.mxu0
      %v1350 = vpop.f32.mrf.mxu0
      %v1351 = vadd.f32 %v375, %v1350
      %v1352 = vpop.f32.mrf.mxu0
      %1353 = vmatprep.mubr.bf16.mxu0 %v818
      %1354 = vmatmul.mubr.bf16.gmra.mxu0 %v817
      %v1355 = vpop.f32.mrf.mxu0
      %v1356 = vadd.f32 %v375, %v1355
      %v1357 = vpop.f32.mrf.mxu0
      %v1358 = vpop.f32.mrf.mxu0
      %v1359 = vadd.f32 %v375, %v1358
      %v1360 = vpop.f32.mrf.mxu0
      %1361 = vmatprep.mubr.bf16.mxu0 %v822
      %1362 = vmatmul.mubr.bf16.gmra.mxu0 %v821
      %v1363 = vpop.f32.mrf.mxu0
      %v1364 = vadd.f32 %v375, %v1363
      %v1365 = vpop.f32.mrf.mxu0
      %v1366 = vpop.f32.mrf.mxu0
      %v1367 = vadd.f32 %v375, %v1366
      %v1368 = vpop.f32.mrf.mxu0
      %1369 = vmatprep.mubr.bf16.mxu0 %v826
      %1370 = vmatmul.mubr.bf16.gmra.mxu0 %v825
      %v1371 = vpop.f32.mrf.mxu0
      %v1372 = vadd.f32 %v375, %v1371
      %v1373 = vpop.f32.mrf.mxu0
      %v1374 = vpop.f32.mrf.mxu0
      %v1375 = vadd.f32 %v375, %v1374
      %v1376 = vpop.f32.mrf.mxu0
      %1377 = vmatprep.mubr.bf16.mxu0 %v830
      %1378 = vmatmul.mubr.bf16.gmra.mxu0 %v829
      %v1379 = vpop.f32.mrf.mxu0
      %v1380 = vadd.f32 %v375, %v1379
      %v1381 = vpop.f32.mrf.mxu0
      %v1382 = vpop.f32.mrf.mxu0
      %v1383 = vadd.f32 %v375, %v1382
      %v1384 = vpop.f32.mrf.mxu0
      %1385 = vmatprep.mubr.bf16.mxu0 %v834
      %1386 = vmatmul.mubr.bf16.gmra.mxu0 %v833
      %v1387 = vpop.f32.mrf.mxu0
      %v1388 = vadd.f32 %v375, %v1387
      %v1389 = vpop.f32.mrf.mxu0
      %v1390 = vpop.f32.mrf.mxu0
      %v1391 = vadd.f32 %v375, %v1390
      %v1392 = vpop.f32.mrf.mxu0
      %1393 = vmatprep.mubr.bf16.mxu0 %v838
      %1394 = vmatmul.mubr.bf16.gmra.mxu0 %v837
      %v1395 = vpop.f32.mrf.mxu0
      %v1396 = vadd.f32 %v375, %v1395
      %v1397 = vpop.f32.mrf.mxu0
      %v1398 = vpop.f32.mrf.mxu0
      %v1399 = vadd.f32 %v375, %v1398
      %v1400 = vpop.f32.mrf.mxu0
      %1401 = vmatprep.mubr.bf16.mxu0 %v842
      %1402 = vmatmul.mubr.bf16.gmra.mxu0 %v841
      %v1403 = vpop.f32.mrf.mxu0
      %v1404 = vadd.f32 %v375, %v1403
      %v1405 = vpop.f32.mrf.mxu0
      %v1406 = vpop.f32.mrf.mxu0
      %v1407 = vadd.f32 %v375, %v1406
      %v1408 = vpop.f32.mrf.mxu0
      %1409 = vmatprep.mubr.bf16.mxu0 %v846
      %1410 = vmatmul.mubr.bf16.gmra.mxu0 %v845
      %v1411 = vpop.f32.mrf.mxu0
      %v1412 = vadd.f32 %v375, %v1411
      %v1413 = vpop.f32.mrf.mxu0
      %v1414 = vpop.f32.mrf.mxu0
      %v1415 = vadd.f32 %v375, %v1414
      %v1416 = vpop.f32.mrf.mxu0
      %1417 = vmatprep.mubr.bf16.mxu0 %v850
      %1418 = vmatmul.mubr.bf16.gmra.mxu0 %v849
      %v1419 = vpop.f32.mrf.mxu0
      %v1420 = vadd.f32 %v375, %v1419
      %v1421 = vpop.f32.mrf.mxu0
      %v1422 = vpop.f32.mrf.mxu0
      %v1423 = vadd.f32 %v375, %v1422
      %v1424 = vpop.f32.mrf.mxu0
      %1425 = vmatprep.mubr.bf16.mxu0 %v854
      %1426 = vmatmul.mubr.bf16.gmra.mxu0 %v853
      %v1427 = vpop.f32.mrf.mxu0
      %v1428 = vadd.f32 %v375, %v1427
      %v1429 = vpop.f32.mrf.mxu0
      %v1430 = vpop.f32.mrf.mxu0
      %v1431 = vadd.f32 %v375, %v1430
      %v1432 = vpop.f32.mrf.mxu0
      %1433 = vmatprep.mubr.bf16.mxu0 %v858
      %1434 = vmatmul.mubr.bf16.gmra.mxu0 %v857
      %v1435 = vpop.f32.mrf.mxu0
      %v1436 = vadd.f32 %v375, %v1435
      %v1437 = vpop.f32.mrf.mxu0
      %v1438 = vpop.f32.mrf.mxu0
      %v1439 = vadd.f32 %v375, %v1438
      %v1440 = vpop.f32.mrf.mxu0
      %1441 = vmatprep.mubr.bf16.mxu0 %v862
      %1442 = vmatmul.mubr.bf16.gmra.mxu0 %v861
      %v1443 = vpop.f32.mrf.mxu0
      %v1444 = vadd.f32 %v375, %v1443
      %v1445 = vpop.f32.mrf.mxu0
      %v1446 = vpop.f32.mrf.mxu0
      %v1447 = vadd.f32 %v375, %v1446
      %v1448 = vpop.f32.mrf.mxu0
      %1449 = vmatprep.mubr.bf16.mxu0 %v866
      %1450 = vmatmul.mubr.bf16.gmra.mxu0 %v865
      %v1451 = vpop.f32.mrf.mxu0
      %v1452 = vadd.f32 %v375, %v1451
      %v1453 = vpop.f32.mrf.mxu0
      %v1454 = vpop.f32.mrf.mxu0
      %v1455 = vadd.f32 %v375, %v1454
      %v1456 = vpop.f32.mrf.mxu0
      %1457 = vmatprep.mubr.bf16.mxu0 %v870
      %1458 = vmatmul.mubr.bf16.gmra.mxu0 %v869
      %v1459 = vpop.f32.mrf.mxu0
      %v1460 = vadd.f32 %v375, %v1459
      %v1461 = vpop.f32.mrf.mxu0
      %v1462 = vpop.f32.mrf.mxu0
      %v1463 = vadd.f32 %v375, %v1462
      %v1464 = vpop.f32.mrf.mxu0
      %1465 = vmatprep.mubr.bf16.mxu0 %v874
      %1466 = vmatmul.mubr.bf16.gmra.mxu0 %v873
      %v1467 = vpop.f32.mrf.mxu0
      %v1468 = vadd.f32 %v375, %v1467
      %v1469 = vpop.f32.mrf.mxu0
      %v1470 = vpop.f32.mrf.mxu0
      %v1471 = vadd.f32 %v375, %v1470
      %v1472 = vpop.f32.mrf.mxu0
      %1473 = vmatprep.mubr.bf16.mxu0 %v878
      %1474 = vmatmul.mubr.bf16.gmra.mxu0 %v877
      %v1475 = vpop.f32.mrf.mxu0
      %v1476 = vadd.f32 %v375, %v1475
      %v1477 = vpop.f32.mrf.mxu0
      %v1478 = vpop.f32.mrf.mxu0
      %v1479 = vadd.f32 %v375, %v1478
      %v1480 = vpop.f32.mrf.mxu0
      %1481 = vmatprep.mubr.bf16.mxu0 %v882
      %1482 = vmatmul.mubr.bf16.gmra.mxu0 %v881
      %v1483 = vpop.f32.mrf.mxu0
      %v1484 = vadd.f32 %v375, %v1483
      %v1485 = vpop.f32.mrf.mxu0
      %v1486 = vpop.f32.mrf.mxu0
      %v1487 = vadd.f32 %v375, %v1486
      %v1488 = vpop.f32.mrf.mxu0
      %1489 = vmatprep.mubr.bf16.mxu0 %v886
      %1490 = vmatmul.mubr.bf16.gmra.mxu0 %v885
      %v1491 = vpop.f32.mrf.mxu0
      %v1492 = vadd.f32 %v375, %v1491
      %v1493 = vpop.f32.mrf.mxu0
      %v1494 = vpop.f32.mrf.mxu0
      %v1495 = vadd.f32 %v375, %v1494
      %v1496 = vpop.f32.mrf.mxu0
      %1497 = vdwg.mxu0
      %1498 = vmatprep.subr.bf16.mxu0 0
      %1499 = vmatpush1.bf16.msra.mxu0 %v1168
      %1500 = vmatprep.subr.bf16.mxu0 0
      %1501 = vmatpush1.bf16.msra.mxu0 %v1167
      %1502 = vmatprep.subr.bf16.mxu0 0
      %1503 = vmatpush1.bf16.msra.mxu0 %v1166
      %1504 = vmatprep.subr.bf16.mxu0 0
      %1505 = vmatpush1.bf16.msra.mxu0 %v1165
      %1506 = vmatprep.subr.bf16.mxu0 0
      %1507 = vmatpush1.bf16.msra.mxu0 %v1164
      %1508 = vmatprep.subr.bf16.mxu0 0
      %1509 = vmatpush1.bf16.msra.mxu0 %v1163
      %1510 = vmatprep.subr.bf16.mxu0 0
      %1511 = vmatpush1.bf16.msra.mxu0 %v1162
      %1512 = vmatprep.subr.bf16.mxu0 0
      %1513 = vmatpush1.bf16.msra.mxu0 %v1161
      %1514 = vmatprep.subr.bf16.mxu0 0
      %1515 = vmatpush2.bf16.msra.mxu0 %v1176
      %1516 = vmatprep.subr.bf16.mxu0 0
      %1517 = vmatpush2.bf16.msra.mxu0 %v1175
      %1518 = vmatprep.subr.bf16.mxu0 0
      %1519 = vmatpush2.bf16.msra.mxu0 %v1174
      %1520 = vmatprep.subr.bf16.mxu0 0
      %1521 = vmatpush2.bf16.msra.mxu0 %v1173
      %1522 = vmatprep.subr.bf16.mxu0 0
      %1523 = vmatpush2.bf16.msra.mxu0 %v1172
      %1524 = vmatprep.subr.bf16.mxu0 0
      %1525 = vmatpush2.bf16.msra.mxu0 %v1171
      %1526 = vmatprep.subr.bf16.mxu0 0
      %1527 = vmatpush2.bf16.msra.mxu0 %v1170
      %1528 = vmatprep.subr.bf16.mxu0 0
      %1529 = vmatpush2.bf16.msra.mxu0 %v1169
      %1530 = vmatprep.mubr.bf16.mxu0 %v764
      %1531 = vmatmul.mubr.bf16.gmra.mxu0 %v763
      %v1532 = vpop.f32.mrf.mxu0
      %v1533 = vadd.f32 %v1244, %v1532
      %v1534 = vpop.f32.mrf.mxu0
      %v1535 = vpop.f32.mrf.mxu0
      %v1536 = vadd.f32 %v1247, %v1535
      %v1537 = vpop.f32.mrf.mxu0
      %1538 = vmatprep.mubr.bf16.mxu0 %v768
      %1539 = vmatmul.mubr.bf16.gmra.mxu0 %v767
      %v1540 = vpop.f32.mrf.mxu0
      %v1541 = vadd.f32 %v1252, %v1540
      %v1542 = vpop.f32.mrf.mxu0
      %v1543 = vpop.f32.mrf.mxu0
      %v1544 = vadd.f32 %v1255, %v1543
      %v1545 = vpop.f32.mrf.mxu0
      %1546 = vmatprep.mubr.bf16.mxu0 %v772
      %1547 = vmatmul.mubr.bf16.gmra.mxu0 %v771
      %v1548 = vpop.f32.mrf.mxu0
      %v1549 = vadd.f32 %v1260, %v1548
      %v1550 = vpop.f32.mrf.mxu0
      %v1551 = vpop.f32.mrf.mxu0
      %v1552 = vadd.f32 %v1263, %v1551
      %v1553 = vpop.f32.mrf.mxu0
      %1554 = vmatprep.mubr.bf16.mxu0 %v776
      %1555 = vmatmul.mubr.bf16.gmra.mxu0 %v775
      %v1556 = vpop.f32.mrf.mxu0
      %v1557 = vadd.f32 %v1268, %v1556
      %v1558 = vpop.f32.mrf.mxu0
      %v1559 = vpop.f32.mrf.mxu0
      %v1560 = vadd.f32 %v1271, %v1559
      %v1561 = vpop.f32.mrf.mxu0
      %1562 = vmatprep.mubr.bf16.mxu0 %v780
      %1563 = vmatmul.mubr.bf16.gmra.mxu0 %v779
      %v1564 = vpop.f32.mrf.mxu0
      %v1565 = vadd.f32 %v1276, %v1564
      %v1566 = vpop.f32.mrf.mxu0
      %v1567 = vpop.f32.mrf.mxu0
      %v1568 = vadd.f32 %v1279, %v1567
      %v1569 = vpop.f32.mrf.mxu0
      %1570 = vmatprep.mubr.bf16.mxu0 %v784
      %1571 = vmatmul.mubr.bf16.gmra.mxu0 %v783
      %v1572 = vpop.f32.mrf.mxu0
      %v1573 = vadd.f32 %v1284, %v1572
      %v1574 = vpop.f32.mrf.mxu0
      %v1575 = vpop.f32.mrf.mxu0
      %v1576 = vadd.f32 %v1287, %v1575
      %v1577 = vpop.f32.mrf.mxu0
      %1578 = vmatprep.mubr.bf16.mxu0 %v788
      %1579 = vmatmul.mubr.bf16.gmra.mxu0 %v787
      %v1580 = vpop.f32.mrf.mxu0
      %v1581 = vadd.f32 %v1292, %v1580
      %v1582 = vpop.f32.mrf.mxu0
      %v1583 = vpop.f32.mrf.mxu0
      %v1584 = vadd.f32 %v1295, %v1583
      %v1585 = vpop.f32.mrf.mxu0
      %1586 = vmatprep.mubr.bf16.mxu0 %v792
      %1587 = vmatmul.mubr.bf16.gmra.mxu0 %v791
      %v1588 = vpop.f32.mrf.mxu0
      %v1589 = vadd.f32 %v1300, %v1588
      %v1590 = vpop.f32.mrf.mxu0
      %v1591 = vpop.f32.mrf.mxu0
      %v1592 = vadd.f32 %v1303, %v1591
      %v1593 = vpop.f32.mrf.mxu0
      %1594 = vmatprep.mubr.bf16.mxu0 %v796
      %1595 = vmatmul.mubr.bf16.gmra.mxu0 %v795
      %v1596 = vpop.f32.mrf.mxu0
      %v1597 = vadd.f32 %v1308, %v1596
      %v1598 = vpop.f32.mrf.mxu0
      %v1599 = vpop.f32.mrf.mxu0
      %v1600 = vadd.f32 %v1311, %v1599
      %v1601 = vpop.f32.mrf.mxu0
      %1602 = vmatprep.mubr.bf16.mxu0 %v800
      %1603 = vmatmul.mubr.bf16.gmra.mxu0 %v799
      %v1604 = vpop.f32.mrf.mxu0
      %v1605 = vadd.f32 %v1316, %v1604
      %v1606 = vpop.f32.mrf.mxu0
      %v1607 = vpop.f32.mrf.mxu0
      %v1608 = vadd.f32 %v1319, %v1607
      %v1609 = vpop.f32.mrf.mxu0
      %1610 = vmatprep.mubr.bf16.mxu0 %v804
      %1611 = vmatmul.mubr.bf16.gmra.mxu0 %v803
      %v1612 = vpop.f32.mrf.mxu0
      %v1613 = vadd.f32 %v1324, %v1612
      %v1614 = vpop.f32.mrf.mxu0
      %v1615 = vpop.f32.mrf.mxu0
      %v1616 = vadd.f32 %v1327, %v1615
      %v1617 = vpop.f32.mrf.mxu0
      %1618 = vmatprep.mubr.bf16.mxu0 %v808
      %1619 = vmatmul.mubr.bf16.gmra.mxu0 %v807
      %v1620 = vpop.f32.mrf.mxu0
      %v1621 = vadd.f32 %v1332, %v1620
      %v1622 = vpop.f32.mrf.mxu0
      %v1623 = vpop.f32.mrf.mxu0
      %v1624 = vadd.f32 %v1335, %v1623
      %v1625 = vpop.f32.mrf.mxu0
      %1626 = vmatprep.mubr.bf16.mxu0 %v812
      %1627 = vmatmul.mubr.bf16.gmra.mxu0 %v811
      %v1628 = vpop.f32.mrf.mxu0
      %v1629 = vadd.f32 %v1340, %v1628
      %v1630 = vpop.f32.mrf.mxu0
      %v1631 = vpop.f32.mrf.mxu0
      %v1632 = vadd.f32 %v1343, %v1631
      %v1633 = vpop.f32.mrf.mxu0
      %1634 = vmatprep.mubr.bf16.mxu0 %v816
      %1635 = vmatmul.mubr.bf16.gmra.mxu0 %v815
      %v1636 = vpop.f32.mrf.mxu0
      %v1637 = vadd.f32 %v1348, %v1636
      %v1638 = vpop.f32.mrf.mxu0
      %v1639 = vpop.f32.mrf.mxu0
      %v1640 = vadd.f32 %v1351, %v1639
      %v1641 = vpop.f32.mrf.mxu0
      %1642 = vmatprep.mubr.bf16.mxu0 %v820
      %1643 = vmatmul.mubr.bf16.gmra.mxu0 %v819
      %v1644 = vpop.f32.mrf.mxu0
      %v1645 = vadd.f32 %v1356, %v1644
      %v1646 = vpop.f32.mrf.mxu0
      %v1647 = vpop.f32.mrf.mxu0
      %v1648 = vadd.f32 %v1359, %v1647
      %v1649 = vpop.f32.mrf.mxu0
      %1650 = vmatprep.mubr.bf16.mxu0 %v824
      %1651 = vmatmul.mubr.bf16.gmra.mxu0 %v823
      %v1652 = vpop.f32.mrf.mxu0
      %v1653 = vadd.f32 %v1364, %v1652
      %v1654 = vpop.f32.mrf.mxu0
      %v1655 = vpop.f32.mrf.mxu0
      %v1656 = vadd.f32 %v1367, %v1655
      %v1657 = vpop.f32.mrf.mxu0
      %1658 = vmatprep.mubr.bf16.mxu0 %v828
      %1659 = vmatmul.mubr.bf16.gmra.mxu0 %v827
      %v1660 = vpop.f32.mrf.mxu0
      %v1661 = vadd.f32 %v1372, %v1660
      %v1662 = vpop.f32.mrf.mxu0
      %v1663 = vpop.f32.mrf.mxu0
      %v1664 = vadd.f32 %v1375, %v1663
      %v1665 = vpop.f32.mrf.mxu0
      %1666 = vmatprep.mubr.bf16.mxu0 %v832
      %1667 = vmatmul.mubr.bf16.gmra.mxu0 %v831
      %v1668 = vpop.f32.mrf.mxu0
      %v1669 = vadd.f32 %v1380, %v1668
      %v1670 = vpop.f32.mrf.mxu0
      %v1671 = vpop.f32.mrf.mxu0
      %v1672 = vadd.f32 %v1383, %v1671
      %v1673 = vpop.f32.mrf.mxu0
      %1674 = vmatprep.mubr.bf16.mxu0 %v836
      %1675 = vmatmul.mubr.bf16.gmra.mxu0 %v835
      %v1676 = vpop.f32.mrf.mxu0
      %v1677 = vadd.f32 %v1388, %v1676
      %v1678 = vpop.f32.mrf.mxu0
      %v1679 = vpop.f32.mrf.mxu0
      %v1680 = vadd.f32 %v1391, %v1679
      %v1681 = vpop.f32.mrf.mxu0
      %1682 = vmatprep.mubr.bf16.mxu0 %v840
      %1683 = vmatmul.mubr.bf16.gmra.mxu0 %v839
      %v1684 = vpop.f32.mrf.mxu0
      %v1685 = vadd.f32 %v1396, %v1684
      %v1686 = vpop.f32.mrf.mxu0
      %v1687 = vpop.f32.mrf.mxu0
      %v1688 = vadd.f32 %v1399, %v1687
      %v1689 = vpop.f32.mrf.mxu0
      %1690 = vmatprep.mubr.bf16.mxu0 %v844
      %1691 = vmatmul.mubr.bf16.gmra.mxu0 %v843
      %v1692 = vpop.f32.mrf.mxu0
      %v1693 = vadd.f32 %v1404, %v1692
      %v1694 = vpop.f32.mrf.mxu0
      %v1695 = vpop.f32.mrf.mxu0
      %v1696 = vadd.f32 %v1407, %v1695
      %v1697 = vpop.f32.mrf.mxu0
      %1698 = vmatprep.mubr.bf16.mxu0 %v848
      %1699 = vmatmul.mubr.bf16.gmra.mxu0 %v847
      %v1700 = vpop.f32.mrf.mxu0
      %v1701 = vadd.f32 %v1412, %v1700
      %v1702 = vpop.f32.mrf.mxu0
      %v1703 = vpop.f32.mrf.mxu0
      %v1704 = vadd.f32 %v1415, %v1703
      %v1705 = vpop.f32.mrf.mxu0
      %1706 = vmatprep.mubr.bf16.mxu0 %v852
      %1707 = vmatmul.mubr.bf16.gmra.mxu0 %v851
      %v1708 = vpop.f32.mrf.mxu0
      %v1709 = vadd.f32 %v1420, %v1708
      %v1710 = vpop.f32.mrf.mxu0
      %v1711 = vpop.f32.mrf.mxu0
      %v1712 = vadd.f32 %v1423, %v1711
      %v1713 = vpop.f32.mrf.mxu0
      %1714 = vmatprep.mubr.bf16.mxu0 %v856
      %1715 = vmatmul.mubr.bf16.gmra.mxu0 %v855
      %v1716 = vpop.f32.mrf.mxu0
      %v1717 = vadd.f32 %v1428, %v1716
      %v1718 = vpop.f32.mrf.mxu0
      %v1719 = vpop.f32.mrf.mxu0
      %v1720 = vadd.f32 %v1431, %v1719
      %v1721 = vpop.f32.mrf.mxu0
      %1722 = vmatprep.mubr.bf16.mxu0 %v860
      %1723 = vmatmul.mubr.bf16.gmra.mxu0 %v859
      %v1724 = vpop.f32.mrf.mxu0
      %v1725 = vadd.f32 %v1436, %v1724
      %v1726 = vpop.f32.mrf.mxu0
      %v1727 = vpop.f32.mrf.mxu0
      %v1728 = vadd.f32 %v1439, %v1727
      %v1729 = vpop.f32.mrf.mxu0
      %1730 = vmatprep.mubr.bf16.mxu0 %v864
      %1731 = vmatmul.mubr.bf16.gmra.mxu0 %v863
      %v1732 = vpop.f32.mrf.mxu0
      %v1733 = vadd.f32 %v1444, %v1732
      %v1734 = vpop.f32.mrf.mxu0
      %v1735 = vpop.f32.mrf.mxu0
      %v1736 = vadd.f32 %v1447, %v1735
      %v1737 = vpop.f32.mrf.mxu0
      %1738 = vmatprep.mubr.bf16.mxu0 %v868
      %1739 = vmatmul.mubr.bf16.gmra.mxu0 %v867
      %v1740 = vpop.f32.mrf.mxu0
      %v1741 = vadd.f32 %v1452, %v1740
      %v1742 = vpop.f32.mrf.mxu0
      %v1743 = vpop.f32.mrf.mxu0
      %v1744 = vadd.f32 %v1455, %v1743
      %v1745 = vpop.f32.mrf.mxu0
      %1746 = vmatprep.mubr.bf16.mxu0 %v872
      %1747 = vmatmul.mubr.bf16.gmra.mxu0 %v871
      %v1748 = vpop.f32.mrf.mxu0
      %v1749 = vadd.f32 %v1460, %v1748
      %v1750 = vpop.f32.mrf.mxu0
      %v1751 = vpop.f32.mrf.mxu0
      %v1752 = vadd.f32 %v1463, %v1751
      %v1753 = vpop.f32.mrf.mxu0
      %1754 = vmatprep.mubr.bf16.mxu0 %v876
      %1755 = vmatmul.mubr.bf16.gmra.mxu0 %v875
      %v1756 = vpop.f32.mrf.mxu0
      %v1757 = vadd.f32 %v1468, %v1756
      %v1758 = vpop.f32.mrf.mxu0
      %v1759 = vpop.f32.mrf.mxu0
      %v1760 = vadd.f32 %v1471, %v1759
      %v1761 = vpop.f32.mrf.mxu0
      %1762 = vmatprep.mubr.bf16.mxu0 %v880
      %1763 = vmatmul.mubr.bf16.gmra.mxu0 %v879
      %v1764 = vpop.f32.mrf.mxu0
      %v1765 = vadd.f32 %v1476, %v1764
      %v1766 = vpop.f32.mrf.mxu0
      %v1767 = vpop.f32.mrf.mxu0
      %v1768 = vadd.f32 %v1479, %v1767
      %v1769 = vpop.f32.mrf.mxu0
      %1770 = vmatprep.mubr.bf16.mxu0 %v884
      %1771 = vmatmul.mubr.bf16.gmra.mxu0 %v883
      %v1772 = vpop.f32.mrf.mxu0
      %v1773 = vadd.f32 %v1484, %v1772
      %v1774 = vpop.f32.mrf.mxu0
      %v1775 = vpop.f32.mrf.mxu0
      %v1776 = vadd.f32 %v1487, %v1775
      %v1777 = vpop.f32.mrf.mxu0
      %1778 = vmatprep.mubr.bf16.mxu0 %v888
      %1779 = vmatmul.mubr.bf16.gmra.mxu0 %v887
      %v1780 = vpop.f32.mrf.mxu0
      %v1781 = vadd.f32 %v1492, %v1780
      %v1782 = vpop.f32.mrf.mxu0
      %v1783 = vpop.f32.mrf.mxu0
      %v1784 = vadd.f32 %v1495, %v1783
      %v1785 = vpop.f32.mrf.mxu0
      %1786 = vdwg.mxu0
      %vm1787 = vcmask 64512
      %1788 = vst.msk [vmem:[%s175] sm:$0xff] %vm1787, %v1533
      %1789 = vst.msk [vmem:[%s175 + $0x8] sm:$0xff] %vm1787, %v1536
      %1790 = vst.msk [vmem:[%s175 + $0x10] sm:$0xff] %vm1787, %v1541
      %1791 = vst.msk [vmem:[%s175 + $0x18] sm:$0xff] %vm1787, %v1544
      %1792 = vst.msk [vmem:[%s175 + $0x20] sm:$0xff] %vm1787, %v1549
      %1793 = vst.msk [vmem:[%s175 + $0x28] sm:$0xff] %vm1787, %v1552
      %1794 = vst.msk [vmem:[%s175 + $0x30] sm:$0xff] %vm1787, %v1557
      %1795 = vst.msk [vmem:[%s175 + $0x38] sm:$0xff] %vm1787, %v1560
      %1796 = vst.msk [vmem:[%s175 + $0x40] sm:$0xff] %vm1787, %v1565
      %1797 = vst.msk [vmem:[%s175 + $0x48] sm:$0xff] %vm1787, %v1568
      %1798 = vst.msk [vmem:[%s175 + $0x50] sm:$0xff] %vm1787, %v1573
      %1799 = vst.msk [vmem:[%s175 + $0x58] sm:$0xff] %vm1787, %v1576
      %1800 = vst.msk [vmem:[%s175 + $0x60] sm:$0xff] %vm1787, %v1581
      %1801 = vst.msk [vmem:[%s175 + $0x68] sm:$0xff] %vm1787, %v1584
      %1802 = vst.msk [vmem:[%s175 + $0x70] sm:$0xff] %vm1787, %v1589
      %1803 = vst.msk [vmem:[%s175 + $0x78] sm:$0xff] %vm1787, %v1592
      %1804 = vst.msk [vmem:[%s175 + $0x80] sm:$0xff] %vm1787, %v1597
      %1805 = vst.msk [vmem:[%s175 + $0x88] sm:$0xff] %vm1787, %v1600
      %1806 = vst.msk [vmem:[%s175 + $0x90] sm:$0xff] %vm1787, %v1605
      %1807 = vst.msk [vmem:[%s175 + $0x98] sm:$0xff] %vm1787, %v1608
      %1808 = vst.msk [vmem:[%s175 + $0xa0] sm:$0xff] %vm1787, %v1613
      %1809 = vst.msk [vmem:[%s175 + $0xa8] sm:$0xff] %vm1787, %v1616
      %1810 = vst.msk [vmem:[%s175 + $0xb0] sm:$0xff] %vm1787, %v1621
      %1811 = vst.msk [vmem:[%s175 + $0xb8] sm:$0xff] %vm1787, %v1624
      %1812 = vst.msk [vmem:[%s175 + $0xc0] sm:$0xff] %vm1787, %v1629
      %1813 = vst.msk [vmem:[%s175 + $0xc8] sm:$0xff] %vm1787, %v1632
      %1814 = vst.msk [vmem:[%s175 + $0xd0] sm:$0xff] %vm1787, %v1637
      %1815 = vst.msk [vmem:[%s175 + $0xd8] sm:$0xff] %vm1787, %v1640
      %1816 = vst.msk [vmem:[%s175 + $0xe0] sm:$0xff] %vm1787, %v1645
      %1817 = vst.msk [vmem:[%s175 + $0xe8] sm:$0xff] %vm1787, %v1648
      %1818 = vst.msk [vmem:[%s175 + $0xf0] sm:$0xff] %vm1787, %v1653
      %1819 = vst.msk [vmem:[%s175 + $0xf8] sm:$0xff] %vm1787, %v1656
      %1820 = vst.msk [vmem:[%s175 + $0x100] sm:$0xff] %vm1787, %v1661
      %1821 = vst.msk [vmem:[%s175 + $0x108] sm:$0xff] %vm1787, %v1664
      %1822 = vst.msk [vmem:[%s175 + $0x110] sm:$0xff] %vm1787, %v1669
      %1823 = vst.msk [vmem:[%s175 + $0x118] sm:$0xff] %vm1787, %v1672
      %1824 = vst.msk [vmem:[%s175 + $0x120] sm:$0xff] %vm1787, %v1677
      %1825 = vst.msk [vmem:[%s175 + $0x128] sm:$0xff] %vm1787, %v1680
      %1826 = vst.msk [vmem:[%s175 + $0x130] sm:$0xff] %vm1787, %v1685
      %1827 = vst.msk [vmem:[%s175 + $0x138] sm:$0xff] %vm1787, %v1688
      %1828 = vst.msk [vmem:[%s175 + $0x140] sm:$0xff] %vm1787, %v1693
      %1829 = vst.msk [vmem:[%s175 + $0x148] sm:$0xff] %vm1787, %v1696
      %1830 = vst.msk [vmem:[%s175 + $0x150] sm:$0xff] %vm1787, %v1701
      %1831 = vst.msk [vmem:[%s175 + $0x158] sm:$0xff] %vm1787, %v1704
      %1832 = vst.msk [vmem:[%s175 + $0x160] sm:$0xff] %vm1787, %v1709
      %1833 = vst.msk [vmem:[%s175 + $0x168] sm:$0xff] %vm1787, %v1712
      %1834 = vst.msk [vmem:[%s175 + $0x170] sm:$0xff] %vm1787, %v1717
      %1835 = vst.msk [vmem:[%s175 + $0x178] sm:$0xff] %vm1787, %v1720
      %1836 = vst.msk [vmem:[%s175 + $0x180] sm:$0xff] %vm1787, %v1725
      %1837 = vst.msk [vmem:[%s175 + $0x188] sm:$0xff] %vm1787, %v1728
      %1838 = vst.msk [vmem:[%s175 + $0x190] sm:$0xff] %vm1787, %v1733
      %1839 = vst.msk [vmem:[%s175 + $0x198] sm:$0xff] %vm1787, %v1736
      %1840 = vst.msk [vmem:[%s175 + $0x1a0] sm:$0xff] %vm1787, %v1741
      %1841 = vst.msk [vmem:[%s175 + $0x1a8] sm:$0xff] %vm1787, %v1744
      %1842 = vst.msk [vmem:[%s175 + $0x1b0] sm:$0xff] %vm1787, %v1749
      %1843 = vst.msk [vmem:[%s175 + $0x1b8] sm:$0xff] %vm1787, %v1752
      %1844 = vst.msk [vmem:[%s175 + $0x1c0] sm:$0xff] %vm1787, %v1757
      %1845 = vst.msk [vmem:[%s175 + $0x1c8] sm:$0xff] %vm1787, %v1760
      %1846 = vst.msk [vmem:[%s175 + $0x1d0] sm:$0xff] %vm1787, %v1765
      %1847 = vst.msk [vmem:[%s175 + $0x1d8] sm:$0xff] %vm1787, %v1768
      %1848 = vst.msk [vmem:[%s175 + $0x1e0] sm:$0xff] %vm1787, %v1773
      %1849 = vst.msk [vmem:[%s175 + $0x1e8] sm:$0xff] %vm1787, %v1776
      %1850 = vst.msk [vmem:[%s175 + $0x1f0] sm:$0xff] %vm1787, %v1781
      %1851 = vst.msk [vmem:[%s175 + $0x1f8] sm:$0xff] %vm1787, %v1784
      %s1852 = smul.u32 64, %s14
      %p1853 = scmp.lt.s32.totalorder %s1852, 255
      %s1854 = scalar_select %p1853, %s1852, 255
      %s1855 = smul.addr %s1854, 8
      %s1856 = scalar_lea.vmem %s3, %s1855
      // Predicated region
      $region33: #{conv_decoder_forward.7} parent=31 // pred_check
        %p1857 = pneg %p100
      $region34: #{conv_decoder_forward.7} parent=31 // pred_check_branch
        %1859 = sbr.rel (%p1857) target = $region36
      $region35: #{conv_decoder_forward.7} parent=31 // pred_region
        %s1860 = smul.u32 64, %s14
      $region36: #{conv_decoder_forward.7} parent=31 // pred_fallthru
        _
    $region32: #{conv_decoder_forward.7} parent=5 // pred_fallthru
      _
    %p1861 = scmp.le.s32.totalorder 2, %s9
    // Predicated region
    $region37: #{conv_decoder_forward.7} parent=5 // pred_check
      %p1862 = pneg %p1861
    $region38: #{conv_decoder_forward.7} parent=5 // pred_check_branch
      %1864 = sbr.rel (%p1862) target = $region40
    $region39: #{conv_decoder_forward.7} parent=5 // pred_region
      %s1865 = ssub.s32 %s9, 2
      // Predicated region
      $region41: #{conv_decoder_forward.7} parent=39 // pred_check
        %p1866 = pneg %p106
      $region42: #{conv_decoder_forward.7} parent=39 // pred_check_branch
        %1868 = sbr.rel (%p1866) target = $region44
      $region43: #{conv_decoder_forward.7} parent=39 // pred_region
        %s1869 = smul.u32 64, %s15
        %p1870 = scmp.lt.s32.totalorder %s1869, 255
        %s1871 = scalar_select %p1870, %s1869, 255
        %s1872 = smul.addr %s1871, 8
        %s1873 = scalar_lea.vmem %s3, %s1872
      $region44: #{conv_decoder_forward.7} parent=39 // pred_fallthru
        _
    $region40: #{conv_decoder_forward.7} parent=5 // pred_fallthru
      _
  $region6: #{conv_decoder_forward.7} parent=0 // loop_footer
    %s13 = sadd.s32 1, %s9
  $region7: #{conv_decoder_forward.7} parent=0 // loop_footer_branch
    %8 = sbr.rel target = $region3
  $region8: #{conv_decoder_forward.7} parent=0 // loop_exit
    _

</llo_original>
